<compile_context>
chip_gen: v7x
topology: tpu7x:2x2x1
jax: 0.10.0
libtpu: 0.0.40
codegen_flags: <defaults>
</compile_context>

<pallas_src>
import functools

import jax
import jax.numpy as jnp
from jax.experimental import pallas as pl
from jax.experimental.pallas import tpu as pltpu

BN_EPS = 1e-5
VMEM_LIMIT = 48 * 1024 * 1024  # fits v7x (64 MiB phys) and v5e/v6e (128 MiB)


def _n_tile(n, cap=512):
    """Row-tile size: full N when small, else the largest divisor of N that is
    a multiple of 8 and <= cap (keeps (tile, 1024) f32 blocks, double-buffered,
    well inside v7x's 64 MiB VMEM)."""
    if n <= cap:
        return n
    for t in range(cap, 7, -8):
        if n % t == 0:
            return t
    # TODO(synk): pad N to a multiple of 8 for awkward production sizes.
    return n


# ----------------------------------------------------------------------------
# Fused (affine+ReLU) -> matmul -> (BN stats, optional per-batch max/min) layer
# ----------------------------------------------------------------------------
def _conv_bn_kernel(x_ref, w_ref, scale_ref, shift_ref, *out_refs,
                    in_affine, in_relu, emit_z, emit_minmax, per_batch_w):
    it = iter(out_refs)
    z_ref = next(it) if emit_z else None
    sum_ref = next(it)
    sq_ref = next(it)
    mx_ref = next(it) if emit_minmax else None
    mn_ref = next(it) if emit_minmax else None

    x = x_ref[0]                                     # (tn, Cin) f32
    if in_affine:                                    # previous layer's BN affine
        x = x * scale_ref[...] + shift_ref[...]
    if in_relu:
        x = jnp.maximum(x, 0.0)

    w = w_ref[0] if per_batch_w else w_ref[...]
    z = jnp.dot(x.astype(jnp.bfloat16), w.astype(jnp.bfloat16),
                preferred_element_type=jnp.float32)  # (tn, Cout), f32 accum

    if emit_z:
        z_ref[0] = z

    @pl.when(pl.program_id(1) == 0)                  # first N-tile of this batch
    def _():
        sum_ref[...] = jnp.zeros(sum_ref.shape, jnp.float32)
        sq_ref[...] = jnp.zeros(sq_ref.shape, jnp.float32)
        if emit_minmax:
            mx_ref[...] = jnp.full(mx_ref.shape, -jnp.inf, jnp.float32)
            mn_ref[...] = jnp.full(mn_ref.shape, jnp.inf, jnp.float32)

    sum_ref[0] += jnp.sum(z, axis=0, keepdims=True)
    sq_ref[0] += jnp.sum(z * z, axis=0, keepdims=True)
    if emit_minmax:
        mx_ref[0] = jnp.maximum(mx_ref[0], jnp.max(z, axis=0, keepdims=True))
        mn_ref[0] = jnp.minimum(mn_ref[0], jnp.min(z, axis=0, keepdims=True))


def conv_bn_layer(x, w, in_scale=None, in_shift=None, *, in_relu=False,
                  emit_z=True, emit_minmax=False, per_batch_w=False):
    """x: (B, N, Cin).  Returns dict with optional 'z' (B,N,Cout) raw pre-BN
    output, per-batch 'sum'/'sumsq' (B,1,Cout), optional 'mx'/'mn'."""
    B, N, Cin = x.shape
    Cout = w.shape[-1]
    tn = _n_tile(N)
    n_tiles = N // tn

    in_affine = in_scale is not None
    if in_affine:
        in_scale = in_scale.reshape(1, Cin).astype(jnp.float32)
        in_shift = in_shift.reshape(1, Cin).astype(jnp.float32)
    else:
        in_scale = jnp.ones((1, Cin), jnp.float32)
        in_shift = jnp.zeros((1, Cin), jnp.float32)

    stat_shape = jax.ShapeDtypeStruct((B, 1, Cout), jnp.float32)
    stat_spec = pl.BlockSpec((1, 1, Cout), lambda b, n: (b, 0, 0))

    out_shape, out_specs, names = [], [], []
    if emit_z:
        out_shape.append(jax.ShapeDtypeStruct((B, N, Cout), jnp.float32))
        out_specs.append(pl.BlockSpec((1, tn, Cout), lambda b, n: (b, n, 0)))
        names.append("z")
    out_shape += [stat_shape, stat_shape]
    out_specs += [stat_spec, stat_spec]
    names += ["sum", "sumsq"]
    if emit_minmax:
        out_shape += [stat_shape, stat_shape]
        out_specs += [stat_spec, stat_spec]
        names += ["mx", "mn"]

    if per_batch_w:
        w_spec = pl.BlockSpec((1, Cin, Cout), lambda b, n: (b, 0, 0))
    else:
        w_spec = pl.BlockSpec((Cin, Cout), lambda b, n: (0, 0))

    kernel = functools.partial(_conv_bn_kernel, in_affine=in_affine,
                               in_relu=in_relu, emit_z=emit_z,
                               emit_minmax=emit_minmax, per_batch_w=per_batch_w)
    outs = pl.pallas_call(
        kernel,
        out_shape=tuple(out_shape),
        grid=(B, n_tiles),
        in_specs=[
            pl.BlockSpec((1, tn, Cin), lambda b, n: (b, n, 0)),
            w_spec,
            pl.BlockSpec((1, Cin), lambda b, n: (0, 0)),
            pl.BlockSpec((1, Cin), lambda b, n: (0, 0)),
        ],
        out_specs=tuple(out_specs),
        compiler_params=pltpu.CompilerParams(
            dimension_semantics=("parallel", "arbitrary"),
            vmem_limit_bytes=VMEM_LIMIT),
    )(x, w, in_scale, in_shift)
    return dict(zip(names, outs))


# ----------------------------------------------------------------------------
# Fused STN fc head: fc1+BN4+ReLU -> fc2+BN5+ReLU -> fc3+bias+identity
# ----------------------------------------------------------------------------
def _stn_head_kernel(g_ref, w1_ref, g4_ref, b4_ref, w2_ref, g5_ref, b5_ref,
                     w3_ref, bi_ref, o_ref):
    def mm(a, w):
        return jnp.dot(a.astype(jnp.bfloat16), w.astype(jnp.bfloat16),
                       preferred_element_type=jnp.float32)

    def bn_relu(z, ga, be):
        m = jnp.mean(z, axis=0, keepdims=True)
        v = jnp.mean(jnp.square(z - m), axis=0, keepdims=True)
        return jnp.maximum((z - m) * jax.lax.rsqrt(v + BN_EPS) * ga + be, 0.0)

    h = bn_relu(mm(g_ref[...], w1_ref[...]), g4_ref[...], b4_ref[...])
    h = bn_relu(mm(h, w2_ref[...]), g5_ref[...], b5_ref[...])
    o_ref[...] = mm(h, w3_ref[...]) + bi_ref[...]


def stn_head(g, w1, g4, b4, w2, g5, b5, w3, bias_iden):
    B = g.shape[0]
    kk = w3.shape[1]
    return pl.pallas_call(
        _stn_head_kernel,
        out_shape=jax.ShapeDtypeStruct((B, kk), jnp.float32),
        compiler_params=pltpu.CompilerParams(vmem_limit_bytes=VMEM_LIMIT),
    )(g, w1, g4.reshape(1, -1), b4.reshape(1, -1),
      w2, g5.reshape(1, -1), b5.reshape(1, -1), w3, bias_iden)


# ----------------------------------------------------------------------------
# Host-side glue: BN stats finalize and max epilogue (tiny (C,) / (B,C) ops)
# ----------------------------------------------------------------------------
def _bn_affine(layer, gamma, beta, n_rows):
    s = jnp.sum(layer["sum"], axis=0)[0]        # (Cout,)
    ss = jnp.sum(layer["sumsq"], axis=0)[0]
    mean = s / n_rows
    var = jnp.maximum(ss / n_rows - mean * mean, 0.0)
    scale = gamma * jax.lax.rsqrt(var + BN_EPS)
    shift = beta - mean * scale
    return scale, shift


def _bn_max(layer, scale, shift, *, relu):
    mx = layer["mx"][:, 0, :]                   # (B, Cout) max of raw z
    mn = layer["mn"][:, 0, :]
    g = jnp.where(scale[None, :] >= 0, mx, mn) * scale[None, :] + shift[None, :]
    if relu:
        g = jnp.maximum(g, 0.0)
    return g


# ----------------------------------------------------------------------------
# Model forward (Pallas path)
# ----------------------------------------------------------------------------
def stn_forward(xt, p, k):
    B, N, _ = xt.shape
    M = B * N
    l1 = conv_bn_layer(xt, p["conv1_w"])
    s1, t1 = _bn_affine(l1, p["bn1_g"], p["bn1_b"], M)
    l2 = conv_bn_layer(l1["z"], p["conv2_w"], s1, t1, in_relu=True)
    s2, t2 = _bn_affine(l2, p["bn2_g"], p["bn2_b"], M)
    l3 = conv_bn_layer(l2["z"], p["conv3_w"], s2, t2, in_relu=True,
                       emit_z=False, emit_minmax=True)
    s3, t3 = _bn_affine(l3, p["bn3_g"], p["bn3_b"], M)
    g = _bn_max(l3, s3, t3, relu=True)                        # (B, 1024)

    bias_iden = (p["fc3_b"] + jnp.eye(k, dtype=jnp.float32).reshape(-1))
    out = stn_head(g, p["fc1_w"], p["bn4_g"], p["bn4_b"],
                   p["fc2_w"], p["bn5_g"], p["bn5_b"],
                   p["fc3_w"], bias_iden.reshape(1, k * k))
    return out.reshape(B, k, k)


def pointnetfeat_forward(x, params, k, global_feat=True, feature_transform=False):
    # x: (B, k, N), same NCW layout as the PyTorch module.
    if feature_transform:
        # TODO(synk): feature_transform=True (fstn) branch; module default is False.
        raise NotImplementedError("feature_transform=True not implemented")
    B, _, N = x.shape
    M = B * N
    xt = jnp.transpose(x, (0, 2, 1))            # (B, N, k) -- plain-JAX glue

    trans = stn_forward(xt, params["stn"], k)   # (B, k, k)

    mp = params["main"]
    # torch.bmm(x^T, trans) folded into conv1:  x^T @ (trans @ W1)
    w1b = jnp.einsum("bij,jc->bic", trans, mp["conv1_w"])     # (B, k, 64), f32
    l1 = conv_bn_layer(xt, w1b, per_batch_w=True)
    s1, t1 = _bn_affine(l1, mp["bn1_g"], mp["bn1_b"], M)
    l2 = conv_bn_layer(l1["z"], mp["conv2_w"], s1, t1, in_relu=True)
    s2, t2 = _bn_affine(l2, mp["bn2_g"], mp["bn2_b"], M)
    l3 = conv_bn_layer(l2["z"], mp["conv3_w"], s2, t2, in_relu=True,
                       emit_z=False, emit_minmax=True)
    s3, t3 = _bn_affine(l3, mp["bn3_g"], mp["bn3_b"], M)
    g = _bn_max(l3, s3, t3, relu=False)                       # (B, 1024)

    if global_feat:
        return g, trans, None

    pointfeat = jnp.maximum(l1["z"] * s1[None, None, :] + t1[None, None, :], 0.0)
    gexp = jnp.broadcast_to(g[:, None, :], (B, N, 1024))
    cat = jnp.concatenate([gexp, pointfeat], axis=-1)         # (B, N, 1088)
    return jnp.transpose(cat, (0, 2, 1)), trans, None


# ----------------------------------------------------------------------------
# Pure-JAX reference (train-mode BN, biases included).  Matmul operands are
# cast to bf16 (f32 accumulation) to mirror the kernels' mixed precision, and
# torch.bmm is folded into conv1 (exact by associativity).
# ----------------------------------------------------------------------------
def ref_forward(x, params, k, global_feat=True):
    B, _, N = x.shape
    xt = jnp.transpose(x, (0, 2, 1))

    def mm(a, w):
        return jnp.dot(a.astype(jnp.bfloat16), w.astype(jnp.bfloat16),
                       preferred_element_type=jnp.float32)

    def bmm(a, w):
        return jax.vmap(lambda ai, wi: jnp.dot(
            ai.astype(jnp.bfloat16), wi.astype(jnp.bfloat16),
            preferred_element_type=jnp.float32))(a, w)

    def bn(z, ga, be):
        zf = z.reshape(-1, z.shape[-1])
        m = jnp.mean(zf, axis=0)
        v = jnp.mean(jnp.square(zf - m), axis=0)
        return (z - m) * jax.lax.rsqrt(v + BN_EPS) * ga + be

    relu = lambda z: jnp.maximum(z, 0.0)

    def stn(p):
        h = relu(bn(mm(xt.reshape(B * N, k), p["conv1_w"]) + p["conv1_b"],
                    p["bn1_g"], p["bn1_b"]))
        h = relu(bn(mm(h, p["conv2_w"]) + p["conv2_b"], p["bn2_g"], p["bn2_b"]))
        h = relu(bn(mm(h, p["conv3_w"]) + p["conv3_b"], p["bn3_g"], p["bn3_b"]))
        g = jnp.max(h.reshape(B, N, 1024), axis=1)
        g = relu(bn(mm(g, p["fc1_w"]) + p["fc1_b"], p["bn4_g"], p["bn4_b"]))
        g = relu(bn(mm(g, p["fc2_w"]) + p["fc2_b"], p["bn5_g"], p["bn5_b"]))
        g = mm(g, p["fc3_w"]) + p["fc3_b"] + jnp.eye(k, dtype=jnp.float32).reshape(1, -1)
        return g.reshape(B, k, k)

    sp, mp = params["stn"], params["main"]
    trans = stn(sp)
    w1b = jnp.einsum("bij,jc->bic", trans, mp["conv1_w"])
    h1 = relu(bn(bmm(xt, w1b) + mp["conv1_b"], mp["bn1_g"], mp["bn1_b"]))      # (B,N,64)
    h2 = relu(bn(mm(h1.reshape(B * N, 64), mp["conv2_w"]) + mp["conv2_b"],
                 mp["bn2_g"], mp["bn2_b"]))
    h3 = bn(mm(h2, mp["conv3_w"]) + mp["conv3_b"], mp["bn3_g"], mp["bn3_b"])
    g = jnp.max(h3.reshape(B, N, 1024), axis=1)
    if global_feat:
        return g, trans, None
    gexp = jnp.broadcast_to(g[:, None, :], (B, N, 1024))
    cat = jnp.concatenate([gexp, h1], axis=-1)
    return jnp.transpose(cat, (0, 2, 1)), trans, None


# ----------------------------------------------------------------------------
# Deterministic parameter init (synthetic; shapes per the module __init__)
# ----------------------------------------------------------------------------
def init_params(key, feat_dim):
    keys = iter(jax.random.split(key, 40))

    def lin(cin, cout):
        w = 0.1 * jax.random.normal(next(keys), (cin, cout), jnp.float32)
        b = 0.01 * jax.random.normal(next(keys), (cout,), jnp.float32)
        return w, b

    def bn(c):
        return jnp.ones((c,), jnp.float32), jnp.zeros((c,), jnp.float32)

    k = feat_dim
    stn = {}
    stn["conv1_w"], stn["conv1_b"] = lin(k, 64)
    stn["bn1_g"], stn["bn1_b"] = bn(64)
    stn["conv2_w"], stn["conv2_b"] = lin(64, 128)
    stn["bn2_g"], stn["bn2_b"] = bn(128)
    stn["conv3_w"], stn["conv3_b"] = lin(128, 1024)
    stn["bn3_g"], stn["bn3_b"] = bn(1024)
    stn["fc1_w"], stn["fc1_b"] = lin(1024, 512)
    stn["bn4_g"], stn["bn4_b"] = bn(512)
    stn["fc2_w"], stn["fc2_b"] = lin(512, 256)
    stn["bn5_g"], stn["bn5_b"] = bn(256)
    stn["fc3_w"], stn["fc3_b"] = lin(256, k * k)

    main = {}
    main["conv1_w"], main["conv1_b"] = lin(k, 64)
    main["bn1_g"], main["bn1_b"] = bn(64)
    main["conv2_w"], main["conv2_b"] = lin(64, 128)
    main["bn2_g"], main["bn2_b"] = bn(128)
    main["conv3_w"], main["conv3_b"] = lin(128, 1024)
    main["bn3_g"], main["bn3_b"] = bn(1024)

    return {"stn": stn, "main": main}


# ----------------------------------------------------------------------------
if __name__ == "__main__":
    B, FEAT, N = 2, 4, 16            # batch, feat_dim (k), n_pts
    key = jax.random.PRNGKey(0)
    kx, kp = jax.random.split(key)
    x = jax.random.normal(kx, (B, FEAT, N), jnp.float32)
    params = init_params(kp, FEAT)

    fwd_g = jax.jit(lambda xx, pp: pointnetfeat_forward(xx, pp, FEAT, global_feat=True))
    fwd_c = jax.jit(lambda xx, pp: pointnetfeat_forward(xx, pp, FEAT, global_feat=False))

    # Pallas path (global feature)
    out, trans, trans_feat = fwd_g(x, params)
    out = jax.block_until_ready(out)
    trans = jax.block_until_ready(trans)

    # Reference
    ref_out, ref_trans, _ = ref_forward(x, params, FEAT, global_feat=True)

    assert out.shape == (B, 1024), out.shape
    assert trans.shape == (B, FEAT, FEAT), trans.shape
    assert trans_feat is None
    assert jnp.allclose(trans, ref_trans, atol=1e-2, rtol=1e-2), \
        float(jnp.max(jnp.abs(trans - ref_trans)))
    assert jnp.allclose(out, ref_out, atol=1e-2, rtol=1e-2), \
        float(jnp.max(jnp.abs(out - ref_out)))

    # Pallas path (concatenated per-point feature)
    out2, trans2, _ = fwd_c(x, params)
    out2 = jax.block_until_ready(out2)
    ref_out2, _, _ = ref_forward(x, params, FEAT, global_feat=False)
    assert out2.shape == (B, 1024 + 64, N), out2.shape
    assert jnp.allclose(out2, ref_out2, atol=1e-2, rtol=1e-2), \
        float(jnp.max(jnp.abs(out2 - ref_out2)))

    print("KERNEL_OK")
</pallas_src>

<mosaic_0001>
module attributes {stable_mosaic.version = 11 : i64} {
  func.func @_conv_bn_kernel(%arg0: i32, %arg1: i32, %arg2: memref<1x16x4xf32, #tpu.memory_space<vmem>>, %arg3: memref<4x64xf32, #tpu.memory_space<vmem>>, %arg4: memref<1x4xf32, #tpu.memory_space<vmem>>, %arg5: memref<1x4xf32, #tpu.memory_space<vmem>>, %arg6: memref<1x16x64xf32, #tpu.memory_space<vmem>>, %arg7: memref<1x1x64xf32, #tpu.memory_space<vmem>>, %arg8: memref<1x1x64xf32, #tpu.memory_space<vmem>>) attributes {dimension_semantics = [#tpu.dimension_semantics<parallel>, #tpu.dimension_semantics<arbitrary>], iteration_bounds = array<i64: 2, 1>, scalar_prefetch = 0 : i64, scratch_operands = 0 : i64, tpu.core_type = #tpu.core_type<tc>, window_params = [{transform_indices = @transform_0, window_bounds = array<i64: 1, 16, 4>}, {pipeline_mode = #tpu.pipeline_mode<synchronous>, transform_indices = @transform_1, window_bounds = array<i64: 4, 64>}, {pipeline_mode = #tpu.pipeline_mode<synchronous>, transform_indices = @transform_2, window_bounds = array<i64: 1, 4>}, {pipeline_mode = #tpu.pipeline_mode<synchronous>, transform_indices = @transform_3, window_bounds = array<i64: 1, 4>}, {transform_indices = @transform_4, window_bounds = array<i64: 1, 16, 64>}, {transform_indices = @transform_5, window_bounds = array<i64: 1, 1, 64>}, {transform_indices = @transform_6, window_bounds = array<i64: 1, 1, 64>}]} {
    %c0 = arith.constant 0 : index
    %c0_0 = arith.constant 0 : index
    %c0_1 = arith.constant 0 : index
    %0 = vector.load %arg2[%c0, %c0_0, %c0_1] : memref<1x16x4xf32, #tpu.memory_space<vmem>>, vector<1x16x4xf32>
    %1 = vector.shape_cast %0 : vector<1x16x4xf32> to vector<16x4xf32>
    %c0_2 = arith.constant 0 : index
    %c0_3 = arith.constant 0 : index
    %2 = vector.load %arg3[%c0_2, %c0_3] : memref<4x64xf32, #tpu.memory_space<vmem>>, vector<4x64xf32>
    %3 = arith.truncf %1 : vector<16x4xf32> to vector<16x4xbf16>
    %4 = arith.truncf %2 : vector<4x64xf32> to vector<4x64xbf16>
    %cst = arith.constant dense<0.000000e+00> : vector<16x64xf32>
    %5 = tpu.matmul %3, %4, %cst {dimension_numbers = #tpu.dot_dimension_numbers<[1], [0], [0], [1], [0, 0, 1, 1], [], []>} : vector<16x4xbf16>, vector<4x64xbf16>, vector<16x64xf32> -> vector<16x64xf32>
    %c0_4 = arith.constant 0 : index
    %c0_5 = arith.constant 0 : index
    %c0_6 = arith.constant 0 : index
    %6 = vector.load %arg6[%c0_4, %c0_5, %c0_6] : memref<1x16x64xf32, #tpu.memory_space<vmem>>, vector<1x16x64xf32>
    %7 = vector.shape_cast %6 : vector<1x16x64xf32> to vector<16x64xf32>
    %8 = vector.shape_cast %5 : vector<16x64xf32> to vector<1x16x64xf32>
    tpu.vector_store %arg6[%c0_4, %c0_5, %c0_6], %8 {strides = array<i32>} : memref<1x16x64xf32, #tpu.memory_space<vmem>>, vector<1x16x64xf32>,
    %c0_i32 = arith.constant 0 : i32
    %9 = arith.cmpi eq, %arg1, %c0_i32 : i32
    %10 = arith.extui %9 : i1 to i32
    %c0_i32_7 = arith.constant 0 : i32
    %11 = arith.cmpi ne, %10, %c0_i32_7 : i32
    scf.if %11 {
      %cst_22 = arith.constant 0.000000e+00 : f32
      %29 = vector.broadcast %cst_22 : f32 to vector<1x1x64xf32>
      %c0_23 = arith.constant 0 : index
      %c0_24 = arith.constant 0 : index
      %c0_25 = arith.constant 0 : index
      %30 = vector.load %arg7[%c0_23, %c0_24, %c0_25] : memref<1x1x64xf32, #tpu.memory_space<vmem>>, vector<1x1x64xf32>
      tpu.vector_store %arg7[%c0_23, %c0_24, %c0_25], %29 {strides = array<i32>} : memref<1x1x64xf32, #tpu.memory_space<vmem>>, vector<1x1x64xf32>,
      %cst_26 = arith.constant 0.000000e+00 : f32
      %31 = vector.broadcast %cst_26 : f32 to vector<1x1x64xf32>
      %c0_27 = arith.constant 0 : index
      %c0_28 = arith.constant 0 : index
      %c0_29 = arith.constant 0 : index
      %32 = vector.load %arg8[%c0_27, %c0_28, %c0_29] : memref<1x1x64xf32, #tpu.memory_space<vmem>>, vector<1x1x64xf32>
      tpu.vector_store %arg8[%c0_27, %c0_28, %c0_29], %31 {strides = array<i32>} : memref<1x1x64xf32, #tpu.memory_space<vmem>>, vector<1x1x64xf32>,
    } else {
    }
    %c0_8 = arith.constant 0 : index
    %c0_9 = arith.constant 0 : index
    %c0_10 = arith.constant 0 : index
    %12 = vector.load %arg7[%c0_8, %c0_9, %c0_10] : memref<1x1x64xf32, #tpu.memory_space<vmem>>, vector<1x1x64xf32>
    %13 = vector.shape_cast %12 : vector<1x1x64xf32> to vector<1x64xf32>
    %cst_11 = arith.constant dense<0.000000e+00> : vector<64xf32>
    %14 = vector.multi_reduction <add>, %5, %cst_11 [0] : vector<16x64xf32> to vector<64xf32>
    %15 = vector.shape_cast %14 : vector<64xf32> to vector<1x64xf32>
    %16 = arith.addf %13, %15 : vector<1x64xf32>
    %c0_12 = arith.constant 0 : index
    %c0_13 = arith.constant 0 : index
    %c0_14 = arith.constant 0 : index
    %17 = vector.load %arg7[%c0_12, %c0_13, %c0_14] : memref<1x1x64xf32, #tpu.memory_space<vmem>>, vector<1x1x64xf32>
    %18 = vector.shape_cast %17 : vector<1x1x64xf32> to vector<1x64xf32>
    %19 = vector.shape_cast %16 : vector<1x64xf32> to vector<1x1x64xf32>
    tpu.vector_store %arg7[%c0_12, %c0_13, %c0_14], %19 {strides = array<i32>} : memref<1x1x64xf32, #tpu.memory_space<vmem>>, vector<1x1x64xf32>,
    %c0_15 = arith.constant 0 : index
    %c0_16 = arith.constant 0 : index
    %c0_17 = arith.constant 0 : index
    %20 = vector.load %arg8[%c0_15, %c0_16, %c0_17] : memref<1x1x64xf32, #tpu.memory_space<vmem>>, vector<1x1x64xf32>
    %21 = vector.shape_cast %20 : vector<1x1x64xf32> to vector<1x64xf32>
    %22 = arith.mulf %5, %5 : vector<16x64xf32>
    %cst_18 = arith.constant dense<0.000000e+00> : vector<64xf32>
    %23 = vector.multi_reduction <add>, %22, %cst_18 [0] : vector<16x64xf32> to vector<64xf32>
    %24 = vector.shape_cast %23 : vector<64xf32> to vector<1x64xf32>
    %25 = arith.addf %21, %24 : vector<1x64xf32>
    %c0_19 = arith.constant 0 : index
    %c0_20 = arith.constant 0 : index
    %c0_21 = arith.constant 0 : index
    %26 = vector.load %arg8[%c0_19, %c0_20, %c0_21] : memref<1x1x64xf32, #tpu.memory_space<vmem>>, vector<1x1x64xf32>
    %27 = vector.shape_cast %26 : vector<1x1x64xf32> to vector<1x64xf32>
    %28 = vector.shape_cast %25 : vector<1x64xf32> to vector<1x1x64xf32>
    tpu.vector_store %arg8[%c0_19, %c0_20, %c0_21], %28 {strides = array<i32>} : memref<1x1x64xf32, #tpu.memory_space<vmem>>, vector<1x1x64xf32>,
    return
  }
  func.func @transform_0(%arg0: i32, %arg1: i32) -> (i32, i32, i32) {
    %c0_i32 = arith.constant 0 : i32
    %c0_i32_0 = arith.constant 0 : i32
    return %arg0, %arg1, %c0_i32 : i32, i32, i32
  }
  func.func @transform_1(%arg0: i32, %arg1: i32) -> (i32, i32) {
    %c0_i32 = arith.constant 0 : i32
    %c0_i32_0 = arith.constant 0 : i32
    %c0_i32_1 = arith.constant 0 : i32
    return %c0_i32, %c0_i32_0 : i32, i32
  }
  func.func @transform_2(%arg0: i32, %arg1: i32) -> (i32, i32) {
    %c0_i32 = arith.constant 0 : i32
    %c0_i32_0 = arith.constant 0 : i32
    %c0_i32_1 = arith.constant 0 : i32
    return %c0_i32, %c0_i32_0 : i32, i32
  }
  func.func @transform_3(%arg0: i32, %arg1: i32) -> (i32, i32) {
    %c0_i32 = arith.constant 0 : i32
    %c0_i32_0 = arith.constant 0 : i32
    %c0_i32_1 = arith.constant 0 : i32
    return %c0_i32, %c0_i32_0 : i32, i32
  }
  func.func @transform_4(%arg0: i32, %arg1: i32) -> (i32, i32, i32) {
    %c0_i32 = arith.constant 0 : i32
    %c0_i32_0 = arith.constant 0 : i32
    return %arg0, %arg1, %c0_i32 : i32, i32, i32
  }
  func.func @transform_5(%arg0: i32, %arg1: i32) -> (i32, i32, i32) {
    %c0_i32 = arith.constant 0 : i32
    %c0_i32_0 = arith.constant 0 : i32
    %c0_i32_1 = arith.constant 0 : i32
    return %arg0, %c0_i32, %c0_i32_0 : i32, i32, i32
  }
  func.func @transform_6(%arg0: i32, %arg1: i32) -> (i32, i32, i32) {
    %c0_i32 = arith.constant 0 : i32
    %c0_i32_0 = arith.constant 0 : i32
    %c0_i32_1 = arith.constant 0 : i32
    return %arg0, %c0_i32, %c0_i32_0 : i32, i32, i32
  }
}

module attributes {stable_mosaic.version = 11 : i64} {
  func.func @_conv_bn_kernel(%arg0: i32, %arg1: i32, %arg2: memref<1x16x64xf32, #tpu.memory_space<vmem>>, %arg3: memref<64x128xf32, #tpu.memory_space<vmem>>, %arg4: memref<1x64xf32, #tpu.memory_space<vmem>>, %arg5: memref<1x64xf32, #tpu.memory_space<vmem>>, %arg6: memref<1x16x128xf32, #tpu.memory_space<vmem>>, %arg7: memref<1x1x128xf32, #tpu.memory_space<vmem>>, %arg8: memref<1x1x128xf32, #tpu.memory_space<vmem>>) attributes {dimension_semantics = [#tpu.dimension_semantics<parallel>, #tpu.dimension_semantics<arbitrary>], iteration_bounds = array<i64: 2, 1>, scalar_prefetch = 0 : i64, scratch_operands = 0 : i64, tpu.core_type = #tpu.core_type<tc>, window_params = [{transform_indices = @transform_0, window_bounds = array<i64: 1, 16, 64>}, {pipeline_mode = #tpu.pipeline_mode<synchronous>, transform_indices = @transform_1, window_bounds = array<i64: 64, 128>}, {pipeline_mode = #tpu.pipeline_mode<synchronous>, transform_indices = @transform_2, window_bounds = array<i64: 1, 64>}, {pipeline_mode = #tpu.pipeline_mode<synchronous>, transform_indices = @transform_3, window_bounds = array<i64: 1, 64>}, {transform_indices = @transform_4, window_bounds = array<i64: 1, 16, 128>}, {transform_indices = @transform_5, window_bounds = array<i64: 1, 1, 128>}, {transform_indices = @transform_6, window_bounds = array<i64: 1, 1, 128>}]} {
    %c0 = arith.constant 0 : index
    %c0_0 = arith.constant 0 : index
    %c0_1 = arith.constant 0 : index
    %0 = vector.load %arg2[%c0, %c0_0, %c0_1] : memref<1x16x64xf32, #tpu.memory_space<vmem>>, vector<1x16x64xf32>
    %1 = vector.shape_cast %0 : vector<1x16x64xf32> to vector<16x64xf32>
    %c0_2 = arith.constant 0 : index
    %c0_3 = arith.constant 0 : index
    %2 = vector.load %arg4[%c0_2, %c0_3] : memref<1x64xf32, #tpu.memory_space<vmem>>, vector<1x64xf32>
    %3 = vector.broadcast %2 : vector<1x64xf32> to vector<16x64xf32>
    %4 = arith.mulf %1, %3 : vector<16x64xf32>
    %c0_4 = arith.constant 0 : index
    %c0_5 = arith.constant 0 : index
    %5 = vector.load %arg5[%c0_4, %c0_5] : memref<1x64xf32, #tpu.memory_space<vmem>>, vector<1x64xf32>
    %6 = vector.broadcast %5 : vector<1x64xf32> to vector<16x64xf32>
    %7 = arith.addf %4, %6 : vector<16x64xf32>
    %cst = arith.constant 0.000000e+00 : f32
    %8 = vector.broadcast %cst : f32 to vector<16x64xf32>
    %9 = arith.maximumf %7, %8 : vector<16x64xf32>
    %c0_6 = arith.constant 0 : index
    %c0_7 = arith.constant 0 : index
    %10 = vector.load %arg3[%c0_6, %c0_7] : memref<64x128xf32, #tpu.memory_space<vmem>>, vector<64x128xf32>
    %11 = arith.truncf %9 : vector<16x64xf32> to vector<16x64xbf16>
    %12 = arith.truncf %10 : vector<64x128xf32> to vector<64x128xbf16>
    %cst_8 = arith.constant dense<0.000000e+00> : vector<16x128xf32>
    %13 = tpu.matmul %11, %12, %cst_8 {dimension_numbers = #tpu.dot_dimension_numbers<[1], [0], [0], [1], [0, 0, 1, 1], [], []>} : vector<16x64xbf16>, vector<64x128xbf16>, vector<16x128xf32> -> vector<16x128xf32>
    %c0_9 = arith.constant 0 : index
    %c0_10 = arith.constant 0 : index
    %c0_11 = arith.constant 0 : index
    %14 = vector.load %arg6[%c0_9, %c0_10, %c0_11] : memref<1x16x128xf32, #tpu.memory_space<vmem>>, vector<1x16x128xf32>
    %15 = vector.shape_cast %14 : vector<1x16x128xf32> to vector<16x128xf32>
    %16 = vector.shape_cast %13 : vector<16x128xf32> to vector<1x16x128xf32>
    tpu.vector_store %arg6[%c0_9, %c0_10, %c0_11], %16 {strides = array<i32>} : memref<1x16x128xf32, #tpu.memory_space<vmem>>, vector<1x16x128xf32>,
    %c0_i32 = arith.constant 0 : i32
    %17 = arith.cmpi eq, %arg1, %c0_i32 : i32
    %18 = arith.extui %17 : i1 to i32
    %c0_i32_12 = arith.constant 0 : i32
    %19 = arith.cmpi ne, %18, %c0_i32_12 : i32
    scf.if %19 {
      %cst_27 = arith.constant 0.000000e+00 : f32
      %37 = vector.broadcast %cst_27 : f32 to vector<1x1x128xf32>
      %c0_28 = arith.constant 0 : index
      %c0_29 = arith.constant 0 : index
      %c0_30 = arith.constant 0 : index
      %38 = vector.load %arg7[%c0_28, %c0_29, %c0_30] : memref<1x1x128xf32, #tpu.memory_space<vmem>>, vector<1x1x128xf32>
      tpu.vector_store %arg7[%c0_28, %c0_29, %c0_30], %37 {strides = array<i32>} : memref<1x1x128xf32, #tpu.memory_space<vmem>>, vector<1x1x128xf32>,
      %cst_31 = arith.constant 0.000000e+00 : f32
      %39 = vector.broadcast %cst_31 : f32 to vector<1x1x128xf32>
      %c0_32 = arith.constant 0 : index
      %c0_33 = arith.constant 0 : index
      %c0_34 = arith.constant 0 : index
      %40 = vector.load %arg8[%c0_32, %c0_33, %c0_34] : memref<1x1x128xf32, #tpu.memory_space<vmem>>, vector<1x1x128xf32>
      tpu.vector_store %arg8[%c0_32, %c0_33, %c0_34], %39 {strides = array<i32>} : memref<1x1x128xf32, #tpu.memory_space<vmem>>, vector<1x1x128xf32>,
    } else {
    }
    %c0_13 = arith.constant 0 : index
    %c0_14 = arith.constant 0 : index
    %c0_15 = arith.constant 0 : index
    %20 = vector.load %arg7[%c0_13, %c0_14, %c0_15] : memref<1x1x128xf32, #tpu.memory_space<vmem>>, vector<1x1x128xf32>
    %21 = vector.shape_cast %20 : vector<1x1x128xf32> to vector<1x128xf32>
    %cst_16 = arith.constant dense<0.000000e+00> : vector<128xf32>
    %22 = vector.multi_reduction <add>, %13, %cst_16 [0] : vector<16x128xf32> to vector<128xf32>
    %23 = vector.shape_cast %22 : vector<128xf32> to vector<1x128xf32>
    %24 = arith.addf %21, %23 : vector<1x128xf32>
    %c0_17 = arith.constant 0 : index
    %c0_18 = arith.constant 0 : index
    %c0_19 = arith.constant 0 : index
    %25 = vector.load %arg7[%c0_17, %c0_18, %c0_19] : memref<1x1x128xf32, #tpu.memory_space<vmem>>, vector<1x1x128xf32>
    %26 = vector.shape_cast %25 : vector<1x1x128xf32> to vector<1x128xf32>
    %27 = vector.shape_cast %24 : vector<1x128xf32> to vector<1x1x128xf32>
    tpu.vector_store %arg7[%c0_17, %c0_18, %c0_19], %27 {strides = array<i32>} : memref<1x1x128xf32, #tpu.memory_space<vmem>>, vector<1x1x128xf32>,
    %c0_20 = arith.constant 0 : index
    %c0_21 = arith.constant 0 : index
    %c0_22 = arith.constant 0 : index
    %28 = vector.load %arg8[%c0_20, %c0_21, %c0_22] : memref<1x1x128xf32, #tpu.memory_space<vmem>>, vector<1x1x128xf32>
    %29 = vector.shape_cast %28 : vector<1x1x128xf32> to vector<1x128xf32>
    %30 = arith.mulf %13, %13 : vector<16x128xf32>
    %cst_23 = arith.constant dense<0.000000e+00> : vector<128xf32>
    %31 = vector.multi_reduction <add>, %30, %cst_23 [0] : vector<16x128xf32> to vector<128xf32>
    %32 = vector.shape_cast %31 : vector<128xf32> to vector<1x128xf32>
    %33 = arith.addf %29, %32 : vector<1x128xf32>
    %c0_24 = arith.constant 0 : index
    %c0_25 = arith.constant 0 : index
    %c0_26 = arith.constant 0 : index
    %34 = vector.load %arg8[%c0_24, %c0_25, %c0_26] : memref<1x1x128xf32, #tpu.memory_space<vmem>>, vector<1x1x128xf32>
    %35 = vector.shape_cast %34 : vector<1x1x128xf32> to vector<1x128xf32>
    %36 = vector.shape_cast %33 : vector<1x128xf32> to vector<1x1x128xf32>
    tpu.vector_store %arg8[%c0_24, %c0_25, %c0_26], %36 {strides = array<i32>} : memref<1x1x128xf32, #tpu.memory_space<vmem>>, vector<1x1x128xf32>,
    return
  }
  func.func @transform_0(%arg0: i32, %arg1: i32) -> (i32, i32, i32) {
    %c0_i32 = arith.constant 0 : i32
    %c0_i32_0 = arith.constant 0 : i32
    return %arg0, %arg1, %c0_i32 : i32, i32, i32
  }
  func.func @transform_1(%arg0: i32, %arg1: i32) -> (i32, i32) {
    %c0_i32 = arith.constant 0 : i32
    %c0_i32_0 = arith.constant 0 : i32
    %c0_i32_1 = arith.constant 0 : i32
    return %c0_i32, %c0_i32_0 : i32, i32
  }
  func.func @transform_2(%arg0: i32, %arg1: i32) -> (i32, i32) {
    %c0_i32 = arith.constant 0 : i32
    %c0_i32_0 = arith.constant 0 : i32
    %c0_i32_1 = arith.constant 0 : i32
    return %c0_i32, %c0_i32_0 : i32, i32
  }
  func.func @transform_3(%arg0: i32, %arg1: i32) -> (i32, i32) {
    %c0_i32 = arith.constant 0 : i32
    %c0_i32_0 = arith.constant 0 : i32
    %c0_i32_1 = arith.constant 0 : i32
    return %c0_i32, %c0_i32_0 : i32, i32
  }
  func.func @transform_4(%arg0: i32, %arg1: i32) -> (i32, i32, i32) {
    %c0_i32 = arith.constant 0 : i32
    %c0_i32_0 = arith.constant 0 : i32
    return %arg0, %arg1, %c0_i32 : i32, i32, i32
  }
  func.func @transform_5(%arg0: i32, %arg1: i32) -> (i32, i32, i32) {
    %c0_i32 = arith.constant 0 : i32
    %c0_i32_0 = arith.constant 0 : i32
    %c0_i32_1 = arith.constant 0 : i32
    return %arg0, %c0_i32, %c0_i32_0 : i32, i32, i32
  }
  func.func @transform_6(%arg0: i32, %arg1: i32) -> (i32, i32, i32) {
    %c0_i32 = arith.constant 0 : i32
    %c0_i32_0 = arith.constant 0 : i32
    %c0_i32_1 = arith.constant 0 : i32
    return %arg0, %c0_i32, %c0_i32_0 : i32, i32, i32
  }
}

module attributes {stable_mosaic.version = 11 : i64} {
  func.func @_conv_bn_kernel(%arg0: i32, %arg1: i32, %arg2: memref<1x16x128xf32, #tpu.memory_space<vmem>>, %arg3: memref<128x1024xf32, #tpu.memory_space<vmem>>, %arg4: memref<1x128xf32, #tpu.memory_space<vmem>>, %arg5: memref<1x128xf32, #tpu.memory_space<vmem>>, %arg6: memref<1x1x1024xf32, #tpu.memory_space<vmem>>, %arg7: memref<1x1x1024xf32, #tpu.memory_space<vmem>>, %arg8: memref<1x1x1024xf32, #tpu.memory_space<vmem>>, %arg9: memref<1x1x1024xf32, #tpu.memory_space<vmem>>) attributes {dimension_semantics = [#tpu.dimension_semantics<parallel>, #tpu.dimension_semantics<arbitrary>], iteration_bounds = array<i64: 2, 1>, scalar_prefetch = 0 : i64, scratch_operands = 0 : i64, tpu.core_type = #tpu.core_type<tc>, window_params = [{transform_indices = @transform_0, window_bounds = array<i64: 1, 16, 128>}, {pipeline_mode = #tpu.pipeline_mode<synchronous>, transform_indices = @transform_1, window_bounds = array<i64: 128, 1024>}, {pipeline_mode = #tpu.pipeline_mode<synchronous>, transform_indices = @transform_2, window_bounds = array<i64: 1, 128>}, {pipeline_mode = #tpu.pipeline_mode<synchronous>, transform_indices = @transform_3, window_bounds = array<i64: 1, 128>}, {transform_indices = @transform_4, window_bounds = array<i64: 1, 1, 1024>}, {transform_indices = @transform_5, window_bounds = array<i64: 1, 1, 1024>}, {transform_indices = @transform_6, window_bounds = array<i64: 1, 1, 1024>}, {transform_indices = @transform_7, window_bounds = array<i64: 1, 1, 1024>}]} {
    %c0 = arith.constant 0 : index
    %c0_0 = arith.constant 0 : index
    %c0_1 = arith.constant 0 : index
    %0 = vector.load %arg2[%c0, %c0_0, %c0_1] : memref<1x16x128xf32, #tpu.memory_space<vmem>>, vector<1x16x128xf32>
    %1 = vector.shape_cast %0 : vector<1x16x128xf32> to vector<16x128xf32>
    %c0_2 = arith.constant 0 : index
    %c0_3 = arith.constant 0 : index
    %2 = vector.load %arg4[%c0_2, %c0_3] : memref<1x128xf32, #tpu.memory_space<vmem>>, vector<1x128xf32>
    %3 = vector.broadcast %2 : vector<1x128xf32> to vector<16x128xf32>
    %4 = arith.mulf %1, %3 : vector<16x128xf32>
    %c0_4 = arith.constant 0 : index
    %c0_5 = arith.constant 0 : index
    %5 = vector.load %arg5[%c0_4, %c0_5] : memref<1x128xf32, #tpu.memory_space<vmem>>, vector<1x128xf32>
    %6 = vector.broadcast %5 : vector<1x128xf32> to vector<16x128xf32>
    %7 = arith.addf %4, %6 : vector<16x128xf32>
    %cst = arith.constant 0.000000e+00 : f32
    %8 = vector.broadcast %cst : f32 to vector<16x128xf32>
    %9 = arith.maximumf %7, %8 : vector<16x128xf32>
    %c0_6 = arith.constant 0 : index
    %c0_7 = arith.constant 0 : index
    %10 = vector.load %arg3[%c0_6, %c0_7] : memref<128x1024xf32, #tpu.memory_space<vmem>>, vector<128x1024xf32>
    %11 = arith.truncf %9 : vector<16x128xf32> to vector<16x128xbf16>
    %12 = arith.truncf %10 : vector<128x1024xf32> to vector<128x1024xbf16>
    %cst_8 = arith.constant dense<0.000000e+00> : vector<16x1024xf32>
    %13 = tpu.matmul %11, %12, %cst_8 {dimension_numbers = #tpu.dot_dimension_numbers<[1], [0], [0], [1], [0, 0, 1, 1], [], []>} : vector<16x128xbf16>, vector<128x1024xbf16>, vector<16x1024xf32> -> vector<16x1024xf32>
    %c0_i32 = arith.constant 0 : i32
    %14 = arith.cmpi eq, %arg1, %c0_i32 : i32
    %15 = arith.extui %14 : i1 to i32
    %c0_i32_9 = arith.constant 0 : i32
    %16 = arith.cmpi ne, %15, %c0_i32_9 : i32
    scf.if %16 {
      %cst_38 = arith.constant 0.000000e+00 : f32
      %50 = vector.broadcast %cst_38 : f32 to vector<1x1x1024xf32>
      %c0_39 = arith.constant 0 : index
      %c0_40 = arith.constant 0 : index
      %c0_41 = arith.constant 0 : index
      %51 = vector.load %arg6[%c0_39, %c0_40, %c0_41] : memref<1x1x1024xf32, #tpu.memory_space<vmem>>, vector<1x1x1024xf32>
      tpu.vector_store %arg6[%c0_39, %c0_40, %c0_41], %50 {strides = array<i32>} : memref<1x1x1024xf32, #tpu.memory_space<vmem>>, vector<1x1x1024xf32>,
      %cst_42 = arith.constant 0.000000e+00 : f32
      %52 = vector.broadcast %cst_42 : f32 to vector<1x1x1024xf32>
      %c0_43 = arith.constant 0 : index
      %c0_44 = arith.constant 0 : index
      %c0_45 = arith.constant 0 : index
      %53 = vector.load %arg7[%c0_43, %c0_44, %c0_45] : memref<1x1x1024xf32, #tpu.memory_space<vmem>>, vector<1x1x1024xf32>
      tpu.vector_store %arg7[%c0_43, %c0_44, %c0_45], %52 {strides = array<i32>} : memref<1x1x1024xf32, #tpu.memory_space<vmem>>, vector<1x1x1024xf32>,
      %cst_46 = arith.constant 0xFF800000 : f32
      %54 = vector.broadcast %cst_46 : f32 to vector<1x1x1024xf32>
      %c0_47 = arith.constant 0 : index
      %c0_48 = arith.constant 0 : index
      %c0_49 = arith.constant 0 : index
      %55 = vector.load %arg8[%c0_47, %c0_48, %c0_49] : memref<1x1x1024xf32, #tpu.memory_space<vmem>>, vector<1x1x1024xf32>
      tpu.vector_store %arg8[%c0_47, %c0_48, %c0_49], %54 {strides = array<i32>} : memref<1x1x1024xf32, #tpu.memory_space<vmem>>, vector<1x1x1024xf32>,
      %cst_50 = arith.constant 0x7F800000 : f32
      %56 = vector.broadcast %cst_50 : f32 to vector<1x1x1024xf32>
      %c0_51 = arith.constant 0 : index
      %c0_52 = arith.constant 0 : index
      %c0_53 = arith.constant 0 : index
      %57 = vector.load %arg9[%c0_51, %c0_52, %c0_53] : memref<1x1x1024xf32, #tpu.memory_space<vmem>>, vector<1x1x1024xf32>
      tpu.vector_store %arg9[%c0_51, %c0_52, %c0_53], %56 {strides = array<i32>} : memref<1x1x1024xf32, #tpu.memory_space<vmem>>, vector<1x1x1024xf32>,
    } else {
    }
    %c0_10 = arith.constant 0 : index
    %c0_11 = arith.constant 0 : index
    %c0_12 = arith.constant 0 : index
    %17 = vector.load %arg6[%c0_10, %c0_11, %c0_12] : memref<1x1x1024xf32, #tpu.memory_space<vmem>>, vector<1x1x1024xf32>
    %18 = vector.shape_cast %17 : vector<1x1x1024xf32> to vector<1x1024xf32>
    %cst_13 = arith.constant dense<0.000000e+00> : vector<1024xf32>
    %19 = vector.multi_reduction <add>, %13, %cst_13 [0] : vector<16x1024xf32> to vector<1024xf32>
    %20 = vector.shape_cast %19 : vector<1024xf32> to vector<1x1024xf32>
    %21 = arith.addf %18, %20 : vector<1x1024xf32>
    %c0_14 = arith.constant 0 : index
    %c0_15 = arith.constant 0 : index
    %c0_16 = arith.constant 0 : index
    %22 = vector.load %arg6[%c0_14, %c0_15, %c0_16] : memref<1x1x1024xf32, #tpu.memory_space<vmem>>, vector<1x1x1024xf32>
    %23 = vector.shape_cast %22 : vector<1x1x1024xf32> to vector<1x1024xf32>
    %24 = vector.shape_cast %21 : vector<1x1024xf32> to vector<1x1x1024xf32>
    tpu.vector_store %arg6[%c0_14, %c0_15, %c0_16], %24 {strides = array<i32>} : memref<1x1x1024xf32, #tpu.memory_space<vmem>>, vector<1x1x1024xf32>,
    %c0_17 = arith.constant 0 : index
    %c0_18 = arith.constant 0 : index
    %c0_19 = arith.constant 0 : index
    %25 = vector.load %arg7[%c0_17, %c0_18, %c0_19] : memref<1x1x1024xf32, #tpu.memory_space<vmem>>, vector<1x1x1024xf32>
    %26 = vector.shape_cast %25 : vector<1x1x1024xf32> to vector<1x1024xf32>
    %27 = arith.mulf %13, %13 : vector<16x1024xf32>
    %cst_20 = arith.constant dense<0.000000e+00> : vector<1024xf32>
    %28 = vector.multi_reduction <add>, %27, %cst_20 [0] : vector<16x1024xf32> to vector<1024xf32>
    %29 = vector.shape_cast %28 : vector<1024xf32> to vector<1x1024xf32>
    %30 = arith.addf %26, %29 : vector<1x1024xf32>
    %c0_21 = arith.constant 0 : index
    %c0_22 = arith.constant 0 : index
    %c0_23 = arith.constant 0 : index
    %31 = vector.load %arg7[%c0_21, %c0_22, %c0_23] : memref<1x1x1024xf32, #tpu.memory_space<vmem>>, vector<1x1x1024xf32>
    %32 = vector.shape_cast %31 : vector<1x1x1024xf32> to vector<1x1024xf32>
    %33 = vector.shape_cast %30 : vector<1x1024xf32> to vector<1x1x1024xf32>
    tpu.vector_store %arg7[%c0_21, %c0_22, %c0_23], %33 {strides = array<i32>} : memref<1x1x1024xf32, #tpu.memory_space<vmem>>, vector<1x1x1024xf32>,
    %c0_24 = arith.constant 0 : index
    %c0_25 = arith.constant 0 : index
    %c0_26 = arith.constant 0 : index
    %34 = vector.load %arg8[%c0_24, %c0_25, %c0_26] : memref<1x1x1024xf32, #tpu.memory_space<vmem>>, vector<1x1x1024xf32>
    %35 = vector.shape_cast %34 : vector<1x1x1024xf32> to vector<1x1024xf32>
    %cst_27 = arith.constant dense<0xFF800000> : vector<1024xf32>
    %36 = vector.multi_reduction <maximumf>, %13, %cst_27 [0] : vector<16x1024xf32> to vector<1024xf32>
    %37 = vector.shape_cast %36 : vector<1024xf32> to vector<1x1024xf32>
    %38 = arith.maximumf %35, %37 : vector<1x1024xf32>
    %c0_28 = arith.constant 0 : index
    %c0_29 = arith.constant 0 : index
    %c0_30 = arith.constant 0 : index
    %39 = vector.load %arg8[%c0_28, %c0_29, %c0_30] : memref<1x1x1024xf32, #tpu.memory_space<vmem>>, vector<1x1x1024xf32>
    %40 = vector.shape_cast %39 : vector<1x1x1024xf32> to vector<1x1024xf32>
    %41 = vector.shape_cast %38 : vector<1x1024xf32> to vector<1x1x1024xf32>
    tpu.vector_store %arg8[%c0_28, %c0_29, %c0_30], %41 {strides = array<i32>} : memref<1x1x1024xf32, #tpu.memory_space<vmem>>, vector<1x1x1024xf32>,
    %c0_31 = arith.constant 0 : index
    %c0_32 = arith.constant 0 : index
    %c0_33 = arith.constant 0 : index
    %42 = vector.load %arg9[%c0_31, %c0_32, %c0_33] : memref<1x1x1024xf32, #tpu.memory_space<vmem>>, vector<1x1x1024xf32>
    %43 = vector.shape_cast %42 : vector<1x1x1024xf32> to vector<1x1024xf32>
    %cst_34 = arith.constant dense<0x7F800000> : vector<1024xf32>
    %44 = vector.multi_reduction <minimumf>, %13, %cst_34 [0] : vector<16x1024xf32> to vector<1024xf32>
    %45 = vector.shape_cast %44 : vector<1024xf32> to vector<1x1024xf32>
    %46 = arith.minimumf %43, %45 : vector<1x1024xf32>
    %c0_35 = arith.constant 0 : index
    %c0_36 = arith.constant 0 : index
    %c0_37 = arith.constant 0 : index
    %47 = vector.load %arg9[%c0_35, %c0_36, %c0_37] : memref<1x1x1024xf32, #tpu.memory_space<vmem>>, vector<1x1x1024xf32>
    %48 = vector.shape_cast %47 : vector<1x1x1024xf32> to vector<1x1024xf32>
    %49 = vector.shape_cast %46 : vector<1x1024xf32> to vector<1x1x1024xf32>
    tpu.vector_store %arg9[%c0_35, %c0_36, %c0_37], %49 {strides = array<i32>} : memref<1x1x1024xf32, #tpu.memory_space<vmem>>, vector<1x1x1024xf32>,
    return
  }
  func.func @transform_0(%arg0: i32, %arg1: i32) -> (i32, i32, i32) {
    %c0_i32 = arith.constant 0 : i32
    %c0_i32_0 = arith.constant 0 : i32
    return %arg0, %arg1, %c0_i32 : i32, i32, i32
  }
  func.func @transform_1(%arg0: i32, %arg1: i32) -> (i32, i32) {
    %c0_i32 = arith.constant 0 : i32
    %c0_i32_0 = arith.constant 0 : i32
    %c0_i32_1 = arith.constant 0 : i32
    return %c0_i32, %c0_i32_0 : i32, i32
  }
  func.func @transform_2(%arg0: i32, %arg1: i32) -> (i32, i32) {
    %c0_i32 = arith.constant 0 : i32
    %c0_i32_0 = arith.constant 0 : i32
    %c0_i32_1 = arith.constant 0 : i32
    return %c0_i32, %c0_i32_0 : i32, i32
  }
  func.func @transform_3(%arg0: i32, %arg1: i32) -> (i32, i32) {
    %c0_i32 = arith.constant 0 : i32
    %c0_i32_0 = arith.constant 0 : i32
    %c0_i32_1 = arith.constant 0 : i32
    return %c0_i32, %c0_i32_0 : i32, i32
  }
  func.func @transform_4(%arg0: i32, %arg1: i32) -> (i32, i32, i32) {
    %c0_i32 = arith.constant 0 : i32
    %c0_i32_0 = arith.constant 0 : i32
    %c0_i32_1 = arith.constant 0 : i32
    return %arg0, %c0_i32, %c0_i32_0 : i32, i32, i32
  }
  func.func @transform_5(%arg0: i32, %arg1: i32) -> (i32, i32, i32) {
    %c0_i32 = arith.constant 0 : i32
    %c0_i32_0 = arith.constant 0 : i32
    %c0_i32_1 = arith.constant 0 : i32
    return %arg0, %c0_i32, %c0_i32_0 : i32, i32, i32
  }
  func.func @transform_6(%arg0: i32, %arg1: i32) -> (i32, i32, i32) {
    %c0_i32 = arith.constant 0 : i32
    %c0_i32_0 = arith.constant 0 : i32
    %c0_i32_1 = arith.constant 0 : i32
    return %arg0, %c0_i32, %c0_i32_0 : i32, i32, i32
  }
  func.func @transform_7(%arg0: i32, %arg1: i32) -> (i32, i32, i32) {
    %c0_i32 = arith.constant 0 : i32
    %c0_i32_0 = arith.constant 0 : i32
    %c0_i32_1 = arith.constant 0 : i32
    return %arg0, %c0_i32, %c0_i32_0 : i32, i32, i32
  }
}

module attributes {stable_mosaic.version = 11 : i64} {
  func.func @_stn_head_kernel(%arg0: memref<2x1024xf32, #tpu.memory_space<vmem>>, %arg1: memref<1024x512xf32, #tpu.memory_space<vmem>>, %arg2: memref<1x512xf32, #tpu.memory_space<vmem>>, %arg3: memref<1x512xf32, #tpu.memory_space<vmem>>, %arg4: memref<512x256xf32, #tpu.memory_space<vmem>>, %arg5: memref<1x256xf32, #tpu.memory_space<vmem>>, %arg6: memref<1x256xf32, #tpu.memory_space<vmem>>, %arg7: memref<256x16xf32, #tpu.memory_space<vmem>>, %arg8: memref<1x16xf32, #tpu.memory_space<vmem>>, %arg9: memref<2x16xf32, #tpu.memory_space<vmem>>) attributes {dimension_semantics = [], scalar_prefetch = 0 : i64, scratch_operands = 0 : i64, tpu.core_type = #tpu.core_type<tc>} {
    %c0 = arith.constant 0 : index
    %c0_0 = arith.constant 0 : index
    %0 = vector.load %arg0[%c0, %c0_0] : memref<2x1024xf32, #tpu.memory_space<vmem>>, vector<2x1024xf32>
    %c0_1 = arith.constant 0 : index
    %c0_2 = arith.constant 0 : index
    %1 = vector.load %arg1[%c0_1, %c0_2] : memref<1024x512xf32, #tpu.memory_space<vmem>>, vector<1024x512xf32>
    %2 = arith.truncf %0 : vector<2x1024xf32> to vector<2x1024xbf16>
    %3 = arith.truncf %1 : vector<1024x512xf32> to vector<1024x512xbf16>
    %cst = arith.constant dense<0.000000e+00> : vector<2x512xf32>
    %4 = tpu.matmul %2, %3, %cst {dimension_numbers = #tpu.dot_dimension_numbers<[1], [0], [0], [1], [0, 0, 1, 1], [], []>} : vector<2x1024xbf16>, vector<1024x512xbf16>, vector<2x512xf32> -> vector<2x512xf32>
    %c0_3 = arith.constant 0 : index
    %c0_4 = arith.constant 0 : index
    %5 = vector.load %arg2[%c0_3, %c0_4] : memref<1x512xf32, #tpu.memory_space<vmem>>, vector<1x512xf32>
    %c0_5 = arith.constant 0 : index
    %c0_6 = arith.constant 0 : index
    %6 = vector.load %arg3[%c0_5, %c0_6] : memref<1x512xf32, #tpu.memory_space<vmem>>, vector<1x512xf32>
    %cst_7 = arith.constant dense<0.000000e+00> : vector<512xf32>
    %7 = vector.multi_reduction <add>, %4, %cst_7 [0] : vector<2x512xf32> to vector<512xf32>
    %8 = vector.shape_cast %7 : vector<512xf32> to vector<1x512xf32>
    %cst_8 = arith.constant 2.000000e+00 : f32
    %9 = vector.broadcast %cst_8 : f32 to vector<1x512xf32>
    %10 = arith.divf %8, %9 : vector<1x512xf32>
    %11 = vector.broadcast %10 : vector<1x512xf32> to vector<2x512xf32>
    %12 = arith.subf %4, %11 : vector<2x512xf32>
    %13 = arith.mulf %12, %12 : vector<2x512xf32>
    %cst_9 = arith.constant dense<0.000000e+00> : vector<512xf32>
    %14 = vector.multi_reduction <add>, %13, %cst_9 [0] : vector<2x512xf32> to vector<512xf32>
    %15 = vector.shape_cast %14 : vector<512xf32> to vector<1x512xf32>
    %cst_10 = arith.constant 2.000000e+00 : f32
    %16 = vector.broadcast %cst_10 : f32 to vector<1x512xf32>
    %17 = arith.divf %15, %16 : vector<1x512xf32>
    %18 = vector.broadcast %10 : vector<1x512xf32> to vector<2x512xf32>
    %19 = arith.subf %4, %18 : vector<2x512xf32>
    %cst_11 = arith.constant 9.99999974E-6 : f32
    %20 = vector.broadcast %cst_11 : f32 to vector<1x512xf32>
    %21 = arith.addf %17, %20 : vector<1x512xf32>
    %22 = math.rsqrt %21 : vector<1x512xf32>
    %23 = vector.broadcast %22 : vector<1x512xf32> to vector<2x512xf32>
    %24 = arith.mulf %19, %23 : vector<2x512xf32>
    %25 = vector.broadcast %5 : vector<1x512xf32> to vector<2x512xf32>
    %26 = arith.mulf %24, %25 : vector<2x512xf32>
    %27 = vector.broadcast %6 : vector<1x512xf32> to vector<2x512xf32>
    %28 = arith.addf %26, %27 : vector<2x512xf32>
    %cst_12 = arith.constant 0.000000e+00 : f32
    %29 = vector.broadcast %cst_12 : f32 to vector<2x512xf32>
    %30 = arith.maximumf %28, %29 : vector<2x512xf32>
    %c0_13 = arith.constant 0 : index
    %c0_14 = arith.constant 0 : index
    %31 = vector.load %arg4[%c0_13, %c0_14] : memref<512x256xf32, #tpu.memory_space<vmem>>, vector<512x256xf32>
    %32 = arith.truncf %30 : vector<2x512xf32> to vector<2x512xbf16>
    %33 = arith.truncf %31 : vector<512x256xf32> to vector<512x256xbf16>
    %cst_15 = arith.constant dense<0.000000e+00> : vector<2x256xf32>
    %34 = tpu.matmul %32, %33, %cst_15 {dimension_numbers = #tpu.dot_dimension_numbers<[1], [0], [0], [1], [0, 0, 1, 1], [], []>} : vector<2x512xbf16>, vector<512x256xbf16>, vector<2x256xf32> -> vector<2x256xf32>
    %c0_16 = arith.constant 0 : index
    %c0_17 = arith.constant 0 : index
    %35 = vector.load %arg5[%c0_16, %c0_17] : memref<1x256xf32, #tpu.memory_space<vmem>>, vector<1x256xf32>
    %c0_18 = arith.constant 0 : index
    %c0_19 = arith.constant 0 : index
    %36 = vector.load %arg6[%c0_18, %c0_19] : memref<1x256xf32, #tpu.memory_space<vmem>>, vector<1x256xf32>
    %cst_20 = arith.constant dense<0.000000e+00> : vector<256xf32>
    %37 = vector.multi_reduction <add>, %34, %cst_20 [0] : vector<2x256xf32> to vector<256xf32>
    %38 = vector.shape_cast %37 : vector<256xf32> to vector<1x256xf32>
    %cst_21 = arith.constant 2.000000e+00 : f32
    %39 = vector.broadcast %cst_21 : f32 to vector<1x256xf32>
    %40 = arith.divf %38, %39 : vector<1x256xf32>
    %41 = vector.broadcast %40 : vector<1x256xf32> to vector<2x256xf32>
    %42 = arith.subf %34, %41 : vector<2x256xf32>
    %43 = arith.mulf %42, %42 : vector<2x256xf32>
    %cst_22 = arith.constant dense<0.000000e+00> : vector<256xf32>
    %44 = vector.multi_reduction <add>, %43, %cst_22 [0] : vector<2x256xf32> to vector<256xf32>
    %45 = vector.shape_cast %44 : vector<256xf32> to vector<1x256xf32>
    %cst_23 = arith.constant 2.000000e+00 : f32
    %46 = vector.broadcast %cst_23 : f32 to vector<1x256xf32>
    %47 = arith.divf %45, %46 : vector<1x256xf32>
    %48 = vector.broadcast %40 : vector<1x256xf32> to vector<2x256xf32>
    %49 = arith.subf %34, %48 : vector<2x256xf32>
    %cst_24 = arith.constant 9.99999974E-6 : f32
    %50 = vector.broadcast %cst_24 : f32 to vector<1x256xf32>
    %51 = arith.addf %47, %50 : vector<1x256xf32>
    %52 = math.rsqrt %51 : vector<1x256xf32>
    %53 = vector.broadcast %52 : vector<1x256xf32> to vector<2x256xf32>
    %54 = arith.mulf %49, %53 : vector<2x256xf32>
    %55 = vector.broadcast %35 : vector<1x256xf32> to vector<2x256xf32>
    %56 = arith.mulf %54, %55 : vector<2x256xf32>
    %57 = vector.broadcast %36 : vector<1x256xf32> to vector<2x256xf32>
    %58 = arith.addf %56, %57 : vector<2x256xf32>
    %cst_25 = arith.constant 0.000000e+00 : f32
    %59 = vector.broadcast %cst_25 : f32 to vector<2x256xf32>
    %60 = arith.maximumf %58, %59 : vector<2x256xf32>
    %c0_26 = arith.constant 0 : index
    %c0_27 = arith.constant 0 : index
    %61 = vector.load %arg7[%c0_26, %c0_27] : memref<256x16xf32, #tpu.memory_space<vmem>>, vector<256x16xf32>
    %62 = arith.truncf %60 : vector<2x256xf32> to vector<2x256xbf16>
    %63 = arith.truncf %61 : vector<256x16xf32> to vector<256x16xbf16>
    %cst_28 = arith.constant dense<0.000000e+00> : vector<2x16xf32>
    %64 = tpu.matmul %62, %63, %cst_28 {dimension_numbers = #tpu.dot_dimension_numbers<[1], [0], [0], [1], [0, 0, 1, 1], [], []>} : vector<2x256xbf16>, vector<256x16xbf16>, vector<2x16xf32> -> vector<2x16xf32>
    %c0_29 = arith.constant 0 : index
    %c0_30 = arith.constant 0 : index
    %65 = vector.load %arg8[%c0_29, %c0_30] : memref<1x16xf32, #tpu.memory_space<vmem>>, vector<1x16xf32>
    %66 = vector.broadcast %65 : vector<1x16xf32> to vector<2x16xf32>
    %67 = arith.addf %64, %66 : vector<2x16xf32>
    %c0_31 = arith.constant 0 : index
    %c0_32 = arith.constant 0 : index
    %68 = vector.load %arg9[%c0_31, %c0_32] : memref<2x16xf32, #tpu.memory_space<vmem>>, vector<2x16xf32>
    tpu.vector_store %arg9[%c0_31, %c0_32], %67 {strides = array<i32>} : memref<2x16xf32, #tpu.memory_space<vmem>>, vector<2x16xf32>,
    return
  }
}

module attributes {stable_mosaic.version = 11 : i64} {
  func.func @_conv_bn_kernel(%arg0: i32, %arg1: i32, %arg2: memref<1x16x4xf32, #tpu.memory_space<vmem>>, %arg3: memref<1x4x64xf32, #tpu.memory_space<vmem>>, %arg4: memref<1x4xf32, #tpu.memory_space<vmem>>, %arg5: memref<1x4xf32, #tpu.memory_space<vmem>>, %arg6: memref<1x16x64xf32, #tpu.memory_space<vmem>>, %arg7: memref<1x1x64xf32, #tpu.memory_space<vmem>>, %arg8: memref<1x1x64xf32, #tpu.memory_space<vmem>>) attributes {dimension_semantics = [#tpu.dimension_semantics<parallel>, #tpu.dimension_semantics<arbitrary>], iteration_bounds = array<i64: 2, 1>, scalar_prefetch = 0 : i64, scratch_operands = 0 : i64, tpu.core_type = #tpu.core_type<tc>, window_params = [{transform_indices = @transform_0, window_bounds = array<i64: 1, 16, 4>}, {transform_indices = @transform_1, window_bounds = array<i64: 1, 4, 64>}, {pipeline_mode = #tpu.pipeline_mode<synchronous>, transform_indices = @transform_2, window_bounds = array<i64: 1, 4>}, {pipeline_mode = #tpu.pipeline_mode<synchronous>, transform_indices = @transform_3, window_bounds = array<i64: 1, 4>}, {transform_indices = @transform_4, window_bounds = array<i64: 1, 16, 64>}, {transform_indices = @transform_5, window_bounds = array<i64: 1, 1, 64>}, {transform_indices = @transform_6, window_bounds = array<i64: 1, 1, 64>}]} {
    %c0 = arith.constant 0 : index
    %c0_0 = arith.constant 0 : index
    %c0_1 = arith.constant 0 : index
    %0 = vector.load %arg2[%c0, %c0_0, %c0_1] : memref<1x16x4xf32, #tpu.memory_space<vmem>>, vector<1x16x4xf32>
    %1 = vector.shape_cast %0 : vector<1x16x4xf32> to vector<16x4xf32>
    %c0_2 = arith.constant 0 : index
    %c0_3 = arith.constant 0 : index
    %c0_4 = arith.constant 0 : index
    %2 = vector.load %arg3[%c0_2, %c0_3, %c0_4] : memref<1x4x64xf32, #tpu.memory_space<vmem>>, vector<1x4x64xf32>
    %3 = vector.shape_cast %2 : vector<1x4x64xf32> to vector<4x64xf32>
    %4 = arith.truncf %1 : vector<16x4xf32> to vector<16x4xbf16>
    %5 = arith.truncf %3 : vector<4x64xf32> to vector<4x64xbf16>
    %cst = arith.constant dense<0.000000e+00> : vector<16x64xf32>
    %6 = tpu.matmul %4, %5, %cst {dimension_numbers = #tpu.dot_dimension_numbers<[1], [0], [0], [1], [0, 0, 1, 1], [], []>} : vector<16x4xbf16>, vector<4x64xbf16>, vector<16x64xf32> -> vector<16x64xf32>
    %c0_5 = arith.constant 0 : index
    %c0_6 = arith.constant 0 : index
    %c0_7 = arith.constant 0 : index
    %7 = vector.load %arg6[%c0_5, %c0_6, %c0_7] : memref<1x16x64xf32, #tpu.memory_space<vmem>>, vector<1x16x64xf32>
    %8 = vector.shape_cast %7 : vector<1x16x64xf32> to vector<16x64xf32>
    %9 = vector.shape_cast %6 : vector<16x64xf32> to vector<1x16x64xf32>
    tpu.vector_store %arg6[%c0_5, %c0_6, %c0_7], %9 {strides = array<i32>} : memref<1x16x64xf32, #tpu.memory_space<vmem>>, vector<1x16x64xf32>,
    %c0_i32 = arith.constant 0 : i32
    %10 = arith.cmpi eq, %arg1, %c0_i32 : i32
    %11 = arith.extui %10 : i1 to i32
    %c0_i32_8 = arith.constant 0 : i32
    %12 = arith.cmpi ne, %11, %c0_i32_8 : i32
    scf.if %12 {
      %cst_23 = arith.constant 0.000000e+00 : f32
      %30 = vector.broadcast %cst_23 : f32 to vector<1x1x64xf32>
      %c0_24 = arith.constant 0 : index
      %c0_25 = arith.constant 0 : index
      %c0_26 = arith.constant 0 : index
      %31 = vector.load %arg7[%c0_24, %c0_25, %c0_26] : memref<1x1x64xf32, #tpu.memory_space<vmem>>, vector<1x1x64xf32>
      tpu.vector_store %arg7[%c0_24, %c0_25, %c0_26], %30 {strides = array<i32>} : memref<1x1x64xf32, #tpu.memory_space<vmem>>, vector<1x1x64xf32>,
      %cst_27 = arith.constant 0.000000e+00 : f32
      %32 = vector.broadcast %cst_27 : f32 to vector<1x1x64xf32>
      %c0_28 = arith.constant 0 : index
      %c0_29 = arith.constant 0 : index
      %c0_30 = arith.constant 0 : index
      %33 = vector.load %arg8[%c0_28, %c0_29, %c0_30] : memref<1x1x64xf32, #tpu.memory_space<vmem>>, vector<1x1x64xf32>
      tpu.vector_store %arg8[%c0_28, %c0_29, %c0_30], %32 {strides = array<i32>} : memref<1x1x64xf32, #tpu.memory_space<vmem>>, vector<1x1x64xf32>,
    } else {
    }
    %c0_9 = arith.constant 0 : index
    %c0_10 = arith.constant 0 : index
    %c0_11 = arith.constant 0 : index
    %13 = vector.load %arg7[%c0_9, %c0_10, %c0_11] : memref<1x1x64xf32, #tpu.memory_space<vmem>>, vector<1x1x64xf32>
    %14 = vector.shape_cast %13 : vector<1x1x64xf32> to vector<1x64xf32>
    %cst_12 = arith.constant dense<0.000000e+00> : vector<64xf32>
    %15 = vector.multi_reduction <add>, %6, %cst_12 [0] : vector<16x64xf32> to vector<64xf32>
    %16 = vector.shape_cast %15 : vector<64xf32> to vector<1x64xf32>
    %17 = arith.addf %14, %16 : vector<1x64xf32>
    %c0_13 = arith.constant 0 : index
    %c0_14 = arith.constant 0 : index
    %c0_15 = arith.constant 0 : index
    %18 = vector.load %arg7[%c0_13, %c0_14, %c0_15] : memref<1x1x64xf32, #tpu.memory_space<vmem>>, vector<1x1x64xf32>
    %19 = vector.shape_cast %18 : vector<1x1x64xf32> to vector<1x64xf32>
    %20 = vector.shape_cast %17 : vector<1x64xf32> to vector<1x1x64xf32>
    tpu.vector_store %arg7[%c0_13, %c0_14, %c0_15], %20 {strides = array<i32>} : memref<1x1x64xf32, #tpu.memory_space<vmem>>, vector<1x1x64xf32>,
    %c0_16 = arith.constant 0 : index
    %c0_17 = arith.constant 0 : index
    %c0_18 = arith.constant 0 : index
    %21 = vector.load %arg8[%c0_16, %c0_17, %c0_18] : memref<1x1x64xf32, #tpu.memory_space<vmem>>, vector<1x1x64xf32>
    %22 = vector.shape_cast %21 : vector<1x1x64xf32> to vector<1x64xf32>
    %23 = arith.mulf %6, %6 : vector<16x64xf32>
    %cst_19 = arith.constant dense<0.000000e+00> : vector<64xf32>
    %24 = vector.multi_reduction <add>, %23, %cst_19 [0] : vector<16x64xf32> to vector<64xf32>
    %25 = vector.shape_cast %24 : vector<64xf32> to vector<1x64xf32>
    %26 = arith.addf %22, %25 : vector<1x64xf32>
    %c0_20 = arith.constant 0 : index
    %c0_21 = arith.constant 0 : index
    %c0_22 = arith.constant 0 : index
    %27 = vector.load %arg8[%c0_20, %c0_21, %c0_22] : memref<1x1x64xf32, #tpu.memory_space<vmem>>, vector<1x1x64xf32>
    %28 = vector.shape_cast %27 : vector<1x1x64xf32> to vector<1x64xf32>
    %29 = vector.shape_cast %26 : vector<1x64xf32> to vector<1x1x64xf32>
    tpu.vector_store %arg8[%c0_20, %c0_21, %c0_22], %29 {strides = array<i32>} : memref<1x1x64xf32, #tpu.memory_space<vmem>>, vector<1x1x64xf32>,
    return
  }
  func.func @transform_0(%arg0: i32, %arg1: i32) -> (i32, i32, i32) {
    %c0_i32 = arith.constant 0 : i32
    %c0_i32_0 = arith.constant 0 : i32
    return %arg0, %arg1, %c0_i32 : i32, i32, i32
  }
  func.func @transform_1(%arg0: i32, %arg1: i32) -> (i32, i32, i32) {
    %c0_i32 = arith.constant 0 : i32
    %c0_i32_0 = arith.constant 0 : i32
    %c0_i32_1 = arith.constant 0 : i32
    return %arg0, %c0_i32, %c0_i32_0 : i32, i32, i32
  }
  func.func @transform_2(%arg0: i32, %arg1: i32) -> (i32, i32) {
    %c0_i32 = arith.constant 0 : i32
    %c0_i32_0 = arith.constant 0 : i32
    %c0_i32_1 = arith.constant 0 : i32
    return %c0_i32, %c0_i32_0 : i32, i32
  }
  func.func @transform_3(%arg0: i32, %arg1: i32) -> (i32, i32) {
    %c0_i32 = arith.constant 0 : i32
    %c0_i32_0 = arith.constant 0 : i32
    %c0_i32_1 = arith.constant 0 : i32
    return %c0_i32, %c0_i32_0 : i32, i32
  }
  func.func @transform_4(%arg0: i32, %arg1: i32) -> (i32, i32, i32) {
    %c0_i32 = arith.constant 0 : i32
    %c0_i32_0 = arith.constant 0 : i32
    return %arg0, %arg1, %c0_i32 : i32, i32, i32
  }
  func.func @transform_5(%arg0: i32, %arg1: i32) -> (i32, i32, i32) {
    %c0_i32 = arith.constant 0 : i32
    %c0_i32_0 = arith.constant 0 : i32
    %c0_i32_1 = arith.constant 0 : i32
    return %arg0, %c0_i32, %c0_i32_0 : i32, i32, i32
  }
  func.func @transform_6(%arg0: i32, %arg1: i32) -> (i32, i32, i32) {
    %c0_i32 = arith.constant 0 : i32
    %c0_i32_0 = arith.constant 0 : i32
    %c0_i32_1 = arith.constant 0 : i32
    return %arg0, %c0_i32, %c0_i32_0 : i32, i32, i32
  }
}

module attributes {stable_mosaic.version = 11 : i64} {
  func.func @_conv_bn_kernel(%arg0: i32, %arg1: i32, %arg2: memref<1x16x64xf32, #tpu.memory_space<vmem>>, %arg3: memref<64x128xf32, #tpu.memory_space<vmem>>, %arg4: memref<1x64xf32, #tpu.memory_space<vmem>>, %arg5: memref<1x64xf32, #tpu.memory_space<vmem>>, %arg6: memref<1x16x128xf32, #tpu.memory_space<vmem>>, %arg7: memref<1x1x128xf32, #tpu.memory_space<vmem>>, %arg8: memref<1x1x128xf32, #tpu.memory_space<vmem>>) attributes {dimension_semantics = [#tpu.dimension_semantics<parallel>, #tpu.dimension_semantics<arbitrary>], iteration_bounds = array<i64: 2, 1>, scalar_prefetch = 0 : i64, scratch_operands = 0 : i64, tpu.core_type = #tpu.core_type<tc>, window_params = [{transform_indices = @transform_0, window_bounds = array<i64: 1, 16, 64>}, {pipeline_mode = #tpu.pipeline_mode<synchronous>, transform_indices = @transform_1, window_bounds = array<i64: 64, 128>}, {pipeline_mode = #tpu.pipeline_mode<synchronous>, transform_indices = @transform_2, window_bounds = array<i64: 1, 64>}, {pipeline_mode = #tpu.pipeline_mode<synchronous>, transform_indices = @transform_3, window_bounds = array<i64: 1, 64>}, {transform_indices = @transform_4, window_bounds = array<i64: 1, 16, 128>}, {transform_indices = @transform_5, window_bounds = array<i64: 1, 1, 128>}, {transform_indices = @transform_6, window_bounds = array<i64: 1, 1, 128>}]} {
    %c0 = arith.constant 0 : index
    %c0_0 = arith.constant 0 : index
    %c0_1 = arith.constant 0 : index
    %0 = vector.load %arg2[%c0, %c0_0, %c0_1] : memref<1x16x64xf32, #tpu.memory_space<vmem>>, vector<1x16x64xf32>
    %1 = vector.shape_cast %0 : vector<1x16x64xf32> to vector<16x64xf32>
    %c0_2 = arith.constant 0 : index
    %c0_3 = arith.constant 0 : index
    %2 = vector.load %arg4[%c0_2, %c0_3] : memref<1x64xf32, #tpu.memory_space<vmem>>, vector<1x64xf32>
    %3 = vector.broadcast %2 : vector<1x64xf32> to vector<16x64xf32>
    %4 = arith.mulf %1, %3 : vector<16x64xf32>
    %c0_4 = arith.constant 0 : index
    %c0_5 = arith.constant 0 : index
    %5 = vector.load %arg5[%c0_4, %c0_5] : memref<1x64xf32, #tpu.memory_space<vmem>>, vector<1x64xf32>
    %6 = vector.broadcast %5 : vector<1x64xf32> to vector<16x64xf32>
    %7 = arith.addf %4, %6 : vector<16x64xf32>
    %cst = arith.constant 0.000000e+00 : f32
    %8 = vector.broadcast %cst : f32 to vector<16x64xf32>
    %9 = arith.maximumf %7, %8 : vector<16x64xf32>
    %c0_6 = arith.constant 0 : index
    %c0_7 = arith.constant 0 : index
    %10 = vector.load %arg3[%c0_6, %c0_7] : memref<64x128xf32, #tpu.memory_space<vmem>>, vector<64x128xf32>
    %11 = arith.truncf %9 : vector<16x64xf32> to vector<16x64xbf16>
    %12 = arith.truncf %10 : vector<64x128xf32> to vector<64x128xbf16>
    %cst_8 = arith.constant dense<0.000000e+00> : vector<16x128xf32>
    %13 = tpu.matmul %11, %12, %cst_8 {dimension_numbers = #tpu.dot_dimension_numbers<[1], [0], [0], [1], [0, 0, 1, 1], [], []>} : vector<16x64xbf16>, vector<64x128xbf16>, vector<16x128xf32> -> vector<16x128xf32>
    %c0_9 = arith.constant 0 : index
    %c0_10 = arith.constant 0 : index
    %c0_11 = arith.constant 0 : index
    %14 = vector.load %arg6[%c0_9, %c0_10, %c0_11] : memref<1x16x128xf32, #tpu.memory_space<vmem>>, vector<1x16x128xf32>
    %15 = vector.shape_cast %14 : vector<1x16x128xf32> to vector<16x128xf32>
    %16 = vector.shape_cast %13 : vector<16x128xf32> to vector<1x16x128xf32>
    tpu.vector_store %arg6[%c0_9, %c0_10, %c0_11], %16 {strides = array<i32>} : memref<1x16x128xf32, #tpu.memory_space<vmem>>, vector<1x16x128xf32>,
    %c0_i32 = arith.constant 0 : i32
    %17 = arith.cmpi eq, %arg1, %c0_i32 : i32
    %18 = arith.extui %17 : i1 to i32
    %c0_i32_12 = arith.constant 0 : i32
    %19 = arith.cmpi ne, %18, %c0_i32_12 : i32
    scf.if %19 {
      %cst_27 = arith.constant 0.000000e+00 : f32
      %37 = vector.broadcast %cst_27 : f32 to vector<1x1x128xf32>
      %c0_28 = arith.constant 0 : index
      %c0_29 = arith.constant 0 : index
      %c0_30 = arith.constant 0 : index
      %38 = vector.load %arg7[%c0_28, %c0_29, %c0_30] : memref<1x1x128xf32, #tpu.memory_space<vmem>>, vector<1x1x128xf32>
      tpu.vector_store %arg7[%c0_28, %c0_29, %c0_30], %37 {strides = array<i32>} : memref<1x1x128xf32, #tpu.memory_space<vmem>>, vector<1x1x128xf32>,
      %cst_31 = arith.constant 0.000000e+00 : f32
      %39 = vector.broadcast %cst_31 : f32 to vector<1x1x128xf32>
      %c0_32 = arith.constant 0 : index
      %c0_33 = arith.constant 0 : index
      %c0_34 = arith.constant 0 : index
      %40 = vector.load %arg8[%c0_32, %c0_33, %c0_34] : memref<1x1x128xf32, #tpu.memory_space<vmem>>, vector<1x1x128xf32>
      tpu.vector_store %arg8[%c0_32, %c0_33, %c0_34], %39 {strides = array<i32>} : memref<1x1x128xf32, #tpu.memory_space<vmem>>, vector<1x1x128xf32>,
    } else {
    }
    %c0_13 = arith.constant 0 : index
    %c0_14 = arith.constant 0 : index
    %c0_15 = arith.constant 0 : index
    %20 = vector.load %arg7[%c0_13, %c0_14, %c0_15] : memref<1x1x128xf32, #tpu.memory_space<vmem>>, vector<1x1x128xf32>
    %21 = vector.shape_cast %20 : vector<1x1x128xf32> to vector<1x128xf32>
    %cst_16 = arith.constant dense<0.000000e+00> : vector<128xf32>
    %22 = vector.multi_reduction <add>, %13, %cst_16 [0] : vector<16x128xf32> to vector<128xf32>
    %23 = vector.shape_cast %22 : vector<128xf32> to vector<1x128xf32>
    %24 = arith.addf %21, %23 : vector<1x128xf32>
    %c0_17 = arith.constant 0 : index
    %c0_18 = arith.constant 0 : index
    %c0_19 = arith.constant 0 : index
    %25 = vector.load %arg7[%c0_17, %c0_18, %c0_19] : memref<1x1x128xf32, #tpu.memory_space<vmem>>, vector<1x1x128xf32>
    %26 = vector.shape_cast %25 : vector<1x1x128xf32> to vector<1x128xf32>
    %27 = vector.shape_cast %24 : vector<1x128xf32> to vector<1x1x128xf32>
    tpu.vector_store %arg7[%c0_17, %c0_18, %c0_19], %27 {strides = array<i32>} : memref<1x1x128xf32, #tpu.memory_space<vmem>>, vector<1x1x128xf32>,
    %c0_20 = arith.constant 0 : index
    %c0_21 = arith.constant 0 : index
    %c0_22 = arith.constant 0 : index
    %28 = vector.load %arg8[%c0_20, %c0_21, %c0_22] : memref<1x1x128xf32, #tpu.memory_space<vmem>>, vector<1x1x128xf32>
    %29 = vector.shape_cast %28 : vector<1x1x128xf32> to vector<1x128xf32>
    %30 = arith.mulf %13, %13 : vector<16x128xf32>
    %cst_23 = arith.constant dense<0.000000e+00> : vector<128xf32>
    %31 = vector.multi_reduction <add>, %30, %cst_23 [0] : vector<16x128xf32> to vector<128xf32>
    %32 = vector.shape_cast %31 : vector<128xf32> to vector<1x128xf32>
    %33 = arith.addf %29, %32 : vector<1x128xf32>
    %c0_24 = arith.constant 0 : index
    %c0_25 = arith.constant 0 : index
    %c0_26 = arith.constant 0 : index
    %34 = vector.load %arg8[%c0_24, %c0_25, %c0_26] : memref<1x1x128xf32, #tpu.memory_space<vmem>>, vector<1x1x128xf32>
    %35 = vector.shape_cast %34 : vector<1x1x128xf32> to vector<1x128xf32>
    %36 = vector.shape_cast %33 : vector<1x128xf32> to vector<1x1x128xf32>
    tpu.vector_store %arg8[%c0_24, %c0_25, %c0_26], %36 {strides = array<i32>} : memref<1x1x128xf32, #tpu.memory_space<vmem>>, vector<1x1x128xf32>,
    return
  }
  func.func @transform_0(%arg0: i32, %arg1: i32) -> (i32, i32, i32) {
    %c0_i32 = arith.constant 0 : i32
    %c0_i32_0 = arith.constant 0 : i32
    return %arg0, %arg1, %c0_i32 : i32, i32, i32
  }
  func.func @transform_1(%arg0: i32, %arg1: i32) -> (i32, i32) {
    %c0_i32 = arith.constant 0 : i32
    %c0_i32_0 = arith.constant 0 : i32
    %c0_i32_1 = arith.constant 0 : i32
    return %c0_i32, %c0_i32_0 : i32, i32
  }
  func.func @transform_2(%arg0: i32, %arg1: i32) -> (i32, i32) {
    %c0_i32 = arith.constant 0 : i32
    %c0_i32_0 = arith.constant 0 : i32
    %c0_i32_1 = arith.constant 0 : i32
    return %c0_i32, %c0_i32_0 : i32, i32
  }
  func.func @transform_3(%arg0: i32, %arg1: i32) -> (i32, i32) {
    %c0_i32 = arith.constant 0 : i32
    %c0_i32_0 = arith.constant 0 : i32
    %c0_i32_1 = arith.constant 0 : i32
    return %c0_i32, %c0_i32_0 : i32, i32
  }
  func.func @transform_4(%arg0: i32, %arg1: i32) -> (i32, i32, i32) {
    %c0_i32 = arith.constant 0 : i32
    %c0_i32_0 = arith.constant 0 : i32
    return %arg0, %arg1, %c0_i32 : i32, i32, i32
  }
  func.func @transform_5(%arg0: i32, %arg1: i32) -> (i32, i32, i32) {
    %c0_i32 = arith.constant 0 : i32
    %c0_i32_0 = arith.constant 0 : i32
    %c0_i32_1 = arith.constant 0 : i32
    return %arg0, %c0_i32, %c0_i32_0 : i32, i32, i32
  }
  func.func @transform_6(%arg0: i32, %arg1: i32) -> (i32, i32, i32) {
    %c0_i32 = arith.constant 0 : i32
    %c0_i32_0 = arith.constant 0 : i32
    %c0_i32_1 = arith.constant 0 : i32
    return %arg0, %c0_i32, %c0_i32_0 : i32, i32, i32
  }
}

module attributes {stable_mosaic.version = 11 : i64} {
  func.func @_conv_bn_kernel(%arg0: i32, %arg1: i32, %arg2: memref<1x16x128xf32, #tpu.memory_space<vmem>>, %arg3: memref<128x1024xf32, #tpu.memory_space<vmem>>, %arg4: memref<1x128xf32, #tpu.memory_space<vmem>>, %arg5: memref<1x128xf32, #tpu.memory_space<vmem>>, %arg6: memref<1x1x1024xf32, #tpu.memory_space<vmem>>, %arg7: memref<1x1x1024xf32, #tpu.memory_space<vmem>>, %arg8: memref<1x1x1024xf32, #tpu.memory_space<vmem>>, %arg9: memref<1x1x1024xf32, #tpu.memory_space<vmem>>) attributes {dimension_semantics = [#tpu.dimension_semantics<parallel>, #tpu.dimension_semantics<arbitrary>], iteration_bounds = array<i64: 2, 1>, scalar_prefetch = 0 : i64, scratch_operands = 0 : i64, tpu.core_type = #tpu.core_type<tc>, window_params = [{transform_indices = @transform_0, window_bounds = array<i64: 1, 16, 128>}, {pipeline_mode = #tpu.pipeline_mode<synchronous>, transform_indices = @transform_1, window_bounds = array<i64: 128, 1024>}, {pipeline_mode = #tpu.pipeline_mode<synchronous>, transform_indices = @transform_2, window_bounds = array<i64: 1, 128>}, {pipeline_mode = #tpu.pipeline_mode<synchronous>, transform_indices = @transform_3, window_bounds = array<i64: 1, 128>}, {transform_indices = @transform_4, window_bounds = array<i64: 1, 1, 1024>}, {transform_indices = @transform_5, window_bounds = array<i64: 1, 1, 1024>}, {transform_indices = @transform_6, window_bounds = array<i64: 1, 1, 1024>}, {transform_indices = @transform_7, window_bounds = array<i64: 1, 1, 1024>}]} {
    %c0 = arith.constant 0 : index
    %c0_0 = arith.constant 0 : index
    %c0_1 = arith.constant 0 : index
    %0 = vector.load %arg2[%c0, %c0_0, %c0_1] : memref<1x16x128xf32, #tpu.memory_space<vmem>>, vector<1x16x128xf32>
    %1 = vector.shape_cast %0 : vector<1x16x128xf32> to vector<16x128xf32>
    %c0_2 = arith.constant 0 : index
    %c0_3 = arith.constant 0 : index
    %2 = vector.load %arg4[%c0_2, %c0_3] : memref<1x128xf32, #tpu.memory_space<vmem>>, vector<1x128xf32>
    %3 = vector.broadcast %2 : vector<1x128xf32> to vector<16x128xf32>
    %4 = arith.mulf %1, %3 : vector<16x128xf32>
    %c0_4 = arith.constant 0 : index
    %c0_5 = arith.constant 0 : index
    %5 = vector.load %arg5[%c0_4, %c0_5] : memref<1x128xf32, #tpu.memory_space<vmem>>, vector<1x128xf32>
    %6 = vector.broadcast %5 : vector<1x128xf32> to vector<16x128xf32>
    %7 = arith.addf %4, %6 : vector<16x128xf32>
    %cst = arith.constant 0.000000e+00 : f32
    %8 = vector.broadcast %cst : f32 to vector<16x128xf32>
    %9 = arith.maximumf %7, %8 : vector<16x128xf32>
    %c0_6 = arith.constant 0 : index
    %c0_7 = arith.constant 0 : index
    %10 = vector.load %arg3[%c0_6, %c0_7] : memref<128x1024xf32, #tpu.memory_space<vmem>>, vector<128x1024xf32>
    %11 = arith.truncf %9 : vector<16x128xf32> to vector<16x128xbf16>
    %12 = arith.truncf %10 : vector<128x1024xf32> to vector<128x1024xbf16>
    %cst_8 = arith.constant dense<0.000000e+00> : vector<16x1024xf32>
    %13 = tpu.matmul %11, %12, %cst_8 {dimension_numbers = #tpu.dot_dimension_numbers<[1], [0], [0], [1], [0, 0, 1, 1], [], []>} : vector<16x128xbf16>, vector<128x1024xbf16>, vector<16x1024xf32> -> vector<16x1024xf32>
    %c0_i32 = arith.constant 0 : i32
    %14 = arith.cmpi eq, %arg1, %c0_i32 : i32
    %15 = arith.extui %14 : i1 to i32
    %c0_i32_9 = arith.constant 0 : i32
    %16 = arith.cmpi ne, %15, %c0_i32_9 : i32
    scf.if %16 {
      %cst_38 = arith.constant 0.000000e+00 : f32
      %50 = vector.broadcast %cst_38 : f32 to vector<1x1x1024xf32>
      %c0_39 = arith.constant 0 : index
      %c0_40 = arith.constant 0 : index
      %c0_41 = arith.constant 0 : index
      %51 = vector.load %arg6[%c0_39, %c0_40, %c0_41] : memref<1x1x1024xf32, #tpu.memory_space<vmem>>, vector<1x1x1024xf32>
      tpu.vector_store %arg6[%c0_39, %c0_40, %c0_41], %50 {strides = array<i32>} : memref<1x1x1024xf32, #tpu.memory_space<vmem>>, vector<1x1x1024xf32>,
      %cst_42 = arith.constant 0.000000e+00 : f32
      %52 = vector.broadcast %cst_42 : f32 to vector<1x1x1024xf32>
      %c0_43 = arith.constant 0 : index
      %c0_44 = arith.constant 0 : index
      %c0_45 = arith.constant 0 : index
      %53 = vector.load %arg7[%c0_43, %c0_44, %c0_45] : memref<1x1x1024xf32, #tpu.memory_space<vmem>>, vector<1x1x1024xf32>
      tpu.vector_store %arg7[%c0_43, %c0_44, %c0_45], %52 {strides = array<i32>} : memref<1x1x1024xf32, #tpu.memory_space<vmem>>, vector<1x1x1024xf32>,
      %cst_46 = arith.constant 0xFF800000 : f32
      %54 = vector.broadcast %cst_46 : f32 to vector<1x1x1024xf32>
      %c0_47 = arith.constant 0 : index
      %c0_48 = arith.constant 0 : index
      %c0_49 = arith.constant 0 : index
      %55 = vector.load %arg8[%c0_47, %c0_48, %c0_49] : memref<1x1x1024xf32, #tpu.memory_space<vmem>>, vector<1x1x1024xf32>
      tpu.vector_store %arg8[%c0_47, %c0_48, %c0_49], %54 {strides = array<i32>} : memref<1x1x1024xf32, #tpu.memory_space<vmem>>, vector<1x1x1024xf32>,
      %cst_50 = arith.constant 0x7F800000 : f32
      %56 = vector.broadcast %cst_50 : f32 to vector<1x1x1024xf32>
      %c0_51 = arith.constant 0 : index
      %c0_52 = arith.constant 0 : index
      %c0_53 = arith.constant 0 : index
      %57 = vector.load %arg9[%c0_51, %c0_52, %c0_53] : memref<1x1x1024xf32, #tpu.memory_space<vmem>>, vector<1x1x1024xf32>
      tpu.vector_store %arg9[%c0_51, %c0_52, %c0_53], %56 {strides = array<i32>} : memref<1x1x1024xf32, #tpu.memory_space<vmem>>, vector<1x1x1024xf32>,
    } else {
    }
    %c0_10 = arith.constant 0 : index
    %c0_11 = arith.constant 0 : index
    %c0_12 = arith.constant 0 : index
    %17 = vector.load %arg6[%c0_10, %c0_11, %c0_12] : memref<1x1x1024xf32, #tpu.memory_space<vmem>>, vector<1x1x1024xf32>
    %18 = vector.shape_cast %17 : vector<1x1x1024xf32> to vector<1x1024xf32>
    %cst_13 = arith.constant dense<0.000000e+00> : vector<1024xf32>
    %19 = vector.multi_reduction <add>, %13, %cst_13 [0] : vector<16x1024xf32> to vector<1024xf32>
    %20 = vector.shape_cast %19 : vector<1024xf32> to vector<1x1024xf32>
    %21 = arith.addf %18, %20 : vector<1x1024xf32>
    %c0_14 = arith.constant 0 : index
    %c0_15 = arith.constant 0 : index
    %c0_16 = arith.constant 0 : index
    %22 = vector.load %arg6[%c0_14, %c0_15, %c0_16] : memref<1x1x1024xf32, #tpu.memory_space<vmem>>, vector<1x1x1024xf32>
    %23 = vector.shape_cast %22 : vector<1x1x1024xf32> to vector<1x1024xf32>
    %24 = vector.shape_cast %21 : vector<1x1024xf32> to vector<1x1x1024xf32>
    tpu.vector_store %arg6[%c0_14, %c0_15, %c0_16], %24 {strides = array<i32>} : memref<1x1x1024xf32, #tpu.memory_space<vmem>>, vector<1x1x1024xf32>,
    %c0_17 = arith.constant 0 : index
    %c0_18 = arith.constant 0 : index
    %c0_19 = arith.constant 0 : index
    %25 = vector.load %arg7[%c0_17, %c0_18, %c0_19] : memref<1x1x1024xf32, #tpu.memory_space<vmem>>, vector<1x1x1024xf32>
    %26 = vector.shape_cast %25 : vector<1x1x1024xf32> to vector<1x1024xf32>
    %27 = arith.mulf %13, %13 : vector<16x1024xf32>
    %cst_20 = arith.constant dense<0.000000e+00> : vector<1024xf32>
    %28 = vector.multi_reduction <add>, %27, %cst_20 [0] : vector<16x1024xf32> to vector<1024xf32>
    %29 = vector.shape_cast %28 : vector<1024xf32> to vector<1x1024xf32>
    %30 = arith.addf %26, %29 : vector<1x1024xf32>
    %c0_21 = arith.constant 0 : index
    %c0_22 = arith.constant 0 : index
    %c0_23 = arith.constant 0 : index
    %31 = vector.load %arg7[%c0_21, %c0_22, %c0_23] : memref<1x1x1024xf32, #tpu.memory_space<vmem>>, vector<1x1x1024xf32>
    %32 = vector.shape_cast %31 : vector<1x1x1024xf32> to vector<1x1024xf32>
    %33 = vector.shape_cast %30 : vector<1x1024xf32> to vector<1x1x1024xf32>
    tpu.vector_store %arg7[%c0_21, %c0_22, %c0_23], %33 {strides = array<i32>} : memref<1x1x1024xf32, #tpu.memory_space<vmem>>, vector<1x1x1024xf32>,
    %c0_24 = arith.constant 0 : index
    %c0_25 = arith.constant 0 : index
    %c0_26 = arith.constant 0 : index
    %34 = vector.load %arg8[%c0_24, %c0_25, %c0_26] : memref<1x1x1024xf32, #tpu.memory_space<vmem>>, vector<1x1x1024xf32>
    %35 = vector.shape_cast %34 : vector<1x1x1024xf32> to vector<1x1024xf32>
    %cst_27 = arith.constant dense<0xFF800000> : vector<1024xf32>
    %36 = vector.multi_reduction <maximumf>, %13, %cst_27 [0] : vector<16x1024xf32> to vector<1024xf32>
    %37 = vector.shape_cast %36 : vector<1024xf32> to vector<1x1024xf32>
    %38 = arith.maximumf %35, %37 : vector<1x1024xf32>
    %c0_28 = arith.constant 0 : index
    %c0_29 = arith.constant 0 : index
    %c0_30 = arith.constant 0 : index
    %39 = vector.load %arg8[%c0_28, %c0_29, %c0_30] : memref<1x1x1024xf32, #tpu.memory_space<vmem>>, vector<1x1x1024xf32>
    %40 = vector.shape_cast %39 : vector<1x1x1024xf32> to vector<1x1024xf32>
    %41 = vector.shape_cast %38 : vector<1x1024xf32> to vector<1x1x1024xf32>
    tpu.vector_store %arg8[%c0_28, %c0_29, %c0_30], %41 {strides = array<i32>} : memref<1x1x1024xf32, #tpu.memory_space<vmem>>, vector<1x1x1024xf32>,
    %c0_31 = arith.constant 0 : index
    %c0_32 = arith.constant 0 : index
    %c0_33 = arith.constant 0 : index
    %42 = vector.load %arg9[%c0_31, %c0_32, %c0_33] : memref<1x1x1024xf32, #tpu.memory_space<vmem>>, vector<1x1x1024xf32>
    %43 = vector.shape_cast %42 : vector<1x1x1024xf32> to vector<1x1024xf32>
    %cst_34 = arith.constant dense<0x7F800000> : vector<1024xf32>
    %44 = vector.multi_reduction <minimumf>, %13, %cst_34 [0] : vector<16x1024xf32> to vector<1024xf32>
    %45 = vector.shape_cast %44 : vector<1024xf32> to vector<1x1024xf32>
    %46 = arith.minimumf %43, %45 : vector<1x1024xf32>
    %c0_35 = arith.constant 0 : index
    %c0_36 = arith.constant 0 : index
    %c0_37 = arith.constant 0 : index
    %47 = vector.load %arg9[%c0_35, %c0_36, %c0_37] : memref<1x1x1024xf32, #tpu.memory_space<vmem>>, vector<1x1x1024xf32>
    %48 = vector.shape_cast %47 : vector<1x1x1024xf32> to vector<1x1024xf32>
    %49 = vector.shape_cast %46 : vector<1x1024xf32> to vector<1x1x1024xf32>
    tpu.vector_store %arg9[%c0_35, %c0_36, %c0_37], %49 {strides = array<i32>} : memref<1x1x1024xf32, #tpu.memory_space<vmem>>, vector<1x1x1024xf32>,
    return
  }
  func.func @transform_0(%arg0: i32, %arg1: i32) -> (i32, i32, i32) {
    %c0_i32 = arith.constant 0 : i32
    %c0_i32_0 = arith.constant 0 : i32
    return %arg0, %arg1, %c0_i32 : i32, i32, i32
  }
  func.func @transform_1(%arg0: i32, %arg1: i32) -> (i32, i32) {
    %c0_i32 = arith.constant 0 : i32
    %c0_i32_0 = arith.constant 0 : i32
    %c0_i32_1 = arith.constant 0 : i32
    return %c0_i32, %c0_i32_0 : i32, i32
  }
  func.func @transform_2(%arg0: i32, %arg1: i32) -> (i32, i32) {
    %c0_i32 = arith.constant 0 : i32
    %c0_i32_0 = arith.constant 0 : i32
    %c0_i32_1 = arith.constant 0 : i32
    return %c0_i32, %c0_i32_0 : i32, i32
  }
  func.func @transform_3(%arg0: i32, %arg1: i32) -> (i32, i32) {
    %c0_i32 = arith.constant 0 : i32
    %c0_i32_0 = arith.constant 0 : i32
    %c0_i32_1 = arith.constant 0 : i32
    return %c0_i32, %c0_i32_0 : i32, i32
  }
  func.func @transform_4(%arg0: i32, %arg1: i32) -> (i32, i32, i32) {
    %c0_i32 = arith.constant 0 : i32
    %c0_i32_0 = arith.constant 0 : i32
    %c0_i32_1 = arith.constant 0 : i32
    return %arg0, %c0_i32, %c0_i32_0 : i32, i32, i32
  }
  func.func @transform_5(%arg0: i32, %arg1: i32) -> (i32, i32, i32) {
    %c0_i32 = arith.constant 0 : i32
    %c0_i32_0 = arith.constant 0 : i32
    %c0_i32_1 = arith.constant 0 : i32
    return %arg0, %c0_i32, %c0_i32_0 : i32, i32, i32
  }
  func.func @transform_6(%arg0: i32, %arg1: i32) -> (i32, i32, i32) {
    %c0_i32 = arith.constant 0 : i32
    %c0_i32_0 = arith.constant 0 : i32
    %c0_i32_1 = arith.constant 0 : i32
    return %arg0, %c0_i32, %c0_i32_0 : i32, i32, i32
  }
  func.func @transform_7(%arg0: i32, %arg1: i32) -> (i32, i32, i32) {
    %c0_i32 = arith.constant 0 : i32
    %c0_i32_0 = arith.constant 0 : i32
    %c0_i32_1 = arith.constant 0 : i32
    return %arg0, %c0_i32, %c0_i32_0 : i32, i32, i32
  }
}

</mosaic_0001>

<llo_original>
// kernel: _lambda_.7
$region0: #{_lambda_.7}
  #allocation0 [shape = 'u32[]', space=smem, size = 0x4, offset = 0x4, fixed_abs, tag = 'smem constant byte address 0x4 - core index']
  #allocation1 [shape = 'u32[144,128]{1,0:T(1,128)}', space=vmem, size = 0x12000, scoped, tag = 'internal scratch']
  %s0 = inlined_call_operand.vmem [shape: f32[2,16,4], index: 0, kind: input, shape index: {}]
  %s1 = inlined_call_operand.hbm [shape: f32[4,64], index: 1, kind: input, shape index: {}]
  %s2 = inlined_call_operand.vmem [shape: f32[1,4], index: 2, kind: input, shape index: {}]
  %s3 = inlined_call_operand.vmem [shape: f32[1,4], index: 3, kind: input, shape index: {}]
  %s4 = inlined_call_operand.vmem [shape: f32[2,16,64], index: 4, kind: output, shape index: {0}]
  %s5 = inlined_call_operand.vmem [shape: f32[2,1,64], index: 5, kind: output, shape index: {1}]
  %s6 = inlined_call_operand.vmem [shape: f32[2,1,64], index: 6, kind: output, shape index: {2}]
  %7 = xla_tuple %s4, %s5, %s6
  %s8 = sld [smem:[#allocation0]]
  $region73: #{_lambda_.7} parent=0
    _
  %s10 = ssub.s32 1, %s8
  %s11 = scalar_select 0, %s10, %s8
  $region1: #{_lambda_.7} parent=0
    #allocation2 [shape = 'u8[2048]{0}', space=vmem, size = 0x800, scoped, tag = 'input window, operand 1, single buffered']
    #allocation3 [shape = 's32[2]{0}', space=sflag, size = 0x8, scoped, tag = 'scoped memory for _lambda_.7']
    %12 = vsyncpa [#allocation3], 0
    loop: start=0, step=1, limit=4
    $region2: #{_lambda_.7} parent=1 // loop_pre_header
      _
    $region3: #{_lambda_.7} parent=1 // loop_header
      %s14 = sphi 0, %s18
      %p15 = scmp.ge.s32.totalorder %s14, 4
      %s21 = sphi 0, %s33
      %s22 = sphi 0, %s29
      %s23 = sphi 0, %s21
      %s24 = sphi 0, %s22
      %s25 = sphi 0, %s23
      %s26 = sphi 0, %s24
      %s38 = sphi 0, %s40
      %s41 = sphi 0, %s38
      %s42 = sphi 0, %s41
      %s58 = sphi 0, %s42
      %s62 = sphi 0, %s62
      %s64 = sphi 0, %s62
      %s65 = sphi 0, %s64
      %s79 = sphi 0, %s65
      %s83 = sphi 0, %s83
      %s85 = sphi 0, %s83
      %s86 = sphi 0, %s85
      %s100 = sphi 0, %s86
      %s104 = sphi 0, %s104
      %s106 = sphi 0, %s104
      %s107 = sphi 0, %s106
      %s121 = sphi 0, %s107
      %s129 = sphi 0, %s131
      %s132 = sphi 0, %s129
      %s133 = sphi 0, %s132
      %s149 = sphi 0, %s133
      %s155 = sphi 0, %s157
      %s158 = sphi 0, %s155
      %s159 = sphi 0, %s158
      %s175 = sphi 0, %s159
      %s181 = sphi 0, %s183
      %s184 = sphi 0, %s181
      %s185 = sphi 0, %s184
      %s201 = sphi 0, %s185
    $region4: #{_lambda_.7} parent=1 // loop_header_branch
      %17 = sbr.rel (%p15) target = $region8
    $region5: #{_lambda_.7} parent=1 // loop_body
      %s19 = ssub.s32 %s14, 1
      %s20 = ssub.s32 %s14, 2
      %s27 = sadd.s32 1, %s22
      %p28 = scmp.ge.s32.totalorder %s27, 1
      %s29 = scalar_select %p28, 0, %s27
      %s30 = sadd.s32 1, %s21
      %s31 = scalar_select %p28, %s30, %s21
      %p32 = scmp.ge.s32.totalorder %s31, 2
      %s33 = scalar_select %p32, 0, %s31
      %s34 = ssub.s32 %s21, %s33
      %s35 = ssub.s32 %s22, %s29
      %s36 = sor.u32 %s34, %s35
      %p37 = scmp.eq.s32.totalorder %s36, 0
      %s39 = sadd.s32 %s38, 1
      %s40 = scalar_select %p37, %s38, %s39
      %p43 = pneg %p37
      %p44 = scmp.eq.s32.totalorder %s14, 1
      %p45 = por %p43, %p44
      %p46 = scmp.ne.s32.totalorder %s38, %s41
      %p47 = scmp.eq.s32.totalorder %s14, 0
      %p48 = por %p46, %p47
      %p49 = scmp.ne.s32.totalorder %s38, %s41
      %p50 = scmp.eq.s32.totalorder %s19, 1
      %p51 = por %p49, %p50
      %p52 = scmp.ne.s32.totalorder %s41, %s42
      %p53 = scmp.eq.s32.totalorder %s19, 0
      %p54 = por %p52, %p53
      %p55 = scmp.ne.s32.totalorder %s41, %s42
      %p56 = scmp.eq.s32.totalorder %s20, 1
      %p57 = por %p55, %p56
      %p59 = scmp.ne.s32.totalorder %s42, %s58
      %p60 = scmp.eq.s32.totalorder %s20, 0
      %p61 = por %p59, %p60
      %s63 = sadd.s32 %s62, 1
      %p66 = scmp.eq.s32.totalorder %s14, 1
      %p67 = scmp.ne.s32.totalorder %s62, %s64
      %p68 = scmp.eq.s32.totalorder %s14, 0
      %p69 = por %p67, %p68
      %p70 = scmp.ne.s32.totalorder %s62, %s64
      %p71 = scmp.eq.s32.totalorder %s19, 1
      %p72 = por %p70, %p71
      %p73 = scmp.ne.s32.totalorder %s64, %s65
      %p74 = scmp.eq.s32.totalorder %s19, 0
      %p75 = por %p73, %p74
      %p76 = scmp.ne.s32.totalorder %s64, %s65
      %p77 = scmp.eq.s32.totalorder %s20, 1
      %p78 = por %p76, %p77
      %p80 = scmp.ne.s32.totalorder %s65, %s79
      %p81 = scmp.eq.s32.totalorder %s20, 0
      %p82 = por %p80, %p81
      %s84 = sadd.s32 %s83, 1
      %p87 = scmp.eq.s32.totalorder %s14, 1
      %p88 = scmp.ne.s32.totalorder %s83, %s85
      %p89 = scmp.eq.s32.totalorder %s14, 0
      %p90 = por %p88, %p89
      %p91 = scmp.ne.s32.totalorder %s83, %s85
      %p92 = scmp.eq.s32.totalorder %s19, 1
      %p93 = por %p91, %p92
      %p94 = scmp.ne.s32.totalorder %s85, %s86
      %p95 = scmp.eq.s32.totalorder %s19, 0
      %p96 = por %p94, %p95
      %p97 = scmp.ne.s32.totalorder %s85, %s86
      %p98 = scmp.eq.s32.totalorder %s20, 1
      %p99 = por %p97, %p98
      %p101 = scmp.ne.s32.totalorder %s86, %s100
      %p102 = scmp.eq.s32.totalorder %s20, 0
      %p103 = por %p101, %p102
      %s105 = sadd.s32 %s104, 1
      %p108 = scmp.eq.s32.totalorder %s14, 1
      %p109 = scmp.ne.s32.totalorder %s104, %s106
      %p110 = scmp.eq.s32.totalorder %s14, 0
      %p111 = por %p109, %p110
      %p112 = scmp.ne.s32.totalorder %s104, %s106
      %p113 = scmp.eq.s32.totalorder %s19, 1
      %p114 = por %p112, %p113
      %p115 = scmp.ne.s32.totalorder %s106, %s107
      %p116 = scmp.eq.s32.totalorder %s19, 0
      %p117 = por %p115, %p116
      %p118 = scmp.ne.s32.totalorder %s106, %s107
      %p119 = scmp.eq.s32.totalorder %s20, 1
      %p120 = por %p118, %p119
      %p122 = scmp.ne.s32.totalorder %s107, %s121
      %p123 = scmp.eq.s32.totalorder %s20, 0
      %p124 = por %p122, %p123
      %s125 = ssub.s32 %s21, %s33
      %s126 = ssub.s32 %s22, %s29
      %s127 = sor.u32 %s125, %s126
      %p128 = scmp.eq.s32.totalorder %s127, 0
      %s130 = sadd.s32 %s129, 1
      %s131 = scalar_select %p128, %s129, %s130
      %p134 = pneg %p128
      %p135 = scmp.eq.s32.totalorder %s14, 1
      %p136 = por %p134, %p135
      %p137 = scmp.ne.s32.totalorder %s129, %s132
      %p138 = scmp.eq.s32.totalorder %s14, 0
      %p139 = por %p137, %p138
      %p140 = scmp.ne.s32.totalorder %s129, %s132
      %p141 = scmp.eq.s32.totalorder %s19, 1
      %p142 = por %p140, %p141
      %p143 = scmp.ne.s32.totalorder %s132, %s133
      %p144 = scmp.eq.s32.totalorder %s19, 0
      %p145 = por %p143, %p144
      %p146 = scmp.ne.s32.totalorder %s132, %s133
      %p147 = scmp.eq.s32.totalorder %s20, 1
      %p148 = por %p146, %p147
      %p150 = scmp.ne.s32.totalorder %s133, %s149
      %p151 = scmp.eq.s32.totalorder %s20, 0
      %p152 = por %p150, %p151
      %s153 = ssub.s32 %s21, %s33
      %p154 = scmp.eq.s32.totalorder %s153, 0
      %s156 = sadd.s32 %s155, 1
      %s157 = scalar_select %p154, %s155, %s156
      %p160 = pneg %p154
      %p161 = scmp.eq.s32.totalorder %s14, 1
      %p162 = por %p160, %p161
      %p163 = scmp.ne.s32.totalorder %s155, %s158
      %p164 = scmp.eq.s32.totalorder %s14, 0
      %p165 = por %p163, %p164
      %p166 = scmp.ne.s32.totalorder %s155, %s158
      %p167 = scmp.eq.s32.totalorder %s19, 1
      %p168 = por %p166, %p167
      %p169 = scmp.ne.s32.totalorder %s158, %s159
      %p170 = scmp.eq.s32.totalorder %s19, 0
      %p171 = por %p169, %p170
      %p172 = scmp.ne.s32.totalorder %s158, %s159
      %p173 = scmp.eq.s32.totalorder %s20, 1
      %p174 = por %p172, %p173
      %p176 = scmp.ne.s32.totalorder %s159, %s175
      %p177 = scmp.eq.s32.totalorder %s20, 0
      %p178 = por %p176, %p177
      %s179 = ssub.s32 %s21, %s33
      %p180 = scmp.eq.s32.totalorder %s179, 0
      %s182 = sadd.s32 %s181, 1
      %s183 = scalar_select %p180, %s181, %s182
      %p186 = pneg %p180
      %p187 = scmp.eq.s32.totalorder %s14, 1
      %p188 = por %p186, %p187
      %p189 = scmp.ne.s32.totalorder %s181, %s184
      %p190 = scmp.eq.s32.totalorder %s14, 0
      %p191 = por %p189, %p190
      %p192 = scmp.ne.s32.totalorder %s181, %s184
      %p193 = scmp.eq.s32.totalorder %s19, 1
      %p194 = por %p192, %p193
      %p195 = scmp.ne.s32.totalorder %s184, %s185
      %p196 = scmp.eq.s32.totalorder %s19, 0
      %p197 = por %p195, %p196
      %p198 = scmp.ne.s32.totalorder %s184, %s185
      %p199 = scmp.eq.s32.totalorder %s20, 1
      %p200 = por %p198, %p199
      %p202 = scmp.ne.s32.totalorder %s185, %s201
      %p203 = scmp.eq.s32.totalorder %s20, 0
      %p204 = por %p202, %p203
      %p205 = scmp.le.s32.totalorder 1, %s14
      %p206 = scmp.lt.s32.totalorder %s14, 3
      %p207 = pnand %p205, %p206
      %p208 = pneg %p207
      // Predicated region
      $region9: #{_lambda_.7} parent=5 // pred_check
        _
      $region10: #{_lambda_.7} parent=5 // pred_check_branch
        %210 = sbr.rel (%p207) target = $region12
      $region11: #{_lambda_.7} parent=5 // pred_region
        %s211 = ssub.s32 %s14, 1
        // Predicated region
        $region13: #{_lambda_.7} parent=11 // pred_check
          %p212 = pneg %p75
        $region14: #{_lambda_.7} parent=11 // pred_check_branch
          %214 = sbr.rel (%p212) target = $region16
        $region15: #{_lambda_.7} parent=11 // pred_region
          %s216 = ssub.s32 64, 64
          %217 = vsyncadd [#allocation3], %s216
          %s219 = sshll.u32 [#allocation2], 4
          %s220 = int_to_ptr.vmem [resolvable:$true] %s219
          %222 = dma.hbm_to_vmem [thread:$0]  %s1, 64, %s220, [#allocation3]
        $region16: #{_lambda_.7} parent=11 // pred_fallthru
          _
        // Predicated region
        $region17: #{_lambda_.7} parent=11 // pred_check
          %p223 = pneg %p96
        $region18: #{_lambda_.7} parent=11 // pred_check_branch
          %225 = sbr.rel (%p223) target = $region20
        $region19: #{_lambda_.7} parent=11 // pred_region
          _
        $region20: #{_lambda_.7} parent=11 // pred_fallthru
          _
        // Predicated region
        $region21: #{_lambda_.7} parent=11 // pred_check
          %p226 = pneg %p117
        $region22: #{_lambda_.7} parent=11 // pred_check_branch
          %228 = sbr.rel (%p226) target = $region24
        $region23: #{_lambda_.7} parent=11 // pred_region
          _
        $region24: #{_lambda_.7} parent=11 // pred_fallthru
          _
      $region12: #{_lambda_.7} parent=5 // pred_fallthru
        _
      %p229 = scmp.lt.s32.totalorder %s14, 2
      // Predicated region
      $region25: #{_lambda_.7} parent=5 // pred_check
        %p230 = pneg %p229
      $region26: #{_lambda_.7} parent=5 // pred_check_branch
        %232 = sbr.rel (%p230) target = $region28
      $region27: #{_lambda_.7} parent=5 // pred_region
        // Predicated region
        $region29: #{_lambda_.7} parent=27 // pred_check
          %p233 = pneg %p48
        $region30: #{_lambda_.7} parent=27 // pred_check_branch
          %235 = sbr.rel (%p233) target = $region32
        $region31: #{_lambda_.7} parent=27 // pred_region
          %s236 = smul.u32 2, %s22
          %p237 = scmp.lt.s32.totalorder %s21, 1
          %s238 = scalar_select %p237, %s21, 1
          %p239 = scmp.lt.s32.totalorder %s236, 1
          %s240 = scalar_select %p239, %s236, 1
          %s241 = smul.addr %s238, 2
          %s242 = sadd.s32 %s240, %s241
          %s243 = smul.addr %s242, 8
          %s244 = scalar_lea.vmem %s0, %s243
          %s245 = smul.u32 2, %s22
        $region32: #{_lambda_.7} parent=27 // pred_fallthru
          _
      $region28: #{_lambda_.7} parent=5 // pred_fallthru
        _
      %p246 = scmp.le.s32.totalorder 1, %s14
      %p247 = scmp.lt.s32.totalorder %s14, 3
      %p248 = pnand %p246, %p247
      %p249 = pneg %p248
      // Predicated region
      $region33: #{_lambda_.7} parent=5 // pred_check
        _
      $region34: #{_lambda_.7} parent=5 // pred_check_branch
        %251 = sbr.rel (%p248) target = $region36
      $region35: #{_lambda_.7} parent=5 // pred_region
        %s252 = ssub.s32 %s14, 1
        // Predicated region
        $region37: #{_lambda_.7} parent=35 // pred_check
          %p253 = pneg %p75
        $region38: #{_lambda_.7} parent=35 // pred_check_branch
          %255 = sbr.rel (%p253) target = $region40
        $region39: #{_lambda_.7} parent=35 // pred_region
          %256 = dma.done [#allocation3], 64
        $region40: #{_lambda_.7} parent=35 // pred_fallthru
          _
        %s257 = smul.u32 2, %s24
        %p258 = scmp.lt.s32.totalorder %s23, 1
        %s259 = scalar_select %p258, %s23, 1
        %p260 = scmp.lt.s32.totalorder %s257, 1
        %s261 = scalar_select %p260, %s257, 1
        %s262 = smul.addr %s259, 2
        %s263 = sadd.s32 %s261, %s262
        %s264 = smul.addr %s263, 8
        %s265 = scalar_lea.vmem %s0, %s264
        %p266 = pneg %p54
        %p267 = pneg %p51
        %p268 = pneg %p75
        %p269 = pneg %p72
        %p270 = pneg %p96
        %p271 = pneg %p93
        %p272 = pneg %p117
        %p273 = pneg %p114
        %p274 = pneg %p145
        %p275 = pneg %p142
        %s276 = smul.u32 2, %s24
        %p277 = scmp.lt.s32.totalorder %s23, 1
        %s278 = scalar_select %p277, %s23, 1
        %p279 = scmp.lt.s32.totalorder %s276, 1
        %s280 = scalar_select %p279, %s276, 1
        %s281 = smul.addr %s278, 2
        %s282 = sadd.s32 %s280, %s281
        %s283 = smul.addr %s282, 8
        %s284 = scalar_lea.vmem %s4, %s283
        %p285 = pneg %p171
        %p286 = pneg %p168
        %p287 = scmp.lt.s32.totalorder %s23, 1
        %s288 = scalar_select %p287, %s23, 1
        %s289 = scalar_lea.vmem %s5, %s288
        %p290 = pneg %p197
        %p291 = pneg %p194
        %p292 = scmp.lt.s32.totalorder %s23, 1
        %s293 = scalar_select %p292, %s23, 1
        %s294 = scalar_lea.vmem %s6, %s293
        %s295 = smul.u32 2, %s24
        %p296 = scmp.lt.s32.totalorder %s23, 1
        %s297 = scalar_select %p296, %s23, 1
        %p298 = scmp.lt.s32.totalorder %s295, 1
        %s299 = scalar_select %p298, %s295, 1
        %s300 = smul.addr %s297, 2
        %s301 = sadd.s32 %s299, %s300
        %s302 = smul.addr %s301, 8
        %s303 = scalar_lea.vmem %s0, %s302
        %s304 = smul.u32 2, %s24
        %s305 = smul.u32 2, %s24
        %p306 = scmp.lt.s32.totalorder %s23, 1
        %s307 = scalar_select %p306, %s23, 1
        %p308 = scmp.lt.s32.totalorder %s305, 1
        %s309 = scalar_select %p308, %s305, 1
        %s310 = smul.addr %s307, 2
        %s311 = sadd.s32 %s309, %s310
        %s312 = smul.addr %s311, 8
        %s313 = scalar_lea.vmem %s4, %s312
        %s314 = smul.u32 2, %s24
        %p315 = scmp.lt.s32.totalorder %s23, 1
        %s316 = scalar_select %p315, %s23, 1
        %s317 = scalar_lea.vmem %s5, %s316
        %p318 = scmp.lt.s32.totalorder %s23, 1
        %s319 = scalar_select %p318, %s23, 1
        %s320 = scalar_lea.vmem %s6, %s319
        %v322 = vld [vmem:[%s303] sm:$0xff]
        %v323 = vld [vmem:[%s303 + $0x8] sm:$0xff]
        %v324 = vld [vmem:[#allocation2] sm:$0xf]
        %v325 = vpack.c.bf16 %v323, %v322
        %v326 = vpack.c.bf16 %v324, %v324
        %vm327 = vcmask 31744
        %v329 = vsel %vm327, %v325, 0
        %vm331 = vcmask 1041408
        %v333 = vsel %vm331, %v326, 0
        %335 = vmatprep.subr.bf16.mxu0 0
        %336 = vmatpush1.bf16.msra.mxu0 %v333
        %337 = vmatprep.subr.bf16.mxu0 0
        %338 = vmatpush1.bf16.msra.mxu0 0
        %339 = vmatprep.subr.bf16.mxu0 0
        %340 = vmatpush1.bf16.msra.mxu0 0
        %341 = vmatprep.subr.bf16.mxu0 0
        %342 = vmatpush1.bf16.msra.mxu0 0
        %343 = vmatprep.subr.bf16.mxu0 0
        %344 = vmatpush1.bf16.msra.mxu0 0
        %345 = vmatprep.subr.bf16.mxu0 0
        %346 = vmatpush1.bf16.msra.mxu0 0
        %347 = vmatprep.subr.bf16.mxu0 0
        %348 = vmatpush1.bf16.msra.mxu0 0
        %349 = vmatprep.subr.bf16.mxu0 0
        %350 = vmatpush1.bf16.msra.mxu0 0
        %351 = vmatprep.subr.bf16.mxu0 0
        %352 = vmatpush1.bf16.msra.mxu0 0
        %353 = vmatprep.subr.bf16.mxu0 0
        %354 = vmatpush1.bf16.msra.mxu0 0
        %355 = vmatprep.subr.bf16.mxu0 0
        %356 = vmatpush1.bf16.msra.mxu0 0
        %357 = vmatprep.subr.bf16.mxu0 0
        %358 = vmatpush1.bf16.msra.mxu0 0
        %359 = vmatprep.subr.bf16.mxu0 0
        %360 = vmatpush1.bf16.msra.mxu0 0
        %361 = vmatprep.subr.bf16.mxu0 0
        %362 = vmatpush1.bf16.msra.mxu0 0
        %363 = vmatprep.subr.bf16.mxu0 0
        %364 = vmatpush1.bf16.msra.mxu0 0
        %365 = vmatprep.subr.bf16.mxu0 0
        %366 = vmatpush1.bf16.msra.mxu0 0
        %367 = vmatprep.mubr.bf16.mxu0 0
        %368 = vmatmul.mubr.bf16.gmra.mrb[0].mxu0 %v329
        %v369 = vpop.f32.mrb[0].mxu0
        %v370 = vadd.f32 0.0, %v369
        %v371 = vpop.f32.mrb[0].mxu0
        %v372 = vpop.f32.mrb[0].mxu0
        %v373 = vadd.f32 0.0, %v372
        %v374 = vpop.f32.mrb[0].mxu0
        %375 = vdwg.mxu0
        %vm376 = vcmask 523264
        %377 = vst.msk [vmem:[%s313] sm:$0xff] %vm376, %v370
        %378 = vst.msk [vmem:[%s313 + $0x8] sm:$0xff] %vm376, %v373
        %p379 = scmp.eq.s32.totalorder %s24, 0
        // Predicated region
        $region41: #{_lambda_.7} parent=35 // pred_check
          %p380 = pneg %p379
        $region42: #{_lambda_.7} parent=35 // pred_check_branch
          %382 = sbr.rel (%p380) target = $region44
        $region43: #{_lambda_.7} parent=35 // pred_region
          %vm383 = vcmask 516096
          %384 = vst.msk [vmem:[%s317] sm:$0x1] %vm383, 0.0
          %385 = vst.msk [vmem:[%s320] sm:$0x1] %vm383, 0.0
        $region44: #{_lambda_.7} parent=35 // pred_fallthru
          _
        %v386 = vld [vmem:[%s317] sm:$0x1]
        %v387 = vsel %vm376, %v370, 0.0
        %v388 = vsel %vm376, %v373, 0.0
        %v389 = vadd.f32 %v387, %v388
        %v390 = vrot.slane %v389, 4
        %v391 = vadd.f32 %v389, %v390
        %v392 = vrot.slane %v391, 2
        %v393 = vadd.f32 %v391, %v392
        %v394 = vrot.slane %v393, 1
        %v395 = vadd.f32 %v393, %v394
        %v396 = vadd.f32 %v386, %v395
        %vm397 = vcmask 516096
        %398 = vst.msk [vmem:[%s317] sm:$0x1] %vm397, %v396
        %v399 = vld [vmem:[%s320] sm:$0x1]
        %v400 = vmul.f32 %v370, %v370
        %v401 = vmul.f32 %v373, %v373
        %v402 = vsel %vm376, %v400, 0.0
        %v403 = vsel %vm376, %v401, 0.0
        %v404 = vadd.f32 %v402, %v403
        %v405 = vrot.slane %v404, 4
        %v406 = vadd.f32 %v404, %v405
        %v407 = vrot.slane %v406, 2
        %v408 = vadd.f32 %v406, %v407
        %v409 = vrot.slane %v408, 1
        %v410 = vadd.f32 %v408, %v409
        %v411 = vadd.f32 %v399, %v410
        %412 = vst.msk [vmem:[%s320] sm:$0x1] %vm397, %v411
        %s413 = smul.u32 2, %s24
        %p414 = scmp.lt.s32.totalorder %s23, 1
        %s415 = scalar_select %p414, %s23, 1
        %p416 = scmp.lt.s32.totalorder %s413, 1
        %s417 = scalar_select %p416, %s413, 1
        %s418 = smul.addr %s415, 2
        %s419 = sadd.s32 %s417, %s418
        %s420 = smul.addr %s419, 8
        %s421 = scalar_lea.vmem %s4, %s420
        %p422 = scmp.lt.s32.totalorder %s23, 1
        %s423 = scalar_select %p422, %s23, 1
        %s424 = scalar_lea.vmem %s5, %s423
        %p425 = scmp.lt.s32.totalorder %s23, 1
        %s426 = scalar_select %p425, %s23, 1
        %s427 = scalar_lea.vmem %s6, %s426
        // Predicated region
        $region45: #{_lambda_.7} parent=35 // pred_check
          %p428 = pneg %p142
        $region46: #{_lambda_.7} parent=35 // pred_check_branch
          %430 = sbr.rel (%p428) target = $region48
        $region47: #{_lambda_.7} parent=35 // pred_region
          %s431 = smul.u32 2, %s24
        $region48: #{_lambda_.7} parent=35 // pred_fallthru
          _
        // Predicated region
        $region49: #{_lambda_.7} parent=35 // pred_check
          %p432 = pneg %p168
        $region50: #{_lambda_.7} parent=35 // pred_check_branch
          %434 = sbr.rel (%p432) target = $region52
        $region51: #{_lambda_.7} parent=35 // pred_region
          _
        $region52: #{_lambda_.7} parent=35 // pred_fallthru
          _
        // Predicated region
        $region53: #{_lambda_.7} parent=35 // pred_check
          %p435 = pneg %p194
        $region54: #{_lambda_.7} parent=35 // pred_check_branch
          %437 = sbr.rel (%p435) target = $region56
        $region55: #{_lambda_.7} parent=35 // pred_region
          _
        $region56: #{_lambda_.7} parent=35 // pred_fallthru
          _
      $region36: #{_lambda_.7} parent=5 // pred_fallthru
        _
      %p438 = scmp.le.s32.totalorder 2, %s14
      // Predicated region
      $region57: #{_lambda_.7} parent=5 // pred_check
        %p439 = pneg %p438
      $region58: #{_lambda_.7} parent=5 // pred_check_branch
        %441 = sbr.rel (%p439) target = $region60
      $region59: #{_lambda_.7} parent=5 // pred_region
        %s442 = ssub.s32 %s14, 2
        // Predicated region
        $region61: #{_lambda_.7} parent=59 // pred_check
          %p443 = pneg %p148
        $region62: #{_lambda_.7} parent=59 // pred_check_branch
          %445 = sbr.rel (%p443) target = $region64
        $region63: #{_lambda_.7} parent=59 // pred_region
          %s446 = smul.u32 2, %s26
          %p447 = scmp.lt.s32.totalorder %s25, 1
          %s448 = scalar_select %p447, %s25, 1
          %p449 = scmp.lt.s32.totalorder %s446, 1
          %s450 = scalar_select %p449, %s446, 1
          %s451 = smul.addr %s448, 2
          %s452 = sadd.s32 %s450, %s451
          %s453 = smul.addr %s452, 8
          %s454 = scalar_lea.vmem %s4, %s453
        $region64: #{_lambda_.7} parent=59 // pred_fallthru
          _
        // Predicated region
        $region65: #{_lambda_.7} parent=59 // pred_check
          %p455 = pneg %p174
        $region66: #{_lambda_.7} parent=59 // pred_check_branch
          %457 = sbr.rel (%p455) target = $region68
        $region67: #{_lambda_.7} parent=59 // pred_region
          %p458 = scmp.lt.s32.totalorder %s25, 1
          %s459 = scalar_select %p458, %s25, 1
          %s460 = scalar_lea.vmem %s5, %s459
        $region68: #{_lambda_.7} parent=59 // pred_fallthru
          _
        // Predicated region
        $region69: #{_lambda_.7} parent=59 // pred_check
          %p461 = pneg %p200
        $region70: #{_lambda_.7} parent=59 // pred_check_branch
          %463 = sbr.rel (%p461) target = $region72
        $region71: #{_lambda_.7} parent=59 // pred_region
          %p464 = scmp.lt.s32.totalorder %s25, 1
          %s465 = scalar_select %p464, %s25, 1
          %s466 = scalar_lea.vmem %s6, %s465
        $region72: #{_lambda_.7} parent=59 // pred_fallthru
          _
      $region60: #{_lambda_.7} parent=5 // pred_fallthru
        _
    $region6: #{_lambda_.7} parent=1 // loop_footer
      %s18 = sadd.s32 1, %s14
    $region7: #{_lambda_.7} parent=1 // loop_footer_branch
      %13 = sbr.rel target = $region3
    $region8: #{_lambda_.7} parent=1 // loop_exit
      _
    %467 = vsyncpa [#allocation3], 1
    %s468 = scalar_lea.sflag [#allocation3], 1
    %469 = vsyncpa %s468, 1

// kernel: _lambda_.8
$region0: #{_lambda_.8}
  #allocation0 [shape = 'u32[]', space=smem, size = 0x4, offset = 0x4, fixed_abs, tag = 'smem constant byte address 0x4 - core index']
  #allocation1 [shape = 'u32[144,128]{1,0:T(1,128)}', space=vmem, size = 0x12000, scoped, tag = 'internal scratch']
  %s0 = inlined_call_operand.vmem [shape: f32[2,16,64], index: 0, kind: input, shape index: {}]
  %s1 = inlined_call_operand.hbm [shape: f32[64,128], index: 1, kind: input, shape index: {}]
  %s2 = inlined_call_operand.vmem [shape: f32[1,64], index: 2, kind: input, shape index: {}]
  %s3 = inlined_call_operand.vmem [shape: f32[1,64], index: 3, kind: input, shape index: {}]
  %s4 = inlined_call_operand.vmem [shape: f32[2,16,128], index: 4, kind: output, shape index: {0}]
  %s5 = inlined_call_operand.vmem [shape: f32[2,1,128], index: 5, kind: output, shape index: {1}]
  %s6 = inlined_call_operand.vmem [shape: f32[2,1,128], index: 6, kind: output, shape index: {2}]
  %7 = xla_tuple %s4, %s5, %s6
  %s8 = sld [smem:[#allocation0]]
  $region73: #{_lambda_.8} parent=0
    _
  %s10 = ssub.s32 1, %s8
  %s11 = scalar_select 0, %s10, %s8
  $region1: #{_lambda_.8} parent=0
    #allocation2 [shape = 'u8[32768]{0}', space=vmem, size = 0x8000, scoped, tag = 'input window, operand 1, single buffered']
    #allocation3 [shape = 's32[2]{0}', space=sflag, size = 0x8, scoped, tag = 'scoped memory for _lambda_.8']
    %12 = vsyncpa [#allocation3], 0
    loop: start=0, step=1, limit=4
    $region2: #{_lambda_.8} parent=1 // loop_pre_header
      _
    $region3: #{_lambda_.8} parent=1 // loop_header
      %s14 = sphi 0, %s18
      %p15 = scmp.ge.s32.totalorder %s14, 4
      %s21 = sphi 0, %s33
      %s22 = sphi 0, %s29
      %s23 = sphi 0, %s21
      %s24 = sphi 0, %s22
      %s25 = sphi 0, %s23
      %s26 = sphi 0, %s24
      %s38 = sphi 0, %s40
      %s41 = sphi 0, %s38
      %s42 = sphi 0, %s41
      %s58 = sphi 0, %s42
      %s62 = sphi 0, %s62
      %s64 = sphi 0, %s62
      %s65 = sphi 0, %s64
      %s79 = sphi 0, %s65
      %s83 = sphi 0, %s83
      %s85 = sphi 0, %s83
      %s86 = sphi 0, %s85
      %s100 = sphi 0, %s86
      %s104 = sphi 0, %s104
      %s106 = sphi 0, %s104
      %s107 = sphi 0, %s106
      %s121 = sphi 0, %s107
      %s129 = sphi 0, %s131
      %s132 = sphi 0, %s129
      %s133 = sphi 0, %s132
      %s149 = sphi 0, %s133
      %s155 = sphi 0, %s157
      %s158 = sphi 0, %s155
      %s159 = sphi 0, %s158
      %s175 = sphi 0, %s159
      %s181 = sphi 0, %s183
      %s184 = sphi 0, %s181
      %s185 = sphi 0, %s184
      %s201 = sphi 0, %s185
    $region4: #{_lambda_.8} parent=1 // loop_header_branch
      %17 = sbr.rel (%p15) target = $region8
    $region5: #{_lambda_.8} parent=1 // loop_body
      %s19 = ssub.s32 %s14, 1
      %s20 = ssub.s32 %s14, 2
      %s27 = sadd.s32 1, %s22
      %p28 = scmp.ge.s32.totalorder %s27, 1
      %s29 = scalar_select %p28, 0, %s27
      %s30 = sadd.s32 1, %s21
      %s31 = scalar_select %p28, %s30, %s21
      %p32 = scmp.ge.s32.totalorder %s31, 2
      %s33 = scalar_select %p32, 0, %s31
      %s34 = ssub.s32 %s21, %s33
      %s35 = ssub.s32 %s22, %s29
      %s36 = sor.u32 %s34, %s35
      %p37 = scmp.eq.s32.totalorder %s36, 0
      %s39 = sadd.s32 %s38, 1
      %s40 = scalar_select %p37, %s38, %s39
      %p43 = pneg %p37
      %p44 = scmp.eq.s32.totalorder %s14, 1
      %p45 = por %p43, %p44
      %p46 = scmp.ne.s32.totalorder %s38, %s41
      %p47 = scmp.eq.s32.totalorder %s14, 0
      %p48 = por %p46, %p47
      %p49 = scmp.ne.s32.totalorder %s38, %s41
      %p50 = scmp.eq.s32.totalorder %s19, 1
      %p51 = por %p49, %p50
      %p52 = scmp.ne.s32.totalorder %s41, %s42
      %p53 = scmp.eq.s32.totalorder %s19, 0
      %p54 = por %p52, %p53
      %p55 = scmp.ne.s32.totalorder %s41, %s42
      %p56 = scmp.eq.s32.totalorder %s20, 1
      %p57 = por %p55, %p56
      %p59 = scmp.ne.s32.totalorder %s42, %s58
      %p60 = scmp.eq.s32.totalorder %s20, 0
      %p61 = por %p59, %p60
      %s63 = sadd.s32 %s62, 1
      %p66 = scmp.eq.s32.totalorder %s14, 1
      %p67 = scmp.ne.s32.totalorder %s62, %s64
      %p68 = scmp.eq.s32.totalorder %s14, 0
      %p69 = por %p67, %p68
      %p70 = scmp.ne.s32.totalorder %s62, %s64
      %p71 = scmp.eq.s32.totalorder %s19, 1
      %p72 = por %p70, %p71
      %p73 = scmp.ne.s32.totalorder %s64, %s65
      %p74 = scmp.eq.s32.totalorder %s19, 0
      %p75 = por %p73, %p74
      %p76 = scmp.ne.s32.totalorder %s64, %s65
      %p77 = scmp.eq.s32.totalorder %s20, 1
      %p78 = por %p76, %p77
      %p80 = scmp.ne.s32.totalorder %s65, %s79
      %p81 = scmp.eq.s32.totalorder %s20, 0
      %p82 = por %p80, %p81
      %s84 = sadd.s32 %s83, 1
      %p87 = scmp.eq.s32.totalorder %s14, 1
      %p88 = scmp.ne.s32.totalorder %s83, %s85
      %p89 = scmp.eq.s32.totalorder %s14, 0
      %p90 = por %p88, %p89
      %p91 = scmp.ne.s32.totalorder %s83, %s85
      %p92 = scmp.eq.s32.totalorder %s19, 1
      %p93 = por %p91, %p92
      %p94 = scmp.ne.s32.totalorder %s85, %s86
      %p95 = scmp.eq.s32.totalorder %s19, 0
      %p96 = por %p94, %p95
      %p97 = scmp.ne.s32.totalorder %s85, %s86
      %p98 = scmp.eq.s32.totalorder %s20, 1
      %p99 = por %p97, %p98
      %p101 = scmp.ne.s32.totalorder %s86, %s100
      %p102 = scmp.eq.s32.totalorder %s20, 0
      %p103 = por %p101, %p102
      %s105 = sadd.s32 %s104, 1
      %p108 = scmp.eq.s32.totalorder %s14, 1
      %p109 = scmp.ne.s32.totalorder %s104, %s106
      %p110 = scmp.eq.s32.totalorder %s14, 0
      %p111 = por %p109, %p110
      %p112 = scmp.ne.s32.totalorder %s104, %s106
      %p113 = scmp.eq.s32.totalorder %s19, 1
      %p114 = por %p112, %p113
      %p115 = scmp.ne.s32.totalorder %s106, %s107
      %p116 = scmp.eq.s32.totalorder %s19, 0
      %p117 = por %p115, %p116
      %p118 = scmp.ne.s32.totalorder %s106, %s107
      %p119 = scmp.eq.s32.totalorder %s20, 1
      %p120 = por %p118, %p119
      %p122 = scmp.ne.s32.totalorder %s107, %s121
      %p123 = scmp.eq.s32.totalorder %s20, 0
      %p124 = por %p122, %p123
      %s125 = ssub.s32 %s21, %s33
      %s126 = ssub.s32 %s22, %s29
      %s127 = sor.u32 %s125, %s126
      %p128 = scmp.eq.s32.totalorder %s127, 0
      %s130 = sadd.s32 %s129, 1
      %s131 = scalar_select %p128, %s129, %s130
      %p134 = pneg %p128
      %p135 = scmp.eq.s32.totalorder %s14, 1
      %p136 = por %p134, %p135
      %p137 = scmp.ne.s32.totalorder %s129, %s132
      %p138 = scmp.eq.s32.totalorder %s14, 0
      %p139 = por %p137, %p138
      %p140 = scmp.ne.s32.totalorder %s129, %s132
      %p141 = scmp.eq.s32.totalorder %s19, 1
      %p142 = por %p140, %p141
      %p143 = scmp.ne.s32.totalorder %s132, %s133
      %p144 = scmp.eq.s32.totalorder %s19, 0
      %p145 = por %p143, %p144
      %p146 = scmp.ne.s32.totalorder %s132, %s133
      %p147 = scmp.eq.s32.totalorder %s20, 1
      %p148 = por %p146, %p147
      %p150 = scmp.ne.s32.totalorder %s133, %s149
      %p151 = scmp.eq.s32.totalorder %s20, 0
      %p152 = por %p150, %p151
      %s153 = ssub.s32 %s21, %s33
      %p154 = scmp.eq.s32.totalorder %s153, 0
      %s156 = sadd.s32 %s155, 1
      %s157 = scalar_select %p154, %s155, %s156
      %p160 = pneg %p154
      %p161 = scmp.eq.s32.totalorder %s14, 1
      %p162 = por %p160, %p161
      %p163 = scmp.ne.s32.totalorder %s155, %s158
      %p164 = scmp.eq.s32.totalorder %s14, 0
      %p165 = por %p163, %p164
      %p166 = scmp.ne.s32.totalorder %s155, %s158
      %p167 = scmp.eq.s32.totalorder %s19, 1
      %p168 = por %p166, %p167
      %p169 = scmp.ne.s32.totalorder %s158, %s159
      %p170 = scmp.eq.s32.totalorder %s19, 0
      %p171 = por %p169, %p170
      %p172 = scmp.ne.s32.totalorder %s158, %s159
      %p173 = scmp.eq.s32.totalorder %s20, 1
      %p174 = por %p172, %p173
      %p176 = scmp.ne.s32.totalorder %s159, %s175
      %p177 = scmp.eq.s32.totalorder %s20, 0
      %p178 = por %p176, %p177
      %s179 = ssub.s32 %s21, %s33
      %p180 = scmp.eq.s32.totalorder %s179, 0
      %s182 = sadd.s32 %s181, 1
      %s183 = scalar_select %p180, %s181, %s182
      %p186 = pneg %p180
      %p187 = scmp.eq.s32.totalorder %s14, 1
      %p188 = por %p186, %p187
      %p189 = scmp.ne.s32.totalorder %s181, %s184
      %p190 = scmp.eq.s32.totalorder %s14, 0
      %p191 = por %p189, %p190
      %p192 = scmp.ne.s32.totalorder %s181, %s184
      %p193 = scmp.eq.s32.totalorder %s19, 1
      %p194 = por %p192, %p193
      %p195 = scmp.ne.s32.totalorder %s184, %s185
      %p196 = scmp.eq.s32.totalorder %s19, 0
      %p197 = por %p195, %p196
      %p198 = scmp.ne.s32.totalorder %s184, %s185
      %p199 = scmp.eq.s32.totalorder %s20, 1
      %p200 = por %p198, %p199
      %p202 = scmp.ne.s32.totalorder %s185, %s201
      %p203 = scmp.eq.s32.totalorder %s20, 0
      %p204 = por %p202, %p203
      %p205 = scmp.le.s32.totalorder 1, %s14
      %p206 = scmp.lt.s32.totalorder %s14, 3
      %p207 = pnand %p205, %p206
      %p208 = pneg %p207
      // Predicated region
      $region9: #{_lambda_.8} parent=5 // pred_check
        _
      $region10: #{_lambda_.8} parent=5 // pred_check_branch
        %210 = sbr.rel (%p207) target = $region12
      $region11: #{_lambda_.8} parent=5 // pred_region
        %s211 = ssub.s32 %s14, 1
        // Predicated region
        $region13: #{_lambda_.8} parent=11 // pred_check
          %p212 = pneg %p75
        $region14: #{_lambda_.8} parent=11 // pred_check_branch
          %214 = sbr.rel (%p212) target = $region16
        $region15: #{_lambda_.8} parent=11 // pred_region
          %s216 = ssub.s32 1024, 1024
          %217 = vsyncadd [#allocation3], %s216
          %s218 = sshll.u32 [#allocation2], 4
          %s219 = int_to_ptr.vmem [resolvable:$true] %s218
          %224 = dma.hbm_to_vmem [thread:$0]  %s1, 1024, %s219, [#allocation3], 128, 128, 8
        $region16: #{_lambda_.8} parent=11 // pred_fallthru
          _
        // Predicated region
        $region17: #{_lambda_.8} parent=11 // pred_check
          %p225 = pneg %p96
        $region18: #{_lambda_.8} parent=11 // pred_check_branch
          %227 = sbr.rel (%p225) target = $region20
        $region19: #{_lambda_.8} parent=11 // pred_region
          _
        $region20: #{_lambda_.8} parent=11 // pred_fallthru
          _
        // Predicated region
        $region21: #{_lambda_.8} parent=11 // pred_check
          %p228 = pneg %p117
        $region22: #{_lambda_.8} parent=11 // pred_check_branch
          %230 = sbr.rel (%p228) target = $region24
        $region23: #{_lambda_.8} parent=11 // pred_region
          _
        $region24: #{_lambda_.8} parent=11 // pred_fallthru
          _
      $region12: #{_lambda_.8} parent=5 // pred_fallthru
        _
      %p231 = scmp.lt.s32.totalorder %s14, 2
      // Predicated region
      $region25: #{_lambda_.8} parent=5 // pred_check
        %p232 = pneg %p231
      $region26: #{_lambda_.8} parent=5 // pred_check_branch
        %234 = sbr.rel (%p232) target = $region28
      $region27: #{_lambda_.8} parent=5 // pred_region
        // Predicated region
        $region29: #{_lambda_.8} parent=27 // pred_check
          %p235 = pneg %p48
        $region30: #{_lambda_.8} parent=27 // pred_check_branch
          %237 = sbr.rel (%p235) target = $region32
        $region31: #{_lambda_.8} parent=27 // pred_region
          %s238 = smul.u32 2, %s22
          %p239 = scmp.lt.s32.totalorder %s21, 1
          %s240 = scalar_select %p239, %s21, 1
          %p241 = scmp.lt.s32.totalorder %s238, 1
          %s242 = scalar_select %p241, %s238, 1
          %s243 = smul.addr %s240, 2
          %s244 = sadd.s32 %s242, %s243
          %s245 = smul.addr %s244, 8
          %s246 = scalar_lea.vmem %s0, %s245
          %s247 = smul.u32 2, %s22
        $region32: #{_lambda_.8} parent=27 // pred_fallthru
          _
      $region28: #{_lambda_.8} parent=5 // pred_fallthru
        _
      %p248 = scmp.le.s32.totalorder 1, %s14
      %p249 = scmp.lt.s32.totalorder %s14, 3
      %p250 = pnand %p248, %p249
      %p251 = pneg %p250
      // Predicated region
      $region33: #{_lambda_.8} parent=5 // pred_check
        _
      $region34: #{_lambda_.8} parent=5 // pred_check_branch
        %253 = sbr.rel (%p250) target = $region36
      $region35: #{_lambda_.8} parent=5 // pred_region
        %s254 = ssub.s32 %s14, 1
        // Predicated region
        $region37: #{_lambda_.8} parent=35 // pred_check
          %p255 = pneg %p75
        $region38: #{_lambda_.8} parent=35 // pred_check_branch
          %257 = sbr.rel (%p255) target = $region40
        $region39: #{_lambda_.8} parent=35 // pred_region
          %258 = dma.done [#allocation3], 1024
        $region40: #{_lambda_.8} parent=35 // pred_fallthru
          _
        %s259 = smul.u32 2, %s24
        %p260 = scmp.lt.s32.totalorder %s23, 1
        %s261 = scalar_select %p260, %s23, 1
        %p262 = scmp.lt.s32.totalorder %s259, 1
        %s263 = scalar_select %p262, %s259, 1
        %s264 = smul.addr %s261, 2
        %s265 = sadd.s32 %s263, %s264
        %s266 = smul.addr %s265, 8
        %s267 = scalar_lea.vmem %s0, %s266
        %p268 = pneg %p54
        %p269 = pneg %p51
        %p270 = pneg %p75
        %p271 = pneg %p72
        %p272 = pneg %p96
        %p273 = pneg %p93
        %p274 = pneg %p117
        %p275 = pneg %p114
        %p276 = pneg %p145
        %p277 = pneg %p142
        %s278 = smul.u32 2, %s24
        %p279 = scmp.lt.s32.totalorder %s23, 1
        %s280 = scalar_select %p279, %s23, 1
        %p281 = scmp.lt.s32.totalorder %s278, 1
        %s282 = scalar_select %p281, %s278, 1
        %s283 = smul.addr %s280, 2
        %s284 = sadd.s32 %s282, %s283
        %s285 = smul.addr %s284, 8
        %s286 = scalar_lea.vmem %s4, %s285
        %p287 = pneg %p171
        %p288 = pneg %p168
        %p289 = scmp.lt.s32.totalorder %s23, 1
        %s290 = scalar_select %p289, %s23, 1
        %s291 = scalar_lea.vmem %s5, %s290
        %p292 = pneg %p197
        %p293 = pneg %p194
        %p294 = scmp.lt.s32.totalorder %s23, 1
        %s295 = scalar_select %p294, %s23, 1
        %s296 = scalar_lea.vmem %s6, %s295
        %s297 = smul.u32 2, %s24
        %p298 = scmp.lt.s32.totalorder %s23, 1
        %s299 = scalar_select %p298, %s23, 1
        %p300 = scmp.lt.s32.totalorder %s297, 1
        %s301 = scalar_select %p300, %s297, 1
        %s302 = smul.addr %s299, 2
        %s303 = sadd.s32 %s301, %s302
        %s304 = smul.addr %s303, 8
        %s305 = scalar_lea.vmem %s0, %s304
        %s306 = smul.u32 2, %s24
        %s307 = smul.u32 2, %s24
        %p308 = scmp.lt.s32.totalorder %s23, 1
        %s309 = scalar_select %p308, %s23, 1
        %p310 = scmp.lt.s32.totalorder %s307, 1
        %s311 = scalar_select %p310, %s307, 1
        %s312 = smul.addr %s309, 2
        %s313 = sadd.s32 %s311, %s312
        %s314 = smul.addr %s313, 8
        %s315 = scalar_lea.vmem %s4, %s314
        %s316 = smul.u32 2, %s24
        %p317 = scmp.lt.s32.totalorder %s23, 1
        %s318 = scalar_select %p317, %s23, 1
        %s319 = scalar_lea.vmem %s5, %s318
        %p320 = scmp.lt.s32.totalorder %s23, 1
        %s321 = scalar_select %p320, %s23, 1
        %s322 = scalar_lea.vmem %s6, %s321
        %v324 = vld [vmem:[%s305] sm:$0xff]
        %v325 = vld [vmem:[%s305 + $0x8] sm:$0xff]
        %v326 = vld [vmem:[%s2] sm:$0x1]
        %v328 = vlaneseq
        %v329 = vshrl.u32 %v328, 7
        %v330 = vsub.s32 0, %v329
        %v331 = vrot.slane %v326, %v330
        %v333 = vmul.f32 %v324, %v331
        %v334 = vmul.f32 %v325, %v331
        %v335 = vld [vmem:[%s3] sm:$0x1]
        %v337 = vlaneseq
        %v338 = vshrl.u32 %v337, 7
        %v339 = vsub.s32 0, %v338
        %v340 = vrot.slane %v335, %v339
        %v342 = vadd.f32 %v333, %v340
        %v343 = vadd.f32 %v334, %v340
        %v344 = vmax.f32 %v342, 0.0
        %v345 = vmax.f32 %v343, 0.0
        %v346 = vld [vmem:[#allocation2] sm:$0xff]
        %v347 = vld [vmem:[#allocation2 + $0x8] sm:$0xff]
        %v348 = vld [vmem:[#allocation2 + $0x10] sm:$0xff]
        %v349 = vld [vmem:[#allocation2 + $0x18] sm:$0xff]
        %v350 = vld [vmem:[#allocation2 + $0x20] sm:$0xff]
        %v351 = vld [vmem:[#allocation2 + $0x28] sm:$0xff]
        %v352 = vld [vmem:[#allocation2 + $0x30] sm:$0xff]
        %v353 = vld [vmem:[#allocation2 + $0x38] sm:$0xff]
        %v354 = vpack.c.bf16 %v345, %v344
        %v355 = vpack.c.bf16 %v347, %v346
        %v356 = vpack.c.bf16 %v349, %v348
        %v357 = vpack.c.bf16 %v351, %v350
        %v358 = vpack.c.bf16 %v353, %v352
        %vm359 = vcmask 523264
        %v361 = vsel %vm359, %v354, 0
        %363 = vmatprep.subr.bf16.mxu0 0
        %364 = vmatpush1.bf16.msra.mxu0 %v355
        %365 = vmatprep.subr.bf16.mxu0 0
        %366 = vmatpush1.bf16.msra.mxu0 %v356
        %367 = vmatprep.subr.bf16.mxu0 0
        %368 = vmatpush1.bf16.msra.mxu0 %v357
        %369 = vmatprep.subr.bf16.mxu0 0
        %370 = vmatpush1.bf16.msra.mxu0 %v358
        %371 = vmatprep.subr.bf16.mxu0 0
        %372 = vmatpush1.bf16.msra.mxu0 0
        %373 = vmatprep.subr.bf16.mxu0 0
        %374 = vmatpush1.bf16.msra.mxu0 0
        %375 = vmatprep.subr.bf16.mxu0 0
        %376 = vmatpush1.bf16.msra.mxu0 0
        %377 = vmatprep.subr.bf16.mxu0 0
        %378 = vmatpush1.bf16.msra.mxu0 0
        %379 = vmatprep.subr.bf16.mxu0 0
        %380 = vmatpush1.bf16.msra.mxu0 0
        %381 = vmatprep.subr.bf16.mxu0 0
        %382 = vmatpush1.bf16.msra.mxu0 0
        %383 = vmatprep.subr.bf16.mxu0 0
        %384 = vmatpush1.bf16.msra.mxu0 0
        %385 = vmatprep.subr.bf16.mxu0 0
        %386 = vmatpush1.bf16.msra.mxu0 0
        %387 = vmatprep.subr.bf16.mxu0 0
        %388 = vmatpush1.bf16.msra.mxu0 0
        %389 = vmatprep.subr.bf16.mxu0 0
        %390 = vmatpush1.bf16.msra.mxu0 0
        %391 = vmatprep.subr.bf16.mxu0 0
        %392 = vmatpush1.bf16.msra.mxu0 0
        %393 = vmatprep.subr.bf16.mxu0 0
        %394 = vmatpush1.bf16.msra.mxu0 0
        %395 = vmatprep.mubr.bf16.mxu0 0
        %396 = vmatmul.mubr.bf16.gmra.mrb[0].mxu0 %v361
        %v397 = vpop.f32.mrb[0].mxu0
        %v398 = vadd.f32 0.0, %v397
        %v399 = vpop.f32.mrb[0].mxu0
        %v400 = vpop.f32.mrb[0].mxu0
        %v401 = vadd.f32 0.0, %v400
        %v402 = vpop.f32.mrb[0].mxu0
        %403 = vdwg.mxu0
        %404 = vst [vmem:[%s315] sm:$0xff] %v398
        %405 = vst [vmem:[%s315 + $0x8] sm:$0xff] %v401
        %p406 = scmp.eq.s32.totalorder %s24, 0
        // Predicated region
        $region41: #{_lambda_.8} parent=35 // pred_check
          %p407 = pneg %p406
        $region42: #{_lambda_.8} parent=35 // pred_check_branch
          %409 = sbr.rel (%p407) target = $region44
        $region43: #{_lambda_.8} parent=35 // pred_region
          %410 = vst [vmem:[%s319] sm:$0x1] 0.0
          %411 = vst [vmem:[%s322] sm:$0x1] 0.0
        $region44: #{_lambda_.8} parent=35 // pred_fallthru
          _
        %v412 = vld [vmem:[%s319] sm:$0x1]
        %v413 = vadd.f32 %v398, %v401
        %v414 = vrot.slane %v413, 4
        %v415 = vadd.f32 %v413, %v414
        %v416 = vrot.slane %v415, 2
        %v417 = vadd.f32 %v415, %v416
        %v418 = vrot.slane %v417, 1
        %v419 = vadd.f32 %v417, %v418
        %v420 = vadd.f32 %v412, %v419
        %421 = vst [vmem:[%s319] sm:$0x1] %v420
        %v422 = vld [vmem:[%s322] sm:$0x1]
        %v423 = vmul.f32 %v398, %v398
        %v424 = vmul.f32 %v401, %v401
        %v425 = vadd.f32 %v423, %v424
        %v426 = vrot.slane %v425, 4
        %v427 = vadd.f32 %v425, %v426
        %v428 = vrot.slane %v427, 2
        %v429 = vadd.f32 %v427, %v428
        %v430 = vrot.slane %v429, 1
        %v431 = vadd.f32 %v429, %v430
        %v432 = vadd.f32 %v422, %v431
        %433 = vst [vmem:[%s322] sm:$0x1] %v432
        %s434 = smul.u32 2, %s24
        %p435 = scmp.lt.s32.totalorder %s23, 1
        %s436 = scalar_select %p435, %s23, 1
        %p437 = scmp.lt.s32.totalorder %s434, 1
        %s438 = scalar_select %p437, %s434, 1
        %s439 = smul.addr %s436, 2
        %s440 = sadd.s32 %s438, %s439
        %s441 = smul.addr %s440, 8
        %s442 = scalar_lea.vmem %s4, %s441
        %p443 = scmp.lt.s32.totalorder %s23, 1
        %s444 = scalar_select %p443, %s23, 1
        %s445 = scalar_lea.vmem %s5, %s444
        %p446 = scmp.lt.s32.totalorder %s23, 1
        %s447 = scalar_select %p446, %s23, 1
        %s448 = scalar_lea.vmem %s6, %s447
        // Predicated region
        $region45: #{_lambda_.8} parent=35 // pred_check
          %p449 = pneg %p142
        $region46: #{_lambda_.8} parent=35 // pred_check_branch
          %451 = sbr.rel (%p449) target = $region48
        $region47: #{_lambda_.8} parent=35 // pred_region
          %s452 = smul.u32 2, %s24
        $region48: #{_lambda_.8} parent=35 // pred_fallthru
          _
        // Predicated region
        $region49: #{_lambda_.8} parent=35 // pred_check
          %p453 = pneg %p168
        $region50: #{_lambda_.8} parent=35 // pred_check_branch
          %455 = sbr.rel (%p453) target = $region52
        $region51: #{_lambda_.8} parent=35 // pred_region
          _
        $region52: #{_lambda_.8} parent=35 // pred_fallthru
          _
        // Predicated region
        $region53: #{_lambda_.8} parent=35 // pred_check
          %p456 = pneg %p194
        $region54: #{_lambda_.8} parent=35 // pred_check_branch
          %458 = sbr.rel (%p456) target = $region56
        $region55: #{_lambda_.8} parent=35 // pred_region
          _
        $region56: #{_lambda_.8} parent=35 // pred_fallthru
          _
      $region36: #{_lambda_.8} parent=5 // pred_fallthru
        _
      %p459 = scmp.le.s32.totalorder 2, %s14
      // Predicated region
      $region57: #{_lambda_.8} parent=5 // pred_check
        %p460 = pneg %p459
      $region58: #{_lambda_.8} parent=5 // pred_check_branch
        %462 = sbr.rel (%p460) target = $region60
      $region59: #{_lambda_.8} parent=5 // pred_region
        %s463 = ssub.s32 %s14, 2
        // Predicated region
        $region61: #{_lambda_.8} parent=59 // pred_check
          %p464 = pneg %p148
        $region62: #{_lambda_.8} parent=59 // pred_check_branch
          %466 = sbr.rel (%p464) target = $region64
        $region63: #{_lambda_.8} parent=59 // pred_region
          %s467 = smul.u32 2, %s26
          %p468 = scmp.lt.s32.totalorder %s25, 1
          %s469 = scalar_select %p468, %s25, 1
          %p470 = scmp.lt.s32.totalorder %s467, 1
          %s471 = scalar_select %p470, %s467, 1
          %s472 = smul.addr %s469, 2
          %s473 = sadd.s32 %s471, %s472
          %s474 = smul.addr %s473, 8
          %s475 = scalar_lea.vmem %s4, %s474
        $region64: #{_lambda_.8} parent=59 // pred_fallthru
          _
        // Predicated region
        $region65: #{_lambda_.8} parent=59 // pred_check
          %p476 = pneg %p174
        $region66: #{_lambda_.8} parent=59 // pred_check_branch
          %478 = sbr.rel (%p476) target = $region68
        $region67: #{_lambda_.8} parent=59 // pred_region
          %p479 = scmp.lt.s32.totalorder %s25, 1
          %s480 = scalar_select %p479, %s25, 1
          %s481 = scalar_lea.vmem %s5, %s480
        $region68: #{_lambda_.8} parent=59 // pred_fallthru
          _
        // Predicated region
        $region69: #{_lambda_.8} parent=59 // pred_check
          %p482 = pneg %p200
        $region70: #{_lambda_.8} parent=59 // pred_check_branch
          %484 = sbr.rel (%p482) target = $region72
        $region71: #{_lambda_.8} parent=59 // pred_region
          %p485 = scmp.lt.s32.totalorder %s25, 1
          %s486 = scalar_select %p485, %s25, 1
          %s487 = scalar_lea.vmem %s6, %s486
        $region72: #{_lambda_.8} parent=59 // pred_fallthru
          _
      $region60: #{_lambda_.8} parent=5 // pred_fallthru
        _
    $region6: #{_lambda_.8} parent=1 // loop_footer
      %s18 = sadd.s32 1, %s14
    $region7: #{_lambda_.8} parent=1 // loop_footer_branch
      %13 = sbr.rel target = $region3
    $region8: #{_lambda_.8} parent=1 // loop_exit
      _
    %488 = vsyncpa [#allocation3], 1
    %s489 = scalar_lea.sflag [#allocation3], 1
    %490 = vsyncpa %s489, 1

// kernel: _lambda_.9
$region0: #{_lambda_.9}
  #allocation0 [shape = 'u32[]', space=smem, size = 0x4, offset = 0x4, fixed_abs, tag = 'smem constant byte address 0x4 - core index']
  #allocation1 [shape = 'u32[144,128]{1,0:T(1,128)}', space=vmem, size = 0x12000, scoped, tag = 'internal scratch']
  %s0 = inlined_call_operand.vmem [shape: f32[2,16,128], index: 0, kind: input, shape index: {}]
  %s1 = inlined_call_operand.hbm [shape: f32[128,1024], index: 1, kind: input, shape index: {}]
  %s2 = inlined_call_operand.vmem [shape: f32[1,128], index: 2, kind: input, shape index: {}]
  %s3 = inlined_call_operand.vmem [shape: f32[1,128], index: 3, kind: input, shape index: {}]
  %s4 = inlined_call_operand.vmem [shape: f32[2,1,1024], index: 4, kind: output, shape index: {0}]
  %s5 = inlined_call_operand.vmem [shape: f32[2,1,1024], index: 5, kind: output, shape index: {1}]
  %s6 = inlined_call_operand.vmem [shape: f32[2,1,1024], index: 6, kind: output, shape index: {2}]
  %s7 = inlined_call_operand.vmem [shape: f32[2,1,1024], index: 7, kind: output, shape index: {3}]
  %8 = xla_tuple %s4, %s5, %s6, %s7
  %s9 = sld [smem:[#allocation0]]
  $region81: #{_lambda_.9} parent=0
    _
  %s11 = ssub.s32 1, %s9
  %s12 = scalar_select 0, %s11, %s9
  $region1: #{_lambda_.9} parent=0
    #allocation2 [shape = 'u8[524288]{0}', space=vmem, size = 0x80000, scoped, tag = 'input window, operand 1, single buffered']
    #allocation3 [shape = 's32[2]{0}', space=sflag, size = 0x8, scoped, tag = 'scoped memory for _lambda_.9']
    %13 = vsyncpa [#allocation3], 0
    loop: start=0, step=1, limit=4
    $region2: #{_lambda_.9} parent=1 // loop_pre_header
      _
    $region3: #{_lambda_.9} parent=1 // loop_header
      %s15 = sphi 0, %s19
      %p16 = scmp.ge.s32.totalorder %s15, 4
      %s22 = sphi 0, %s34
      %s23 = sphi 0, %s30
      %s24 = sphi 0, %s22
      %s25 = sphi 0, %s23
      %s26 = sphi 0, %s24
      %s27 = sphi 0, %s25
      %s39 = sphi 0, %s41
      %s42 = sphi 0, %s39
      %s43 = sphi 0, %s42
      %s59 = sphi 0, %s43
      %s63 = sphi 0, %s63
      %s65 = sphi 0, %s63
      %s66 = sphi 0, %s65
      %s80 = sphi 0, %s66
      %s84 = sphi 0, %s84
      %s86 = sphi 0, %s84
      %s87 = sphi 0, %s86
      %s101 = sphi 0, %s87
      %s105 = sphi 0, %s105
      %s107 = sphi 0, %s105
      %s108 = sphi 0, %s107
      %s122 = sphi 0, %s108
      %s128 = sphi 0, %s130
      %s131 = sphi 0, %s128
      %s132 = sphi 0, %s131
      %s148 = sphi 0, %s132
      %s154 = sphi 0, %s156
      %s157 = sphi 0, %s154
      %s158 = sphi 0, %s157
      %s174 = sphi 0, %s158
      %s180 = sphi 0, %s182
      %s183 = sphi 0, %s180
      %s184 = sphi 0, %s183
      %s200 = sphi 0, %s184
      %s206 = sphi 0, %s208
      %s209 = sphi 0, %s206
      %s210 = sphi 0, %s209
      %s226 = sphi 0, %s210
    $region4: #{_lambda_.9} parent=1 // loop_header_branch
      %18 = sbr.rel (%p16) target = $region8
    $region5: #{_lambda_.9} parent=1 // loop_body
      %s20 = ssub.s32 %s15, 1
      %s21 = ssub.s32 %s15, 2
      %s28 = sadd.s32 1, %s23
      %p29 = scmp.ge.s32.totalorder %s28, 1
      %s30 = scalar_select %p29, 0, %s28
      %s31 = sadd.s32 1, %s22
      %s32 = scalar_select %p29, %s31, %s22
      %p33 = scmp.ge.s32.totalorder %s32, 2
      %s34 = scalar_select %p33, 0, %s32
      %s35 = ssub.s32 %s22, %s34
      %s36 = ssub.s32 %s23, %s30
      %s37 = sor.u32 %s35, %s36
      %p38 = scmp.eq.s32.totalorder %s37, 0
      %s40 = sadd.s32 %s39, 1
      %s41 = scalar_select %p38, %s39, %s40
      %p44 = pneg %p38
      %p45 = scmp.eq.s32.totalorder %s15, 1
      %p46 = por %p44, %p45
      %p47 = scmp.ne.s32.totalorder %s39, %s42
      %p48 = scmp.eq.s32.totalorder %s15, 0
      %p49 = por %p47, %p48
      %p50 = scmp.ne.s32.totalorder %s39, %s42
      %p51 = scmp.eq.s32.totalorder %s20, 1
      %p52 = por %p50, %p51
      %p53 = scmp.ne.s32.totalorder %s42, %s43
      %p54 = scmp.eq.s32.totalorder %s20, 0
      %p55 = por %p53, %p54
      %p56 = scmp.ne.s32.totalorder %s42, %s43
      %p57 = scmp.eq.s32.totalorder %s21, 1
      %p58 = por %p56, %p57
      %p60 = scmp.ne.s32.totalorder %s43, %s59
      %p61 = scmp.eq.s32.totalorder %s21, 0
      %p62 = por %p60, %p61
      %s64 = sadd.s32 %s63, 1
      %p67 = scmp.eq.s32.totalorder %s15, 1
      %p68 = scmp.ne.s32.totalorder %s63, %s65
      %p69 = scmp.eq.s32.totalorder %s15, 0
      %p70 = por %p68, %p69
      %p71 = scmp.ne.s32.totalorder %s63, %s65
      %p72 = scmp.eq.s32.totalorder %s20, 1
      %p73 = por %p71, %p72
      %p74 = scmp.ne.s32.totalorder %s65, %s66
      %p75 = scmp.eq.s32.totalorder %s20, 0
      %p76 = por %p74, %p75
      %p77 = scmp.ne.s32.totalorder %s65, %s66
      %p78 = scmp.eq.s32.totalorder %s21, 1
      %p79 = por %p77, %p78
      %p81 = scmp.ne.s32.totalorder %s66, %s80
      %p82 = scmp.eq.s32.totalorder %s21, 0
      %p83 = por %p81, %p82
      %s85 = sadd.s32 %s84, 1
      %p88 = scmp.eq.s32.totalorder %s15, 1
      %p89 = scmp.ne.s32.totalorder %s84, %s86
      %p90 = scmp.eq.s32.totalorder %s15, 0
      %p91 = por %p89, %p90
      %p92 = scmp.ne.s32.totalorder %s84, %s86
      %p93 = scmp.eq.s32.totalorder %s20, 1
      %p94 = por %p92, %p93
      %p95 = scmp.ne.s32.totalorder %s86, %s87
      %p96 = scmp.eq.s32.totalorder %s20, 0
      %p97 = por %p95, %p96
      %p98 = scmp.ne.s32.totalorder %s86, %s87
      %p99 = scmp.eq.s32.totalorder %s21, 1
      %p100 = por %p98, %p99
      %p102 = scmp.ne.s32.totalorder %s87, %s101
      %p103 = scmp.eq.s32.totalorder %s21, 0
      %p104 = por %p102, %p103
      %s106 = sadd.s32 %s105, 1
      %p109 = scmp.eq.s32.totalorder %s15, 1
      %p110 = scmp.ne.s32.totalorder %s105, %s107
      %p111 = scmp.eq.s32.totalorder %s15, 0
      %p112 = por %p110, %p111
      %p113 = scmp.ne.s32.totalorder %s105, %s107
      %p114 = scmp.eq.s32.totalorder %s20, 1
      %p115 = por %p113, %p114
      %p116 = scmp.ne.s32.totalorder %s107, %s108
      %p117 = scmp.eq.s32.totalorder %s20, 0
      %p118 = por %p116, %p117
      %p119 = scmp.ne.s32.totalorder %s107, %s108
      %p120 = scmp.eq.s32.totalorder %s21, 1
      %p121 = por %p119, %p120
      %p123 = scmp.ne.s32.totalorder %s108, %s122
      %p124 = scmp.eq.s32.totalorder %s21, 0
      %p125 = por %p123, %p124
      %s126 = ssub.s32 %s22, %s34
      %p127 = scmp.eq.s32.totalorder %s126, 0
      %s129 = sadd.s32 %s128, 1
      %s130 = scalar_select %p127, %s128, %s129
      %p133 = pneg %p127
      %p134 = scmp.eq.s32.totalorder %s15, 1
      %p135 = por %p133, %p134
      %p136 = scmp.ne.s32.totalorder %s128, %s131
      %p137 = scmp.eq.s32.totalorder %s15, 0
      %p138 = por %p136, %p137
      %p139 = scmp.ne.s32.totalorder %s128, %s131
      %p140 = scmp.eq.s32.totalorder %s20, 1
      %p141 = por %p139, %p140
      %p142 = scmp.ne.s32.totalorder %s131, %s132
      %p143 = scmp.eq.s32.totalorder %s20, 0
      %p144 = por %p142, %p143
      %p145 = scmp.ne.s32.totalorder %s131, %s132
      %p146 = scmp.eq.s32.totalorder %s21, 1
      %p147 = por %p145, %p146
      %p149 = scmp.ne.s32.totalorder %s132, %s148
      %p150 = scmp.eq.s32.totalorder %s21, 0
      %p151 = por %p149, %p150
      %s152 = ssub.s32 %s22, %s34
      %p153 = scmp.eq.s32.totalorder %s152, 0
      %s155 = sadd.s32 %s154, 1
      %s156 = scalar_select %p153, %s154, %s155
      %p159 = pneg %p153
      %p160 = scmp.eq.s32.totalorder %s15, 1
      %p161 = por %p159, %p160
      %p162 = scmp.ne.s32.totalorder %s154, %s157
      %p163 = scmp.eq.s32.totalorder %s15, 0
      %p164 = por %p162, %p163
      %p165 = scmp.ne.s32.totalorder %s154, %s157
      %p166 = scmp.eq.s32.totalorder %s20, 1
      %p167 = por %p165, %p166
      %p168 = scmp.ne.s32.totalorder %s157, %s158
      %p169 = scmp.eq.s32.totalorder %s20, 0
      %p170 = por %p168, %p169
      %p171 = scmp.ne.s32.totalorder %s157, %s158
      %p172 = scmp.eq.s32.totalorder %s21, 1
      %p173 = por %p171, %p172
      %p175 = scmp.ne.s32.totalorder %s158, %s174
      %p176 = scmp.eq.s32.totalorder %s21, 0
      %p177 = por %p175, %p176
      %s178 = ssub.s32 %s22, %s34
      %p179 = scmp.eq.s32.totalorder %s178, 0
      %s181 = sadd.s32 %s180, 1
      %s182 = scalar_select %p179, %s180, %s181
      %p185 = pneg %p179
      %p186 = scmp.eq.s32.totalorder %s15, 1
      %p187 = por %p185, %p186
      %p188 = scmp.ne.s32.totalorder %s180, %s183
      %p189 = scmp.eq.s32.totalorder %s15, 0
      %p190 = por %p188, %p189
      %p191 = scmp.ne.s32.totalorder %s180, %s183
      %p192 = scmp.eq.s32.totalorder %s20, 1
      %p193 = por %p191, %p192
      %p194 = scmp.ne.s32.totalorder %s183, %s184
      %p195 = scmp.eq.s32.totalorder %s20, 0
      %p196 = por %p194, %p195
      %p197 = scmp.ne.s32.totalorder %s183, %s184
      %p198 = scmp.eq.s32.totalorder %s21, 1
      %p199 = por %p197, %p198
      %p201 = scmp.ne.s32.totalorder %s184, %s200
      %p202 = scmp.eq.s32.totalorder %s21, 0
      %p203 = por %p201, %p202
      %s204 = ssub.s32 %s22, %s34
      %p205 = scmp.eq.s32.totalorder %s204, 0
      %s207 = sadd.s32 %s206, 1
      %s208 = scalar_select %p205, %s206, %s207
      %p211 = pneg %p205
      %p212 = scmp.eq.s32.totalorder %s15, 1
      %p213 = por %p211, %p212
      %p214 = scmp.ne.s32.totalorder %s206, %s209
      %p215 = scmp.eq.s32.totalorder %s15, 0
      %p216 = por %p214, %p215
      %p217 = scmp.ne.s32.totalorder %s206, %s209
      %p218 = scmp.eq.s32.totalorder %s20, 1
      %p219 = por %p217, %p218
      %p220 = scmp.ne.s32.totalorder %s209, %s210
      %p221 = scmp.eq.s32.totalorder %s20, 0
      %p222 = por %p220, %p221
      %p223 = scmp.ne.s32.totalorder %s209, %s210
      %p224 = scmp.eq.s32.totalorder %s21, 1
      %p225 = por %p223, %p224
      %p227 = scmp.ne.s32.totalorder %s210, %s226
      %p228 = scmp.eq.s32.totalorder %s21, 0
      %p229 = por %p227, %p228
      %p230 = scmp.le.s32.totalorder 1, %s15
      %p231 = scmp.lt.s32.totalorder %s15, 3
      %p232 = pnand %p230, %p231
      %p233 = pneg %p232
      // Predicated region
      $region9: #{_lambda_.9} parent=5 // pred_check
        _
      $region10: #{_lambda_.9} parent=5 // pred_check_branch
        %235 = sbr.rel (%p232) target = $region12
      $region11: #{_lambda_.9} parent=5 // pred_region
        %s236 = ssub.s32 %s15, 1
        // Predicated region
        $region13: #{_lambda_.9} parent=11 // pred_check
          %p237 = pneg %p76
        $region14: #{_lambda_.9} parent=11 // pred_check_branch
          %239 = sbr.rel (%p237) target = $region16
        $region15: #{_lambda_.9} parent=11 // pred_region
          %s241 = ssub.s32 16384, 16384
          %242 = vsyncadd [#allocation3], %s241
          %s243 = sshll.u32 [#allocation2], 4
          %s244 = int_to_ptr.vmem [resolvable:$true] %s243
          %249 = dma.hbm_to_vmem [thread:$0]  %s1, 16384, %s244, [#allocation3], 1024, 1024, 64
        $region16: #{_lambda_.9} parent=11 // pred_fallthru
          _
        // Predicated region
        $region17: #{_lambda_.9} parent=11 // pred_check
          %p250 = pneg %p97
        $region18: #{_lambda_.9} parent=11 // pred_check_branch
          %252 = sbr.rel (%p250) target = $region20
        $region19: #{_lambda_.9} parent=11 // pred_region
          _
        $region20: #{_lambda_.9} parent=11 // pred_fallthru
          _
        // Predicated region
        $region21: #{_lambda_.9} parent=11 // pred_check
          %p253 = pneg %p118
        $region22: #{_lambda_.9} parent=11 // pred_check_branch
          %255 = sbr.rel (%p253) target = $region24
        $region23: #{_lambda_.9} parent=11 // pred_region
          _
        $region24: #{_lambda_.9} parent=11 // pred_fallthru
          _
      $region12: #{_lambda_.9} parent=5 // pred_fallthru
        _
      %p256 = scmp.lt.s32.totalorder %s15, 2
      // Predicated region
      $region25: #{_lambda_.9} parent=5 // pred_check
        %p257 = pneg %p256
      $region26: #{_lambda_.9} parent=5 // pred_check_branch
        %259 = sbr.rel (%p257) target = $region28
      $region27: #{_lambda_.9} parent=5 // pred_region
        // Predicated region
        $region29: #{_lambda_.9} parent=27 // pred_check
          %p260 = pneg %p49
        $region30: #{_lambda_.9} parent=27 // pred_check_branch
          %262 = sbr.rel (%p260) target = $region32
        $region31: #{_lambda_.9} parent=27 // pred_region
          %s263 = smul.u32 2, %s23
          %p264 = scmp.lt.s32.totalorder %s22, 1
          %s265 = scalar_select %p264, %s22, 1
          %p266 = scmp.lt.s32.totalorder %s263, 1
          %s267 = scalar_select %p266, %s263, 1
          %s268 = smul.addr %s265, 2
          %s269 = sadd.s32 %s267, %s268
          %s270 = smul.addr %s269, 8
          %s271 = scalar_lea.vmem %s0, %s270
          %s272 = smul.u32 2, %s23
        $region32: #{_lambda_.9} parent=27 // pred_fallthru
          _
      $region28: #{_lambda_.9} parent=5 // pred_fallthru
        _
      %p273 = scmp.le.s32.totalorder 1, %s15
      %p274 = scmp.lt.s32.totalorder %s15, 3
      %p275 = pnand %p273, %p274
      %p276 = pneg %p275
      // Predicated region
      $region33: #{_lambda_.9} parent=5 // pred_check
        _
      $region34: #{_lambda_.9} parent=5 // pred_check_branch
        %278 = sbr.rel (%p275) target = $region36
      $region35: #{_lambda_.9} parent=5 // pred_region
        %s279 = ssub.s32 %s15, 1
        // Predicated region
        $region37: #{_lambda_.9} parent=35 // pred_check
          %p280 = pneg %p76
        $region38: #{_lambda_.9} parent=35 // pred_check_branch
          %282 = sbr.rel (%p280) target = $region40
        $region39: #{_lambda_.9} parent=35 // pred_region
          %283 = dma.done [#allocation3], 16384
        $region40: #{_lambda_.9} parent=35 // pred_fallthru
          _
        %s284 = smul.u32 2, %s25
        %p285 = scmp.lt.s32.totalorder %s24, 1
        %s286 = scalar_select %p285, %s24, 1
        %p287 = scmp.lt.s32.totalorder %s284, 1
        %s288 = scalar_select %p287, %s284, 1
        %s289 = smul.addr %s286, 2
        %s290 = sadd.s32 %s288, %s289
        %s291 = smul.addr %s290, 8
        %s292 = scalar_lea.vmem %s0, %s291
        %p293 = pneg %p55
        %p294 = pneg %p52
        %p295 = pneg %p76
        %p296 = pneg %p73
        %p297 = pneg %p97
        %p298 = pneg %p94
        %p299 = pneg %p118
        %p300 = pneg %p115
        %p301 = pneg %p144
        %p302 = pneg %p141
        %p303 = scmp.lt.s32.totalorder %s24, 1
        %s304 = scalar_select %p303, %s24, 1
        %s305 = smul.addr %s304, 8
        %s306 = scalar_lea.vmem %s4, %s305
        %p307 = pneg %p170
        %p308 = pneg %p167
        %p309 = scmp.lt.s32.totalorder %s24, 1
        %s310 = scalar_select %p309, %s24, 1
        %s311 = smul.addr %s310, 8
        %s312 = scalar_lea.vmem %s5, %s311
        %p313 = pneg %p196
        %p314 = pneg %p193
        %p315 = scmp.lt.s32.totalorder %s24, 1
        %s316 = scalar_select %p315, %s24, 1
        %s317 = smul.addr %s316, 8
        %s318 = scalar_lea.vmem %s6, %s317
        %p319 = pneg %p222
        %p320 = pneg %p219
        %p321 = scmp.lt.s32.totalorder %s24, 1
        %s322 = scalar_select %p321, %s24, 1
        %s323 = smul.addr %s322, 8
        %s324 = scalar_lea.vmem %s7, %s323
        %s325 = smul.u32 2, %s25
        %p326 = scmp.lt.s32.totalorder %s24, 1
        %s327 = scalar_select %p326, %s24, 1
        %p328 = scmp.lt.s32.totalorder %s325, 1
        %s329 = scalar_select %p328, %s325, 1
        %s330 = smul.addr %s327, 2
        %s331 = sadd.s32 %s329, %s330
        %s332 = smul.addr %s331, 8
        %s333 = scalar_lea.vmem %s0, %s332
        %s334 = smul.u32 2, %s25
        %p335 = scmp.lt.s32.totalorder %s24, 1
        %s336 = scalar_select %p335, %s24, 1
        %s337 = smul.addr %s336, 8
        %s338 = scalar_lea.vmem %s4, %s337
        %p339 = scmp.lt.s32.totalorder %s24, 1
        %s340 = scalar_select %p339, %s24, 1
        %s341 = smul.addr %s340, 8
        %s342 = scalar_lea.vmem %s5, %s341
        %p343 = scmp.lt.s32.totalorder %s24, 1
        %s344 = scalar_select %p343, %s24, 1
        %s345 = smul.addr %s344, 8
        %s346 = scalar_lea.vmem %s6, %s345
        %p347 = scmp.lt.s32.totalorder %s24, 1
        %s348 = scalar_select %p347, %s24, 1
        %s349 = smul.addr %s348, 8
        %s350 = scalar_lea.vmem %s7, %s349
        %v352 = vld [vmem:[%s333] sm:$0xff]
        %v353 = vld [vmem:[%s333 + $0x8] sm:$0xff]
        %v354 = vld [vmem:[%s2] sm:$0x1]
        %v356 = vlaneseq
        %v357 = vshrl.u32 %v356, 7
        %v358 = vsub.s32 0, %v357
        %v359 = vrot.slane %v354, %v358
        %v361 = vmul.f32 %v352, %v359
        %v362 = vmul.f32 %v353, %v359
        %v363 = vld [vmem:[%s3] sm:$0x1]
        %v365 = vlaneseq
        %v366 = vshrl.u32 %v365, 7
        %v367 = vsub.s32 0, %v366
        %v368 = vrot.slane %v363, %v367
        %v370 = vadd.f32 %v361, %v368
        %v371 = vadd.f32 %v362, %v368
        %v372 = vmax.f32 %v370, 0.0
        %v373 = vmax.f32 %v371, 0.0
        %v374 = vld [vmem:[#allocation2] sm:$0xff]
        %v375 = vld [vmem:[#allocation2 + $0x8] sm:$0xff]
        %v376 = vld [vmem:[#allocation2 + $0x10] sm:$0xff]
        %v377 = vld [vmem:[#allocation2 + $0x18] sm:$0xff]
        %v378 = vld [vmem:[#allocation2 + $0x20] sm:$0xff]
        %v379 = vld [vmem:[#allocation2 + $0x28] sm:$0xff]
        %v380 = vld [vmem:[#allocation2 + $0x30] sm:$0xff]
        %v381 = vld [vmem:[#allocation2 + $0x38] sm:$0xff]
        %v382 = vld [vmem:[#allocation2 + $0x40] sm:$0xff]
        %v383 = vld [vmem:[#allocation2 + $0x48] sm:$0xff]
        %v384 = vld [vmem:[#allocation2 + $0x50] sm:$0xff]
        %v385 = vld [vmem:[#allocation2 + $0x58] sm:$0xff]
        %v386 = vld [vmem:[#allocation2 + $0x60] sm:$0xff]
        %v387 = vld [vmem:[#allocation2 + $0x68] sm:$0xff]
        %v388 = vld [vmem:[#allocation2 + $0x70] sm:$0xff]
        %v389 = vld [vmem:[#allocation2 + $0x78] sm:$0xff]
        %v390 = vld [vmem:[#allocation2 + $0x80] sm:$0xff]
        %v391 = vld [vmem:[#allocation2 + $0x88] sm:$0xff]
        %v392 = vld [vmem:[#allocation2 + $0x90] sm:$0xff]
        %v393 = vld [vmem:[#allocation2 + $0x98] sm:$0xff]
        %v394 = vld [vmem:[#allocation2 + $0xa0] sm:$0xff]
        %v395 = vld [vmem:[#allocation2 + $0xa8] sm:$0xff]
        %v396 = vld [vmem:[#allocation2 + $0xb0] sm:$0xff]
        %v397 = vld [vmem:[#allocation2 + $0xb8] sm:$0xff]
        %v398 = vld [vmem:[#allocation2 + $0xc0] sm:$0xff]
        %v399 = vld [vmem:[#allocation2 + $0xc8] sm:$0xff]
        %v400 = vld [vmem:[#allocation2 + $0xd0] sm:$0xff]
        %v401 = vld [vmem:[#allocation2 + $0xd8] sm:$0xff]
        %v402 = vld [vmem:[#allocation2 + $0xe0] sm:$0xff]
        %v403 = vld [vmem:[#allocation2 + $0xe8] sm:$0xff]
        %v404 = vld [vmem:[#allocation2 + $0xf0] sm:$0xff]
        %v405 = vld [vmem:[#allocation2 + $0xf8] sm:$0xff]
        %v406 = vld [vmem:[#allocation2 + $0x100] sm:$0xff]
        %v407 = vld [vmem:[#allocation2 + $0x108] sm:$0xff]
        %v408 = vld [vmem:[#allocation2 + $0x110] sm:$0xff]
        %v409 = vld [vmem:[#allocation2 + $0x118] sm:$0xff]
        %v410 = vld [vmem:[#allocation2 + $0x120] sm:$0xff]
        %v411 = vld [vmem:[#allocation2 + $0x128] sm:$0xff]
        %v412 = vld [vmem:[#allocation2 + $0x130] sm:$0xff]
        %v413 = vld [vmem:[#allocation2 + $0x138] sm:$0xff]
        %v414 = vld [vmem:[#allocation2 + $0x140] sm:$0xff]
        %v415 = vld [vmem:[#allocation2 + $0x148] sm:$0xff]
        %v416 = vld [vmem:[#allocation2 + $0x150] sm:$0xff]
        %v417 = vld [vmem:[#allocation2 + $0x158] sm:$0xff]
        %v418 = vld [vmem:[#allocation2 + $0x160] sm:$0xff]
        %v419 = vld [vmem:[#allocation2 + $0x168] sm:$0xff]
        %v420 = vld [vmem:[#allocation2 + $0x170] sm:$0xff]
        %v421 = vld [vmem:[#allocation2 + $0x178] sm:$0xff]
        %v422 = vld [vmem:[#allocation2 + $0x180] sm:$0xff]
        %v423 = vld [vmem:[#allocation2 + $0x188] sm:$0xff]
        %v424 = vld [vmem:[#allocation2 + $0x190] sm:$0xff]
        %v425 = vld [vmem:[#allocation2 + $0x198] sm:$0xff]
        %v426 = vld [vmem:[#allocation2 + $0x1a0] sm:$0xff]
        %v427 = vld [vmem:[#allocation2 + $0x1a8] sm:$0xff]
        %v428 = vld [vmem:[#allocation2 + $0x1b0] sm:$0xff]
        %v429 = vld [vmem:[#allocation2 + $0x1b8] sm:$0xff]
        %v430 = vld [vmem:[#allocation2 + $0x1c0] sm:$0xff]
        %v431 = vld [vmem:[#allocation2 + $0x1c8] sm:$0xff]
        %v432 = vld [vmem:[#allocation2 + $0x1d0] sm:$0xff]
        %v433 = vld [vmem:[#allocation2 + $0x1d8] sm:$0xff]
        %v434 = vld [vmem:[#allocation2 + $0x1e0] sm:$0xff]
        %v435 = vld [vmem:[#allocation2 + $0x1e8] sm:$0xff]
        %v436 = vld [vmem:[#allocation2 + $0x1f0] sm:$0xff]
        %v437 = vld [vmem:[#allocation2 + $0x1f8] sm:$0xff]
        %v438 = vld [vmem:[#allocation2 + $0x200] sm:$0xff]
        %v439 = vld [vmem:[#allocation2 + $0x208] sm:$0xff]
        %v440 = vld [vmem:[#allocation2 + $0x210] sm:$0xff]
        %v441 = vld [vmem:[#allocation2 + $0x218] sm:$0xff]
        %v442 = vld [vmem:[#allocation2 + $0x220] sm:$0xff]
        %v443 = vld [vmem:[#allocation2 + $0x228] sm:$0xff]
        %v444 = vld [vmem:[#allocation2 + $0x230] sm:$0xff]
        %v445 = vld [vmem:[#allocation2 + $0x238] sm:$0xff]
        %v446 = vld [vmem:[#allocation2 + $0x240] sm:$0xff]
        %v447 = vld [vmem:[#allocation2 + $0x248] sm:$0xff]
        %v448 = vld [vmem:[#allocation2 + $0x250] sm:$0xff]
        %v449 = vld [vmem:[#allocation2 + $0x258] sm:$0xff]
        %v450 = vld [vmem:[#allocation2 + $0x260] sm:$0xff]
        %v451 = vld [vmem:[#allocation2 + $0x268] sm:$0xff]
        %v452 = vld [vmem:[#allocation2 + $0x270] sm:$0xff]
        %v453 = vld [vmem:[#allocation2 + $0x278] sm:$0xff]
        %v454 = vld [vmem:[#allocation2 + $0x280] sm:$0xff]
        %v455 = vld [vmem:[#allocation2 + $0x288] sm:$0xff]
        %v456 = vld [vmem:[#allocation2 + $0x290] sm:$0xff]
        %v457 = vld [vmem:[#allocation2 + $0x298] sm:$0xff]
        %v458 = vld [vmem:[#allocation2 + $0x2a0] sm:$0xff]
        %v459 = vld [vmem:[#allocation2 + $0x2a8] sm:$0xff]
        %v460 = vld [vmem:[#allocation2 + $0x2b0] sm:$0xff]
        %v461 = vld [vmem:[#allocation2 + $0x2b8] sm:$0xff]
        %v462 = vld [vmem:[#allocation2 + $0x2c0] sm:$0xff]
        %v463 = vld [vmem:[#allocation2 + $0x2c8] sm:$0xff]
        %v464 = vld [vmem:[#allocation2 + $0x2d0] sm:$0xff]
        %v465 = vld [vmem:[#allocation2 + $0x2d8] sm:$0xff]
        %v466 = vld [vmem:[#allocation2 + $0x2e0] sm:$0xff]
        %v467 = vld [vmem:[#allocation2 + $0x2e8] sm:$0xff]
        %v468 = vld [vmem:[#allocation2 + $0x2f0] sm:$0xff]
        %v469 = vld [vmem:[#allocation2 + $0x2f8] sm:$0xff]
        %v470 = vld [vmem:[#allocation2 + $0x300] sm:$0xff]
        %v471 = vld [vmem:[#allocation2 + $0x308] sm:$0xff]
        %v472 = vld [vmem:[#allocation2 + $0x310] sm:$0xff]
        %v473 = vld [vmem:[#allocation2 + $0x318] sm:$0xff]
        %v474 = vld [vmem:[#allocation2 + $0x320] sm:$0xff]
        %v475 = vld [vmem:[#allocation2 + $0x328] sm:$0xff]
        %v476 = vld [vmem:[#allocation2 + $0x330] sm:$0xff]
        %v477 = vld [vmem:[#allocation2 + $0x338] sm:$0xff]
        %v478 = vld [vmem:[#allocation2 + $0x340] sm:$0xff]
        %v479 = vld [vmem:[#allocation2 + $0x348] sm:$0xff]
        %v480 = vld [vmem:[#allocation2 + $0x350] sm:$0xff]
        %v481 = vld [vmem:[#allocation2 + $0x358] sm:$0xff]
        %v482 = vld [vmem:[#allocation2 + $0x360] sm:$0xff]
        %v483 = vld [vmem:[#allocation2 + $0x368] sm:$0xff]
        %v484 = vld [vmem:[#allocation2 + $0x370] sm:$0xff]
        %v485 = vld [vmem:[#allocation2 + $0x378] sm:$0xff]
        %v486 = vld [vmem:[#allocation2 + $0x380] sm:$0xff]
        %v487 = vld [vmem:[#allocation2 + $0x388] sm:$0xff]
        %v488 = vld [vmem:[#allocation2 + $0x390] sm:$0xff]
        %v489 = vld [vmem:[#allocation2 + $0x398] sm:$0xff]
        %v490 = vld [vmem:[#allocation2 + $0x3a0] sm:$0xff]
        %v491 = vld [vmem:[#allocation2 + $0x3a8] sm:$0xff]
        %v492 = vld [vmem:[#allocation2 + $0x3b0] sm:$0xff]
        %v493 = vld [vmem:[#allocation2 + $0x3b8] sm:$0xff]
        %v494 = vld [vmem:[#allocation2 + $0x3c0] sm:$0xff]
        %v495 = vld [vmem:[#allocation2 + $0x3c8] sm:$0xff]
        %v496 = vld [vmem:[#allocation2 + $0x3d0] sm:$0xff]
        %v497 = vld [vmem:[#allocation2 + $0x3d8] sm:$0xff]
        %v498 = vld [vmem:[#allocation2 + $0x3e0] sm:$0xff]
        %v499 = vld [vmem:[#allocation2 + $0x3e8] sm:$0xff]
        %v500 = vld [vmem:[#allocation2 + $0x3f0] sm:$0xff]
        %v501 = vld [vmem:[#allocation2 + $0x3f8] sm:$0xff]
        %v502 = vpack.c.bf16 %v373, %v372
        %v503 = vpack.c.bf16 %v382, %v374
        %v504 = vpack.c.bf16 %v383, %v375
        %v505 = vpack.c.bf16 %v384, %v376
        %v506 = vpack.c.bf16 %v385, %v377
        %v507 = vpack.c.bf16 %v386, %v378
        %v508 = vpack.c.bf16 %v387, %v379
        %v509 = vpack.c.bf16 %v388, %v380
        %v510 = vpack.c.bf16 %v389, %v381
        %v511 = vpack.c.bf16 %v398, %v390
        %v512 = vpack.c.bf16 %v399, %v391
        %v513 = vpack.c.bf16 %v400, %v392
        %v514 = vpack.c.bf16 %v401, %v393
        %v515 = vpack.c.bf16 %v402, %v394
        %v516 = vpack.c.bf16 %v403, %v395
        %v517 = vpack.c.bf16 %v404, %v396
        %v518 = vpack.c.bf16 %v405, %v397
        %v519 = vpack.c.bf16 %v414, %v406
        %v520 = vpack.c.bf16 %v415, %v407
        %v521 = vpack.c.bf16 %v416, %v408
        %v522 = vpack.c.bf16 %v417, %v409
        %v523 = vpack.c.bf16 %v418, %v410
        %v524 = vpack.c.bf16 %v419, %v411
        %v525 = vpack.c.bf16 %v420, %v412
        %v526 = vpack.c.bf16 %v421, %v413
        %v527 = vpack.c.bf16 %v430, %v422
        %v528 = vpack.c.bf16 %v431, %v423
        %v529 = vpack.c.bf16 %v432, %v424
        %v530 = vpack.c.bf16 %v433, %v425
        %v531 = vpack.c.bf16 %v434, %v426
        %v532 = vpack.c.bf16 %v435, %v427
        %v533 = vpack.c.bf16 %v436, %v428
        %v534 = vpack.c.bf16 %v437, %v429
        %v535 = vpack.c.bf16 %v446, %v438
        %v536 = vpack.c.bf16 %v447, %v439
        %v537 = vpack.c.bf16 %v448, %v440
        %v538 = vpack.c.bf16 %v449, %v441
        %v539 = vpack.c.bf16 %v450, %v442
        %v540 = vpack.c.bf16 %v451, %v443
        %v541 = vpack.c.bf16 %v452, %v444
        %v542 = vpack.c.bf16 %v453, %v445
        %v543 = vpack.c.bf16 %v462, %v454
        %v544 = vpack.c.bf16 %v463, %v455
        %v545 = vpack.c.bf16 %v464, %v456
        %v546 = vpack.c.bf16 %v465, %v457
        %v547 = vpack.c.bf16 %v466, %v458
        %v548 = vpack.c.bf16 %v467, %v459
        %v549 = vpack.c.bf16 %v468, %v460
        %v550 = vpack.c.bf16 %v469, %v461
        %v551 = vpack.c.bf16 %v478, %v470
        %v552 = vpack.c.bf16 %v479, %v471
        %v553 = vpack.c.bf16 %v480, %v472
        %v554 = vpack.c.bf16 %v481, %v473
        %v555 = vpack.c.bf16 %v482, %v474
        %v556 = vpack.c.bf16 %v483, %v475
        %v557 = vpack.c.bf16 %v484, %v476
        %v558 = vpack.c.bf16 %v485, %v477
        %v559 = vpack.c.bf16 %v494, %v486
        %v560 = vpack.c.bf16 %v495, %v487
        %v561 = vpack.c.bf16 %v496, %v488
        %v562 = vpack.c.bf16 %v497, %v489
        %v563 = vpack.c.bf16 %v498, %v490
        %v564 = vpack.c.bf16 %v499, %v491
        %v565 = vpack.c.bf16 %v500, %v492
        %v566 = vpack.c.bf16 %v501, %v493
        %567 = vmatprep.subr.bf16.mxu0 %v504
        %568 = vmatpush1.bf16.msra.mxu0 %v503
        %569 = vmatprep.subr.bf16.mxu0 %v512
        %570 = vmatpush1.bf16.msra.mxu0 %v511
        %571 = vmatprep.subr.bf16.mxu0 %v520
        %572 = vmatpush1.bf16.msra.mxu0 %v519
        %573 = vmatprep.subr.bf16.mxu0 %v528
        %574 = vmatpush1.bf16.msra.mxu0 %v527
        %575 = vmatprep.subr.bf16.mxu0 %v536
        %576 = vmatpush1.bf16.msra.mxu0 %v535
        %577 = vmatprep.subr.bf16.mxu0 %v544
        %578 = vmatpush1.bf16.msra.mxu0 %v543
        %579 = vmatprep.subr.bf16.mxu0 %v552
        %580 = vmatpush1.bf16.msra.mxu0 %v551
        %581 = vmatprep.subr.bf16.mxu0 %v560
        %582 = vmatpush1.bf16.msra.mxu0 %v559
        %583 = vmatprep.subr.bf16.mxu0 0
        %584 = vmatpush1.bf16.msra.mxu0 0
        %585 = vmatprep.subr.bf16.mxu0 0
        %586 = vmatpush1.bf16.msra.mxu0 0
        %587 = vmatprep.subr.bf16.mxu0 0
        %588 = vmatpush1.bf16.msra.mxu0 0
        %589 = vmatprep.subr.bf16.mxu0 0
        %590 = vmatpush1.bf16.msra.mxu0 0
        %591 = vmatprep.subr.bf16.mxu0 0
        %592 = vmatpush1.bf16.msra.mxu0 0
        %593 = vmatprep.subr.bf16.mxu0 0
        %594 = vmatpush1.bf16.msra.mxu0 0
        %595 = vmatprep.subr.bf16.mxu0 0
        %596 = vmatpush1.bf16.msra.mxu0 0
        %597 = vmatprep.subr.bf16.mxu0 0
        %598 = vmatpush1.bf16.msra.mxu0 0
        %599 = vmatprep.mubr.bf16.mxu0 0
        %600 = vmatmul.mubr.bf16.gmra.mrb[0].mxu0 %v502
        %v601 = vpop.f32.mrb[0].mxu0
        %v602 = vadd.f32 0.0, %v601
        %v603 = vpop.f32.mrb[0].mxu0
        %v604 = vadd.f32 0.0, %v603
        %v605 = vpop.f32.mrb[0].mxu0
        %v606 = vadd.f32 0.0, %v605
        %v607 = vpop.f32.mrb[0].mxu0
        %v608 = vadd.f32 0.0, %v607
        %609 = vdwg.mxu0
        %610 = vmatprep.subr.bf16.mxu0 %v506
        %611 = vmatpush1.bf16.msra.mxu0 %v505
        %612 = vmatprep.subr.bf16.mxu0 %v514
        %613 = vmatpush1.bf16.msra.mxu0 %v513
        %614 = vmatprep.subr.bf16.mxu0 %v522
        %615 = vmatpush1.bf16.msra.mxu0 %v521
        %616 = vmatprep.subr.bf16.mxu0 %v530
        %617 = vmatpush1.bf16.msra.mxu0 %v529
        %618 = vmatprep.subr.bf16.mxu0 %v538
        %619 = vmatpush1.bf16.msra.mxu0 %v537
        %620 = vmatprep.subr.bf16.mxu0 %v546
        %621 = vmatpush1.bf16.msra.mxu0 %v545
        %622 = vmatprep.subr.bf16.mxu0 %v554
        %623 = vmatpush1.bf16.msra.mxu0 %v553
        %624 = vmatprep.subr.bf16.mxu0 %v562
        %625 = vmatpush1.bf16.msra.mxu0 %v561
        %626 = vmatprep.subr.bf16.mxu0 0
        %627 = vmatpush1.bf16.msra.mxu0 0
        %628 = vmatprep.subr.bf16.mxu0 0
        %629 = vmatpush1.bf16.msra.mxu0 0
        %630 = vmatprep.subr.bf16.mxu0 0
        %631 = vmatpush1.bf16.msra.mxu0 0
        %632 = vmatprep.subr.bf16.mxu0 0
        %633 = vmatpush1.bf16.msra.mxu0 0
        %634 = vmatprep.subr.bf16.mxu0 0
        %635 = vmatpush1.bf16.msra.mxu0 0
        %636 = vmatprep.subr.bf16.mxu0 0
        %637 = vmatpush1.bf16.msra.mxu0 0
        %638 = vmatprep.subr.bf16.mxu0 0
        %639 = vmatpush1.bf16.msra.mxu0 0
        %640 = vmatprep.subr.bf16.mxu0 0
        %641 = vmatpush1.bf16.msra.mxu0 0
        %642 = vmatprep.mubr.bf16.mxu0 0
        %643 = vmatmul.mubr.bf16.gmra.mrb[0].mxu0 %v502
        %v644 = vpop.f32.mrb[0].mxu0
        %v645 = vadd.f32 0.0, %v644
        %v646 = vpop.f32.mrb[0].mxu0
        %v647 = vadd.f32 0.0, %v646
        %v648 = vpop.f32.mrb[0].mxu0
        %v649 = vadd.f32 0.0, %v648
        %v650 = vpop.f32.mrb[0].mxu0
        %v651 = vadd.f32 0.0, %v650
        %652 = vdwg.mxu0
        %653 = vmatprep.subr.bf16.mxu0 %v508
        %654 = vmatpush1.bf16.msra.mxu0 %v507
        %655 = vmatprep.subr.bf16.mxu0 %v516
        %656 = vmatpush1.bf16.msra.mxu0 %v515
        %657 = vmatprep.subr.bf16.mxu0 %v524
        %658 = vmatpush1.bf16.msra.mxu0 %v523
        %659 = vmatprep.subr.bf16.mxu0 %v532
        %660 = vmatpush1.bf16.msra.mxu0 %v531
        %661 = vmatprep.subr.bf16.mxu0 %v540
        %662 = vmatpush1.bf16.msra.mxu0 %v539
        %663 = vmatprep.subr.bf16.mxu0 %v548
        %664 = vmatpush1.bf16.msra.mxu0 %v547
        %665 = vmatprep.subr.bf16.mxu0 %v556
        %666 = vmatpush1.bf16.msra.mxu0 %v555
        %667 = vmatprep.subr.bf16.mxu0 %v564
        %668 = vmatpush1.bf16.msra.mxu0 %v563
        %669 = vmatprep.subr.bf16.mxu0 0
        %670 = vmatpush1.bf16.msra.mxu0 0
        %671 = vmatprep.subr.bf16.mxu0 0
        %672 = vmatpush1.bf16.msra.mxu0 0
        %673 = vmatprep.subr.bf16.mxu0 0
        %674 = vmatpush1.bf16.msra.mxu0 0
        %675 = vmatprep.subr.bf16.mxu0 0
        %676 = vmatpush1.bf16.msra.mxu0 0
        %677 = vmatprep.subr.bf16.mxu0 0
        %678 = vmatpush1.bf16.msra.mxu0 0
        %679 = vmatprep.subr.bf16.mxu0 0
        %680 = vmatpush1.bf16.msra.mxu0 0
        %681 = vmatprep.subr.bf16.mxu0 0
        %682 = vmatpush1.bf16.msra.mxu0 0
        %683 = vmatprep.subr.bf16.mxu0 0
        %684 = vmatpush1.bf16.msra.mxu0 0
        %685 = vmatprep.mubr.bf16.mxu0 0
        %686 = vmatmul.mubr.bf16.gmra.mrb[0].mxu0 %v502
        %v687 = vpop.f32.mrb[0].mxu0
        %v688 = vadd.f32 0.0, %v687
        %v689 = vpop.f32.mrb[0].mxu0
        %v690 = vadd.f32 0.0, %v689
        %v691 = vpop.f32.mrb[0].mxu0
        %v692 = vadd.f32 0.0, %v691
        %v693 = vpop.f32.mrb[0].mxu0
        %v694 = vadd.f32 0.0, %v693
        %695 = vdwg.mxu0
        %696 = vmatprep.subr.bf16.mxu0 %v510
        %697 = vmatpush1.bf16.msra.mxu0 %v509
        %698 = vmatprep.subr.bf16.mxu0 %v518
        %699 = vmatpush1.bf16.msra.mxu0 %v517
        %700 = vmatprep.subr.bf16.mxu0 %v526
        %701 = vmatpush1.bf16.msra.mxu0 %v525
        %702 = vmatprep.subr.bf16.mxu0 %v534
        %703 = vmatpush1.bf16.msra.mxu0 %v533
        %704 = vmatprep.subr.bf16.mxu0 %v542
        %705 = vmatpush1.bf16.msra.mxu0 %v541
        %706 = vmatprep.subr.bf16.mxu0 %v550
        %707 = vmatpush1.bf16.msra.mxu0 %v549
        %708 = vmatprep.subr.bf16.mxu0 %v558
        %709 = vmatpush1.bf16.msra.mxu0 %v557
        %710 = vmatprep.subr.bf16.mxu0 %v566
        %711 = vmatpush1.bf16.msra.mxu0 %v565
        %712 = vmatprep.subr.bf16.mxu0 0
        %713 = vmatpush1.bf16.msra.mxu0 0
        %714 = vmatprep.subr.bf16.mxu0 0
        %715 = vmatpush1.bf16.msra.mxu0 0
        %716 = vmatprep.subr.bf16.mxu0 0
        %717 = vmatpush1.bf16.msra.mxu0 0
        %718 = vmatprep.subr.bf16.mxu0 0
        %719 = vmatpush1.bf16.msra.mxu0 0
        %720 = vmatprep.subr.bf16.mxu0 0
        %721 = vmatpush1.bf16.msra.mxu0 0
        %722 = vmatprep.subr.bf16.mxu0 0
        %723 = vmatpush1.bf16.msra.mxu0 0
        %724 = vmatprep.subr.bf16.mxu0 0
        %725 = vmatpush1.bf16.msra.mxu0 0
        %726 = vmatprep.subr.bf16.mxu0 0
        %727 = vmatpush1.bf16.msra.mxu0 0
        %728 = vmatprep.mubr.bf16.mxu0 0
        %729 = vmatmul.mubr.bf16.gmra.mrb[0].mxu0 %v502
        %v730 = vpop.f32.mrb[0].mxu0
        %v731 = vadd.f32 0.0, %v730
        %v732 = vpop.f32.mrb[0].mxu0
        %v733 = vadd.f32 0.0, %v732
        %v734 = vpop.f32.mrb[0].mxu0
        %v735 = vadd.f32 0.0, %v734
        %v736 = vpop.f32.mrb[0].mxu0
        %v737 = vadd.f32 0.0, %v736
        %738 = vdwg.mxu0
        %p739 = scmp.eq.s32.totalorder %s25, 0
        // Predicated region
        $region41: #{_lambda_.9} parent=35 // pred_check
          %p740 = pneg %p739
        $region42: #{_lambda_.9} parent=35 // pred_check_branch
          %742 = sbr.rel (%p740) target = $region44
        $region43: #{_lambda_.9} parent=35 // pred_region
          %743 = vst [vmem:[%s338] sm:$0xff] 0.0
          %744 = vst [vmem:[%s342] sm:$0xff] 0.0
          %745 = vst [vmem:[%s346] sm:$0xff] -inf
          %746 = vst [vmem:[%s350] sm:$0xff] inf
        $region44: #{_lambda_.9} parent=35 // pred_fallthru
          _
        %v747 = vld [vmem:[%s338] sm:$0xff]
        %v748 = vadd.f32 %v602, %v606
        %v749 = vrot.slane %v748, 4
        %v750 = vadd.f32 %v748, %v749
        %v751 = vrot.slane %v750, 2
        %v752 = vadd.f32 %v750, %v751
        %v753 = vrot.slane %v752, 1
        %v754 = vadd.f32 %v752, %v753
        %v755 = vadd.f32 %v604, %v608
        %v756 = vrot.slane %v755, 4
        %v757 = vadd.f32 %v755, %v756
        %v758 = vrot.slane %v757, 2
        %v759 = vadd.f32 %v757, %v758
        %v760 = vrot.slane %v759, 1
        %v761 = vadd.f32 %v759, %v760
        %v762 = vadd.f32 %v645, %v649
        %v763 = vrot.slane %v762, 4
        %v764 = vadd.f32 %v762, %v763
        %v765 = vrot.slane %v764, 2
        %v766 = vadd.f32 %v764, %v765
        %v767 = vrot.slane %v766, 1
        %v768 = vadd.f32 %v766, %v767
        %v769 = vadd.f32 %v647, %v651
        %v770 = vrot.slane %v769, 4
        %v771 = vadd.f32 %v769, %v770
        %v772 = vrot.slane %v771, 2
        %v773 = vadd.f32 %v771, %v772
        %v774 = vrot.slane %v773, 1
        %v775 = vadd.f32 %v773, %v774
        %v776 = vadd.f32 %v688, %v692
        %v777 = vrot.slane %v776, 4
        %v778 = vadd.f32 %v776, %v777
        %v779 = vrot.slane %v778, 2
        %v780 = vadd.f32 %v778, %v779
        %v781 = vrot.slane %v780, 1
        %v782 = vadd.f32 %v780, %v781
        %v783 = vadd.f32 %v690, %v694
        %v784 = vrot.slane %v783, 4
        %v785 = vadd.f32 %v783, %v784
        %v786 = vrot.slane %v785, 2
        %v787 = vadd.f32 %v785, %v786
        %v788 = vrot.slane %v787, 1
        %v789 = vadd.f32 %v787, %v788
        %v790 = vadd.f32 %v731, %v735
        %v791 = vrot.slane %v790, 4
        %v792 = vadd.f32 %v790, %v791
        %v793 = vrot.slane %v792, 2
        %v794 = vadd.f32 %v792, %v793
        %v795 = vrot.slane %v794, 1
        %v796 = vadd.f32 %v794, %v795
        %v797 = vadd.f32 %v733, %v737
        %v798 = vrot.slane %v797, 4
        %v799 = vadd.f32 %v797, %v798
        %v800 = vrot.slane %v799, 2
        %v801 = vadd.f32 %v799, %v800
        %v802 = vrot.slane %v801, 1
        %v803 = vadd.f32 %v801, %v802
        %v812 = vcombine.low %v754, %v761
        %v813 = vcombine.low %v768, %v775
        %v814 = vcombine.low %v782, %v789
        %v815 = vcombine.low %v796, %v803
        %v817 = vunpack.c.l.s4 1966171168
        %v818 = vunpack.c.0.s8 %v817
        %v819 = vlaneseq
        %v820 = vshrl.u32 %v819, 7
        %v821 = vsub.s32 %v818, %v820
        %v822 = vrot.slane %v812, %v821
        %v824 = vunpack.c.l.s4 1966171168
        %v825 = vunpack.c.0.s8 %v824
        %v826 = vlaneseq
        %v827 = vshrl.u32 %v826, 7
        %v828 = vsub.s32 %v825, %v827
        %v829 = vrot.slane %v813, %v828
        %v831 = vunpack.c.l.s4 1966171168
        %v832 = vunpack.c.0.s8 %v831
        %v833 = vlaneseq
        %v834 = vshrl.u32 %v833, 7
        %v835 = vsub.s32 %v832, %v834
        %v836 = vrot.slane %v814, %v835
        %v838 = vunpack.c.l.s4 1966171168
        %v839 = vunpack.c.0.s8 %v838
        %v840 = vlaneseq
        %v841 = vshrl.u32 %v840, 7
        %v842 = vsub.s32 %v839, %v841
        %v843 = vrot.slane %v815, %v842
        %v844 = vcombine.low %v822, %v829
        %v845 = vcombine.low %v836, %v843
        %v847 = vunpack.c.l.s4 1966171168
        %v848 = vunpack.c.0.s8 %v847
        %v849 = vlaneseq
        %v850 = vshrl.u32 %v849, 7
        %v851 = vsub.s32 %v848, %v850
        %v852 = vrot.slane %v844, %v851
        %v854 = vunpack.c.l.s4 1966171168
        %v855 = vunpack.c.0.s8 %v854
        %v856 = vlaneseq
        %v857 = vshrl.u32 %v856, 7
        %v858 = vsub.s32 %v855, %v857
        %v859 = vrot.slane %v845, %v858
        %v860 = vcombine.low %v852, %v859
        %v862 = vadd.f32 %v747, %v860
        %863 = vst [vmem:[%s338] sm:$0xff] %v862
        %v864 = vld [vmem:[%s342] sm:$0xff]
        %v865 = vmul.f32 %v602, %v602
        %v866 = vmul.f32 %v604, %v604
        %v867 = vmul.f32 %v645, %v645
        %v868 = vmul.f32 %v647, %v647
        %v869 = vmul.f32 %v688, %v688
        %v870 = vmul.f32 %v690, %v690
        %v871 = vmul.f32 %v731, %v731
        %v872 = vmul.f32 %v733, %v733
        %v873 = vmul.f32 %v606, %v606
        %v874 = vmul.f32 %v608, %v608
        %v875 = vmul.f32 %v649, %v649
        %v876 = vmul.f32 %v651, %v651
        %v877 = vmul.f32 %v692, %v692
        %v878 = vmul.f32 %v694, %v694
        %v879 = vmul.f32 %v735, %v735
        %v880 = vmul.f32 %v737, %v737
        %v881 = vadd.f32 %v865, %v873
        %v882 = vrot.slane %v881, 4
        %v883 = vadd.f32 %v881, %v882
        %v884 = vrot.slane %v883, 2
        %v885 = vadd.f32 %v883, %v884
        %v886 = vrot.slane %v885, 1
        %v887 = vadd.f32 %v885, %v886
        %v888 = vadd.f32 %v866, %v874
        %v889 = vrot.slane %v888, 4
        %v890 = vadd.f32 %v888, %v889
        %v891 = vrot.slane %v890, 2
        %v892 = vadd.f32 %v890, %v891
        %v893 = vrot.slane %v892, 1
        %v894 = vadd.f32 %v892, %v893
        %v895 = vadd.f32 %v867, %v875
        %v896 = vrot.slane %v895, 4
        %v897 = vadd.f32 %v895, %v896
        %v898 = vrot.slane %v897, 2
        %v899 = vadd.f32 %v897, %v898
        %v900 = vrot.slane %v899, 1
        %v901 = vadd.f32 %v899, %v900
        %v902 = vadd.f32 %v868, %v876
        %v903 = vrot.slane %v902, 4
        %v904 = vadd.f32 %v902, %v903
        %v905 = vrot.slane %v904, 2
        %v906 = vadd.f32 %v904, %v905
        %v907 = vrot.slane %v906, 1
        %v908 = vadd.f32 %v906, %v907
        %v909 = vadd.f32 %v869, %v877
        %v910 = vrot.slane %v909, 4
        %v911 = vadd.f32 %v909, %v910
        %v912 = vrot.slane %v911, 2
        %v913 = vadd.f32 %v911, %v912
        %v914 = vrot.slane %v913, 1
        %v915 = vadd.f32 %v913, %v914
        %v916 = vadd.f32 %v870, %v878
        %v917 = vrot.slane %v916, 4
        %v918 = vadd.f32 %v916, %v917
        %v919 = vrot.slane %v918, 2
        %v920 = vadd.f32 %v918, %v919
        %v921 = vrot.slane %v920, 1
        %v922 = vadd.f32 %v920, %v921
        %v923 = vadd.f32 %v871, %v879
        %v924 = vrot.slane %v923, 4
        %v925 = vadd.f32 %v923, %v924
        %v926 = vrot.slane %v925, 2
        %v927 = vadd.f32 %v925, %v926
        %v928 = vrot.slane %v927, 1
        %v929 = vadd.f32 %v927, %v928
        %v930 = vadd.f32 %v872, %v880
        %v931 = vrot.slane %v930, 4
        %v932 = vadd.f32 %v930, %v931
        %v933 = vrot.slane %v932, 2
        %v934 = vadd.f32 %v932, %v933
        %v935 = vrot.slane %v934, 1
        %v936 = vadd.f32 %v934, %v935
        %v945 = vcombine.low %v887, %v894
        %v946 = vcombine.low %v901, %v908
        %v947 = vcombine.low %v915, %v922
        %v948 = vcombine.low %v929, %v936
        %v950 = vunpack.c.l.s4 1966171168
        %v951 = vunpack.c.0.s8 %v950
        %v952 = vlaneseq
        %v953 = vshrl.u32 %v952, 7
        %v954 = vsub.s32 %v951, %v953
        %v955 = vrot.slane %v945, %v954
        %v957 = vunpack.c.l.s4 1966171168
        %v958 = vunpack.c.0.s8 %v957
        %v959 = vlaneseq
        %v960 = vshrl.u32 %v959, 7
        %v961 = vsub.s32 %v958, %v960
        %v962 = vrot.slane %v946, %v961
        %v964 = vunpack.c.l.s4 1966171168
        %v965 = vunpack.c.0.s8 %v964
        %v966 = vlaneseq
        %v967 = vshrl.u32 %v966, 7
        %v968 = vsub.s32 %v965, %v967
        %v969 = vrot.slane %v947, %v968
        %v971 = vunpack.c.l.s4 1966171168
        %v972 = vunpack.c.0.s8 %v971
        %v973 = vlaneseq
        %v974 = vshrl.u32 %v973, 7
        %v975 = vsub.s32 %v972, %v974
        %v976 = vrot.slane %v948, %v975
        %v977 = vcombine.low %v955, %v962
        %v978 = vcombine.low %v969, %v976
        %v980 = vunpack.c.l.s4 1966171168
        %v981 = vunpack.c.0.s8 %v980
        %v982 = vlaneseq
        %v983 = vshrl.u32 %v982, 7
        %v984 = vsub.s32 %v981, %v983
        %v985 = vrot.slane %v977, %v984
        %v987 = vunpack.c.l.s4 1966171168
        %v988 = vunpack.c.0.s8 %v987
        %v989 = vlaneseq
        %v990 = vshrl.u32 %v989, 7
        %v991 = vsub.s32 %v988, %v990
        %v992 = vrot.slane %v978, %v991
        %v993 = vcombine.low %v985, %v992
        %v995 = vadd.f32 %v864, %v993
        %996 = vst [vmem:[%s342] sm:$0xff] %v995
        %v997 = vld [vmem:[%s346] sm:$0xff]
        %v998 = vmax.f32 %v602, %v606
        %v999 = vrot.slane %v998, 4
        %v1000 = vmax.f32 %v998, %v999
        %v1001 = vrot.slane %v1000, 2
        %v1002 = vmax.f32 %v1000, %v1001
        %v1003 = vrot.slane %v1002, 1
        %v1004 = vmax.f32 %v1002, %v1003
        %v1005 = vmax.f32 %v604, %v608
        %v1006 = vrot.slane %v1005, 4
        %v1007 = vmax.f32 %v1005, %v1006
        %v1008 = vrot.slane %v1007, 2
        %v1009 = vmax.f32 %v1007, %v1008
        %v1010 = vrot.slane %v1009, 1
        %v1011 = vmax.f32 %v1009, %v1010
        %v1012 = vmax.f32 %v645, %v649
        %v1013 = vrot.slane %v1012, 4
        %v1014 = vmax.f32 %v1012, %v1013
        %v1015 = vrot.slane %v1014, 2
        %v1016 = vmax.f32 %v1014, %v1015
        %v1017 = vrot.slane %v1016, 1
        %v1018 = vmax.f32 %v1016, %v1017
        %v1019 = vmax.f32 %v647, %v651
        %v1020 = vrot.slane %v1019, 4
        %v1021 = vmax.f32 %v1019, %v1020
        %v1022 = vrot.slane %v1021, 2
        %v1023 = vmax.f32 %v1021, %v1022
        %v1024 = vrot.slane %v1023, 1
        %v1025 = vmax.f32 %v1023, %v1024
        %v1026 = vmax.f32 %v688, %v692
        %v1027 = vrot.slane %v1026, 4
        %v1028 = vmax.f32 %v1026, %v1027
        %v1029 = vrot.slane %v1028, 2
        %v1030 = vmax.f32 %v1028, %v1029
        %v1031 = vrot.slane %v1030, 1
        %v1032 = vmax.f32 %v1030, %v1031
        %v1033 = vmax.f32 %v690, %v694
        %v1034 = vrot.slane %v1033, 4
        %v1035 = vmax.f32 %v1033, %v1034
        %v1036 = vrot.slane %v1035, 2
        %v1037 = vmax.f32 %v1035, %v1036
        %v1038 = vrot.slane %v1037, 1
        %v1039 = vmax.f32 %v1037, %v1038
        %v1040 = vmax.f32 %v731, %v735
        %v1041 = vrot.slane %v1040, 4
        %v1042 = vmax.f32 %v1040, %v1041
        %v1043 = vrot.slane %v1042, 2
        %v1044 = vmax.f32 %v1042, %v1043
        %v1045 = vrot.slane %v1044, 1
        %v1046 = vmax.f32 %v1044, %v1045
        %v1047 = vmax.f32 %v733, %v737
        %v1048 = vrot.slane %v1047, 4
        %v1049 = vmax.f32 %v1047, %v1048
        %v1050 = vrot.slane %v1049, 2
        %v1051 = vmax.f32 %v1049, %v1050
        %v1052 = vrot.slane %v1051, 1
        %v1053 = vmax.f32 %v1051, %v1052
        %v1062 = vcombine.low %v1004, %v1011
        %v1063 = vcombine.low %v1018, %v1025
        %v1064 = vcombine.low %v1032, %v1039
        %v1065 = vcombine.low %v1046, %v1053
        %v1067 = vunpack.c.l.s4 1966171168
        %v1068 = vunpack.c.0.s8 %v1067
        %v1069 = vlaneseq
        %v1070 = vshrl.u32 %v1069, 7
        %v1071 = vsub.s32 %v1068, %v1070
        %v1072 = vrot.slane %v1062, %v1071
        %v1074 = vunpack.c.l.s4 1966171168
        %v1075 = vunpack.c.0.s8 %v1074
        %v1076 = vlaneseq
        %v1077 = vshrl.u32 %v1076, 7
        %v1078 = vsub.s32 %v1075, %v1077
        %v1079 = vrot.slane %v1063, %v1078
        %v1081 = vunpack.c.l.s4 1966171168
        %v1082 = vunpack.c.0.s8 %v1081
        %v1083 = vlaneseq
        %v1084 = vshrl.u32 %v1083, 7
        %v1085 = vsub.s32 %v1082, %v1084
        %v1086 = vrot.slane %v1064, %v1085
        %v1088 = vunpack.c.l.s4 1966171168
        %v1089 = vunpack.c.0.s8 %v1088
        %v1090 = vlaneseq
        %v1091 = vshrl.u32 %v1090, 7
        %v1092 = vsub.s32 %v1089, %v1091
        %v1093 = vrot.slane %v1065, %v1092
        %v1094 = vcombine.low %v1072, %v1079
        %v1095 = vcombine.low %v1086, %v1093
        %v1097 = vunpack.c.l.s4 1966171168
        %v1098 = vunpack.c.0.s8 %v1097
        %v1099 = vlaneseq
        %v1100 = vshrl.u32 %v1099, 7
        %v1101 = vsub.s32 %v1098, %v1100
        %v1102 = vrot.slane %v1094, %v1101
        %v1104 = vunpack.c.l.s4 1966171168
        %v1105 = vunpack.c.0.s8 %v1104
        %v1106 = vlaneseq
        %v1107 = vshrl.u32 %v1106, 7
        %v1108 = vsub.s32 %v1105, %v1107
        %v1109 = vrot.slane %v1095, %v1108
        %v1110 = vcombine.low %v1102, %v1109
        %v1112 = vmax.f32 %v997, %v1110
        %1113 = vst [vmem:[%s346] sm:$0xff] %v1112
        %v1114 = vld [vmem:[%s350] sm:$0xff]
        %v1115 = vmin.f32 %v602, %v606
        %v1116 = vrot.slane %v1115, 4
        %v1117 = vmin.f32 %v1115, %v1116
        %v1118 = vrot.slane %v1117, 2
        %v1119 = vmin.f32 %v1117, %v1118
        %v1120 = vrot.slane %v1119, 1
        %v1121 = vmin.f32 %v1119, %v1120
        %v1122 = vmin.f32 %v604, %v608
        %v1123 = vrot.slane %v1122, 4
        %v1124 = vmin.f32 %v1122, %v1123
        %v1125 = vrot.slane %v1124, 2
        %v1126 = vmin.f32 %v1124, %v1125
        %v1127 = vrot.slane %v1126, 1
        %v1128 = vmin.f32 %v1126, %v1127
        %v1129 = vmin.f32 %v645, %v649
        %v1130 = vrot.slane %v1129, 4
        %v1131 = vmin.f32 %v1129, %v1130
        %v1132 = vrot.slane %v1131, 2
        %v1133 = vmin.f32 %v1131, %v1132
        %v1134 = vrot.slane %v1133, 1
        %v1135 = vmin.f32 %v1133, %v1134
        %v1136 = vmin.f32 %v647, %v651
        %v1137 = vrot.slane %v1136, 4
        %v1138 = vmin.f32 %v1136, %v1137
        %v1139 = vrot.slane %v1138, 2
        %v1140 = vmin.f32 %v1138, %v1139
        %v1141 = vrot.slane %v1140, 1
        %v1142 = vmin.f32 %v1140, %v1141
        %v1143 = vmin.f32 %v688, %v692
        %v1144 = vrot.slane %v1143, 4
        %v1145 = vmin.f32 %v1143, %v1144
        %v1146 = vrot.slane %v1145, 2
        %v1147 = vmin.f32 %v1145, %v1146
        %v1148 = vrot.slane %v1147, 1
        %v1149 = vmin.f32 %v1147, %v1148
        %v1150 = vmin.f32 %v690, %v694
        %v1151 = vrot.slane %v1150, 4
        %v1152 = vmin.f32 %v1150, %v1151
        %v1153 = vrot.slane %v1152, 2
        %v1154 = vmin.f32 %v1152, %v1153
        %v1155 = vrot.slane %v1154, 1
        %v1156 = vmin.f32 %v1154, %v1155
        %v1157 = vmin.f32 %v731, %v735
        %v1158 = vrot.slane %v1157, 4
        %v1159 = vmin.f32 %v1157, %v1158
        %v1160 = vrot.slane %v1159, 2
        %v1161 = vmin.f32 %v1159, %v1160
        %v1162 = vrot.slane %v1161, 1
        %v1163 = vmin.f32 %v1161, %v1162
        %v1164 = vmin.f32 %v733, %v737
        %v1165 = vrot.slane %v1164, 4
        %v1166 = vmin.f32 %v1164, %v1165
        %v1167 = vrot.slane %v1166, 2
        %v1168 = vmin.f32 %v1166, %v1167
        %v1169 = vrot.slane %v1168, 1
        %v1170 = vmin.f32 %v1168, %v1169
        %v1179 = vcombine.low %v1121, %v1128
        %v1180 = vcombine.low %v1135, %v1142
        %v1181 = vcombine.low %v1149, %v1156
        %v1182 = vcombine.low %v1163, %v1170
        %v1184 = vunpack.c.l.s4 1966171168
        %v1185 = vunpack.c.0.s8 %v1184
        %v1186 = vlaneseq
        %v1187 = vshrl.u32 %v1186, 7
        %v1188 = vsub.s32 %v1185, %v1187
        %v1189 = vrot.slane %v1179, %v1188
        %v1191 = vunpack.c.l.s4 1966171168
        %v1192 = vunpack.c.0.s8 %v1191
        %v1193 = vlaneseq
        %v1194 = vshrl.u32 %v1193, 7
        %v1195 = vsub.s32 %v1192, %v1194
        %v1196 = vrot.slane %v1180, %v1195
        %v1198 = vunpack.c.l.s4 1966171168
        %v1199 = vunpack.c.0.s8 %v1198
        %v1200 = vlaneseq
        %v1201 = vshrl.u32 %v1200, 7
        %v1202 = vsub.s32 %v1199, %v1201
        %v1203 = vrot.slane %v1181, %v1202
        %v1205 = vunpack.c.l.s4 1966171168
        %v1206 = vunpack.c.0.s8 %v1205
        %v1207 = vlaneseq
        %v1208 = vshrl.u32 %v1207, 7
        %v1209 = vsub.s32 %v1206, %v1208
        %v1210 = vrot.slane %v1182, %v1209
        %v1211 = vcombine.low %v1189, %v1196
        %v1212 = vcombine.low %v1203, %v1210
        %v1214 = vunpack.c.l.s4 1966171168
        %v1215 = vunpack.c.0.s8 %v1214
        %v1216 = vlaneseq
        %v1217 = vshrl.u32 %v1216, 7
        %v1218 = vsub.s32 %v1215, %v1217
        %v1219 = vrot.slane %v1211, %v1218
        %v1221 = vunpack.c.l.s4 1966171168
        %v1222 = vunpack.c.0.s8 %v1221
        %v1223 = vlaneseq
        %v1224 = vshrl.u32 %v1223, 7
        %v1225 = vsub.s32 %v1222, %v1224
        %v1226 = vrot.slane %v1212, %v1225
        %v1227 = vcombine.low %v1219, %v1226
        %v1229 = vmin.f32 %v1114, %v1227
        %1230 = vst [vmem:[%s350] sm:$0xff] %v1229
        %p1231 = scmp.lt.s32.totalorder %s24, 1
        %s1232 = scalar_select %p1231, %s24, 1
        %s1233 = smul.addr %s1232, 8
        %s1234 = scalar_lea.vmem %s4, %s1233
        %p1235 = scmp.lt.s32.totalorder %s24, 1
        %s1236 = scalar_select %p1235, %s24, 1
        %s1237 = smul.addr %s1236, 8
        %s1238 = scalar_lea.vmem %s5, %s1237
        %p1239 = scmp.lt.s32.totalorder %s24, 1
        %s1240 = scalar_select %p1239, %s24, 1
        %s1241 = smul.addr %s1240, 8
        %s1242 = scalar_lea.vmem %s6, %s1241
        %p1243 = scmp.lt.s32.totalorder %s24, 1
        %s1244 = scalar_select %p1243, %s24, 1
        %s1245 = smul.addr %s1244, 8
        %s1246 = scalar_lea.vmem %s7, %s1245
        // Predicated region
        $region45: #{_lambda_.9} parent=35 // pred_check
          %p1247 = pneg %p141
        $region46: #{_lambda_.9} parent=35 // pred_check_branch
          %1249 = sbr.rel (%p1247) target = $region48
        $region47: #{_lambda_.9} parent=35 // pred_region
          _
        $region48: #{_lambda_.9} parent=35 // pred_fallthru
          _
        // Predicated region
        $region49: #{_lambda_.9} parent=35 // pred_check
          %p1250 = pneg %p167
        $region50: #{_lambda_.9} parent=35 // pred_check_branch
          %1252 = sbr.rel (%p1250) target = $region52
        $region51: #{_lambda_.9} parent=35 // pred_region
          _
        $region52: #{_lambda_.9} parent=35 // pred_fallthru
          _
        // Predicated region
        $region53: #{_lambda_.9} parent=35 // pred_check
          %p1253 = pneg %p193
        $region54: #{_lambda_.9} parent=35 // pred_check_branch
          %1255 = sbr.rel (%p1253) target = $region56
        $region55: #{_lambda_.9} parent=35 // pred_region
          _
        $region56: #{_lambda_.9} parent=35 // pred_fallthru
          _
        // Predicated region
        $region57: #{_lambda_.9} parent=35 // pred_check
          %p1256 = pneg %p219
        $region58: #{_lambda_.9} parent=35 // pred_check_branch
          %1258 = sbr.rel (%p1256) target = $region60
        $region59: #{_lambda_.9} parent=35 // pred_region
          _
        $region60: #{_lambda_.9} parent=35 // pred_fallthru
          _
      $region36: #{_lambda_.9} parent=5 // pred_fallthru
        _
      %p1259 = scmp.le.s32.totalorder 2, %s15
      // Predicated region
      $region61: #{_lambda_.9} parent=5 // pred_check
        %p1260 = pneg %p1259
      $region62: #{_lambda_.9} parent=5 // pred_check_branch
        %1262 = sbr.rel (%p1260) target = $region64
      $region63: #{_lambda_.9} parent=5 // pred_region
        %s1263 = ssub.s32 %s15, 2
        // Predicated region
        $region65: #{_lambda_.9} parent=63 // pred_check
          %p1264 = pneg %p147
        $region66: #{_lambda_.9} parent=63 // pred_check_branch
          %1266 = sbr.rel (%p1264) target = $region68
        $region67: #{_lambda_.9} parent=63 // pred_region
          %p1267 = scmp.lt.s32.totalorder %s26, 1
          %s1268 = scalar_select %p1267, %s26, 1
          %s1269 = smul.addr %s1268, 8
          %s1270 = scalar_lea.vmem %s4, %s1269
        $region68: #{_lambda_.9} parent=63 // pred_fallthru
          _
        // Predicated region
        $region69: #{_lambda_.9} parent=63 // pred_check
          %p1271 = pneg %p173
        $region70: #{_lambda_.9} parent=63 // pred_check_branch
          %1273 = sbr.rel (%p1271) target = $region72
        $region71: #{_lambda_.9} parent=63 // pred_region
          %p1274 = scmp.lt.s32.totalorder %s26, 1
          %s1275 = scalar_select %p1274, %s26, 1
          %s1276 = smul.addr %s1275, 8
          %s1277 = scalar_lea.vmem %s5, %s1276
        $region72: #{_lambda_.9} parent=63 // pred_fallthru
          _
        // Predicated region
        $region73: #{_lambda_.9} parent=63 // pred_check
          %p1278 = pneg %p199
        $region74: #{_lambda_.9} parent=63 // pred_check_branch
          %1280 = sbr.rel (%p1278) target = $region76
        $region75: #{_lambda_.9} parent=63 // pred_region
          %p1281 = scmp.lt.s32.totalorder %s26, 1
          %s1282 = scalar_select %p1281, %s26, 1
          %s1283 = smul.addr %s1282, 8
          %s1284 = scalar_lea.vmem %s6, %s1283
        $region76: #{_lambda_.9} parent=63 // pred_fallthru
          _
        // Predicated region
        $region77: #{_lambda_.9} parent=63 // pred_check
          %p1285 = pneg %p225
        $region78: #{_lambda_.9} parent=63 // pred_check_branch
          %1287 = sbr.rel (%p1285) target = $region80
        $region79: #{_lambda_.9} parent=63 // pred_region
          %p1288 = scmp.lt.s32.totalorder %s26, 1
          %s1289 = scalar_select %p1288, %s26, 1
          %s1290 = smul.addr %s1289, 8
          %s1291 = scalar_lea.vmem %s7, %s1290
        $region80: #{_lambda_.9} parent=63 // pred_fallthru
          _
      $region64: #{_lambda_.9} parent=5 // pred_fallthru
        _
    $region6: #{_lambda_.9} parent=1 // loop_footer
      %s19 = sadd.s32 1, %s15
    $region7: #{_lambda_.9} parent=1 // loop_footer_branch
      %14 = sbr.rel target = $region3
    $region8: #{_lambda_.9} parent=1 // loop_exit
      _
    %1292 = vsyncpa [#allocation3], 1
    %s1293 = scalar_lea.sflag [#allocation3], 1
    %1294 = vsyncpa %s1293, 1

// kernel: _lambda_.11
$region0: #{_lambda_.11}
  #allocation0 [shape = 'u32[]', space=smem, size = 0x4, offset = 0x4, fixed_abs, tag = 'smem constant byte address 0x4 - core index']
  #allocation1 [shape = 'u32[144,128]{1,0:T(1,128)}', space=vmem, size = 0x12000, scoped, tag = 'internal scratch']
  %s0 = inlined_call_operand.vmem [shape: f32[2,16,4], index: 0, kind: input, shape index: {}]
  %s1 = inlined_call_operand.vmem [shape: f32[2,4,64], index: 1, kind: input, shape index: {}]
  %s2 = inlined_call_operand.vmem [shape: f32[1,4], index: 2, kind: input, shape index: {}]
  %s3 = inlined_call_operand.vmem [shape: f32[1,4], index: 3, kind: input, shape index: {}]
  %s4 = inlined_call_operand.vmem [shape: f32[2,16,64], index: 4, kind: output, shape index: {0}]
  %s5 = inlined_call_operand.vmem [shape: f32[2,1,64], index: 5, kind: output, shape index: {1}]
  %s6 = inlined_call_operand.vmem [shape: f32[2,1,64], index: 6, kind: output, shape index: {2}]
  %7 = xla_tuple %s4, %s5, %s6
  %s8 = sld [smem:[#allocation0]]
  $region69: #{_lambda_.11} parent=0
    _
  %s10 = ssub.s32 1, %s8
  %s11 = scalar_select 0, %s10, %s8
  loop: start=0, step=1, limit=4
  $region2: #{_lambda_.11} parent=0 // loop_pre_header
    _
  $region3: #{_lambda_.11} parent=0 // loop_header
    %s13 = sphi 0, %s17
    %p14 = scmp.ge.s32.totalorder %s13, 4
    %s20 = sphi 0, %s32
    %s21 = sphi 0, %s28
    %s22 = sphi 0, %s20
    %s23 = sphi 0, %s21
    %s24 = sphi 0, %s22
    %s25 = sphi 0, %s23
    %s37 = sphi 0, %s39
    %s40 = sphi 0, %s37
    %s41 = sphi 0, %s40
    %s57 = sphi 0, %s41
    %s63 = sphi 0, %s65
    %s66 = sphi 0, %s63
    %s67 = sphi 0, %s66
    %s83 = sphi 0, %s67
    %s87 = sphi 0, %s87
    %s89 = sphi 0, %s87
    %s90 = sphi 0, %s89
    %s104 = sphi 0, %s90
    %s108 = sphi 0, %s108
    %s110 = sphi 0, %s108
    %s111 = sphi 0, %s110
    %s125 = sphi 0, %s111
    %s133 = sphi 0, %s135
    %s136 = sphi 0, %s133
    %s137 = sphi 0, %s136
    %s153 = sphi 0, %s137
    %s159 = sphi 0, %s161
    %s162 = sphi 0, %s159
    %s163 = sphi 0, %s162
    %s179 = sphi 0, %s163
    %s185 = sphi 0, %s187
    %s188 = sphi 0, %s185
    %s189 = sphi 0, %s188
    %s205 = sphi 0, %s189
  $region4: #{_lambda_.11} parent=0 // loop_header_branch
    %16 = sbr.rel (%p14) target = $region8
  $region5: #{_lambda_.11} parent=0 // loop_body
    %s18 = ssub.s32 %s13, 1
    %s19 = ssub.s32 %s13, 2
    %s26 = sadd.s32 1, %s21
    %p27 = scmp.ge.s32.totalorder %s26, 1
    %s28 = scalar_select %p27, 0, %s26
    %s29 = sadd.s32 1, %s20
    %s30 = scalar_select %p27, %s29, %s20
    %p31 = scmp.ge.s32.totalorder %s30, 2
    %s32 = scalar_select %p31, 0, %s30
    %s33 = ssub.s32 %s20, %s32
    %s34 = ssub.s32 %s21, %s28
    %s35 = sor.u32 %s33, %s34
    %p36 = scmp.eq.s32.totalorder %s35, 0
    %s38 = sadd.s32 %s37, 1
    %s39 = scalar_select %p36, %s37, %s38
    %p42 = pneg %p36
    %p43 = scmp.eq.s32.totalorder %s13, 1
    %p44 = por %p42, %p43
    %p45 = scmp.ne.s32.totalorder %s37, %s40
    %p46 = scmp.eq.s32.totalorder %s13, 0
    %p47 = por %p45, %p46
    %p48 = scmp.ne.s32.totalorder %s37, %s40
    %p49 = scmp.eq.s32.totalorder %s18, 1
    %p50 = por %p48, %p49
    %p51 = scmp.ne.s32.totalorder %s40, %s41
    %p52 = scmp.eq.s32.totalorder %s18, 0
    %p53 = por %p51, %p52
    %p54 = scmp.ne.s32.totalorder %s40, %s41
    %p55 = scmp.eq.s32.totalorder %s19, 1
    %p56 = por %p54, %p55
    %p58 = scmp.ne.s32.totalorder %s41, %s57
    %p59 = scmp.eq.s32.totalorder %s19, 0
    %p60 = por %p58, %p59
    %s61 = ssub.s32 %s20, %s32
    %p62 = scmp.eq.s32.totalorder %s61, 0
    %s64 = sadd.s32 %s63, 1
    %s65 = scalar_select %p62, %s63, %s64
    %p68 = pneg %p62
    %p69 = scmp.eq.s32.totalorder %s13, 1
    %p70 = por %p68, %p69
    %p71 = scmp.ne.s32.totalorder %s63, %s66
    %p72 = scmp.eq.s32.totalorder %s13, 0
    %p73 = por %p71, %p72
    %p74 = scmp.ne.s32.totalorder %s63, %s66
    %p75 = scmp.eq.s32.totalorder %s18, 1
    %p76 = por %p74, %p75
    %p77 = scmp.ne.s32.totalorder %s66, %s67
    %p78 = scmp.eq.s32.totalorder %s18, 0
    %p79 = por %p77, %p78
    %p80 = scmp.ne.s32.totalorder %s66, %s67
    %p81 = scmp.eq.s32.totalorder %s19, 1
    %p82 = por %p80, %p81
    %p84 = scmp.ne.s32.totalorder %s67, %s83
    %p85 = scmp.eq.s32.totalorder %s19, 0
    %p86 = por %p84, %p85
    %s88 = sadd.s32 %s87, 1
    %p91 = scmp.eq.s32.totalorder %s13, 1
    %p92 = scmp.ne.s32.totalorder %s87, %s89
    %p93 = scmp.eq.s32.totalorder %s13, 0
    %p94 = por %p92, %p93
    %p95 = scmp.ne.s32.totalorder %s87, %s89
    %p96 = scmp.eq.s32.totalorder %s18, 1
    %p97 = por %p95, %p96
    %p98 = scmp.ne.s32.totalorder %s89, %s90
    %p99 = scmp.eq.s32.totalorder %s18, 0
    %p100 = por %p98, %p99
    %p101 = scmp.ne.s32.totalorder %s89, %s90
    %p102 = scmp.eq.s32.totalorder %s19, 1
    %p103 = por %p101, %p102
    %p105 = scmp.ne.s32.totalorder %s90, %s104
    %p106 = scmp.eq.s32.totalorder %s19, 0
    %p107 = por %p105, %p106
    %s109 = sadd.s32 %s108, 1
    %p112 = scmp.eq.s32.totalorder %s13, 1
    %p113 = scmp.ne.s32.totalorder %s108, %s110
    %p114 = scmp.eq.s32.totalorder %s13, 0
    %p115 = por %p113, %p114
    %p116 = scmp.ne.s32.totalorder %s108, %s110
    %p117 = scmp.eq.s32.totalorder %s18, 1
    %p118 = por %p116, %p117
    %p119 = scmp.ne.s32.totalorder %s110, %s111
    %p120 = scmp.eq.s32.totalorder %s18, 0
    %p121 = por %p119, %p120
    %p122 = scmp.ne.s32.totalorder %s110, %s111
    %p123 = scmp.eq.s32.totalorder %s19, 1
    %p124 = por %p122, %p123
    %p126 = scmp.ne.s32.totalorder %s111, %s125
    %p127 = scmp.eq.s32.totalorder %s19, 0
    %p128 = por %p126, %p127
    %s129 = ssub.s32 %s20, %s32
    %s130 = ssub.s32 %s21, %s28
    %s131 = sor.u32 %s129, %s130
    %p132 = scmp.eq.s32.totalorder %s131, 0
    %s134 = sadd.s32 %s133, 1
    %s135 = scalar_select %p132, %s133, %s134
    %p138 = pneg %p132
    %p139 = scmp.eq.s32.totalorder %s13, 1
    %p140 = por %p138, %p139
    %p141 = scmp.ne.s32.totalorder %s133, %s136
    %p142 = scmp.eq.s32.totalorder %s13, 0
    %p143 = por %p141, %p142
    %p144 = scmp.ne.s32.totalorder %s133, %s136
    %p145 = scmp.eq.s32.totalorder %s18, 1
    %p146 = por %p144, %p145
    %p147 = scmp.ne.s32.totalorder %s136, %s137
    %p148 = scmp.eq.s32.totalorder %s18, 0
    %p149 = por %p147, %p148
    %p150 = scmp.ne.s32.totalorder %s136, %s137
    %p151 = scmp.eq.s32.totalorder %s19, 1
    %p152 = por %p150, %p151
    %p154 = scmp.ne.s32.totalorder %s137, %s153
    %p155 = scmp.eq.s32.totalorder %s19, 0
    %p156 = por %p154, %p155
    %s157 = ssub.s32 %s20, %s32
    %p158 = scmp.eq.s32.totalorder %s157, 0
    %s160 = sadd.s32 %s159, 1
    %s161 = scalar_select %p158, %s159, %s160
    %p164 = pneg %p158
    %p165 = scmp.eq.s32.totalorder %s13, 1
    %p166 = por %p164, %p165
    %p167 = scmp.ne.s32.totalorder %s159, %s162
    %p168 = scmp.eq.s32.totalorder %s13, 0
    %p169 = por %p167, %p168
    %p170 = scmp.ne.s32.totalorder %s159, %s162
    %p171 = scmp.eq.s32.totalorder %s18, 1
    %p172 = por %p170, %p171
    %p173 = scmp.ne.s32.totalorder %s162, %s163
    %p174 = scmp.eq.s32.totalorder %s18, 0
    %p175 = por %p173, %p174
    %p176 = scmp.ne.s32.totalorder %s162, %s163
    %p177 = scmp.eq.s32.totalorder %s19, 1
    %p178 = por %p176, %p177
    %p180 = scmp.ne.s32.totalorder %s163, %s179
    %p181 = scmp.eq.s32.totalorder %s19, 0
    %p182 = por %p180, %p181
    %s183 = ssub.s32 %s20, %s32
    %p184 = scmp.eq.s32.totalorder %s183, 0
    %s186 = sadd.s32 %s185, 1
    %s187 = scalar_select %p184, %s185, %s186
    %p190 = pneg %p184
    %p191 = scmp.eq.s32.totalorder %s13, 1
    %p192 = por %p190, %p191
    %p193 = scmp.ne.s32.totalorder %s185, %s188
    %p194 = scmp.eq.s32.totalorder %s13, 0
    %p195 = por %p193, %p194
    %p196 = scmp.ne.s32.totalorder %s185, %s188
    %p197 = scmp.eq.s32.totalorder %s18, 1
    %p198 = por %p196, %p197
    %p199 = scmp.ne.s32.totalorder %s188, %s189
    %p200 = scmp.eq.s32.totalorder %s18, 0
    %p201 = por %p199, %p200
    %p202 = scmp.ne.s32.totalorder %s188, %s189
    %p203 = scmp.eq.s32.totalorder %s19, 1
    %p204 = por %p202, %p203
    %p206 = scmp.ne.s32.totalorder %s189, %s205
    %p207 = scmp.eq.s32.totalorder %s19, 0
    %p208 = por %p206, %p207
    %p209 = scmp.le.s32.totalorder 1, %s13
    %p210 = scmp.lt.s32.totalorder %s13, 3
    %p211 = pnand %p209, %p210
    %p212 = pneg %p211
    // Predicated region
    $region9: #{_lambda_.11} parent=5 // pred_check
      _
    $region10: #{_lambda_.11} parent=5 // pred_check_branch
      %214 = sbr.rel (%p211) target = $region12
    $region11: #{_lambda_.11} parent=5 // pred_region
      %s215 = ssub.s32 %s13, 1
      // Predicated region
      $region13: #{_lambda_.11} parent=11 // pred_check
        %p216 = pneg %p100
      $region14: #{_lambda_.11} parent=11 // pred_check_branch
        %218 = sbr.rel (%p216) target = $region16
      $region15: #{_lambda_.11} parent=11 // pred_region
        _
      $region16: #{_lambda_.11} parent=11 // pred_fallthru
        _
      // Predicated region
      $region17: #{_lambda_.11} parent=11 // pred_check
        %p219 = pneg %p121
      $region18: #{_lambda_.11} parent=11 // pred_check_branch
        %221 = sbr.rel (%p219) target = $region20
      $region19: #{_lambda_.11} parent=11 // pred_region
        _
      $region20: #{_lambda_.11} parent=11 // pred_fallthru
        _
    $region12: #{_lambda_.11} parent=5 // pred_fallthru
      _
    %p222 = scmp.lt.s32.totalorder %s13, 2
    // Predicated region
    $region21: #{_lambda_.11} parent=5 // pred_check
      %p223 = pneg %p222
    $region22: #{_lambda_.11} parent=5 // pred_check_branch
      %225 = sbr.rel (%p223) target = $region24
    $region23: #{_lambda_.11} parent=5 // pred_region
      // Predicated region
      $region25: #{_lambda_.11} parent=23 // pred_check
        %p226 = pneg %p47
      $region26: #{_lambda_.11} parent=23 // pred_check_branch
        %228 = sbr.rel (%p226) target = $region28
      $region27: #{_lambda_.11} parent=23 // pred_region
        %s229 = smul.u32 2, %s21
        %p230 = scmp.lt.s32.totalorder %s20, 1
        %s231 = scalar_select %p230, %s20, 1
        %p232 = scmp.lt.s32.totalorder %s229, 1
        %s233 = scalar_select %p232, %s229, 1
        %s234 = smul.addr %s231, 2
        %s235 = sadd.s32 %s233, %s234
        %s236 = smul.addr %s235, 8
        %s237 = scalar_lea.vmem %s0, %s236
        %s238 = smul.u32 2, %s21
      $region28: #{_lambda_.11} parent=23 // pred_fallthru
        _
      // Predicated region
      $region29: #{_lambda_.11} parent=23 // pred_check
        %p239 = pneg %p73
      $region30: #{_lambda_.11} parent=23 // pred_check_branch
        %241 = sbr.rel (%p239) target = $region32
      $region31: #{_lambda_.11} parent=23 // pred_region
        %p242 = scmp.lt.s32.totalorder %s20, 1
        %s243 = scalar_select %p242, %s20, 1
        %s244 = smul.addr %s243, 4
        %s245 = scalar_lea.vmem %s1, %s244
      $region32: #{_lambda_.11} parent=23 // pred_fallthru
        _
    $region24: #{_lambda_.11} parent=5 // pred_fallthru
      _
    %p246 = scmp.le.s32.totalorder 1, %s13
    %p247 = scmp.lt.s32.totalorder %s13, 3
    %p248 = pnand %p246, %p247
    %p249 = pneg %p248
    // Predicated region
    $region33: #{_lambda_.11} parent=5 // pred_check
      _
    $region34: #{_lambda_.11} parent=5 // pred_check_branch
      %251 = sbr.rel (%p248) target = $region36
    $region35: #{_lambda_.11} parent=5 // pred_region
      %s252 = ssub.s32 %s13, 1
      %s253 = smul.u32 2, %s23
      %p254 = scmp.lt.s32.totalorder %s22, 1
      %s255 = scalar_select %p254, %s22, 1
      %p256 = scmp.lt.s32.totalorder %s253, 1
      %s257 = scalar_select %p256, %s253, 1
      %s258 = smul.addr %s255, 2
      %s259 = sadd.s32 %s257, %s258
      %s260 = smul.addr %s259, 8
      %s261 = scalar_lea.vmem %s0, %s260
      %p262 = pneg %p53
      %p263 = pneg %p50
      %p264 = scmp.lt.s32.totalorder %s22, 1
      %s265 = scalar_select %p264, %s22, 1
      %s266 = smul.addr %s265, 4
      %s267 = scalar_lea.vmem %s1, %s266
      %p268 = pneg %p79
      %p269 = pneg %p76
      %p270 = pneg %p100
      %p271 = pneg %p97
      %p272 = pneg %p121
      %p273 = pneg %p118
      %p274 = pneg %p149
      %p275 = pneg %p146
      %s276 = smul.u32 2, %s23
      %p277 = scmp.lt.s32.totalorder %s22, 1
      %s278 = scalar_select %p277, %s22, 1
      %p279 = scmp.lt.s32.totalorder %s276, 1
      %s280 = scalar_select %p279, %s276, 1
      %s281 = smul.addr %s278, 2
      %s282 = sadd.s32 %s280, %s281
      %s283 = smul.addr %s282, 8
      %s284 = scalar_lea.vmem %s4, %s283
      %p285 = pneg %p175
      %p286 = pneg %p172
      %p287 = scmp.lt.s32.totalorder %s22, 1
      %s288 = scalar_select %p287, %s22, 1
      %s289 = scalar_lea.vmem %s5, %s288
      %p290 = pneg %p201
      %p291 = pneg %p198
      %p292 = scmp.lt.s32.totalorder %s22, 1
      %s293 = scalar_select %p292, %s22, 1
      %s294 = scalar_lea.vmem %s6, %s293
      %s295 = smul.u32 2, %s23
      %p296 = scmp.lt.s32.totalorder %s22, 1
      %s297 = scalar_select %p296, %s22, 1
      %p298 = scmp.lt.s32.totalorder %s295, 1
      %s299 = scalar_select %p298, %s295, 1
      %s300 = smul.addr %s297, 2
      %s301 = sadd.s32 %s299, %s300
      %s302 = smul.addr %s301, 8
      %s303 = scalar_lea.vmem %s0, %s302
      %s304 = smul.u32 2, %s23
      %p305 = scmp.lt.s32.totalorder %s22, 1
      %s306 = scalar_select %p305, %s22, 1
      %s307 = smul.addr %s306, 4
      %s308 = scalar_lea.vmem %s1, %s307
      %s309 = smul.u32 2, %s23
      %p310 = scmp.lt.s32.totalorder %s22, 1
      %s311 = scalar_select %p310, %s22, 1
      %p312 = scmp.lt.s32.totalorder %s309, 1
      %s313 = scalar_select %p312, %s309, 1
      %s314 = smul.addr %s311, 2
      %s315 = sadd.s32 %s313, %s314
      %s316 = smul.addr %s315, 8
      %s317 = scalar_lea.vmem %s4, %s316
      %s318 = smul.u32 2, %s23
      %p319 = scmp.lt.s32.totalorder %s22, 1
      %s320 = scalar_select %p319, %s22, 1
      %s321 = scalar_lea.vmem %s5, %s320
      %p322 = scmp.lt.s32.totalorder %s22, 1
      %s323 = scalar_select %p322, %s22, 1
      %s324 = scalar_lea.vmem %s6, %s323
      %v326 = vld [vmem:[%s303] sm:$0xff]
      %v327 = vld [vmem:[%s303 + $0x8] sm:$0xff]
      %v328 = vld [vmem:[%s308] sm:$0xf]
      %v329 = vpack.c.bf16 %v327, %v326
      %v330 = vpack.c.bf16 %v328, %v328
      %vm331 = vcmask 31744
      %v333 = vsel %vm331, %v329, 0
      %vm335 = vcmask 1041408
      %v337 = vsel %vm335, %v330, 0
      %339 = vmatprep.subr.bf16.mxu0 0
      %340 = vmatpush1.bf16.msra.mxu0 %v337
      %341 = vmatprep.subr.bf16.mxu0 0
      %342 = vmatpush1.bf16.msra.mxu0 0
      %343 = vmatprep.subr.bf16.mxu0 0
      %344 = vmatpush1.bf16.msra.mxu0 0
      %345 = vmatprep.subr.bf16.mxu0 0
      %346 = vmatpush1.bf16.msra.mxu0 0
      %347 = vmatprep.subr.bf16.mxu0 0
      %348 = vmatpush1.bf16.msra.mxu0 0
      %349 = vmatprep.subr.bf16.mxu0 0
      %350 = vmatpush1.bf16.msra.mxu0 0
      %351 = vmatprep.subr.bf16.mxu0 0
      %352 = vmatpush1.bf16.msra.mxu0 0
      %353 = vmatprep.subr.bf16.mxu0 0
      %354 = vmatpush1.bf16.msra.mxu0 0
      %355 = vmatprep.subr.bf16.mxu0 0
      %356 = vmatpush1.bf16.msra.mxu0 0
      %357 = vmatprep.subr.bf16.mxu0 0
      %358 = vmatpush1.bf16.msra.mxu0 0
      %359 = vmatprep.subr.bf16.mxu0 0
      %360 = vmatpush1.bf16.msra.mxu0 0
      %361 = vmatprep.subr.bf16.mxu0 0
      %362 = vmatpush1.bf16.msra.mxu0 0
      %363 = vmatprep.subr.bf16.mxu0 0
      %364 = vmatpush1.bf16.msra.mxu0 0
      %365 = vmatprep.subr.bf16.mxu0 0
      %366 = vmatpush1.bf16.msra.mxu0 0
      %367 = vmatprep.subr.bf16.mxu0 0
      %368 = vmatpush1.bf16.msra.mxu0 0
      %369 = vmatprep.subr.bf16.mxu0 0
      %370 = vmatpush1.bf16.msra.mxu0 0
      %371 = vmatprep.mubr.bf16.mxu0 0
      %372 = vmatmul.mubr.bf16.gmra.mrb[0].mxu0 %v333
      %v373 = vpop.f32.mrb[0].mxu0
      %v374 = vadd.f32 0.0, %v373
      %v375 = vpop.f32.mrb[0].mxu0
      %v376 = vpop.f32.mrb[0].mxu0
      %v377 = vadd.f32 0.0, %v376
      %v378 = vpop.f32.mrb[0].mxu0
      %379 = vdwg.mxu0
      %vm380 = vcmask 523264
      %381 = vst.msk [vmem:[%s317] sm:$0xff] %vm380, %v374
      %382 = vst.msk [vmem:[%s317 + $0x8] sm:$0xff] %vm380, %v377
      %p383 = scmp.eq.s32.totalorder %s23, 0
      // Predicated region
      $region37: #{_lambda_.11} parent=35 // pred_check
        %p384 = pneg %p383
      $region38: #{_lambda_.11} parent=35 // pred_check_branch
        %386 = sbr.rel (%p384) target = $region40
      $region39: #{_lambda_.11} parent=35 // pred_region
        %vm387 = vcmask 516096
        %388 = vst.msk [vmem:[%s321] sm:$0x1] %vm387, 0.0
        %389 = vst.msk [vmem:[%s324] sm:$0x1] %vm387, 0.0
      $region40: #{_lambda_.11} parent=35 // pred_fallthru
        _
      %v390 = vld [vmem:[%s321] sm:$0x1]
      %v391 = vsel %vm380, %v374, 0.0
      %v392 = vsel %vm380, %v377, 0.0
      %v393 = vadd.f32 %v391, %v392
      %v394 = vrot.slane %v393, 4
      %v395 = vadd.f32 %v393, %v394
      %v396 = vrot.slane %v395, 2
      %v397 = vadd.f32 %v395, %v396
      %v398 = vrot.slane %v397, 1
      %v399 = vadd.f32 %v397, %v398
      %v400 = vadd.f32 %v390, %v399
      %vm401 = vcmask 516096
      %402 = vst.msk [vmem:[%s321] sm:$0x1] %vm401, %v400
      %v403 = vld [vmem:[%s324] sm:$0x1]
      %v404 = vmul.f32 %v374, %v374
      %v405 = vmul.f32 %v377, %v377
      %v406 = vsel %vm380, %v404, 0.0
      %v407 = vsel %vm380, %v405, 0.0
      %v408 = vadd.f32 %v406, %v407
      %v409 = vrot.slane %v408, 4
      %v410 = vadd.f32 %v408, %v409
      %v411 = vrot.slane %v410, 2
      %v412 = vadd.f32 %v410, %v411
      %v413 = vrot.slane %v412, 1
      %v414 = vadd.f32 %v412, %v413
      %v415 = vadd.f32 %v403, %v414
      %416 = vst.msk [vmem:[%s324] sm:$0x1] %vm401, %v415
      %s417 = smul.u32 2, %s23
      %p418 = scmp.lt.s32.totalorder %s22, 1
      %s419 = scalar_select %p418, %s22, 1
      %p420 = scmp.lt.s32.totalorder %s417, 1
      %s421 = scalar_select %p420, %s417, 1
      %s422 = smul.addr %s419, 2
      %s423 = sadd.s32 %s421, %s422
      %s424 = smul.addr %s423, 8
      %s425 = scalar_lea.vmem %s4, %s424
      %p426 = scmp.lt.s32.totalorder %s22, 1
      %s427 = scalar_select %p426, %s22, 1
      %s428 = scalar_lea.vmem %s5, %s427
      %p429 = scmp.lt.s32.totalorder %s22, 1
      %s430 = scalar_select %p429, %s22, 1
      %s431 = scalar_lea.vmem %s6, %s430
      // Predicated region
      $region41: #{_lambda_.11} parent=35 // pred_check
        %p432 = pneg %p146
      $region42: #{_lambda_.11} parent=35 // pred_check_branch
        %434 = sbr.rel (%p432) target = $region44
      $region43: #{_lambda_.11} parent=35 // pred_region
        %s435 = smul.u32 2, %s23
      $region44: #{_lambda_.11} parent=35 // pred_fallthru
        _
      // Predicated region
      $region45: #{_lambda_.11} parent=35 // pred_check
        %p436 = pneg %p172
      $region46: #{_lambda_.11} parent=35 // pred_check_branch
        %438 = sbr.rel (%p436) target = $region48
      $region47: #{_lambda_.11} parent=35 // pred_region
        _
      $region48: #{_lambda_.11} parent=35 // pred_fallthru
        _
      // Predicated region
      $region49: #{_lambda_.11} parent=35 // pred_check
        %p439 = pneg %p198
      $region50: #{_lambda_.11} parent=35 // pred_check_branch
        %441 = sbr.rel (%p439) target = $region52
      $region51: #{_lambda_.11} parent=35 // pred_region
        _
      $region52: #{_lambda_.11} parent=35 // pred_fallthru
        _
    $region36: #{_lambda_.11} parent=5 // pred_fallthru
      _
    %p442 = scmp.le.s32.totalorder 2, %s13
    // Predicated region
    $region53: #{_lambda_.11} parent=5 // pred_check
      %p443 = pneg %p442
    $region54: #{_lambda_.11} parent=5 // pred_check_branch
      %445 = sbr.rel (%p443) target = $region56
    $region55: #{_lambda_.11} parent=5 // pred_region
      %s446 = ssub.s32 %s13, 2
      // Predicated region
      $region57: #{_lambda_.11} parent=55 // pred_check
        %p447 = pneg %p152
      $region58: #{_lambda_.11} parent=55 // pred_check_branch
        %449 = sbr.rel (%p447) target = $region60
      $region59: #{_lambda_.11} parent=55 // pred_region
        %s450 = smul.u32 2, %s25
        %p451 = scmp.lt.s32.totalorder %s24, 1
        %s452 = scalar_select %p451, %s24, 1
        %p453 = scmp.lt.s32.totalorder %s450, 1
        %s454 = scalar_select %p453, %s450, 1
        %s455 = smul.addr %s452, 2
        %s456 = sadd.s32 %s454, %s455
        %s457 = smul.addr %s456, 8
        %s458 = scalar_lea.vmem %s4, %s457
      $region60: #{_lambda_.11} parent=55 // pred_fallthru
        _
      // Predicated region
      $region61: #{_lambda_.11} parent=55 // pred_check
        %p459 = pneg %p178
      $region62: #{_lambda_.11} parent=55 // pred_check_branch
        %461 = sbr.rel (%p459) target = $region64
      $region63: #{_lambda_.11} parent=55 // pred_region
        %p462 = scmp.lt.s32.totalorder %s24, 1
        %s463 = scalar_select %p462, %s24, 1
        %s464 = scalar_lea.vmem %s5, %s463
      $region64: #{_lambda_.11} parent=55 // pred_fallthru
        _
      // Predicated region
      $region65: #{_lambda_.11} parent=55 // pred_check
        %p465 = pneg %p204
      $region66: #{_lambda_.11} parent=55 // pred_check_branch
        %467 = sbr.rel (%p465) target = $region68
      $region67: #{_lambda_.11} parent=55 // pred_region
        %p468 = scmp.lt.s32.totalorder %s24, 1
        %s469 = scalar_select %p468, %s24, 1
        %s470 = scalar_lea.vmem %s6, %s469
      $region68: #{_lambda_.11} parent=55 // pred_fallthru
        _
    $region56: #{_lambda_.11} parent=5 // pred_fallthru
      _
  $region6: #{_lambda_.11} parent=0 // loop_footer
    %s17 = sadd.s32 1, %s13
  $region7: #{_lambda_.11} parent=0 // loop_footer_branch
    %12 = sbr.rel target = $region3
  $region8: #{_lambda_.11} parent=0 // loop_exit
    _

// kernel: _lambda_.12
$region0: #{_lambda_.12}
  #allocation0 [shape = 'u32[]', space=smem, size = 0x4, offset = 0x4, fixed_abs, tag = 'smem constant byte address 0x4 - core index']
  #allocation1 [shape = 'u32[144,128]{1,0:T(1,128)}', space=vmem, size = 0x12000, scoped, tag = 'internal scratch']
  %s0 = inlined_call_operand.vmem [shape: f32[2,16,64], index: 0, kind: input, shape index: {}]
  %s1 = inlined_call_operand.vmem [shape: f32[64,128], index: 1, kind: input, shape index: {}]
  %s2 = inlined_call_operand.vmem [shape: f32[1,64], index: 2, kind: input, shape index: {}]
  %s3 = inlined_call_operand.vmem [shape: f32[1,64], index: 3, kind: input, shape index: {}]
  %s4 = inlined_call_operand.vmem [shape: f32[2,16,128], index: 4, kind: output, shape index: {0}]
  %s5 = inlined_call_operand.vmem [shape: f32[2,1,128], index: 5, kind: output, shape index: {1}]
  %s6 = inlined_call_operand.vmem [shape: f32[2,1,128], index: 6, kind: output, shape index: {2}]
  %7 = xla_tuple %s4, %s5, %s6
  %s8 = sld [smem:[#allocation0]]
  $region69: #{_lambda_.12} parent=0
    _
  %s10 = ssub.s32 1, %s8
  %s11 = scalar_select 0, %s10, %s8
  loop: start=0, step=1, limit=4
  $region2: #{_lambda_.12} parent=0 // loop_pre_header
    _
  $region3: #{_lambda_.12} parent=0 // loop_header
    %s13 = sphi 0, %s17
    %p14 = scmp.ge.s32.totalorder %s13, 4
    %s20 = sphi 0, %s32
    %s21 = sphi 0, %s28
    %s22 = sphi 0, %s20
    %s23 = sphi 0, %s21
    %s24 = sphi 0, %s22
    %s25 = sphi 0, %s23
    %s37 = sphi 0, %s39
    %s40 = sphi 0, %s37
    %s41 = sphi 0, %s40
    %s57 = sphi 0, %s41
    %s61 = sphi 0, %s61
    %s63 = sphi 0, %s61
    %s64 = sphi 0, %s63
    %s78 = sphi 0, %s64
    %s82 = sphi 0, %s82
    %s84 = sphi 0, %s82
    %s85 = sphi 0, %s84
    %s99 = sphi 0, %s85
    %s103 = sphi 0, %s103
    %s105 = sphi 0, %s103
    %s106 = sphi 0, %s105
    %s120 = sphi 0, %s106
    %s128 = sphi 0, %s130
    %s131 = sphi 0, %s128
    %s132 = sphi 0, %s131
    %s148 = sphi 0, %s132
    %s154 = sphi 0, %s156
    %s157 = sphi 0, %s154
    %s158 = sphi 0, %s157
    %s174 = sphi 0, %s158
    %s180 = sphi 0, %s182
    %s183 = sphi 0, %s180
    %s184 = sphi 0, %s183
    %s200 = sphi 0, %s184
  $region4: #{_lambda_.12} parent=0 // loop_header_branch
    %16 = sbr.rel (%p14) target = $region8
  $region5: #{_lambda_.12} parent=0 // loop_body
    %s18 = ssub.s32 %s13, 1
    %s19 = ssub.s32 %s13, 2
    %s26 = sadd.s32 1, %s21
    %p27 = scmp.ge.s32.totalorder %s26, 1
    %s28 = scalar_select %p27, 0, %s26
    %s29 = sadd.s32 1, %s20
    %s30 = scalar_select %p27, %s29, %s20
    %p31 = scmp.ge.s32.totalorder %s30, 2
    %s32 = scalar_select %p31, 0, %s30
    %s33 = ssub.s32 %s20, %s32
    %s34 = ssub.s32 %s21, %s28
    %s35 = sor.u32 %s33, %s34
    %p36 = scmp.eq.s32.totalorder %s35, 0
    %s38 = sadd.s32 %s37, 1
    %s39 = scalar_select %p36, %s37, %s38
    %p42 = pneg %p36
    %p43 = scmp.eq.s32.totalorder %s13, 1
    %p44 = por %p42, %p43
    %p45 = scmp.ne.s32.totalorder %s37, %s40
    %p46 = scmp.eq.s32.totalorder %s13, 0
    %p47 = por %p45, %p46
    %p48 = scmp.ne.s32.totalorder %s37, %s40
    %p49 = scmp.eq.s32.totalorder %s18, 1
    %p50 = por %p48, %p49
    %p51 = scmp.ne.s32.totalorder %s40, %s41
    %p52 = scmp.eq.s32.totalorder %s18, 0
    %p53 = por %p51, %p52
    %p54 = scmp.ne.s32.totalorder %s40, %s41
    %p55 = scmp.eq.s32.totalorder %s19, 1
    %p56 = por %p54, %p55
    %p58 = scmp.ne.s32.totalorder %s41, %s57
    %p59 = scmp.eq.s32.totalorder %s19, 0
    %p60 = por %p58, %p59
    %s62 = sadd.s32 %s61, 1
    %p65 = scmp.eq.s32.totalorder %s13, 1
    %p66 = scmp.ne.s32.totalorder %s61, %s63
    %p67 = scmp.eq.s32.totalorder %s13, 0
    %p68 = por %p66, %p67
    %p69 = scmp.ne.s32.totalorder %s61, %s63
    %p70 = scmp.eq.s32.totalorder %s18, 1
    %p71 = por %p69, %p70
    %p72 = scmp.ne.s32.totalorder %s63, %s64
    %p73 = scmp.eq.s32.totalorder %s18, 0
    %p74 = por %p72, %p73
    %p75 = scmp.ne.s32.totalorder %s63, %s64
    %p76 = scmp.eq.s32.totalorder %s19, 1
    %p77 = por %p75, %p76
    %p79 = scmp.ne.s32.totalorder %s64, %s78
    %p80 = scmp.eq.s32.totalorder %s19, 0
    %p81 = por %p79, %p80
    %s83 = sadd.s32 %s82, 1
    %p86 = scmp.eq.s32.totalorder %s13, 1
    %p87 = scmp.ne.s32.totalorder %s82, %s84
    %p88 = scmp.eq.s32.totalorder %s13, 0
    %p89 = por %p87, %p88
    %p90 = scmp.ne.s32.totalorder %s82, %s84
    %p91 = scmp.eq.s32.totalorder %s18, 1
    %p92 = por %p90, %p91
    %p93 = scmp.ne.s32.totalorder %s84, %s85
    %p94 = scmp.eq.s32.totalorder %s18, 0
    %p95 = por %p93, %p94
    %p96 = scmp.ne.s32.totalorder %s84, %s85
    %p97 = scmp.eq.s32.totalorder %s19, 1
    %p98 = por %p96, %p97
    %p100 = scmp.ne.s32.totalorder %s85, %s99
    %p101 = scmp.eq.s32.totalorder %s19, 0
    %p102 = por %p100, %p101
    %s104 = sadd.s32 %s103, 1
    %p107 = scmp.eq.s32.totalorder %s13, 1
    %p108 = scmp.ne.s32.totalorder %s103, %s105
    %p109 = scmp.eq.s32.totalorder %s13, 0
    %p110 = por %p108, %p109
    %p111 = scmp.ne.s32.totalorder %s103, %s105
    %p112 = scmp.eq.s32.totalorder %s18, 1
    %p113 = por %p111, %p112
    %p114 = scmp.ne.s32.totalorder %s105, %s106
    %p115 = scmp.eq.s32.totalorder %s18, 0
    %p116 = por %p114, %p115
    %p117 = scmp.ne.s32.totalorder %s105, %s106
    %p118 = scmp.eq.s32.totalorder %s19, 1
    %p119 = por %p117, %p118
    %p121 = scmp.ne.s32.totalorder %s106, %s120
    %p122 = scmp.eq.s32.totalorder %s19, 0
    %p123 = por %p121, %p122
    %s124 = ssub.s32 %s20, %s32
    %s125 = ssub.s32 %s21, %s28
    %s126 = sor.u32 %s124, %s125
    %p127 = scmp.eq.s32.totalorder %s126, 0
    %s129 = sadd.s32 %s128, 1
    %s130 = scalar_select %p127, %s128, %s129
    %p133 = pneg %p127
    %p134 = scmp.eq.s32.totalorder %s13, 1
    %p135 = por %p133, %p134
    %p136 = scmp.ne.s32.totalorder %s128, %s131
    %p137 = scmp.eq.s32.totalorder %s13, 0
    %p138 = por %p136, %p137
    %p139 = scmp.ne.s32.totalorder %s128, %s131
    %p140 = scmp.eq.s32.totalorder %s18, 1
    %p141 = por %p139, %p140
    %p142 = scmp.ne.s32.totalorder %s131, %s132
    %p143 = scmp.eq.s32.totalorder %s18, 0
    %p144 = por %p142, %p143
    %p145 = scmp.ne.s32.totalorder %s131, %s132
    %p146 = scmp.eq.s32.totalorder %s19, 1
    %p147 = por %p145, %p146
    %p149 = scmp.ne.s32.totalorder %s132, %s148
    %p150 = scmp.eq.s32.totalorder %s19, 0
    %p151 = por %p149, %p150
    %s152 = ssub.s32 %s20, %s32
    %p153 = scmp.eq.s32.totalorder %s152, 0
    %s155 = sadd.s32 %s154, 1
    %s156 = scalar_select %p153, %s154, %s155
    %p159 = pneg %p153
    %p160 = scmp.eq.s32.totalorder %s13, 1
    %p161 = por %p159, %p160
    %p162 = scmp.ne.s32.totalorder %s154, %s157
    %p163 = scmp.eq.s32.totalorder %s13, 0
    %p164 = por %p162, %p163
    %p165 = scmp.ne.s32.totalorder %s154, %s157
    %p166 = scmp.eq.s32.totalorder %s18, 1
    %p167 = por %p165, %p166
    %p168 = scmp.ne.s32.totalorder %s157, %s158
    %p169 = scmp.eq.s32.totalorder %s18, 0
    %p170 = por %p168, %p169
    %p171 = scmp.ne.s32.totalorder %s157, %s158
    %p172 = scmp.eq.s32.totalorder %s19, 1
    %p173 = por %p171, %p172
    %p175 = scmp.ne.s32.totalorder %s158, %s174
    %p176 = scmp.eq.s32.totalorder %s19, 0
    %p177 = por %p175, %p176
    %s178 = ssub.s32 %s20, %s32
    %p179 = scmp.eq.s32.totalorder %s178, 0
    %s181 = sadd.s32 %s180, 1
    %s182 = scalar_select %p179, %s180, %s181
    %p185 = pneg %p179
    %p186 = scmp.eq.s32.totalorder %s13, 1
    %p187 = por %p185, %p186
    %p188 = scmp.ne.s32.totalorder %s180, %s183
    %p189 = scmp.eq.s32.totalorder %s13, 0
    %p190 = por %p188, %p189
    %p191 = scmp.ne.s32.totalorder %s180, %s183
    %p192 = scmp.eq.s32.totalorder %s18, 1
    %p193 = por %p191, %p192
    %p194 = scmp.ne.s32.totalorder %s183, %s184
    %p195 = scmp.eq.s32.totalorder %s18, 0
    %p196 = por %p194, %p195
    %p197 = scmp.ne.s32.totalorder %s183, %s184
    %p198 = scmp.eq.s32.totalorder %s19, 1
    %p199 = por %p197, %p198
    %p201 = scmp.ne.s32.totalorder %s184, %s200
    %p202 = scmp.eq.s32.totalorder %s19, 0
    %p203 = por %p201, %p202
    %p204 = scmp.le.s32.totalorder 1, %s13
    %p205 = scmp.lt.s32.totalorder %s13, 3
    %p206 = pnand %p204, %p205
    %p207 = pneg %p206
    // Predicated region
    $region9: #{_lambda_.12} parent=5 // pred_check
      _
    $region10: #{_lambda_.12} parent=5 // pred_check_branch
      %209 = sbr.rel (%p206) target = $region12
    $region11: #{_lambda_.12} parent=5 // pred_region
      %s210 = ssub.s32 %s13, 1
      // Predicated region
      $region13: #{_lambda_.12} parent=11 // pred_check
        %p211 = pneg %p74
      $region14: #{_lambda_.12} parent=11 // pred_check_branch
        %213 = sbr.rel (%p211) target = $region16
      $region15: #{_lambda_.12} parent=11 // pred_region
        _
      $region16: #{_lambda_.12} parent=11 // pred_fallthru
        _
      // Predicated region
      $region17: #{_lambda_.12} parent=11 // pred_check
        %p214 = pneg %p95
      $region18: #{_lambda_.12} parent=11 // pred_check_branch
        %216 = sbr.rel (%p214) target = $region20
      $region19: #{_lambda_.12} parent=11 // pred_region
        _
      $region20: #{_lambda_.12} parent=11 // pred_fallthru
        _
      // Predicated region
      $region21: #{_lambda_.12} parent=11 // pred_check
        %p217 = pneg %p116
      $region22: #{_lambda_.12} parent=11 // pred_check_branch
        %219 = sbr.rel (%p217) target = $region24
      $region23: #{_lambda_.12} parent=11 // pred_region
        _
      $region24: #{_lambda_.12} parent=11 // pred_fallthru
        _
    $region12: #{_lambda_.12} parent=5 // pred_fallthru
      _
    %p220 = scmp.lt.s32.totalorder %s13, 2
    // Predicated region
    $region25: #{_lambda_.12} parent=5 // pred_check
      %p221 = pneg %p220
    $region26: #{_lambda_.12} parent=5 // pred_check_branch
      %223 = sbr.rel (%p221) target = $region28
    $region27: #{_lambda_.12} parent=5 // pred_region
      // Predicated region
      $region29: #{_lambda_.12} parent=27 // pred_check
        %p224 = pneg %p47
      $region30: #{_lambda_.12} parent=27 // pred_check_branch
        %226 = sbr.rel (%p224) target = $region32
      $region31: #{_lambda_.12} parent=27 // pred_region
        %s227 = smul.u32 2, %s21
        %p228 = scmp.lt.s32.totalorder %s20, 1
        %s229 = scalar_select %p228, %s20, 1
        %p230 = scmp.lt.s32.totalorder %s227, 1
        %s231 = scalar_select %p230, %s227, 1
        %s232 = smul.addr %s229, 2
        %s233 = sadd.s32 %s231, %s232
        %s234 = smul.addr %s233, 8
        %s235 = scalar_lea.vmem %s0, %s234
        %s236 = smul.u32 2, %s21
      $region32: #{_lambda_.12} parent=27 // pred_fallthru
        _
    $region28: #{_lambda_.12} parent=5 // pred_fallthru
      _
    %p237 = scmp.le.s32.totalorder 1, %s13
    %p238 = scmp.lt.s32.totalorder %s13, 3
    %p239 = pnand %p237, %p238
    %p240 = pneg %p239
    // Predicated region
    $region33: #{_lambda_.12} parent=5 // pred_check
      _
    $region34: #{_lambda_.12} parent=5 // pred_check_branch
      %242 = sbr.rel (%p239) target = $region36
    $region35: #{_lambda_.12} parent=5 // pred_region
      %s243 = ssub.s32 %s13, 1
      %s244 = smul.u32 2, %s23
      %p245 = scmp.lt.s32.totalorder %s22, 1
      %s246 = scalar_select %p245, %s22, 1
      %p247 = scmp.lt.s32.totalorder %s244, 1
      %s248 = scalar_select %p247, %s244, 1
      %s249 = smul.addr %s246, 2
      %s250 = sadd.s32 %s248, %s249
      %s251 = smul.addr %s250, 8
      %s252 = scalar_lea.vmem %s0, %s251
      %p253 = pneg %p53
      %p254 = pneg %p50
      %p255 = pneg %p74
      %p256 = pneg %p71
      %p257 = pneg %p95
      %p258 = pneg %p92
      %p259 = pneg %p116
      %p260 = pneg %p113
      %p261 = pneg %p144
      %p262 = pneg %p141
      %s263 = smul.u32 2, %s23
      %p264 = scmp.lt.s32.totalorder %s22, 1
      %s265 = scalar_select %p264, %s22, 1
      %p266 = scmp.lt.s32.totalorder %s263, 1
      %s267 = scalar_select %p266, %s263, 1
      %s268 = smul.addr %s265, 2
      %s269 = sadd.s32 %s267, %s268
      %s270 = smul.addr %s269, 8
      %s271 = scalar_lea.vmem %s4, %s270
      %p272 = pneg %p170
      %p273 = pneg %p167
      %p274 = scmp.lt.s32.totalorder %s22, 1
      %s275 = scalar_select %p274, %s22, 1
      %s276 = scalar_lea.vmem %s5, %s275
      %p277 = pneg %p196
      %p278 = pneg %p193
      %p279 = scmp.lt.s32.totalorder %s22, 1
      %s280 = scalar_select %p279, %s22, 1
      %s281 = scalar_lea.vmem %s6, %s280
      %s282 = smul.u32 2, %s23
      %p283 = scmp.lt.s32.totalorder %s22, 1
      %s284 = scalar_select %p283, %s22, 1
      %p285 = scmp.lt.s32.totalorder %s282, 1
      %s286 = scalar_select %p285, %s282, 1
      %s287 = smul.addr %s284, 2
      %s288 = sadd.s32 %s286, %s287
      %s289 = smul.addr %s288, 8
      %s290 = scalar_lea.vmem %s0, %s289
      %s291 = smul.u32 2, %s23
      %s292 = smul.u32 2, %s23
      %p293 = scmp.lt.s32.totalorder %s22, 1
      %s294 = scalar_select %p293, %s22, 1
      %p295 = scmp.lt.s32.totalorder %s292, 1
      %s296 = scalar_select %p295, %s292, 1
      %s297 = smul.addr %s294, 2
      %s298 = sadd.s32 %s296, %s297
      %s299 = smul.addr %s298, 8
      %s300 = scalar_lea.vmem %s4, %s299
      %s301 = smul.u32 2, %s23
      %p302 = scmp.lt.s32.totalorder %s22, 1
      %s303 = scalar_select %p302, %s22, 1
      %s304 = scalar_lea.vmem %s5, %s303
      %p305 = scmp.lt.s32.totalorder %s22, 1
      %s306 = scalar_select %p305, %s22, 1
      %s307 = scalar_lea.vmem %s6, %s306
      %v309 = vld [vmem:[%s290] sm:$0xff]
      %v310 = vld [vmem:[%s290 + $0x8] sm:$0xff]
      %v311 = vld [vmem:[%s2] sm:$0x1]
      %v313 = vlaneseq
      %v314 = vshrl.u32 %v313, 7
      %v315 = vsub.s32 0, %v314
      %v316 = vrot.slane %v311, %v315
      %v318 = vmul.f32 %v309, %v316
      %v319 = vmul.f32 %v310, %v316
      %v320 = vld [vmem:[%s3] sm:$0x1]
      %v322 = vlaneseq
      %v323 = vshrl.u32 %v322, 7
      %v324 = vsub.s32 0, %v323
      %v325 = vrot.slane %v320, %v324
      %v327 = vadd.f32 %v318, %v325
      %v328 = vadd.f32 %v319, %v325
      %v329 = vmax.f32 %v327, 0.0
      %v330 = vmax.f32 %v328, 0.0
      %v331 = vld [vmem:[%s1] sm:$0xff]
      %v332 = vld [vmem:[%s1 + $0x8] sm:$0xff]
      %v333 = vld [vmem:[%s1 + $0x10] sm:$0xff]
      %v334 = vld [vmem:[%s1 + $0x18] sm:$0xff]
      %v335 = vld [vmem:[%s1 + $0x20] sm:$0xff]
      %v336 = vld [vmem:[%s1 + $0x28] sm:$0xff]
      %v337 = vld [vmem:[%s1 + $0x30] sm:$0xff]
      %v338 = vld [vmem:[%s1 + $0x38] sm:$0xff]
      %v339 = vpack.c.bf16 %v330, %v329
      %v340 = vpack.c.bf16 %v332, %v331
      %v341 = vpack.c.bf16 %v334, %v333
      %v342 = vpack.c.bf16 %v336, %v335
      %v343 = vpack.c.bf16 %v338, %v337
      %vm344 = vcmask 523264
      %v346 = vsel %vm344, %v339, 0
      %348 = vmatprep.subr.bf16.mxu0 0
      %349 = vmatpush1.bf16.msra.mxu0 %v340
      %350 = vmatprep.subr.bf16.mxu0 0
      %351 = vmatpush1.bf16.msra.mxu0 %v341
      %352 = vmatprep.subr.bf16.mxu0 0
      %353 = vmatpush1.bf16.msra.mxu0 %v342
      %354 = vmatprep.subr.bf16.mxu0 0
      %355 = vmatpush1.bf16.msra.mxu0 %v343
      %356 = vmatprep.subr.bf16.mxu0 0
      %357 = vmatpush1.bf16.msra.mxu0 0
      %358 = vmatprep.subr.bf16.mxu0 0
      %359 = vmatpush1.bf16.msra.mxu0 0
      %360 = vmatprep.subr.bf16.mxu0 0
      %361 = vmatpush1.bf16.msra.mxu0 0
      %362 = vmatprep.subr.bf16.mxu0 0
      %363 = vmatpush1.bf16.msra.mxu0 0
      %364 = vmatprep.subr.bf16.mxu0 0
      %365 = vmatpush1.bf16.msra.mxu0 0
      %366 = vmatprep.subr.bf16.mxu0 0
      %367 = vmatpush1.bf16.msra.mxu0 0
      %368 = vmatprep.subr.bf16.mxu0 0
      %369 = vmatpush1.bf16.msra.mxu0 0
      %370 = vmatprep.subr.bf16.mxu0 0
      %371 = vmatpush1.bf16.msra.mxu0 0
      %372 = vmatprep.subr.bf16.mxu0 0
      %373 = vmatpush1.bf16.msra.mxu0 0
      %374 = vmatprep.subr.bf16.mxu0 0
      %375 = vmatpush1.bf16.msra.mxu0 0
      %376 = vmatprep.subr.bf16.mxu0 0
      %377 = vmatpush1.bf16.msra.mxu0 0
      %378 = vmatprep.subr.bf16.mxu0 0
      %379 = vmatpush1.bf16.msra.mxu0 0
      %380 = vmatprep.mubr.bf16.mxu0 0
      %381 = vmatmul.mubr.bf16.gmra.mrb[0].mxu0 %v346
      %v382 = vpop.f32.mrb[0].mxu0
      %v383 = vadd.f32 0.0, %v382
      %v384 = vpop.f32.mrb[0].mxu0
      %v385 = vpop.f32.mrb[0].mxu0
      %v386 = vadd.f32 0.0, %v385
      %v387 = vpop.f32.mrb[0].mxu0
      %388 = vdwg.mxu0
      %389 = vst [vmem:[%s300] sm:$0xff] %v383
      %390 = vst [vmem:[%s300 + $0x8] sm:$0xff] %v386
      %p391 = scmp.eq.s32.totalorder %s23, 0
      // Predicated region
      $region37: #{_lambda_.12} parent=35 // pred_check
        %p392 = pneg %p391
      $region38: #{_lambda_.12} parent=35 // pred_check_branch
        %394 = sbr.rel (%p392) target = $region40
      $region39: #{_lambda_.12} parent=35 // pred_region
        %395 = vst [vmem:[%s304] sm:$0x1] 0.0
        %396 = vst [vmem:[%s307] sm:$0x1] 0.0
      $region40: #{_lambda_.12} parent=35 // pred_fallthru
        _
      %v397 = vld [vmem:[%s304] sm:$0x1]
      %v398 = vadd.f32 %v383, %v386
      %v399 = vrot.slane %v398, 4
      %v400 = vadd.f32 %v398, %v399
      %v401 = vrot.slane %v400, 2
      %v402 = vadd.f32 %v400, %v401
      %v403 = vrot.slane %v402, 1
      %v404 = vadd.f32 %v402, %v403
      %v405 = vadd.f32 %v397, %v404
      %406 = vst [vmem:[%s304] sm:$0x1] %v405
      %v407 = vld [vmem:[%s307] sm:$0x1]
      %v408 = vmul.f32 %v383, %v383
      %v409 = vmul.f32 %v386, %v386
      %v410 = vadd.f32 %v408, %v409
      %v411 = vrot.slane %v410, 4
      %v412 = vadd.f32 %v410, %v411
      %v413 = vrot.slane %v412, 2
      %v414 = vadd.f32 %v412, %v413
      %v415 = vrot.slane %v414, 1
      %v416 = vadd.f32 %v414, %v415
      %v417 = vadd.f32 %v407, %v416
      %418 = vst [vmem:[%s307] sm:$0x1] %v417
      %s419 = smul.u32 2, %s23
      %p420 = scmp.lt.s32.totalorder %s22, 1
      %s421 = scalar_select %p420, %s22, 1
      %p422 = scmp.lt.s32.totalorder %s419, 1
      %s423 = scalar_select %p422, %s419, 1
      %s424 = smul.addr %s421, 2
      %s425 = sadd.s32 %s423, %s424
      %s426 = smul.addr %s425, 8
      %s427 = scalar_lea.vmem %s4, %s426
      %p428 = scmp.lt.s32.totalorder %s22, 1
      %s429 = scalar_select %p428, %s22, 1
      %s430 = scalar_lea.vmem %s5, %s429
      %p431 = scmp.lt.s32.totalorder %s22, 1
      %s432 = scalar_select %p431, %s22, 1
      %s433 = scalar_lea.vmem %s6, %s432
      // Predicated region
      $region41: #{_lambda_.12} parent=35 // pred_check
        %p434 = pneg %p141
      $region42: #{_lambda_.12} parent=35 // pred_check_branch
        %436 = sbr.rel (%p434) target = $region44
      $region43: #{_lambda_.12} parent=35 // pred_region
        %s437 = smul.u32 2, %s23
      $region44: #{_lambda_.12} parent=35 // pred_fallthru
        _
      // Predicated region
      $region45: #{_lambda_.12} parent=35 // pred_check
        %p438 = pneg %p167
      $region46: #{_lambda_.12} parent=35 // pred_check_branch
        %440 = sbr.rel (%p438) target = $region48
      $region47: #{_lambda_.12} parent=35 // pred_region
        _
      $region48: #{_lambda_.12} parent=35 // pred_fallthru
        _
      // Predicated region
      $region49: #{_lambda_.12} parent=35 // pred_check
        %p441 = pneg %p193
      $region50: #{_lambda_.12} parent=35 // pred_check_branch
        %443 = sbr.rel (%p441) target = $region52
      $region51: #{_lambda_.12} parent=35 // pred_region
        _
      $region52: #{_lambda_.12} parent=35 // pred_fallthru
        _
    $region36: #{_lambda_.12} parent=5 // pred_fallthru
      _
    %p444 = scmp.le.s32.totalorder 2, %s13
    // Predicated region
    $region53: #{_lambda_.12} parent=5 // pred_check
      %p445 = pneg %p444
    $region54: #{_lambda_.12} parent=5 // pred_check_branch
      %447 = sbr.rel (%p445) target = $region56
    $region55: #{_lambda_.12} parent=5 // pred_region
      %s448 = ssub.s32 %s13, 2
      // Predicated region
      $region57: #{_lambda_.12} parent=55 // pred_check
        %p449 = pneg %p147
      $region58: #{_lambda_.12} parent=55 // pred_check_branch
        %451 = sbr.rel (%p449) target = $region60
      $region59: #{_lambda_.12} parent=55 // pred_region
        %s452 = smul.u32 2, %s25
        %p453 = scmp.lt.s32.totalorder %s24, 1
        %s454 = scalar_select %p453, %s24, 1
        %p455 = scmp.lt.s32.totalorder %s452, 1
        %s456 = scalar_select %p455, %s452, 1
        %s457 = smul.addr %s454, 2
        %s458 = sadd.s32 %s456, %s457
        %s459 = smul.addr %s458, 8
        %s460 = scalar_lea.vmem %s4, %s459
      $region60: #{_lambda_.12} parent=55 // pred_fallthru
        _
      // Predicated region
      $region61: #{_lambda_.12} parent=55 // pred_check
        %p461 = pneg %p173
      $region62: #{_lambda_.12} parent=55 // pred_check_branch
        %463 = sbr.rel (%p461) target = $region64
      $region63: #{_lambda_.12} parent=55 // pred_region
        %p464 = scmp.lt.s32.totalorder %s24, 1
        %s465 = scalar_select %p464, %s24, 1
        %s466 = scalar_lea.vmem %s5, %s465
      $region64: #{_lambda_.12} parent=55 // pred_fallthru
        _
      // Predicated region
      $region65: #{_lambda_.12} parent=55 // pred_check
        %p467 = pneg %p199
      $region66: #{_lambda_.12} parent=55 // pred_check_branch
        %469 = sbr.rel (%p467) target = $region68
      $region67: #{_lambda_.12} parent=55 // pred_region
        %p470 = scmp.lt.s32.totalorder %s24, 1
        %s471 = scalar_select %p470, %s24, 1
        %s472 = scalar_lea.vmem %s6, %s471
      $region68: #{_lambda_.12} parent=55 // pred_fallthru
        _
    $region56: #{_lambda_.12} parent=5 // pred_fallthru
      _
  $region6: #{_lambda_.12} parent=0 // loop_footer
    %s17 = sadd.s32 1, %s13
  $region7: #{_lambda_.12} parent=0 // loop_footer_branch
    %12 = sbr.rel target = $region3
  $region8: #{_lambda_.12} parent=0 // loop_exit
    _

// kernel: _lambda_.10
$region0: #{_lambda_.10}
  #allocation0 [shape = 'u32[]', space=smem, size = 0x4, offset = 0x4, fixed_abs, tag = 'smem constant byte address 0x4 - core index']
  #allocation1 [shape = 'u32[144,128]{1,0:T(1,128)}', space=vmem, size = 0x12000, scoped, tag = 'internal scratch']
  %s0 = inlined_call_operand.vmem [shape: f32[2,1024], index: 0, kind: input, shape index: {}]
  %s1 = inlined_call_operand.hbm [shape: f32[1024,512], index: 1, kind: input, shape index: {}]
  %s2 = inlined_call_operand.hbm [shape: f32[1,512], index: 2, kind: input, shape index: {}]
  %s3 = inlined_call_operand.hbm [shape: f32[1,512], index: 3, kind: input, shape index: {}]
  %s4 = inlined_call_operand.hbm [shape: f32[512,256], index: 4, kind: input, shape index: {}]
  %s5 = inlined_call_operand.hbm [shape: f32[1,256], index: 5, kind: input, shape index: {}]
  %s6 = inlined_call_operand.hbm [shape: f32[1,256], index: 6, kind: input, shape index: {}]
  %s7 = inlined_call_operand.vmem [shape: f32[256,16], index: 7, kind: input, shape index: {}]
  %s8 = inlined_call_operand.vmem [shape: f32[1,16], index: 8, kind: input, shape index: {}]
  %s9 = inlined_call_operand.vmem [shape: f32[2,16], index: 9, kind: output, shape index: {}]
  %s10 = sld [smem:[#allocation0]]
  $region70: #{_lambda_.10} parent=0
    _
  %s12 = ssub.s32 1, %s10
  %s13 = scalar_select 0, %s12, %s10
  $region1: #{_lambda_.10} parent=0
    #allocation2 [shape = 'u8[2097152]{0}', space=vmem, size = 0x200000, scoped, tag = 'input window, operand 1, single buffered']
    #allocation3 [shape = 's32[1]{0}', space=sflag, size = 0x4, scoped, tag = 'scoped memory for _lambda_.10']
    #allocation4 [shape = 'u8[2048]{0}', space=vmem, size = 0x800, scoped, tag = 'input window, operand 2, single buffered']
    #allocation5 [shape = 's32[1]{0}', space=sflag, size = 0x4, scoped, tag = 'scoped memory for _lambda_.10']
    #allocation6 [shape = 'u8[2048]{0}', space=vmem, size = 0x800, scoped, tag = 'input window, operand 3, single buffered']
    #allocation7 [shape = 'u8[524288]{0}', space=vmem, size = 0x80000, scoped, tag = 'input window, operand 4, single buffered']
    #allocation8 [shape = 's32[1]{0}', space=sflag, size = 0x4, scoped, tag = 'scoped memory for _lambda_.10']
    #allocation9 [shape = 'u8[1024]{0}', space=vmem, size = 0x400, scoped, tag = 'input window, operand 5, single buffered']
    #allocation10 [shape = 'u8[1024]{0}', space=vmem, size = 0x400, scoped, tag = 'input window, operand 6, single buffered']
    #allocation11 [shape = 's32[1]{0}', space=sflag, size = 0x4, scoped, tag = 'scoped memory for _lambda_.10']
    %14 = vsyncpa [#allocation3], 0
    %15 = vsyncpa [#allocation5], 0
    %16 = vsyncpa [#allocation8], 0
    %17 = vsyncpa [#allocation11], 0
    // Predicated region
    $region2: #{_lambda_.10} parent=1 // pred_check
      _
    $region3: #{_lambda_.10} parent=1 // pred_check_branch
      %19 = sbr.rel (0) target = $region5
    $region4: #{_lambda_.10} parent=1 // pred_region
      _
    $region5: #{_lambda_.10} parent=1 // pred_fallthru
      _
    // Predicated region
    $region6: #{_lambda_.10} parent=1 // pred_check
      _
    $region7: #{_lambda_.10} parent=1 // pred_check_branch
      %21 = sbr.rel (0) target = $region9
    $region8: #{_lambda_.10} parent=1 // pred_region
      %s23 = ssub.s32 65536, 65536
      %24 = vsyncadd [#allocation3], %s23
      %s25 = sshll.u32 [#allocation2], 4
      %s26 = int_to_ptr.vmem [resolvable:$true] %s25
      %31 = dma.hbm_to_vmem [thread:$0]  %s1, 65536, %s26, [#allocation3], 512, 512, 32
    $region9: #{_lambda_.10} parent=1 // pred_fallthru
      _
    // Predicated region
    $region10: #{_lambda_.10} parent=1 // pred_check
      _
    $region11: #{_lambda_.10} parent=1 // pred_check_branch
      %33 = sbr.rel (0) target = $region13
    $region12: #{_lambda_.10} parent=1 // pred_region
      %s35 = ssub.s32 64, 64
      %36 = vsyncadd [#allocation5], %s35
      %s38 = sshll.u32 [#allocation4], 4
      %s39 = int_to_ptr.vmem [resolvable:$true] %s38
      %41 = dma.hbm_to_vmem [thread:$0]  %s2, 64, %s39, [#allocation5]
    $region13: #{_lambda_.10} parent=1 // pred_fallthru
      _
    // Predicated region
    $region14: #{_lambda_.10} parent=1 // pred_check
      _
    $region15: #{_lambda_.10} parent=1 // pred_check_branch
      %43 = sbr.rel (0) target = $region17
    $region16: #{_lambda_.10} parent=1 // pred_region
      %s45 = ssub.s32 64, 64
      %46 = vsyncadd [#allocation5], %s45
      %s48 = sshll.u32 [#allocation6], 4
      %s49 = int_to_ptr.vmem [resolvable:$true] %s48
      %51 = dma.hbm_to_vmem [thread:$0]  %s3, 64, %s49, [#allocation5]
    $region17: #{_lambda_.10} parent=1 // pred_fallthru
      _
    // Predicated region
    $region18: #{_lambda_.10} parent=1 // pred_check
      _
    $region19: #{_lambda_.10} parent=1 // pred_check_branch
      %53 = sbr.rel (0) target = $region21
    $region20: #{_lambda_.10} parent=1 // pred_region
      %s55 = ssub.s32 16384, 16384
      %56 = vsyncadd [#allocation8], %s55
      %s57 = sshll.u32 [#allocation7], 4
      %s58 = int_to_ptr.vmem [resolvable:$true] %s57
      %63 = dma.hbm_to_vmem [thread:$0]  %s4, 16384, %s58, [#allocation8], 256, 256, 16
    $region21: #{_lambda_.10} parent=1 // pred_fallthru
      _
    // Predicated region
    $region22: #{_lambda_.10} parent=1 // pred_check
      _
    $region23: #{_lambda_.10} parent=1 // pred_check_branch
      %65 = sbr.rel (0) target = $region25
    $region24: #{_lambda_.10} parent=1 // pred_region
      %s67 = ssub.s32 32, 32
      %68 = vsyncadd [#allocation8], %s67
      %s70 = sshll.u32 [#allocation9], 4
      %s71 = int_to_ptr.vmem [resolvable:$true] %s70
      %73 = dma.hbm_to_vmem [thread:$0]  %s5, 32, %s71, [#allocation8]
    $region25: #{_lambda_.10} parent=1 // pred_fallthru
      _
    // Predicated region
    $region26: #{_lambda_.10} parent=1 // pred_check
      _
    $region27: #{_lambda_.10} parent=1 // pred_check_branch
      %75 = sbr.rel (0) target = $region29
    $region28: #{_lambda_.10} parent=1 // pred_region
      %s77 = ssub.s32 32, 32
      %78 = vsyncadd [#allocation11], %s77
      %s80 = sshll.u32 [#allocation10], 4
      %s81 = int_to_ptr.vmem [resolvable:$true] %s80
      %83 = dma.hbm_to_vmem [thread:$0]  %s6, 32, %s81, [#allocation11]
    $region29: #{_lambda_.10} parent=1 // pred_fallthru
      _
    // Predicated region
    $region30: #{_lambda_.10} parent=1 // pred_check
      _
    $region31: #{_lambda_.10} parent=1 // pred_check_branch
      %85 = sbr.rel (0) target = $region33
    $region32: #{_lambda_.10} parent=1 // pred_region
      _
    $region33: #{_lambda_.10} parent=1 // pred_fallthru
      _
    // Predicated region
    $region34: #{_lambda_.10} parent=1 // pred_check
      _
    $region35: #{_lambda_.10} parent=1 // pred_check_branch
      %87 = sbr.rel (0) target = $region37
    $region36: #{_lambda_.10} parent=1 // pred_region
      _
    $region37: #{_lambda_.10} parent=1 // pred_fallthru
      _
    // Predicated region
    $region38: #{_lambda_.10} parent=1 // pred_check
      _
    $region39: #{_lambda_.10} parent=1 // pred_check_branch
      %89 = sbr.rel (0) target = $region41
    $region40: #{_lambda_.10} parent=1 // pred_region
      %90 = dma.done [#allocation3], 65536
    $region41: #{_lambda_.10} parent=1 // pred_fallthru
      _
    // Predicated region
    $region42: #{_lambda_.10} parent=1 // pred_check
      _
    $region43: #{_lambda_.10} parent=1 // pred_check_branch
      %92 = sbr.rel (0) target = $region45
    $region44: #{_lambda_.10} parent=1 // pred_region
      %93 = dma.done [#allocation5], 64
    $region45: #{_lambda_.10} parent=1 // pred_fallthru
      _
    // Predicated region
    $region46: #{_lambda_.10} parent=1 // pred_check
      _
    $region47: #{_lambda_.10} parent=1 // pred_check_branch
      %95 = sbr.rel (0) target = $region49
    $region48: #{_lambda_.10} parent=1 // pred_region
      %96 = dma.done [#allocation5], 64
    $region49: #{_lambda_.10} parent=1 // pred_fallthru
      _
    // Predicated region
    $region50: #{_lambda_.10} parent=1 // pred_check
      _
    $region51: #{_lambda_.10} parent=1 // pred_check_branch
      %98 = sbr.rel (0) target = $region53
    $region52: #{_lambda_.10} parent=1 // pred_region
      %99 = dma.done [#allocation8], 16384
    $region53: #{_lambda_.10} parent=1 // pred_fallthru
      _
    // Predicated region
    $region54: #{_lambda_.10} parent=1 // pred_check
      _
    $region55: #{_lambda_.10} parent=1 // pred_check_branch
      %101 = sbr.rel (0) target = $region57
    $region56: #{_lambda_.10} parent=1 // pred_region
      %102 = dma.done [#allocation8], 32
    $region57: #{_lambda_.10} parent=1 // pred_fallthru
      _
    // Predicated region
    $region58: #{_lambda_.10} parent=1 // pred_check
      _
    $region59: #{_lambda_.10} parent=1 // pred_check_branch
      %104 = sbr.rel (0) target = $region61
    $region60: #{_lambda_.10} parent=1 // pred_region
      %105 = dma.done [#allocation11], 32
    $region61: #{_lambda_.10} parent=1 // pred_fallthru
      _
    %v107 = vld [vmem:[%s0] sm:$0xff]
    %v108 = vld [vmem:[%s0 + $0x8] sm:$0xff]
    %v109 = vld [vmem:[#allocation2] sm:$0xff]
    %v110 = vld [vmem:[#allocation2 + $0x8] sm:$0xff]
    %v111 = vld [vmem:[#allocation2 + $0x10] sm:$0xff]
    %v112 = vld [vmem:[#allocation2 + $0x18] sm:$0xff]
    %v113 = vld [vmem:[#allocation2 + $0x20] sm:$0xff]
    %v114 = vld [vmem:[#allocation2 + $0x28] sm:$0xff]
    %v115 = vld [vmem:[#allocation2 + $0x30] sm:$0xff]
    %v116 = vld [vmem:[#allocation2 + $0x38] sm:$0xff]
    %v117 = vld [vmem:[#allocation2 + $0x40] sm:$0xff]
    %v118 = vld [vmem:[#allocation2 + $0x48] sm:$0xff]
    %v119 = vld [vmem:[#allocation2 + $0x50] sm:$0xff]
    %v120 = vld [vmem:[#allocation2 + $0x58] sm:$0xff]
    %v121 = vld [vmem:[#allocation2 + $0x60] sm:$0xff]
    %v122 = vld [vmem:[#allocation2 + $0x68] sm:$0xff]
    %v123 = vld [vmem:[#allocation2 + $0x70] sm:$0xff]
    %v124 = vld [vmem:[#allocation2 + $0x78] sm:$0xff]
    %v125 = vld [vmem:[#allocation2 + $0x80] sm:$0xff]
    %v126 = vld [vmem:[#allocation2 + $0x88] sm:$0xff]
    %v127 = vld [vmem:[#allocation2 + $0x90] sm:$0xff]
    %v128 = vld [vmem:[#allocation2 + $0x98] sm:$0xff]
    %v129 = vld [vmem:[#allocation2 + $0xa0] sm:$0xff]
    %v130 = vld [vmem:[#allocation2 + $0xa8] sm:$0xff]
    %v131 = vld [vmem:[#allocation2 + $0xb0] sm:$0xff]
    %v132 = vld [vmem:[#allocation2 + $0xb8] sm:$0xff]
    %v133 = vld [vmem:[#allocation2 + $0xc0] sm:$0xff]
    %v134 = vld [vmem:[#allocation2 + $0xc8] sm:$0xff]
    %v135 = vld [vmem:[#allocation2 + $0xd0] sm:$0xff]
    %v136 = vld [vmem:[#allocation2 + $0xd8] sm:$0xff]
    %v137 = vld [vmem:[#allocation2 + $0xe0] sm:$0xff]
    %v138 = vld [vmem:[#allocation2 + $0xe8] sm:$0xff]
    %v139 = vld [vmem:[#allocation2 + $0xf0] sm:$0xff]
    %v140 = vld [vmem:[#allocation2 + $0xf8] sm:$0xff]
    %v141 = vld [vmem:[#allocation2 + $0x100] sm:$0xff]
    %v142 = vld [vmem:[#allocation2 + $0x108] sm:$0xff]
    %v143 = vld [vmem:[#allocation2 + $0x110] sm:$0xff]
    %v144 = vld [vmem:[#allocation2 + $0x118] sm:$0xff]
    %v145 = vld [vmem:[#allocation2 + $0x120] sm:$0xff]
    %v146 = vld [vmem:[#allocation2 + $0x128] sm:$0xff]
    %v147 = vld [vmem:[#allocation2 + $0x130] sm:$0xff]
    %v148 = vld [vmem:[#allocation2 + $0x138] sm:$0xff]
    %v149 = vld [vmem:[#allocation2 + $0x140] sm:$0xff]
    %v150 = vld [vmem:[#allocation2 + $0x148] sm:$0xff]
    %v151 = vld [vmem:[#allocation2 + $0x150] sm:$0xff]
    %v152 = vld [vmem:[#allocation2 + $0x158] sm:$0xff]
    %v153 = vld [vmem:[#allocation2 + $0x160] sm:$0xff]
    %v154 = vld [vmem:[#allocation2 + $0x168] sm:$0xff]
    %v155 = vld [vmem:[#allocation2 + $0x170] sm:$0xff]
    %v156 = vld [vmem:[#allocation2 + $0x178] sm:$0xff]
    %v157 = vld [vmem:[#allocation2 + $0x180] sm:$0xff]
    %v158 = vld [vmem:[#allocation2 + $0x188] sm:$0xff]
    %v159 = vld [vmem:[#allocation2 + $0x190] sm:$0xff]
    %v160 = vld [vmem:[#allocation2 + $0x198] sm:$0xff]
    %v161 = vld [vmem:[#allocation2 + $0x1a0] sm:$0xff]
    %v162 = vld [vmem:[#allocation2 + $0x1a8] sm:$0xff]
    %v163 = vld [vmem:[#allocation2 + $0x1b0] sm:$0xff]
    %v164 = vld [vmem:[#allocation2 + $0x1b8] sm:$0xff]
    %v165 = vld [vmem:[#allocation2 + $0x1c0] sm:$0xff]
    %v166 = vld [vmem:[#allocation2 + $0x1c8] sm:$0xff]
    %v167 = vld [vmem:[#allocation2 + $0x1d0] sm:$0xff]
    %v168 = vld [vmem:[#allocation2 + $0x1d8] sm:$0xff]
    %v169 = vld [vmem:[#allocation2 + $0x1e0] sm:$0xff]
    %v170 = vld [vmem:[#allocation2 + $0x1e8] sm:$0xff]
    %v171 = vld [vmem:[#allocation2 + $0x1f0] sm:$0xff]
    %v172 = vld [vmem:[#allocation2 + $0x1f8] sm:$0xff]
    %v173 = vld [vmem:[#allocation2 + $0x200] sm:$0xff]
    %v174 = vld [vmem:[#allocation2 + $0x208] sm:$0xff]
    %v175 = vld [vmem:[#allocation2 + $0x210] sm:$0xff]
    %v176 = vld [vmem:[#allocation2 + $0x218] sm:$0xff]
    %v177 = vld [vmem:[#allocation2 + $0x220] sm:$0xff]
    %v178 = vld [vmem:[#allocation2 + $0x228] sm:$0xff]
    %v179 = vld [vmem:[#allocation2 + $0x230] sm:$0xff]
    %v180 = vld [vmem:[#allocation2 + $0x238] sm:$0xff]
    %v181 = vld [vmem:[#allocation2 + $0x240] sm:$0xff]
    %v182 = vld [vmem:[#allocation2 + $0x248] sm:$0xff]
    %v183 = vld [vmem:[#allocation2 + $0x250] sm:$0xff]
    %v184 = vld [vmem:[#allocation2 + $0x258] sm:$0xff]
    %v185 = vld [vmem:[#allocation2 + $0x260] sm:$0xff]
    %v186 = vld [vmem:[#allocation2 + $0x268] sm:$0xff]
    %v187 = vld [vmem:[#allocation2 + $0x270] sm:$0xff]
    %v188 = vld [vmem:[#allocation2 + $0x278] sm:$0xff]
    %v189 = vld [vmem:[#allocation2 + $0x280] sm:$0xff]
    %v190 = vld [vmem:[#allocation2 + $0x288] sm:$0xff]
    %v191 = vld [vmem:[#allocation2 + $0x290] sm:$0xff]
    %v192 = vld [vmem:[#allocation2 + $0x298] sm:$0xff]
    %v193 = vld [vmem:[#allocation2 + $0x2a0] sm:$0xff]
    %v194 = vld [vmem:[#allocation2 + $0x2a8] sm:$0xff]
    %v195 = vld [vmem:[#allocation2 + $0x2b0] sm:$0xff]
    %v196 = vld [vmem:[#allocation2 + $0x2b8] sm:$0xff]
    %v197 = vld [vmem:[#allocation2 + $0x2c0] sm:$0xff]
    %v198 = vld [vmem:[#allocation2 + $0x2c8] sm:$0xff]
    %v199 = vld [vmem:[#allocation2 + $0x2d0] sm:$0xff]
    %v200 = vld [vmem:[#allocation2 + $0x2d8] sm:$0xff]
    %v201 = vld [vmem:[#allocation2 + $0x2e0] sm:$0xff]
    %v202 = vld [vmem:[#allocation2 + $0x2e8] sm:$0xff]
    %v203 = vld [vmem:[#allocation2 + $0x2f0] sm:$0xff]
    %v204 = vld [vmem:[#allocation2 + $0x2f8] sm:$0xff]
    %v205 = vld [vmem:[#allocation2 + $0x300] sm:$0xff]
    %v206 = vld [vmem:[#allocation2 + $0x308] sm:$0xff]
    %v207 = vld [vmem:[#allocation2 + $0x310] sm:$0xff]
    %v208 = vld [vmem:[#allocation2 + $0x318] sm:$0xff]
    %v209 = vld [vmem:[#allocation2 + $0x320] sm:$0xff]
    %v210 = vld [vmem:[#allocation2 + $0x328] sm:$0xff]
    %v211 = vld [vmem:[#allocation2 + $0x330] sm:$0xff]
    %v212 = vld [vmem:[#allocation2 + $0x338] sm:$0xff]
    %v213 = vld [vmem:[#allocation2 + $0x340] sm:$0xff]
    %v214 = vld [vmem:[#allocation2 + $0x348] sm:$0xff]
    %v215 = vld [vmem:[#allocation2 + $0x350] sm:$0xff]
    %v216 = vld [vmem:[#allocation2 + $0x358] sm:$0xff]
    %v217 = vld [vmem:[#allocation2 + $0x360] sm:$0xff]
    %v218 = vld [vmem:[#allocation2 + $0x368] sm:$0xff]
    %v219 = vld [vmem:[#allocation2 + $0x370] sm:$0xff]
    %v220 = vld [vmem:[#allocation2 + $0x378] sm:$0xff]
    %v221 = vld [vmem:[#allocation2 + $0x380] sm:$0xff]
    %v222 = vld [vmem:[#allocation2 + $0x388] sm:$0xff]
    %v223 = vld [vmem:[#allocation2 + $0x390] sm:$0xff]
    %v224 = vld [vmem:[#allocation2 + $0x398] sm:$0xff]
    %v225 = vld [vmem:[#allocation2 + $0x3a0] sm:$0xff]
    %v226 = vld [vmem:[#allocation2 + $0x3a8] sm:$0xff]
    %v227 = vld [vmem:[#allocation2 + $0x3b0] sm:$0xff]
    %v228 = vld [vmem:[#allocation2 + $0x3b8] sm:$0xff]
    %v229 = vld [vmem:[#allocation2 + $0x3c0] sm:$0xff]
    %v230 = vld [vmem:[#allocation2 + $0x3c8] sm:$0xff]
    %v231 = vld [vmem:[#allocation2 + $0x3d0] sm:$0xff]
    %v232 = vld [vmem:[#allocation2 + $0x3d8] sm:$0xff]
    %v233 = vld [vmem:[#allocation2 + $0x3e0] sm:$0xff]
    %v234 = vld [vmem:[#allocation2 + $0x3e8] sm:$0xff]
    %v235 = vld [vmem:[#allocation2 + $0x3f0] sm:$0xff]
    %v236 = vld [vmem:[#allocation2 + $0x3f8] sm:$0xff]
    %v237 = vld [vmem:[#allocation2 + $0x400] sm:$0xff]
    %v238 = vld [vmem:[#allocation2 + $0x408] sm:$0xff]
    %v239 = vld [vmem:[#allocation2 + $0x410] sm:$0xff]
    %v240 = vld [vmem:[#allocation2 + $0x418] sm:$0xff]
    %v241 = vld [vmem:[#allocation2 + $0x420] sm:$0xff]
    %v242 = vld [vmem:[#allocation2 + $0x428] sm:$0xff]
    %v243 = vld [vmem:[#allocation2 + $0x430] sm:$0xff]
    %v244 = vld [vmem:[#allocation2 + $0x438] sm:$0xff]
    %v245 = vld [vmem:[#allocation2 + $0x440] sm:$0xff]
    %v246 = vld [vmem:[#allocation2 + $0x448] sm:$0xff]
    %v247 = vld [vmem:[#allocation2 + $0x450] sm:$0xff]
    %v248 = vld [vmem:[#allocation2 + $0x458] sm:$0xff]
    %v249 = vld [vmem:[#allocation2 + $0x460] sm:$0xff]
    %v250 = vld [vmem:[#allocation2 + $0x468] sm:$0xff]
    %v251 = vld [vmem:[#allocation2 + $0x470] sm:$0xff]
    %v252 = vld [vmem:[#allocation2 + $0x478] sm:$0xff]
    %v253 = vld [vmem:[#allocation2 + $0x480] sm:$0xff]
    %v254 = vld [vmem:[#allocation2 + $0x488] sm:$0xff]
    %v255 = vld [vmem:[#allocation2 + $0x490] sm:$0xff]
    %v256 = vld [vmem:[#allocation2 + $0x498] sm:$0xff]
    %v257 = vld [vmem:[#allocation2 + $0x4a0] sm:$0xff]
    %v258 = vld [vmem:[#allocation2 + $0x4a8] sm:$0xff]
    %v259 = vld [vmem:[#allocation2 + $0x4b0] sm:$0xff]
    %v260 = vld [vmem:[#allocation2 + $0x4b8] sm:$0xff]
    %v261 = vld [vmem:[#allocation2 + $0x4c0] sm:$0xff]
    %v262 = vld [vmem:[#allocation2 + $0x4c8] sm:$0xff]
    %v263 = vld [vmem:[#allocation2 + $0x4d0] sm:$0xff]
    %v264 = vld [vmem:[#allocation2 + $0x4d8] sm:$0xff]
    %v265 = vld [vmem:[#allocation2 + $0x4e0] sm:$0xff]
    %v266 = vld [vmem:[#allocation2 + $0x4e8] sm:$0xff]
    %v267 = vld [vmem:[#allocation2 + $0x4f0] sm:$0xff]
    %v268 = vld [vmem:[#allocation2 + $0x4f8] sm:$0xff]
    %v269 = vld [vmem:[#allocation2 + $0x500] sm:$0xff]
    %v270 = vld [vmem:[#allocation2 + $0x508] sm:$0xff]
    %v271 = vld [vmem:[#allocation2 + $0x510] sm:$0xff]
    %v272 = vld [vmem:[#allocation2 + $0x518] sm:$0xff]
    %v273 = vld [vmem:[#allocation2 + $0x520] sm:$0xff]
    %v274 = vld [vmem:[#allocation2 + $0x528] sm:$0xff]
    %v275 = vld [vmem:[#allocation2 + $0x530] sm:$0xff]
    %v276 = vld [vmem:[#allocation2 + $0x538] sm:$0xff]
    %v277 = vld [vmem:[#allocation2 + $0x540] sm:$0xff]
    %v278 = vld [vmem:[#allocation2 + $0x548] sm:$0xff]
    %v279 = vld [vmem:[#allocation2 + $0x550] sm:$0xff]
    %v280 = vld [vmem:[#allocation2 + $0x558] sm:$0xff]
    %v281 = vld [vmem:[#allocation2 + $0x560] sm:$0xff]
    %v282 = vld [vmem:[#allocation2 + $0x568] sm:$0xff]
    %v283 = vld [vmem:[#allocation2 + $0x570] sm:$0xff]
    %v284 = vld [vmem:[#allocation2 + $0x578] sm:$0xff]
    %v285 = vld [vmem:[#allocation2 + $0x580] sm:$0xff]
    %v286 = vld [vmem:[#allocation2 + $0x588] sm:$0xff]
    %v287 = vld [vmem:[#allocation2 + $0x590] sm:$0xff]
    %v288 = vld [vmem:[#allocation2 + $0x598] sm:$0xff]
    %v289 = vld [vmem:[#allocation2 + $0x5a0] sm:$0xff]
    %v290 = vld [vmem:[#allocation2 + $0x5a8] sm:$0xff]
    %v291 = vld [vmem:[#allocation2 + $0x5b0] sm:$0xff]
    %v292 = vld [vmem:[#allocation2 + $0x5b8] sm:$0xff]
    %v293 = vld [vmem:[#allocation2 + $0x5c0] sm:$0xff]
    %v294 = vld [vmem:[#allocation2 + $0x5c8] sm:$0xff]
    %v295 = vld [vmem:[#allocation2 + $0x5d0] sm:$0xff]
    %v296 = vld [vmem:[#allocation2 + $0x5d8] sm:$0xff]
    %v297 = vld [vmem:[#allocation2 + $0x5e0] sm:$0xff]
    %v298 = vld [vmem:[#allocation2 + $0x5e8] sm:$0xff]
    %v299 = vld [vmem:[#allocation2 + $0x5f0] sm:$0xff]
    %v300 = vld [vmem:[#allocation2 + $0x5f8] sm:$0xff]
    %v301 = vld [vmem:[#allocation2 + $0x600] sm:$0xff]
    %v302 = vld [vmem:[#allocation2 + $0x608] sm:$0xff]
    %v303 = vld [vmem:[#allocation2 + $0x610] sm:$0xff]
    %v304 = vld [vmem:[#allocation2 + $0x618] sm:$0xff]
    %v305 = vld [vmem:[#allocation2 + $0x620] sm:$0xff]
    %v306 = vld [vmem:[#allocation2 + $0x628] sm:$0xff]
    %v307 = vld [vmem:[#allocation2 + $0x630] sm:$0xff]
    %v308 = vld [vmem:[#allocation2 + $0x638] sm:$0xff]
    %v309 = vld [vmem:[#allocation2 + $0x640] sm:$0xff]
    %v310 = vld [vmem:[#allocation2 + $0x648] sm:$0xff]
    %v311 = vld [vmem:[#allocation2 + $0x650] sm:$0xff]
    %v312 = vld [vmem:[#allocation2 + $0x658] sm:$0xff]
    %v313 = vld [vmem:[#allocation2 + $0x660] sm:$0xff]
    %v314 = vld [vmem:[#allocation2 + $0x668] sm:$0xff]
    %v315 = vld [vmem:[#allocation2 + $0x670] sm:$0xff]
    %v316 = vld [vmem:[#allocation2 + $0x678] sm:$0xff]
    %v317 = vld [vmem:[#allocation2 + $0x680] sm:$0xff]
    %v318 = vld [vmem:[#allocation2 + $0x688] sm:$0xff]
    %v319 = vld [vmem:[#allocation2 + $0x690] sm:$0xff]
    %v320 = vld [vmem:[#allocation2 + $0x698] sm:$0xff]
    %v321 = vld [vmem:[#allocation2 + $0x6a0] sm:$0xff]
    %v322 = vld [vmem:[#allocation2 + $0x6a8] sm:$0xff]
    %v323 = vld [vmem:[#allocation2 + $0x6b0] sm:$0xff]
    %v324 = vld [vmem:[#allocation2 + $0x6b8] sm:$0xff]
    %v325 = vld [vmem:[#allocation2 + $0x6c0] sm:$0xff]
    %v326 = vld [vmem:[#allocation2 + $0x6c8] sm:$0xff]
    %v327 = vld [vmem:[#allocation2 + $0x6d0] sm:$0xff]
    %v328 = vld [vmem:[#allocation2 + $0x6d8] sm:$0xff]
    %v329 = vld [vmem:[#allocation2 + $0x6e0] sm:$0xff]
    %v330 = vld [vmem:[#allocation2 + $0x6e8] sm:$0xff]
    %v331 = vld [vmem:[#allocation2 + $0x6f0] sm:$0xff]
    %v332 = vld [vmem:[#allocation2 + $0x6f8] sm:$0xff]
    %v333 = vld [vmem:[#allocation2 + $0x700] sm:$0xff]
    %v334 = vld [vmem:[#allocation2 + $0x708] sm:$0xff]
    %v335 = vld [vmem:[#allocation2 + $0x710] sm:$0xff]
    %v336 = vld [vmem:[#allocation2 + $0x718] sm:$0xff]
    %v337 = vld [vmem:[#allocation2 + $0x720] sm:$0xff]
    %v338 = vld [vmem:[#allocation2 + $0x728] sm:$0xff]
    %v339 = vld [vmem:[#allocation2 + $0x730] sm:$0xff]
    %v340 = vld [vmem:[#allocation2 + $0x738] sm:$0xff]
    %v341 = vld [vmem:[#allocation2 + $0x740] sm:$0xff]
    %v342 = vld [vmem:[#allocation2 + $0x748] sm:$0xff]
    %v343 = vld [vmem:[#allocation2 + $0x750] sm:$0xff]
    %v344 = vld [vmem:[#allocation2 + $0x758] sm:$0xff]
    %v345 = vld [vmem:[#allocation2 + $0x760] sm:$0xff]
    %v346 = vld [vmem:[#allocation2 + $0x768] sm:$0xff]
    %v347 = vld [vmem:[#allocation2 + $0x770] sm:$0xff]
    %v348 = vld [vmem:[#allocation2 + $0x778] sm:$0xff]
    %v349 = vld [vmem:[#allocation2 + $0x780] sm:$0xff]
    %v350 = vld [vmem:[#allocation2 + $0x788] sm:$0xff]
    %v351 = vld [vmem:[#allocation2 + $0x790] sm:$0xff]
    %v352 = vld [vmem:[#allocation2 + $0x798] sm:$0xff]
    %v353 = vld [vmem:[#allocation2 + $0x7a0] sm:$0xff]
    %v354 = vld [vmem:[#allocation2 + $0x7a8] sm:$0xff]
    %v355 = vld [vmem:[#allocation2 + $0x7b0] sm:$0xff]
    %v356 = vld [vmem:[#allocation2 + $0x7b8] sm:$0xff]
    %v357 = vld [vmem:[#allocation2 + $0x7c0] sm:$0xff]
    %v358 = vld [vmem:[#allocation2 + $0x7c8] sm:$0xff]
    %v359 = vld [vmem:[#allocation2 + $0x7d0] sm:$0xff]
    %v360 = vld [vmem:[#allocation2 + $0x7d8] sm:$0xff]
    %v361 = vld [vmem:[#allocation2 + $0x7e0] sm:$0xff]
    %v362 = vld [vmem:[#allocation2 + $0x7e8] sm:$0xff]
    %v363 = vld [vmem:[#allocation2 + $0x7f0] sm:$0xff]
    %v364 = vld [vmem:[#allocation2 + $0x7f8] sm:$0xff]
    %v365 = vld [vmem:[#allocation2 + $0x800] sm:$0xff]
    %v366 = vld [vmem:[#allocation2 + $0x808] sm:$0xff]
    %v367 = vld [vmem:[#allocation2 + $0x810] sm:$0xff]
    %v368 = vld [vmem:[#allocation2 + $0x818] sm:$0xff]
    %v369 = vld [vmem:[#allocation2 + $0x820] sm:$0xff]
    %v370 = vld [vmem:[#allocation2 + $0x828] sm:$0xff]
    %v371 = vld [vmem:[#allocation2 + $0x830] sm:$0xff]
    %v372 = vld [vmem:[#allocation2 + $0x838] sm:$0xff]
    %v373 = vld [vmem:[#allocation2 + $0x840] sm:$0xff]
    %v374 = vld [vmem:[#allocation2 + $0x848] sm:$0xff]
    %v375 = vld [vmem:[#allocation2 + $0x850] sm:$0xff]
    %v376 = vld [vmem:[#allocation2 + $0x858] sm:$0xff]
    %v377 = vld [vmem:[#allocation2 + $0x860] sm:$0xff]
    %v378 = vld [vmem:[#allocation2 + $0x868] sm:$0xff]
    %v379 = vld [vmem:[#allocation2 + $0x870] sm:$0xff]
    %v380 = vld [vmem:[#allocation2 + $0x878] sm:$0xff]
    %v381 = vld [vmem:[#allocation2 + $0x880] sm:$0xff]
    %v382 = vld [vmem:[#allocation2 + $0x888] sm:$0xff]
    %v383 = vld [vmem:[#allocation2 + $0x890] sm:$0xff]
    %v384 = vld [vmem:[#allocation2 + $0x898] sm:$0xff]
    %v385 = vld [vmem:[#allocation2 + $0x8a0] sm:$0xff]
    %v386 = vld [vmem:[#allocation2 + $0x8a8] sm:$0xff]
    %v387 = vld [vmem:[#allocation2 + $0x8b0] sm:$0xff]
    %v388 = vld [vmem:[#allocation2 + $0x8b8] sm:$0xff]
    %v389 = vld [vmem:[#allocation2 + $0x8c0] sm:$0xff]
    %v390 = vld [vmem:[#allocation2 + $0x8c8] sm:$0xff]
    %v391 = vld [vmem:[#allocation2 + $0x8d0] sm:$0xff]
    %v392 = vld [vmem:[#allocation2 + $0x8d8] sm:$0xff]
    %v393 = vld [vmem:[#allocation2 + $0x8e0] sm:$0xff]
    %v394 = vld [vmem:[#allocation2 + $0x8e8] sm:$0xff]
    %v395 = vld [vmem:[#allocation2 + $0x8f0] sm:$0xff]
    %v396 = vld [vmem:[#allocation2 + $0x8f8] sm:$0xff]
    %v397 = vld [vmem:[#allocation2 + $0x900] sm:$0xff]
    %v398 = vld [vmem:[#allocation2 + $0x908] sm:$0xff]
    %v399 = vld [vmem:[#allocation2 + $0x910] sm:$0xff]
    %v400 = vld [vmem:[#allocation2 + $0x918] sm:$0xff]
    %v401 = vld [vmem:[#allocation2 + $0x920] sm:$0xff]
    %v402 = vld [vmem:[#allocation2 + $0x928] sm:$0xff]
    %v403 = vld [vmem:[#allocation2 + $0x930] sm:$0xff]
    %v404 = vld [vmem:[#allocation2 + $0x938] sm:$0xff]
    %v405 = vld [vmem:[#allocation2 + $0x940] sm:$0xff]
    %v406 = vld [vmem:[#allocation2 + $0x948] sm:$0xff]
    %v407 = vld [vmem:[#allocation2 + $0x950] sm:$0xff]
    %v408 = vld [vmem:[#allocation2 + $0x958] sm:$0xff]
    %v409 = vld [vmem:[#allocation2 + $0x960] sm:$0xff]
    %v410 = vld [vmem:[#allocation2 + $0x968] sm:$0xff]
    %v411 = vld [vmem:[#allocation2 + $0x970] sm:$0xff]
    %v412 = vld [vmem:[#allocation2 + $0x978] sm:$0xff]
    %v413 = vld [vmem:[#allocation2 + $0x980] sm:$0xff]
    %v414 = vld [vmem:[#allocation2 + $0x988] sm:$0xff]
    %v415 = vld [vmem:[#allocation2 + $0x990] sm:$0xff]
    %v416 = vld [vmem:[#allocation2 + $0x998] sm:$0xff]
    %v417 = vld [vmem:[#allocation2 + $0x9a0] sm:$0xff]
    %v418 = vld [vmem:[#allocation2 + $0x9a8] sm:$0xff]
    %v419 = vld [vmem:[#allocation2 + $0x9b0] sm:$0xff]
    %v420 = vld [vmem:[#allocation2 + $0x9b8] sm:$0xff]
    %v421 = vld [vmem:[#allocation2 + $0x9c0] sm:$0xff]
    %v422 = vld [vmem:[#allocation2 + $0x9c8] sm:$0xff]
    %v423 = vld [vmem:[#allocation2 + $0x9d0] sm:$0xff]
    %v424 = vld [vmem:[#allocation2 + $0x9d8] sm:$0xff]
    %v425 = vld [vmem:[#allocation2 + $0x9e0] sm:$0xff]
    %v426 = vld [vmem:[#allocation2 + $0x9e8] sm:$0xff]
    %v427 = vld [vmem:[#allocation2 + $0x9f0] sm:$0xff]
    %v428 = vld [vmem:[#allocation2 + $0x9f8] sm:$0xff]
    %v429 = vld [vmem:[#allocation2 + $0xa00] sm:$0xff]
    %v430 = vld [vmem:[#allocation2 + $0xa08] sm:$0xff]
    %v431 = vld [vmem:[#allocation2 + $0xa10] sm:$0xff]
    %v432 = vld [vmem:[#allocation2 + $0xa18] sm:$0xff]
    %v433 = vld [vmem:[#allocation2 + $0xa20] sm:$0xff]
    %v434 = vld [vmem:[#allocation2 + $0xa28] sm:$0xff]
    %v435 = vld [vmem:[#allocation2 + $0xa30] sm:$0xff]
    %v436 = vld [vmem:[#allocation2 + $0xa38] sm:$0xff]
    %v437 = vld [vmem:[#allocation2 + $0xa40] sm:$0xff]
    %v438 = vld [vmem:[#allocation2 + $0xa48] sm:$0xff]
    %v439 = vld [vmem:[#allocation2 + $0xa50] sm:$0xff]
    %v440 = vld [vmem:[#allocation2 + $0xa58] sm:$0xff]
    %v441 = vld [vmem:[#allocation2 + $0xa60] sm:$0xff]
    %v442 = vld [vmem:[#allocation2 + $0xa68] sm:$0xff]
    %v443 = vld [vmem:[#allocation2 + $0xa70] sm:$0xff]
    %v444 = vld [vmem:[#allocation2 + $0xa78] sm:$0xff]
    %v445 = vld [vmem:[#allocation2 + $0xa80] sm:$0xff]
    %v446 = vld [vmem:[#allocation2 + $0xa88] sm:$0xff]
    %v447 = vld [vmem:[#allocation2 + $0xa90] sm:$0xff]
    %v448 = vld [vmem:[#allocation2 + $0xa98] sm:$0xff]
    %v449 = vld [vmem:[#allocation2 + $0xaa0] sm:$0xff]
    %v450 = vld [vmem:[#allocation2 + $0xaa8] sm:$0xff]
    %v451 = vld [vmem:[#allocation2 + $0xab0] sm:$0xff]
    %v452 = vld [vmem:[#allocation2 + $0xab8] sm:$0xff]
    %v453 = vld [vmem:[#allocation2 + $0xac0] sm:$0xff]
    %v454 = vld [vmem:[#allocation2 + $0xac8] sm:$0xff]
    %v455 = vld [vmem:[#allocation2 + $0xad0] sm:$0xff]
    %v456 = vld [vmem:[#allocation2 + $0xad8] sm:$0xff]
    %v457 = vld [vmem:[#allocation2 + $0xae0] sm:$0xff]
    %v458 = vld [vmem:[#allocation2 + $0xae8] sm:$0xff]
    %v459 = vld [vmem:[#allocation2 + $0xaf0] sm:$0xff]
    %v460 = vld [vmem:[#allocation2 + $0xaf8] sm:$0xff]
    %v461 = vld [vmem:[#allocation2 + $0xb00] sm:$0xff]
    %v462 = vld [vmem:[#allocation2 + $0xb08] sm:$0xff]
    %v463 = vld [vmem:[#allocation2 + $0xb10] sm:$0xff]
    %v464 = vld [vmem:[#allocation2 + $0xb18] sm:$0xff]
    %v465 = vld [vmem:[#allocation2 + $0xb20] sm:$0xff]
    %v466 = vld [vmem:[#allocation2 + $0xb28] sm:$0xff]
    %v467 = vld [vmem:[#allocation2 + $0xb30] sm:$0xff]
    %v468 = vld [vmem:[#allocation2 + $0xb38] sm:$0xff]
    %v469 = vld [vmem:[#allocation2 + $0xb40] sm:$0xff]
    %v470 = vld [vmem:[#allocation2 + $0xb48] sm:$0xff]
    %v471 = vld [vmem:[#allocation2 + $0xb50] sm:$0xff]
    %v472 = vld [vmem:[#allocation2 + $0xb58] sm:$0xff]
    %v473 = vld [vmem:[#allocation2 + $0xb60] sm:$0xff]
    %v474 = vld [vmem:[#allocation2 + $0xb68] sm:$0xff]
    %v475 = vld [vmem:[#allocation2 + $0xb70] sm:$0xff]
    %v476 = vld [vmem:[#allocation2 + $0xb78] sm:$0xff]
    %v477 = vld [vmem:[#allocation2 + $0xb80] sm:$0xff]
    %v478 = vld [vmem:[#allocation2 + $0xb88] sm:$0xff]
    %v479 = vld [vmem:[#allocation2 + $0xb90] sm:$0xff]
    %v480 = vld [vmem:[#allocation2 + $0xb98] sm:$0xff]
    %v481 = vld [vmem:[#allocation2 + $0xba0] sm:$0xff]
    %v482 = vld [vmem:[#allocation2 + $0xba8] sm:$0xff]
    %v483 = vld [vmem:[#allocation2 + $0xbb0] sm:$0xff]
    %v484 = vld [vmem:[#allocation2 + $0xbb8] sm:$0xff]
    %v485 = vld [vmem:[#allocation2 + $0xbc0] sm:$0xff]
    %v486 = vld [vmem:[#allocation2 + $0xbc8] sm:$0xff]
    %v487 = vld [vmem:[#allocation2 + $0xbd0] sm:$0xff]
    %v488 = vld [vmem:[#allocation2 + $0xbd8] sm:$0xff]
    %v489 = vld [vmem:[#allocation2 + $0xbe0] sm:$0xff]
    %v490 = vld [vmem:[#allocation2 + $0xbe8] sm:$0xff]
    %v491 = vld [vmem:[#allocation2 + $0xbf0] sm:$0xff]
    %v492 = vld [vmem:[#allocation2 + $0xbf8] sm:$0xff]
    %v493 = vld [vmem:[#allocation2 + $0xc00] sm:$0xff]
    %v494 = vld [vmem:[#allocation2 + $0xc08] sm:$0xff]
    %v495 = vld [vmem:[#allocation2 + $0xc10] sm:$0xff]
    %v496 = vld [vmem:[#allocation2 + $0xc18] sm:$0xff]
    %v497 = vld [vmem:[#allocation2 + $0xc20] sm:$0xff]
    %v498 = vld [vmem:[#allocation2 + $0xc28] sm:$0xff]
    %v499 = vld [vmem:[#allocation2 + $0xc30] sm:$0xff]
    %v500 = vld [vmem:[#allocation2 + $0xc38] sm:$0xff]
    %v501 = vld [vmem:[#allocation2 + $0xc40] sm:$0xff]
    %v502 = vld [vmem:[#allocation2 + $0xc48] sm:$0xff]
    %v503 = vld [vmem:[#allocation2 + $0xc50] sm:$0xff]
    %v504 = vld [vmem:[#allocation2 + $0xc58] sm:$0xff]
    %v505 = vld [vmem:[#allocation2 + $0xc60] sm:$0xff]
    %v506 = vld [vmem:[#allocation2 + $0xc68] sm:$0xff]
    %v507 = vld [vmem:[#allocation2 + $0xc70] sm:$0xff]
    %v508 = vld [vmem:[#allocation2 + $0xc78] sm:$0xff]
    %v509 = vld [vmem:[#allocation2 + $0xc80] sm:$0xff]
    %v510 = vld [vmem:[#allocation2 + $0xc88] sm:$0xff]
    %v511 = vld [vmem:[#allocation2 + $0xc90] sm:$0xff]
    %v512 = vld [vmem:[#allocation2 + $0xc98] sm:$0xff]
    %v513 = vld [vmem:[#allocation2 + $0xca0] sm:$0xff]
    %v514 = vld [vmem:[#allocation2 + $0xca8] sm:$0xff]
    %v515 = vld [vmem:[#allocation2 + $0xcb0] sm:$0xff]
    %v516 = vld [vmem:[#allocation2 + $0xcb8] sm:$0xff]
    %v517 = vld [vmem:[#allocation2 + $0xcc0] sm:$0xff]
    %v518 = vld [vmem:[#allocation2 + $0xcc8] sm:$0xff]
    %v519 = vld [vmem:[#allocation2 + $0xcd0] sm:$0xff]
    %v520 = vld [vmem:[#allocation2 + $0xcd8] sm:$0xff]
    %v521 = vld [vmem:[#allocation2 + $0xce0] sm:$0xff]
    %v522 = vld [vmem:[#allocation2 + $0xce8] sm:$0xff]
    %v523 = vld [vmem:[#allocation2 + $0xcf0] sm:$0xff]
    %v524 = vld [vmem:[#allocation2 + $0xcf8] sm:$0xff]
    %v525 = vld [vmem:[#allocation2 + $0xd00] sm:$0xff]
    %v526 = vld [vmem:[#allocation2 + $0xd08] sm:$0xff]
    %v527 = vld [vmem:[#allocation2 + $0xd10] sm:$0xff]
    %v528 = vld [vmem:[#allocation2 + $0xd18] sm:$0xff]
    %v529 = vld [vmem:[#allocation2 + $0xd20] sm:$0xff]
    %v530 = vld [vmem:[#allocation2 + $0xd28] sm:$0xff]
    %v531 = vld [vmem:[#allocation2 + $0xd30] sm:$0xff]
    %v532 = vld [vmem:[#allocation2 + $0xd38] sm:$0xff]
    %v533 = vld [vmem:[#allocation2 + $0xd40] sm:$0xff]
    %v534 = vld [vmem:[#allocation2 + $0xd48] sm:$0xff]
    %v535 = vld [vmem:[#allocation2 + $0xd50] sm:$0xff]
    %v536 = vld [vmem:[#allocation2 + $0xd58] sm:$0xff]
    %v537 = vld [vmem:[#allocation2 + $0xd60] sm:$0xff]
    %v538 = vld [vmem:[#allocation2 + $0xd68] sm:$0xff]
    %v539 = vld [vmem:[#allocation2 + $0xd70] sm:$0xff]
    %v540 = vld [vmem:[#allocation2 + $0xd78] sm:$0xff]
    %v541 = vld [vmem:[#allocation2 + $0xd80] sm:$0xff]
    %v542 = vld [vmem:[#allocation2 + $0xd88] sm:$0xff]
    %v543 = vld [vmem:[#allocation2 + $0xd90] sm:$0xff]
    %v544 = vld [vmem:[#allocation2 + $0xd98] sm:$0xff]
    %v545 = vld [vmem:[#allocation2 + $0xda0] sm:$0xff]
    %v546 = vld [vmem:[#allocation2 + $0xda8] sm:$0xff]
    %v547 = vld [vmem:[#allocation2 + $0xdb0] sm:$0xff]
    %v548 = vld [vmem:[#allocation2 + $0xdb8] sm:$0xff]
    %v549 = vld [vmem:[#allocation2 + $0xdc0] sm:$0xff]
    %v550 = vld [vmem:[#allocation2 + $0xdc8] sm:$0xff]
    %v551 = vld [vmem:[#allocation2 + $0xdd0] sm:$0xff]
    %v552 = vld [vmem:[#allocation2 + $0xdd8] sm:$0xff]
    %v553 = vld [vmem:[#allocation2 + $0xde0] sm:$0xff]
    %v554 = vld [vmem:[#allocation2 + $0xde8] sm:$0xff]
    %v555 = vld [vmem:[#allocation2 + $0xdf0] sm:$0xff]
    %v556 = vld [vmem:[#allocation2 + $0xdf8] sm:$0xff]
    %v557 = vld [vmem:[#allocation2 + $0xe00] sm:$0xff]
    %v558 = vld [vmem:[#allocation2 + $0xe08] sm:$0xff]
    %v559 = vld [vmem:[#allocation2 + $0xe10] sm:$0xff]
    %v560 = vld [vmem:[#allocation2 + $0xe18] sm:$0xff]
    %v561 = vld [vmem:[#allocation2 + $0xe20] sm:$0xff]
    %v562 = vld [vmem:[#allocation2 + $0xe28] sm:$0xff]
    %v563 = vld [vmem:[#allocation2 + $0xe30] sm:$0xff]
    %v564 = vld [vmem:[#allocation2 + $0xe38] sm:$0xff]
    %v565 = vld [vmem:[#allocation2 + $0xe40] sm:$0xff]
    %v566 = vld [vmem:[#allocation2 + $0xe48] sm:$0xff]
    %v567 = vld [vmem:[#allocation2 + $0xe50] sm:$0xff]
    %v568 = vld [vmem:[#allocation2 + $0xe58] sm:$0xff]
    %v569 = vld [vmem:[#allocation2 + $0xe60] sm:$0xff]
    %v570 = vld [vmem:[#allocation2 + $0xe68] sm:$0xff]
    %v571 = vld [vmem:[#allocation2 + $0xe70] sm:$0xff]
    %v572 = vld [vmem:[#allocation2 + $0xe78] sm:$0xff]
    %v573 = vld [vmem:[#allocation2 + $0xe80] sm:$0xff]
    %v574 = vld [vmem:[#allocation2 + $0xe88] sm:$0xff]
    %v575 = vld [vmem:[#allocation2 + $0xe90] sm:$0xff]
    %v576 = vld [vmem:[#allocation2 + $0xe98] sm:$0xff]
    %v577 = vld [vmem:[#allocation2 + $0xea0] sm:$0xff]
    %v578 = vld [vmem:[#allocation2 + $0xea8] sm:$0xff]
    %v579 = vld [vmem:[#allocation2 + $0xeb0] sm:$0xff]
    %v580 = vld [vmem:[#allocation2 + $0xeb8] sm:$0xff]
    %v581 = vld [vmem:[#allocation2 + $0xec0] sm:$0xff]
    %v582 = vld [vmem:[#allocation2 + $0xec8] sm:$0xff]
    %v583 = vld [vmem:[#allocation2 + $0xed0] sm:$0xff]
    %v584 = vld [vmem:[#allocation2 + $0xed8] sm:$0xff]
    %v585 = vld [vmem:[#allocation2 + $0xee0] sm:$0xff]
    %v586 = vld [vmem:[#allocation2 + $0xee8] sm:$0xff]
    %v587 = vld [vmem:[#allocation2 + $0xef0] sm:$0xff]
    %v588 = vld [vmem:[#allocation2 + $0xef8] sm:$0xff]
    %v589 = vld [vmem:[#allocation2 + $0xf00] sm:$0xff]
    %v590 = vld [vmem:[#allocation2 + $0xf08] sm:$0xff]
    %v591 = vld [vmem:[#allocation2 + $0xf10] sm:$0xff]
    %v592 = vld [vmem:[#allocation2 + $0xf18] sm:$0xff]
    %v593 = vld [vmem:[#allocation2 + $0xf20] sm:$0xff]
    %v594 = vld [vmem:[#allocation2 + $0xf28] sm:$0xff]
    %v595 = vld [vmem:[#allocation2 + $0xf30] sm:$0xff]
    %v596 = vld [vmem:[#allocation2 + $0xf38] sm:$0xff]
    %v597 = vld [vmem:[#allocation2 + $0xf40] sm:$0xff]
    %v598 = vld [vmem:[#allocation2 + $0xf48] sm:$0xff]
    %v599 = vld [vmem:[#allocation2 + $0xf50] sm:$0xff]
    %v600 = vld [vmem:[#allocation2 + $0xf58] sm:$0xff]
    %v601 = vld [vmem:[#allocation2 + $0xf60] sm:$0xff]
    %v602 = vld [vmem:[#allocation2 + $0xf68] sm:$0xff]
    %v603 = vld [vmem:[#allocation2 + $0xf70] sm:$0xff]
    %v604 = vld [vmem:[#allocation2 + $0xf78] sm:$0xff]
    %v605 = vld [vmem:[#allocation2 + $0xf80] sm:$0xff]
    %v606 = vld [vmem:[#allocation2 + $0xf88] sm:$0xff]
    %v607 = vld [vmem:[#allocation2 + $0xf90] sm:$0xff]
    %v608 = vld [vmem:[#allocation2 + $0xf98] sm:$0xff]
    %v609 = vld [vmem:[#allocation2 + $0xfa0] sm:$0xff]
    %v610 = vld [vmem:[#allocation2 + $0xfa8] sm:$0xff]
    %v611 = vld [vmem:[#allocation2 + $0xfb0] sm:$0xff]
    %v612 = vld [vmem:[#allocation2 + $0xfb8] sm:$0xff]
    %v613 = vld [vmem:[#allocation2 + $0xfc0] sm:$0xff]
    %v614 = vld [vmem:[#allocation2 + $0xfc8] sm:$0xff]
    %v615 = vld [vmem:[#allocation2 + $0xfd0] sm:$0xff]
    %v616 = vld [vmem:[#allocation2 + $0xfd8] sm:$0xff]
    %v617 = vld [vmem:[#allocation2 + $0xfe0] sm:$0xff]
    %v618 = vld [vmem:[#allocation2 + $0xfe8] sm:$0xff]
    %v619 = vld [vmem:[#allocation2 + $0xff0] sm:$0xff]
    %v620 = vld [vmem:[#allocation2 + $0xff8] sm:$0xff]
    %v623 = vcombine.high %v107, %v107
    %v625 = vunpack.c.l.s4 1983009808
    %v626 = vunpack.c.0.s8 %v625
    %v627 = vlaneseq
    %v628 = vshrl.u32 %v627, 7
    %v629 = vsub.s32 %v626, %v628
    %v630 = vrot.slane %v107, %v629
    %v632 = vunpack.c.l.s4 1983009808
    %v633 = vunpack.c.0.s8 %v632
    %v634 = vlaneseq
    %v635 = vshrl.u32 %v634, 7
    %v636 = vsub.s32 %v633, %v635
    %v637 = vrot.slane %v623, %v636
    %v638 = vcombine.high %v630, %v630
    %v639 = vcombine.high %v637, %v637
    %v640 = vcombine.high %v108, %v108
    %v642 = vunpack.c.l.s4 1983009808
    %v643 = vunpack.c.0.s8 %v642
    %v644 = vlaneseq
    %v645 = vshrl.u32 %v644, 7
    %v646 = vsub.s32 %v643, %v645
    %v647 = vrot.slane %v108, %v646
    %v649 = vunpack.c.l.s4 1983009808
    %v650 = vunpack.c.0.s8 %v649
    %v651 = vlaneseq
    %v652 = vshrl.u32 %v651, 7
    %v653 = vsub.s32 %v650, %v652
    %v654 = vrot.slane %v640, %v653
    %v655 = vcombine.high %v647, %v647
    %v656 = vcombine.high %v654, %v654
    %v665 = vpack.c.bf16 %v630, %v630
    %v666 = vpack.c.bf16 %v638, %v638
    %v667 = vpack.c.bf16 %v637, %v637
    %v668 = vpack.c.bf16 %v639, %v639
    %v669 = vpack.c.bf16 %v647, %v647
    %v670 = vpack.c.bf16 %v655, %v655
    %v671 = vpack.c.bf16 %v654, %v654
    %v672 = vpack.c.bf16 %v656, %v656
    %v673 = vpack.c.bf16 %v113, %v109
    %v674 = vpack.c.bf16 %v114, %v110
    %v675 = vpack.c.bf16 %v115, %v111
    %v676 = vpack.c.bf16 %v116, %v112
    %v677 = vpack.c.bf16 %v121, %v117
    %v678 = vpack.c.bf16 %v122, %v118
    %v679 = vpack.c.bf16 %v123, %v119
    %v680 = vpack.c.bf16 %v124, %v120
    %v681 = vpack.c.bf16 %v129, %v125
    %v682 = vpack.c.bf16 %v130, %v126
    %v683 = vpack.c.bf16 %v131, %v127
    %v684 = vpack.c.bf16 %v132, %v128
    %v685 = vpack.c.bf16 %v137, %v133
    %v686 = vpack.c.bf16 %v138, %v134
    %v687 = vpack.c.bf16 %v139, %v135
    %v688 = vpack.c.bf16 %v140, %v136
    %v689 = vpack.c.bf16 %v145, %v141
    %v690 = vpack.c.bf16 %v146, %v142
    %v691 = vpack.c.bf16 %v147, %v143
    %v692 = vpack.c.bf16 %v148, %v144
    %v693 = vpack.c.bf16 %v153, %v149
    %v694 = vpack.c.bf16 %v154, %v150
    %v695 = vpack.c.bf16 %v155, %v151
    %v696 = vpack.c.bf16 %v156, %v152
    %v697 = vpack.c.bf16 %v161, %v157
    %v698 = vpack.c.bf16 %v162, %v158
    %v699 = vpack.c.bf16 %v163, %v159
    %v700 = vpack.c.bf16 %v164, %v160
    %v701 = vpack.c.bf16 %v169, %v165
    %v702 = vpack.c.bf16 %v170, %v166
    %v703 = vpack.c.bf16 %v171, %v167
    %v704 = vpack.c.bf16 %v172, %v168
    %v705 = vpack.c.bf16 %v177, %v173
    %v706 = vpack.c.bf16 %v178, %v174
    %v707 = vpack.c.bf16 %v179, %v175
    %v708 = vpack.c.bf16 %v180, %v176
    %v709 = vpack.c.bf16 %v185, %v181
    %v710 = vpack.c.bf16 %v186, %v182
    %v711 = vpack.c.bf16 %v187, %v183
    %v712 = vpack.c.bf16 %v188, %v184
    %v713 = vpack.c.bf16 %v193, %v189
    %v714 = vpack.c.bf16 %v194, %v190
    %v715 = vpack.c.bf16 %v195, %v191
    %v716 = vpack.c.bf16 %v196, %v192
    %v717 = vpack.c.bf16 %v201, %v197
    %v718 = vpack.c.bf16 %v202, %v198
    %v719 = vpack.c.bf16 %v203, %v199
    %v720 = vpack.c.bf16 %v204, %v200
    %v721 = vpack.c.bf16 %v209, %v205
    %v722 = vpack.c.bf16 %v210, %v206
    %v723 = vpack.c.bf16 %v211, %v207
    %v724 = vpack.c.bf16 %v212, %v208
    %v725 = vpack.c.bf16 %v217, %v213
    %v726 = vpack.c.bf16 %v218, %v214
    %v727 = vpack.c.bf16 %v219, %v215
    %v728 = vpack.c.bf16 %v220, %v216
    %v729 = vpack.c.bf16 %v225, %v221
    %v730 = vpack.c.bf16 %v226, %v222
    %v731 = vpack.c.bf16 %v227, %v223
    %v732 = vpack.c.bf16 %v228, %v224
    %v733 = vpack.c.bf16 %v233, %v229
    %v734 = vpack.c.bf16 %v234, %v230
    %v735 = vpack.c.bf16 %v235, %v231
    %v736 = vpack.c.bf16 %v236, %v232
    %v737 = vpack.c.bf16 %v241, %v237
    %v738 = vpack.c.bf16 %v242, %v238
    %v739 = vpack.c.bf16 %v243, %v239
    %v740 = vpack.c.bf16 %v244, %v240
    %v741 = vpack.c.bf16 %v249, %v245
    %v742 = vpack.c.bf16 %v250, %v246
    %v743 = vpack.c.bf16 %v251, %v247
    %v744 = vpack.c.bf16 %v252, %v248
    %v745 = vpack.c.bf16 %v257, %v253
    %v746 = vpack.c.bf16 %v258, %v254
    %v747 = vpack.c.bf16 %v259, %v255
    %v748 = vpack.c.bf16 %v260, %v256
    %v749 = vpack.c.bf16 %v265, %v261
    %v750 = vpack.c.bf16 %v266, %v262
    %v751 = vpack.c.bf16 %v267, %v263
    %v752 = vpack.c.bf16 %v268, %v264
    %v753 = vpack.c.bf16 %v273, %v269
    %v754 = vpack.c.bf16 %v274, %v270
    %v755 = vpack.c.bf16 %v275, %v271
    %v756 = vpack.c.bf16 %v276, %v272
    %v757 = vpack.c.bf16 %v281, %v277
    %v758 = vpack.c.bf16 %v282, %v278
    %v759 = vpack.c.bf16 %v283, %v279
    %v760 = vpack.c.bf16 %v284, %v280
    %v761 = vpack.c.bf16 %v289, %v285
    %v762 = vpack.c.bf16 %v290, %v286
    %v763 = vpack.c.bf16 %v291, %v287
    %v764 = vpack.c.bf16 %v292, %v288
    %v765 = vpack.c.bf16 %v297, %v293
    %v766 = vpack.c.bf16 %v298, %v294
    %v767 = vpack.c.bf16 %v299, %v295
    %v768 = vpack.c.bf16 %v300, %v296
    %v769 = vpack.c.bf16 %v305, %v301
    %v770 = vpack.c.bf16 %v306, %v302
    %v771 = vpack.c.bf16 %v307, %v303
    %v772 = vpack.c.bf16 %v308, %v304
    %v773 = vpack.c.bf16 %v313, %v309
    %v774 = vpack.c.bf16 %v314, %v310
    %v775 = vpack.c.bf16 %v315, %v311
    %v776 = vpack.c.bf16 %v316, %v312
    %v777 = vpack.c.bf16 %v321, %v317
    %v778 = vpack.c.bf16 %v322, %v318
    %v779 = vpack.c.bf16 %v323, %v319
    %v780 = vpack.c.bf16 %v324, %v320
    %v781 = vpack.c.bf16 %v329, %v325
    %v782 = vpack.c.bf16 %v330, %v326
    %v783 = vpack.c.bf16 %v331, %v327
    %v784 = vpack.c.bf16 %v332, %v328
    %v785 = vpack.c.bf16 %v337, %v333
    %v786 = vpack.c.bf16 %v338, %v334
    %v787 = vpack.c.bf16 %v339, %v335
    %v788 = vpack.c.bf16 %v340, %v336
    %v789 = vpack.c.bf16 %v345, %v341
    %v790 = vpack.c.bf16 %v346, %v342
    %v791 = vpack.c.bf16 %v347, %v343
    %v792 = vpack.c.bf16 %v348, %v344
    %v793 = vpack.c.bf16 %v353, %v349
    %v794 = vpack.c.bf16 %v354, %v350
    %v795 = vpack.c.bf16 %v355, %v351
    %v796 = vpack.c.bf16 %v356, %v352
    %v797 = vpack.c.bf16 %v361, %v357
    %v798 = vpack.c.bf16 %v362, %v358
    %v799 = vpack.c.bf16 %v363, %v359
    %v800 = vpack.c.bf16 %v364, %v360
    %v801 = vpack.c.bf16 %v369, %v365
    %v802 = vpack.c.bf16 %v370, %v366
    %v803 = vpack.c.bf16 %v371, %v367
    %v804 = vpack.c.bf16 %v372, %v368
    %v805 = vpack.c.bf16 %v377, %v373
    %v806 = vpack.c.bf16 %v378, %v374
    %v807 = vpack.c.bf16 %v379, %v375
    %v808 = vpack.c.bf16 %v380, %v376
    %v809 = vpack.c.bf16 %v385, %v381
    %v810 = vpack.c.bf16 %v386, %v382
    %v811 = vpack.c.bf16 %v387, %v383
    %v812 = vpack.c.bf16 %v388, %v384
    %v813 = vpack.c.bf16 %v393, %v389
    %v814 = vpack.c.bf16 %v394, %v390
    %v815 = vpack.c.bf16 %v395, %v391
    %v816 = vpack.c.bf16 %v396, %v392
    %v817 = vpack.c.bf16 %v401, %v397
    %v818 = vpack.c.bf16 %v402, %v398
    %v819 = vpack.c.bf16 %v403, %v399
    %v820 = vpack.c.bf16 %v404, %v400
    %v821 = vpack.c.bf16 %v409, %v405
    %v822 = vpack.c.bf16 %v410, %v406
    %v823 = vpack.c.bf16 %v411, %v407
    %v824 = vpack.c.bf16 %v412, %v408
    %v825 = vpack.c.bf16 %v417, %v413
    %v826 = vpack.c.bf16 %v418, %v414
    %v827 = vpack.c.bf16 %v419, %v415
    %v828 = vpack.c.bf16 %v420, %v416
    %v829 = vpack.c.bf16 %v425, %v421
    %v830 = vpack.c.bf16 %v426, %v422
    %v831 = vpack.c.bf16 %v427, %v423
    %v832 = vpack.c.bf16 %v428, %v424
    %v833 = vpack.c.bf16 %v433, %v429
    %v834 = vpack.c.bf16 %v434, %v430
    %v835 = vpack.c.bf16 %v435, %v431
    %v836 = vpack.c.bf16 %v436, %v432
    %v837 = vpack.c.bf16 %v441, %v437
    %v838 = vpack.c.bf16 %v442, %v438
    %v839 = vpack.c.bf16 %v443, %v439
    %v840 = vpack.c.bf16 %v444, %v440
    %v841 = vpack.c.bf16 %v449, %v445
    %v842 = vpack.c.bf16 %v450, %v446
    %v843 = vpack.c.bf16 %v451, %v447
    %v844 = vpack.c.bf16 %v452, %v448
    %v845 = vpack.c.bf16 %v457, %v453
    %v846 = vpack.c.bf16 %v458, %v454
    %v847 = vpack.c.bf16 %v459, %v455
    %v848 = vpack.c.bf16 %v460, %v456
    %v849 = vpack.c.bf16 %v465, %v461
    %v850 = vpack.c.bf16 %v466, %v462
    %v851 = vpack.c.bf16 %v467, %v463
    %v852 = vpack.c.bf16 %v468, %v464
    %v853 = vpack.c.bf16 %v473, %v469
    %v854 = vpack.c.bf16 %v474, %v470
    %v855 = vpack.c.bf16 %v475, %v471
    %v856 = vpack.c.bf16 %v476, %v472
    %v857 = vpack.c.bf16 %v481, %v477
    %v858 = vpack.c.bf16 %v482, %v478
    %v859 = vpack.c.bf16 %v483, %v479
    %v860 = vpack.c.bf16 %v484, %v480
    %v861 = vpack.c.bf16 %v489, %v485
    %v862 = vpack.c.bf16 %v490, %v486
    %v863 = vpack.c.bf16 %v491, %v487
    %v864 = vpack.c.bf16 %v492, %v488
    %v865 = vpack.c.bf16 %v497, %v493
    %v866 = vpack.c.bf16 %v498, %v494
    %v867 = vpack.c.bf16 %v499, %v495
    %v868 = vpack.c.bf16 %v500, %v496
    %v869 = vpack.c.bf16 %v505, %v501
    %v870 = vpack.c.bf16 %v506, %v502
    %v871 = vpack.c.bf16 %v507, %v503
    %v872 = vpack.c.bf16 %v508, %v504
    %v873 = vpack.c.bf16 %v513, %v509
    %v874 = vpack.c.bf16 %v514, %v510
    %v875 = vpack.c.bf16 %v515, %v511
    %v876 = vpack.c.bf16 %v516, %v512
    %v877 = vpack.c.bf16 %v521, %v517
    %v878 = vpack.c.bf16 %v522, %v518
    %v879 = vpack.c.bf16 %v523, %v519
    %v880 = vpack.c.bf16 %v524, %v520
    %v881 = vpack.c.bf16 %v529, %v525
    %v882 = vpack.c.bf16 %v530, %v526
    %v883 = vpack.c.bf16 %v531, %v527
    %v884 = vpack.c.bf16 %v532, %v528
    %v885 = vpack.c.bf16 %v537, %v533
    %v886 = vpack.c.bf16 %v538, %v534
    %v887 = vpack.c.bf16 %v539, %v535
    %v888 = vpack.c.bf16 %v540, %v536
    %v889 = vpack.c.bf16 %v545, %v541
    %v890 = vpack.c.bf16 %v546, %v542
    %v891 = vpack.c.bf16 %v547, %v543
    %v892 = vpack.c.bf16 %v548, %v544
    %v893 = vpack.c.bf16 %v553, %v549
    %v894 = vpack.c.bf16 %v554, %v550
    %v895 = vpack.c.bf16 %v555, %v551
    %v896 = vpack.c.bf16 %v556, %v552
    %v897 = vpack.c.bf16 %v561, %v557
    %v898 = vpack.c.bf16 %v562, %v558
    %v899 = vpack.c.bf16 %v563, %v559
    %v900 = vpack.c.bf16 %v564, %v560
    %v901 = vpack.c.bf16 %v569, %v565
    %v902 = vpack.c.bf16 %v570, %v566
    %v903 = vpack.c.bf16 %v571, %v567
    %v904 = vpack.c.bf16 %v572, %v568
    %v905 = vpack.c.bf16 %v577, %v573
    %v906 = vpack.c.bf16 %v578, %v574
    %v907 = vpack.c.bf16 %v579, %v575
    %v908 = vpack.c.bf16 %v580, %v576
    %v909 = vpack.c.bf16 %v585, %v581
    %v910 = vpack.c.bf16 %v586, %v582
    %v911 = vpack.c.bf16 %v587, %v583
    %v912 = vpack.c.bf16 %v588, %v584
    %v913 = vpack.c.bf16 %v593, %v589
    %v914 = vpack.c.bf16 %v594, %v590
    %v915 = vpack.c.bf16 %v595, %v591
    %v916 = vpack.c.bf16 %v596, %v592
    %v917 = vpack.c.bf16 %v601, %v597
    %v918 = vpack.c.bf16 %v602, %v598
    %v919 = vpack.c.bf16 %v603, %v599
    %v920 = vpack.c.bf16 %v604, %v600
    %v921 = vpack.c.bf16 %v609, %v605
    %v922 = vpack.c.bf16 %v610, %v606
    %v923 = vpack.c.bf16 %v611, %v607
    %v924 = vpack.c.bf16 %v612, %v608
    %v925 = vpack.c.bf16 %v617, %v613
    %v926 = vpack.c.bf16 %v618, %v614
    %v927 = vpack.c.bf16 %v619, %v615
    %v928 = vpack.c.bf16 %v620, %v616
    %929 = vmatprep.subr.bf16.mxu0 %v674
    %930 = vmatpush1.bf16.msra.mxu0 %v673
    %931 = vmatprep.subr.bf16.mxu0 %v678
    %932 = vmatpush1.bf16.msra.mxu0 %v677
    %933 = vmatprep.subr.bf16.mxu0 %v682
    %934 = vmatpush1.bf16.msra.mxu0 %v681
    %935 = vmatprep.subr.bf16.mxu0 %v686
    %936 = vmatpush1.bf16.msra.mxu0 %v685
    %937 = vmatprep.subr.bf16.mxu0 %v690
    %938 = vmatpush1.bf16.msra.mxu0 %v689
    %939 = vmatprep.subr.bf16.mxu0 %v694
    %940 = vmatpush1.bf16.msra.mxu0 %v693
    %941 = vmatprep.subr.bf16.mxu0 %v698
    %942 = vmatpush1.bf16.msra.mxu0 %v697
    %943 = vmatprep.subr.bf16.mxu0 %v702
    %944 = vmatpush1.bf16.msra.mxu0 %v701
    %945 = vmatprep.subr.bf16.mxu0 %v706
    %946 = vmatpush1.bf16.msra.mxu0 %v705
    %947 = vmatprep.subr.bf16.mxu0 %v710
    %948 = vmatpush1.bf16.msra.mxu0 %v709
    %949 = vmatprep.subr.bf16.mxu0 %v714
    %950 = vmatpush1.bf16.msra.mxu0 %v713
    %951 = vmatprep.subr.bf16.mxu0 %v718
    %952 = vmatpush1.bf16.msra.mxu0 %v717
    %953 = vmatprep.subr.bf16.mxu0 %v722
    %954 = vmatpush1.bf16.msra.mxu0 %v721
    %955 = vmatprep.subr.bf16.mxu0 %v726
    %956 = vmatpush1.bf16.msra.mxu0 %v725
    %957 = vmatprep.subr.bf16.mxu0 %v730
    %958 = vmatpush1.bf16.msra.mxu0 %v729
    %959 = vmatprep.subr.bf16.mxu0 %v734
    %960 = vmatpush1.bf16.msra.mxu0 %v733
    %961 = vmatprep.mubr.bf16.mxu0 %v666
    %962 = vmatmul.mubr.bf16.gmra.mrb[0].mxu0 %v665
    %v963 = vpop.f32.mrb[0].mxu0
    %v964 = vadd.f32 0.0, %v963
    %v965 = vpop.f32.mrb[0].mxu0
    %v966 = vadd.f32 0.0, %v965
    %v967 = vpop.f32.mrb[0].mxu0
    %v968 = vpop.f32.mrb[0].mxu0
    %969 = vdwg.mxu0
    %970 = vmatprep.subr.bf16.mxu0 %v738
    %971 = vmatpush1.bf16.msra.mxu0 %v737
    %972 = vmatprep.subr.bf16.mxu0 %v742
    %973 = vmatpush1.bf16.msra.mxu0 %v741
    %974 = vmatprep.subr.bf16.mxu0 %v746
    %975 = vmatpush1.bf16.msra.mxu0 %v745
    %976 = vmatprep.subr.bf16.mxu0 %v750
    %977 = vmatpush1.bf16.msra.mxu0 %v749
    %978 = vmatprep.subr.bf16.mxu0 %v754
    %979 = vmatpush1.bf16.msra.mxu0 %v753
    %980 = vmatprep.subr.bf16.mxu0 %v758
    %981 = vmatpush1.bf16.msra.mxu0 %v757
    %982 = vmatprep.subr.bf16.mxu0 %v762
    %983 = vmatpush1.bf16.msra.mxu0 %v761
    %984 = vmatprep.subr.bf16.mxu0 %v766
    %985 = vmatpush1.bf16.msra.mxu0 %v765
    %986 = vmatprep.subr.bf16.mxu0 %v770
    %987 = vmatpush1.bf16.msra.mxu0 %v769
    %988 = vmatprep.subr.bf16.mxu0 %v774
    %989 = vmatpush1.bf16.msra.mxu0 %v773
    %990 = vmatprep.subr.bf16.mxu0 %v778
    %991 = vmatpush1.bf16.msra.mxu0 %v777
    %992 = vmatprep.subr.bf16.mxu0 %v782
    %993 = vmatpush1.bf16.msra.mxu0 %v781
    %994 = vmatprep.subr.bf16.mxu0 %v786
    %995 = vmatpush1.bf16.msra.mxu0 %v785
    %996 = vmatprep.subr.bf16.mxu0 %v790
    %997 = vmatpush1.bf16.msra.mxu0 %v789
    %998 = vmatprep.subr.bf16.mxu0 %v794
    %999 = vmatpush1.bf16.msra.mxu0 %v793
    %1000 = vmatprep.subr.bf16.mxu0 %v798
    %1001 = vmatpush1.bf16.msra.mxu0 %v797
    %1002 = vmatprep.mubr.bf16.mxu0 %v668
    %1003 = vmatmul.mubr.bf16.gmra.mrb[0].mxu0 %v667
    %v1004 = vpop.f32.mrb[0].mxu0
    %v1005 = vadd.f32 %v964, %v1004
    %v1006 = vpop.f32.mrb[0].mxu0
    %v1007 = vadd.f32 %v966, %v1006
    %v1008 = vpop.f32.mrb[0].mxu0
    %v1009 = vpop.f32.mrb[0].mxu0
    %1010 = vdwg.mxu0
    %1011 = vmatprep.subr.bf16.mxu0 %v802
    %1012 = vmatpush1.bf16.msra.mxu0 %v801
    %1013 = vmatprep.subr.bf16.mxu0 %v806
    %1014 = vmatpush1.bf16.msra.mxu0 %v805
    %1015 = vmatprep.subr.bf16.mxu0 %v810
    %1016 = vmatpush1.bf16.msra.mxu0 %v809
    %1017 = vmatprep.subr.bf16.mxu0 %v814
    %1018 = vmatpush1.bf16.msra.mxu0 %v813
    %1019 = vmatprep.subr.bf16.mxu0 %v818
    %1020 = vmatpush1.bf16.msra.mxu0 %v817
    %1021 = vmatprep.subr.bf16.mxu0 %v822
    %1022 = vmatpush1.bf16.msra.mxu0 %v821
    %1023 = vmatprep.subr.bf16.mxu0 %v826
    %1024 = vmatpush1.bf16.msra.mxu0 %v825
    %1025 = vmatprep.subr.bf16.mxu0 %v830
    %1026 = vmatpush1.bf16.msra.mxu0 %v829
    %1027 = vmatprep.subr.bf16.mxu0 %v834
    %1028 = vmatpush1.bf16.msra.mxu0 %v833
    %1029 = vmatprep.subr.bf16.mxu0 %v838
    %1030 = vmatpush1.bf16.msra.mxu0 %v837
    %1031 = vmatprep.subr.bf16.mxu0 %v842
    %1032 = vmatpush1.bf16.msra.mxu0 %v841
    %1033 = vmatprep.subr.bf16.mxu0 %v846
    %1034 = vmatpush1.bf16.msra.mxu0 %v845
    %1035 = vmatprep.subr.bf16.mxu0 %v850
    %1036 = vmatpush1.bf16.msra.mxu0 %v849
    %1037 = vmatprep.subr.bf16.mxu0 %v854
    %1038 = vmatpush1.bf16.msra.mxu0 %v853
    %1039 = vmatprep.subr.bf16.mxu0 %v858
    %1040 = vmatpush1.bf16.msra.mxu0 %v857
    %1041 = vmatprep.subr.bf16.mxu0 %v862
    %1042 = vmatpush1.bf16.msra.mxu0 %v861
    %1043 = vmatprep.mubr.bf16.mxu0 %v670
    %1044 = vmatmul.mubr.bf16.gmra.mrb[0].mxu0 %v669
    %v1045 = vpop.f32.mrb[0].mxu0
    %v1046 = vadd.f32 %v1005, %v1045
    %v1047 = vpop.f32.mrb[0].mxu0
    %v1048 = vadd.f32 %v1007, %v1047
    %v1049 = vpop.f32.mrb[0].mxu0
    %v1050 = vpop.f32.mrb[0].mxu0
    %1051 = vdwg.mxu0
    %1052 = vmatprep.subr.bf16.mxu0 %v866
    %1053 = vmatpush1.bf16.msra.mxu0 %v865
    %1054 = vmatprep.subr.bf16.mxu0 %v870
    %1055 = vmatpush1.bf16.msra.mxu0 %v869
    %1056 = vmatprep.subr.bf16.mxu0 %v874
    %1057 = vmatpush1.bf16.msra.mxu0 %v873
    %1058 = vmatprep.subr.bf16.mxu0 %v878
    %1059 = vmatpush1.bf16.msra.mxu0 %v877
    %1060 = vmatprep.subr.bf16.mxu0 %v882
    %1061 = vmatpush1.bf16.msra.mxu0 %v881
    %1062 = vmatprep.subr.bf16.mxu0 %v886
    %1063 = vmatpush1.bf16.msra.mxu0 %v885
    %1064 = vmatprep.subr.bf16.mxu0 %v890
    %1065 = vmatpush1.bf16.msra.mxu0 %v889
    %1066 = vmatprep.subr.bf16.mxu0 %v894
    %1067 = vmatpush1.bf16.msra.mxu0 %v893
    %1068 = vmatprep.subr.bf16.mxu0 %v898
    %1069 = vmatpush1.bf16.msra.mxu0 %v897
    %1070 = vmatprep.subr.bf16.mxu0 %v902
    %1071 = vmatpush1.bf16.msra.mxu0 %v901
    %1072 = vmatprep.subr.bf16.mxu0 %v906
    %1073 = vmatpush1.bf16.msra.mxu0 %v905
    %1074 = vmatprep.subr.bf16.mxu0 %v910
    %1075 = vmatpush1.bf16.msra.mxu0 %v909
    %1076 = vmatprep.subr.bf16.mxu0 %v914
    %1077 = vmatpush1.bf16.msra.mxu0 %v913
    %1078 = vmatprep.subr.bf16.mxu0 %v918
    %1079 = vmatpush1.bf16.msra.mxu0 %v917
    %1080 = vmatprep.subr.bf16.mxu0 %v922
    %1081 = vmatpush1.bf16.msra.mxu0 %v921
    %1082 = vmatprep.subr.bf16.mxu0 %v926
    %1083 = vmatpush1.bf16.msra.mxu0 %v925
    %1084 = vmatprep.mubr.bf16.mxu0 %v672
    %1085 = vmatmul.mubr.bf16.gmra.mrb[0].mxu0 %v671
    %v1086 = vpop.f32.mrb[0].mxu0
    %v1087 = vadd.f32 %v1046, %v1086
    %v1088 = vpop.f32.mrb[0].mxu0
    %v1089 = vadd.f32 %v1048, %v1088
    %v1090 = vpop.f32.mrb[0].mxu0
    %v1091 = vpop.f32.mrb[0].mxu0
    %1092 = vdwg.mxu0
    %1093 = vmatprep.subr.bf16.mxu0 %v676
    %1094 = vmatpush1.bf16.msra.mxu0 %v675
    %1095 = vmatprep.subr.bf16.mxu0 %v680
    %1096 = vmatpush1.bf16.msra.mxu0 %v679
    %1097 = vmatprep.subr.bf16.mxu0 %v684
    %1098 = vmatpush1.bf16.msra.mxu0 %v683
    %1099 = vmatprep.subr.bf16.mxu0 %v688
    %1100 = vmatpush1.bf16.msra.mxu0 %v687
    %1101 = vmatprep.subr.bf16.mxu0 %v692
    %1102 = vmatpush1.bf16.msra.mxu0 %v691
    %1103 = vmatprep.subr.bf16.mxu0 %v696
    %1104 = vmatpush1.bf16.msra.mxu0 %v695
    %1105 = vmatprep.subr.bf16.mxu0 %v700
    %1106 = vmatpush1.bf16.msra.mxu0 %v699
    %1107 = vmatprep.subr.bf16.mxu0 %v704
    %1108 = vmatpush1.bf16.msra.mxu0 %v703
    %1109 = vmatprep.subr.bf16.mxu0 %v708
    %1110 = vmatpush1.bf16.msra.mxu0 %v707
    %1111 = vmatprep.subr.bf16.mxu0 %v712
    %1112 = vmatpush1.bf16.msra.mxu0 %v711
    %1113 = vmatprep.subr.bf16.mxu0 %v716
    %1114 = vmatpush1.bf16.msra.mxu0 %v715
    %1115 = vmatprep.subr.bf16.mxu0 %v720
    %1116 = vmatpush1.bf16.msra.mxu0 %v719
    %1117 = vmatprep.subr.bf16.mxu0 %v724
    %1118 = vmatpush1.bf16.msra.mxu0 %v723
    %1119 = vmatprep.subr.bf16.mxu0 %v728
    %1120 = vmatpush1.bf16.msra.mxu0 %v727
    %1121 = vmatprep.subr.bf16.mxu0 %v732
    %1122 = vmatpush1.bf16.msra.mxu0 %v731
    %1123 = vmatprep.subr.bf16.mxu0 %v736
    %1124 = vmatpush1.bf16.msra.mxu0 %v735
    %1125 = vmatprep.mubr.bf16.mxu0 %v666
    %1126 = vmatmul.mubr.bf16.gmra.mrb[0].mxu0 %v665
    %v1127 = vpop.f32.mrb[0].mxu0
    %v1128 = vadd.f32 0.0, %v1127
    %v1129 = vpop.f32.mrb[0].mxu0
    %v1130 = vadd.f32 0.0, %v1129
    %v1131 = vpop.f32.mrb[0].mxu0
    %v1132 = vpop.f32.mrb[0].mxu0
    %1133 = vdwg.mxu0
    %1134 = vmatprep.subr.bf16.mxu0 %v740
    %1135 = vmatpush1.bf16.msra.mxu0 %v739
    %1136 = vmatprep.subr.bf16.mxu0 %v744
    %1137 = vmatpush1.bf16.msra.mxu0 %v743
    %1138 = vmatprep.subr.bf16.mxu0 %v748
    %1139 = vmatpush1.bf16.msra.mxu0 %v747
    %1140 = vmatprep.subr.bf16.mxu0 %v752
    %1141 = vmatpush1.bf16.msra.mxu0 %v751
    %1142 = vmatprep.subr.bf16.mxu0 %v756
    %1143 = vmatpush1.bf16.msra.mxu0 %v755
    %1144 = vmatprep.subr.bf16.mxu0 %v760
    %1145 = vmatpush1.bf16.msra.mxu0 %v759
    %1146 = vmatprep.subr.bf16.mxu0 %v764
    %1147 = vmatpush1.bf16.msra.mxu0 %v763
    %1148 = vmatprep.subr.bf16.mxu0 %v768
    %1149 = vmatpush1.bf16.msra.mxu0 %v767
    %1150 = vmatprep.subr.bf16.mxu0 %v772
    %1151 = vmatpush1.bf16.msra.mxu0 %v771
    %1152 = vmatprep.subr.bf16.mxu0 %v776
    %1153 = vmatpush1.bf16.msra.mxu0 %v775
    %1154 = vmatprep.subr.bf16.mxu0 %v780
    %1155 = vmatpush1.bf16.msra.mxu0 %v779
    %1156 = vmatprep.subr.bf16.mxu0 %v784
    %1157 = vmatpush1.bf16.msra.mxu0 %v783
    %1158 = vmatprep.subr.bf16.mxu0 %v788
    %1159 = vmatpush1.bf16.msra.mxu0 %v787
    %1160 = vmatprep.subr.bf16.mxu0 %v792
    %1161 = vmatpush1.bf16.msra.mxu0 %v791
    %1162 = vmatprep.subr.bf16.mxu0 %v796
    %1163 = vmatpush1.bf16.msra.mxu0 %v795
    %1164 = vmatprep.subr.bf16.mxu0 %v800
    %1165 = vmatpush1.bf16.msra.mxu0 %v799
    %1166 = vmatprep.mubr.bf16.mxu0 %v668
    %1167 = vmatmul.mubr.bf16.gmra.mrb[0].mxu0 %v667
    %v1168 = vpop.f32.mrb[0].mxu0
    %v1169 = vadd.f32 %v1128, %v1168
    %v1170 = vpop.f32.mrb[0].mxu0
    %v1171 = vadd.f32 %v1130, %v1170
    %v1172 = vpop.f32.mrb[0].mxu0
    %v1173 = vpop.f32.mrb[0].mxu0
    %1174 = vdwg.mxu0
    %1175 = vmatprep.subr.bf16.mxu0 %v804
    %1176 = vmatpush1.bf16.msra.mxu0 %v803
    %1177 = vmatprep.subr.bf16.mxu0 %v808
    %1178 = vmatpush1.bf16.msra.mxu0 %v807
    %1179 = vmatprep.subr.bf16.mxu0 %v812
    %1180 = vmatpush1.bf16.msra.mxu0 %v811
    %1181 = vmatprep.subr.bf16.mxu0 %v816
    %1182 = vmatpush1.bf16.msra.mxu0 %v815
    %1183 = vmatprep.subr.bf16.mxu0 %v820
    %1184 = vmatpush1.bf16.msra.mxu0 %v819
    %1185 = vmatprep.subr.bf16.mxu0 %v824
    %1186 = vmatpush1.bf16.msra.mxu0 %v823
    %1187 = vmatprep.subr.bf16.mxu0 %v828
    %1188 = vmatpush1.bf16.msra.mxu0 %v827
    %1189 = vmatprep.subr.bf16.mxu0 %v832
    %1190 = vmatpush1.bf16.msra.mxu0 %v831
    %1191 = vmatprep.subr.bf16.mxu0 %v836
    %1192 = vmatpush1.bf16.msra.mxu0 %v835
    %1193 = vmatprep.subr.bf16.mxu0 %v840
    %1194 = vmatpush1.bf16.msra.mxu0 %v839
    %1195 = vmatprep.subr.bf16.mxu0 %v844
    %1196 = vmatpush1.bf16.msra.mxu0 %v843
    %1197 = vmatprep.subr.bf16.mxu0 %v848
    %1198 = vmatpush1.bf16.msra.mxu0 %v847
    %1199 = vmatprep.subr.bf16.mxu0 %v852
    %1200 = vmatpush1.bf16.msra.mxu0 %v851
    %1201 = vmatprep.subr.bf16.mxu0 %v856
    %1202 = vmatpush1.bf16.msra.mxu0 %v855
    %1203 = vmatprep.subr.bf16.mxu0 %v860
    %1204 = vmatpush1.bf16.msra.mxu0 %v859
    %1205 = vmatprep.subr.bf16.mxu0 %v864
    %1206 = vmatpush1.bf16.msra.mxu0 %v863
    %1207 = vmatprep.mubr.bf16.mxu0 %v670
    %1208 = vmatmul.mubr.bf16.gmra.mrb[0].mxu0 %v669
    %v1209 = vpop.f32.mrb[0].mxu0
    %v1210 = vadd.f32 %v1169, %v1209
    %v1211 = vpop.f32.mrb[0].mxu0
    %v1212 = vadd.f32 %v1171, %v1211
    %v1213 = vpop.f32.mrb[0].mxu0
    %v1214 = vpop.f32.mrb[0].mxu0
    %1215 = vdwg.mxu0
    %1216 = vmatprep.subr.bf16.mxu0 %v868
    %1217 = vmatpush1.bf16.msra.mxu0 %v867
    %1218 = vmatprep.subr.bf16.mxu0 %v872
    %1219 = vmatpush1.bf16.msra.mxu0 %v871
    %1220 = vmatprep.subr.bf16.mxu0 %v876
    %1221 = vmatpush1.bf16.msra.mxu0 %v875
    %1222 = vmatprep.subr.bf16.mxu0 %v880
    %1223 = vmatpush1.bf16.msra.mxu0 %v879
    %1224 = vmatprep.subr.bf16.mxu0 %v884
    %1225 = vmatpush1.bf16.msra.mxu0 %v883
    %1226 = vmatprep.subr.bf16.mxu0 %v888
    %1227 = vmatpush1.bf16.msra.mxu0 %v887
    %1228 = vmatprep.subr.bf16.mxu0 %v892
    %1229 = vmatpush1.bf16.msra.mxu0 %v891
    %1230 = vmatprep.subr.bf16.mxu0 %v896
    %1231 = vmatpush1.bf16.msra.mxu0 %v895
    %1232 = vmatprep.subr.bf16.mxu0 %v900
    %1233 = vmatpush1.bf16.msra.mxu0 %v899
    %1234 = vmatprep.subr.bf16.mxu0 %v904
    %1235 = vmatpush1.bf16.msra.mxu0 %v903
    %1236 = vmatprep.subr.bf16.mxu0 %v908
    %1237 = vmatpush1.bf16.msra.mxu0 %v907
    %1238 = vmatprep.subr.bf16.mxu0 %v912
    %1239 = vmatpush1.bf16.msra.mxu0 %v911
    %1240 = vmatprep.subr.bf16.mxu0 %v916
    %1241 = vmatpush1.bf16.msra.mxu0 %v915
    %1242 = vmatprep.subr.bf16.mxu0 %v920
    %1243 = vmatpush1.bf16.msra.mxu0 %v919
    %1244 = vmatprep.subr.bf16.mxu0 %v924
    %1245 = vmatpush1.bf16.msra.mxu0 %v923
    %1246 = vmatprep.subr.bf16.mxu0 %v928
    %1247 = vmatpush1.bf16.msra.mxu0 %v927
    %1248 = vmatprep.mubr.bf16.mxu0 %v672
    %1249 = vmatmul.mubr.bf16.gmra.mrb[0].mxu0 %v671
    %v1250 = vpop.f32.mrb[0].mxu0
    %v1251 = vadd.f32 %v1210, %v1250
    %v1252 = vpop.f32.mrb[0].mxu0
    %v1253 = vadd.f32 %v1212, %v1252
    %v1254 = vpop.f32.mrb[0].mxu0
    %v1255 = vpop.f32.mrb[0].mxu0
    %1256 = vdwg.mxu0
    %v1257 = vld [vmem:[#allocation4] sm:$0xf]
    %v1258 = vld [vmem:[#allocation6] sm:$0xf]
    %vm1259 = vcmask 1041408
    %v1260 = vsel %vm1259, %v1087, 0.0
    %v1261 = vrot.slane %v1260, 4
    %v1262 = vadd.f32 %v1260, %v1261
    %v1263 = vrot.slane %v1262, 2
    %v1264 = vadd.f32 %v1262, %v1263
    %v1265 = vrot.slane %v1264, 1
    %v1266 = vadd.f32 %v1264, %v1265
    %v1267 = vsel %vm1259, %v1089, 0.0
    %v1268 = vrot.slane %v1267, 4
    %v1269 = vadd.f32 %v1267, %v1268
    %v1270 = vrot.slane %v1269, 2
    %v1271 = vadd.f32 %v1269, %v1270
    %v1272 = vrot.slane %v1271, 1
    %v1273 = vadd.f32 %v1271, %v1272
    %v1274 = vsel %vm1259, %v1251, 0.0
    %v1275 = vrot.slane %v1274, 4
    %v1276 = vadd.f32 %v1274, %v1275
    %v1277 = vrot.slane %v1276, 2
    %v1278 = vadd.f32 %v1276, %v1277
    %v1279 = vrot.slane %v1278, 1
    %v1280 = vadd.f32 %v1278, %v1279
    %v1281 = vsel %vm1259, %v1253, 0.0
    %v1282 = vrot.slane %v1281, 4
    %v1283 = vadd.f32 %v1281, %v1282
    %v1284 = vrot.slane %v1283, 2
    %v1285 = vadd.f32 %v1283, %v1284
    %v1286 = vrot.slane %v1285, 1
    %v1287 = vadd.f32 %v1285, %v1286
    %v1288 = vrcp.pop 2.0
    %v1289 = vmul.f32 %v1266, %v1288
    %v1290 = vmul.f32 %v1273, %v1288
    %v1291 = vmul.f32 %v1280, %v1288
    %v1292 = vmul.f32 %v1287, %v1288
    %v1293 = vsub.f32 %v1087, %v1289
    %v1294 = vsub.f32 %v1089, %v1290
    %v1295 = vsub.f32 %v1251, %v1291
    %v1296 = vsub.f32 %v1253, %v1292
    %v1297 = vmul.f32 %v1293, %v1293
    %v1298 = vmul.f32 %v1294, %v1294
    %v1299 = vmul.f32 %v1295, %v1295
    %v1300 = vmul.f32 %v1296, %v1296
    %v1301 = vsel %vm1259, %v1297, 0.0
    %v1302 = vrot.slane %v1301, 4
    %v1303 = vadd.f32 %v1301, %v1302
    %v1304 = vrot.slane %v1303, 2
    %v1305 = vadd.f32 %v1303, %v1304
    %v1306 = vrot.slane %v1305, 1
    %v1307 = vadd.f32 %v1305, %v1306
    %v1308 = vsel %vm1259, %v1298, 0.0
    %v1309 = vrot.slane %v1308, 4
    %v1310 = vadd.f32 %v1308, %v1309
    %v1311 = vrot.slane %v1310, 2
    %v1312 = vadd.f32 %v1310, %v1311
    %v1313 = vrot.slane %v1312, 1
    %v1314 = vadd.f32 %v1312, %v1313
    %v1315 = vsel %vm1259, %v1299, 0.0
    %v1316 = vrot.slane %v1315, 4
    %v1317 = vadd.f32 %v1315, %v1316
    %v1318 = vrot.slane %v1317, 2
    %v1319 = vadd.f32 %v1317, %v1318
    %v1320 = vrot.slane %v1319, 1
    %v1321 = vadd.f32 %v1319, %v1320
    %v1322 = vsel %vm1259, %v1300, 0.0
    %v1323 = vrot.slane %v1322, 4
    %v1324 = vadd.f32 %v1322, %v1323
    %v1325 = vrot.slane %v1324, 2
    %v1326 = vadd.f32 %v1324, %v1325
    %v1327 = vrot.slane %v1326, 1
    %v1328 = vadd.f32 %v1326, %v1327
    %v1329 = vmul.f32 %v1307, %v1288
    %v1330 = vmul.f32 %v1314, %v1288
    %v1331 = vmul.f32 %v1321, %v1288
    %v1332 = vmul.f32 %v1328, %v1288
    %v1333 = vadd.f32 %v1329, 1e-05
    %v1334 = vadd.f32 %v1330, 1e-05
    %v1335 = vadd.f32 %v1331, 1e-05
    %v1336 = vadd.f32 %v1332, 1e-05
    %v1337 = vrsqrt.pop %v1333
    %v1338 = vrsqrt.pop %v1334
    %v1339 = vrsqrt.pop %v1335
    %v1340 = vrsqrt.pop %v1336
    %v1341 = vmul.f32 %v1293, %v1337
    %v1342 = vmul.f32 %v1294, %v1338
    %v1343 = vmul.f32 %v1295, %v1339
    %v1344 = vmul.f32 %v1296, %v1340
    %v1346 = vlaneseq
    %v1347 = vshrl.u32 %v1346, 7
    %v1348 = vsub.s32 0, %v1347
    %v1349 = vrot.slane %v1257, %v1348
    %v1350 = vlaneseq
    %v1351 = vshrl.u32 %v1350, 7
    %v1352 = vsub.s32 1, %v1351
    %v1353 = vrot.slane %v1257, %v1352
    %v1354 = vlaneseq
    %v1355 = vshrl.u32 %v1354, 7
    %v1356 = vsub.s32 2, %v1355
    %v1357 = vrot.slane %v1257, %v1356
    %v1358 = vlaneseq
    %v1359 = vshrl.u32 %v1358, 7
    %v1360 = vsub.s32 3, %v1359
    %v1361 = vrot.slane %v1257, %v1360
    %v1366 = vmul.f32 %v1341, %v1349
    %v1367 = vmul.f32 %v1342, %v1353
    %v1368 = vmul.f32 %v1343, %v1357
    %v1369 = vmul.f32 %v1344, %v1361
    %v1371 = vlaneseq
    %v1372 = vshrl.u32 %v1371, 7
    %v1373 = vsub.s32 0, %v1372
    %v1374 = vrot.slane %v1258, %v1373
    %v1375 = vlaneseq
    %v1376 = vshrl.u32 %v1375, 7
    %v1377 = vsub.s32 1, %v1376
    %v1378 = vrot.slane %v1258, %v1377
    %v1379 = vlaneseq
    %v1380 = vshrl.u32 %v1379, 7
    %v1381 = vsub.s32 2, %v1380
    %v1382 = vrot.slane %v1258, %v1381
    %v1383 = vlaneseq
    %v1384 = vshrl.u32 %v1383, 7
    %v1385 = vsub.s32 3, %v1384
    %v1386 = vrot.slane %v1258, %v1385
    %v1391 = vadd.f32 %v1366, %v1374
    %v1392 = vadd.f32 %v1367, %v1378
    %v1393 = vadd.f32 %v1368, %v1382
    %v1394 = vadd.f32 %v1369, %v1386
    %v1395 = vmax.f32 %v1391, 0.0
    %v1396 = vmax.f32 %v1392, 0.0
    %v1397 = vmax.f32 %v1393, 0.0
    %v1398 = vmax.f32 %v1394, 0.0
    %v1399 = vld [vmem:[#allocation7] sm:$0xff]
    %v1400 = vld [vmem:[#allocation7 + $0x8] sm:$0xff]
    %v1401 = vld [vmem:[#allocation7 + $0x10] sm:$0xff]
    %v1402 = vld [vmem:[#allocation7 + $0x18] sm:$0xff]
    %v1403 = vld [vmem:[#allocation7 + $0x20] sm:$0xff]
    %v1404 = vld [vmem:[#allocation7 + $0x28] sm:$0xff]
    %v1405 = vld [vmem:[#allocation7 + $0x30] sm:$0xff]
    %v1406 = vld [vmem:[#allocation7 + $0x38] sm:$0xff]
    %v1407 = vld [vmem:[#allocation7 + $0x40] sm:$0xff]
    %v1408 = vld [vmem:[#allocation7 + $0x48] sm:$0xff]
    %v1409 = vld [vmem:[#allocation7 + $0x50] sm:$0xff]
    %v1410 = vld [vmem:[#allocation7 + $0x58] sm:$0xff]
    %v1411 = vld [vmem:[#allocation7 + $0x60] sm:$0xff]
    %v1412 = vld [vmem:[#allocation7 + $0x68] sm:$0xff]
    %v1413 = vld [vmem:[#allocation7 + $0x70] sm:$0xff]
    %v1414 = vld [vmem:[#allocation7 + $0x78] sm:$0xff]
    %v1415 = vld [vmem:[#allocation7 + $0x80] sm:$0xff]
    %v1416 = vld [vmem:[#allocation7 + $0x88] sm:$0xff]
    %v1417 = vld [vmem:[#allocation7 + $0x90] sm:$0xff]
    %v1418 = vld [vmem:[#allocation7 + $0x98] sm:$0xff]
    %v1419 = vld [vmem:[#allocation7 + $0xa0] sm:$0xff]
    %v1420 = vld [vmem:[#allocation7 + $0xa8] sm:$0xff]
    %v1421 = vld [vmem:[#allocation7 + $0xb0] sm:$0xff]
    %v1422 = vld [vmem:[#allocation7 + $0xb8] sm:$0xff]
    %v1423 = vld [vmem:[#allocation7 + $0xc0] sm:$0xff]
    %v1424 = vld [vmem:[#allocation7 + $0xc8] sm:$0xff]
    %v1425 = vld [vmem:[#allocation7 + $0xd0] sm:$0xff]
    %v1426 = vld [vmem:[#allocation7 + $0xd8] sm:$0xff]
    %v1427 = vld [vmem:[#allocation7 + $0xe0] sm:$0xff]
    %v1428 = vld [vmem:[#allocation7 + $0xe8] sm:$0xff]
    %v1429 = vld [vmem:[#allocation7 + $0xf0] sm:$0xff]
    %v1430 = vld [vmem:[#allocation7 + $0xf8] sm:$0xff]
    %v1431 = vld [vmem:[#allocation7 + $0x100] sm:$0xff]
    %v1432 = vld [vmem:[#allocation7 + $0x108] sm:$0xff]
    %v1433 = vld [vmem:[#allocation7 + $0x110] sm:$0xff]
    %v1434 = vld [vmem:[#allocation7 + $0x118] sm:$0xff]
    %v1435 = vld [vmem:[#allocation7 + $0x120] sm:$0xff]
    %v1436 = vld [vmem:[#allocation7 + $0x128] sm:$0xff]
    %v1437 = vld [vmem:[#allocation7 + $0x130] sm:$0xff]
    %v1438 = vld [vmem:[#allocation7 + $0x138] sm:$0xff]
    %v1439 = vld [vmem:[#allocation7 + $0x140] sm:$0xff]
    %v1440 = vld [vmem:[#allocation7 + $0x148] sm:$0xff]
    %v1441 = vld [vmem:[#allocation7 + $0x150] sm:$0xff]
    %v1442 = vld [vmem:[#allocation7 + $0x158] sm:$0xff]
    %v1443 = vld [vmem:[#allocation7 + $0x160] sm:$0xff]
    %v1444 = vld [vmem:[#allocation7 + $0x168] sm:$0xff]
    %v1445 = vld [vmem:[#allocation7 + $0x170] sm:$0xff]
    %v1446 = vld [vmem:[#allocation7 + $0x178] sm:$0xff]
    %v1447 = vld [vmem:[#allocation7 + $0x180] sm:$0xff]
    %v1448 = vld [vmem:[#allocation7 + $0x188] sm:$0xff]
    %v1449 = vld [vmem:[#allocation7 + $0x190] sm:$0xff]
    %v1450 = vld [vmem:[#allocation7 + $0x198] sm:$0xff]
    %v1451 = vld [vmem:[#allocation7 + $0x1a0] sm:$0xff]
    %v1452 = vld [vmem:[#allocation7 + $0x1a8] sm:$0xff]
    %v1453 = vld [vmem:[#allocation7 + $0x1b0] sm:$0xff]
    %v1454 = vld [vmem:[#allocation7 + $0x1b8] sm:$0xff]
    %v1455 = vld [vmem:[#allocation7 + $0x1c0] sm:$0xff]
    %v1456 = vld [vmem:[#allocation7 + $0x1c8] sm:$0xff]
    %v1457 = vld [vmem:[#allocation7 + $0x1d0] sm:$0xff]
    %v1458 = vld [vmem:[#allocation7 + $0x1d8] sm:$0xff]
    %v1459 = vld [vmem:[#allocation7 + $0x1e0] sm:$0xff]
    %v1460 = vld [vmem:[#allocation7 + $0x1e8] sm:$0xff]
    %v1461 = vld [vmem:[#allocation7 + $0x1f0] sm:$0xff]
    %v1462 = vld [vmem:[#allocation7 + $0x1f8] sm:$0xff]
    %v1463 = vld [vmem:[#allocation7 + $0x200] sm:$0xff]
    %v1464 = vld [vmem:[#allocation7 + $0x208] sm:$0xff]
    %v1465 = vld [vmem:[#allocation7 + $0x210] sm:$0xff]
    %v1466 = vld [vmem:[#allocation7 + $0x218] sm:$0xff]
    %v1467 = vld [vmem:[#allocation7 + $0x220] sm:$0xff]
    %v1468 = vld [vmem:[#allocation7 + $0x228] sm:$0xff]
    %v1469 = vld [vmem:[#allocation7 + $0x230] sm:$0xff]
    %v1470 = vld [vmem:[#allocation7 + $0x238] sm:$0xff]
    %v1471 = vld [vmem:[#allocation7 + $0x240] sm:$0xff]
    %v1472 = vld [vmem:[#allocation7 + $0x248] sm:$0xff]
    %v1473 = vld [vmem:[#allocation7 + $0x250] sm:$0xff]
    %v1474 = vld [vmem:[#allocation7 + $0x258] sm:$0xff]
    %v1475 = vld [vmem:[#allocation7 + $0x260] sm:$0xff]
    %v1476 = vld [vmem:[#allocation7 + $0x268] sm:$0xff]
    %v1477 = vld [vmem:[#allocation7 + $0x270] sm:$0xff]
    %v1478 = vld [vmem:[#allocation7 + $0x278] sm:$0xff]
    %v1479 = vld [vmem:[#allocation7 + $0x280] sm:$0xff]
    %v1480 = vld [vmem:[#allocation7 + $0x288] sm:$0xff]
    %v1481 = vld [vmem:[#allocation7 + $0x290] sm:$0xff]
    %v1482 = vld [vmem:[#allocation7 + $0x298] sm:$0xff]
    %v1483 = vld [vmem:[#allocation7 + $0x2a0] sm:$0xff]
    %v1484 = vld [vmem:[#allocation7 + $0x2a8] sm:$0xff]
    %v1485 = vld [vmem:[#allocation7 + $0x2b0] sm:$0xff]
    %v1486 = vld [vmem:[#allocation7 + $0x2b8] sm:$0xff]
    %v1487 = vld [vmem:[#allocation7 + $0x2c0] sm:$0xff]
    %v1488 = vld [vmem:[#allocation7 + $0x2c8] sm:$0xff]
    %v1489 = vld [vmem:[#allocation7 + $0x2d0] sm:$0xff]
    %v1490 = vld [vmem:[#allocation7 + $0x2d8] sm:$0xff]
    %v1491 = vld [vmem:[#allocation7 + $0x2e0] sm:$0xff]
    %v1492 = vld [vmem:[#allocation7 + $0x2e8] sm:$0xff]
    %v1493 = vld [vmem:[#allocation7 + $0x2f0] sm:$0xff]
    %v1494 = vld [vmem:[#allocation7 + $0x2f8] sm:$0xff]
    %v1495 = vld [vmem:[#allocation7 + $0x300] sm:$0xff]
    %v1496 = vld [vmem:[#allocation7 + $0x308] sm:$0xff]
    %v1497 = vld [vmem:[#allocation7 + $0x310] sm:$0xff]
    %v1498 = vld [vmem:[#allocation7 + $0x318] sm:$0xff]
    %v1499 = vld [vmem:[#allocation7 + $0x320] sm:$0xff]
    %v1500 = vld [vmem:[#allocation7 + $0x328] sm:$0xff]
    %v1501 = vld [vmem:[#allocation7 + $0x330] sm:$0xff]
    %v1502 = vld [vmem:[#allocation7 + $0x338] sm:$0xff]
    %v1503 = vld [vmem:[#allocation7 + $0x340] sm:$0xff]
    %v1504 = vld [vmem:[#allocation7 + $0x348] sm:$0xff]
    %v1505 = vld [vmem:[#allocation7 + $0x350] sm:$0xff]
    %v1506 = vld [vmem:[#allocation7 + $0x358] sm:$0xff]
    %v1507 = vld [vmem:[#allocation7 + $0x360] sm:$0xff]
    %v1508 = vld [vmem:[#allocation7 + $0x368] sm:$0xff]
    %v1509 = vld [vmem:[#allocation7 + $0x370] sm:$0xff]
    %v1510 = vld [vmem:[#allocation7 + $0x378] sm:$0xff]
    %v1511 = vld [vmem:[#allocation7 + $0x380] sm:$0xff]
    %v1512 = vld [vmem:[#allocation7 + $0x388] sm:$0xff]
    %v1513 = vld [vmem:[#allocation7 + $0x390] sm:$0xff]
    %v1514 = vld [vmem:[#allocation7 + $0x398] sm:$0xff]
    %v1515 = vld [vmem:[#allocation7 + $0x3a0] sm:$0xff]
    %v1516 = vld [vmem:[#allocation7 + $0x3a8] sm:$0xff]
    %v1517 = vld [vmem:[#allocation7 + $0x3b0] sm:$0xff]
    %v1518 = vld [vmem:[#allocation7 + $0x3b8] sm:$0xff]
    %v1519 = vld [vmem:[#allocation7 + $0x3c0] sm:$0xff]
    %v1520 = vld [vmem:[#allocation7 + $0x3c8] sm:$0xff]
    %v1521 = vld [vmem:[#allocation7 + $0x3d0] sm:$0xff]
    %v1522 = vld [vmem:[#allocation7 + $0x3d8] sm:$0xff]
    %v1523 = vld [vmem:[#allocation7 + $0x3e0] sm:$0xff]
    %v1524 = vld [vmem:[#allocation7 + $0x3e8] sm:$0xff]
    %v1525 = vld [vmem:[#allocation7 + $0x3f0] sm:$0xff]
    %v1526 = vld [vmem:[#allocation7 + $0x3f8] sm:$0xff]
    %v1527 = vpack.c.bf16 %v1395, %v1395
    %v1528 = vpack.c.bf16 %v1396, %v1396
    %v1529 = vpack.c.bf16 %v1397, %v1397
    %v1530 = vpack.c.bf16 %v1398, %v1398
    %v1531 = vpack.c.bf16 %v1401, %v1399
    %v1532 = vpack.c.bf16 %v1402, %v1400
    %v1533 = vpack.c.bf16 %v1405, %v1403
    %v1534 = vpack.c.bf16 %v1406, %v1404
    %v1535 = vpack.c.bf16 %v1409, %v1407
    %v1536 = vpack.c.bf16 %v1410, %v1408
    %v1537 = vpack.c.bf16 %v1413, %v1411
    %v1538 = vpack.c.bf16 %v1414, %v1412
    %v1539 = vpack.c.bf16 %v1417, %v1415
    %v1540 = vpack.c.bf16 %v1418, %v1416
    %v1541 = vpack.c.bf16 %v1421, %v1419
    %v1542 = vpack.c.bf16 %v1422, %v1420
    %v1543 = vpack.c.bf16 %v1425, %v1423
    %v1544 = vpack.c.bf16 %v1426, %v1424
    %v1545 = vpack.c.bf16 %v1429, %v1427
    %v1546 = vpack.c.bf16 %v1430, %v1428
    %v1547 = vpack.c.bf16 %v1433, %v1431
    %v1548 = vpack.c.bf16 %v1434, %v1432
    %v1549 = vpack.c.bf16 %v1437, %v1435
    %v1550 = vpack.c.bf16 %v1438, %v1436
    %v1551 = vpack.c.bf16 %v1441, %v1439
    %v1552 = vpack.c.bf16 %v1442, %v1440
    %v1553 = vpack.c.bf16 %v1445, %v1443
    %v1554 = vpack.c.bf16 %v1446, %v1444
    %v1555 = vpack.c.bf16 %v1449, %v1447
    %v1556 = vpack.c.bf16 %v1450, %v1448
    %v1557 = vpack.c.bf16 %v1453, %v1451
    %v1558 = vpack.c.bf16 %v1454, %v1452
    %v1559 = vpack.c.bf16 %v1457, %v1455
    %v1560 = vpack.c.bf16 %v1458, %v1456
    %v1561 = vpack.c.bf16 %v1461, %v1459
    %v1562 = vpack.c.bf16 %v1462, %v1460
    %v1563 = vpack.c.bf16 %v1465, %v1463
    %v1564 = vpack.c.bf16 %v1466, %v1464
    %v1565 = vpack.c.bf16 %v1469, %v1467
    %v1566 = vpack.c.bf16 %v1470, %v1468
    %v1567 = vpack.c.bf16 %v1473, %v1471
    %v1568 = vpack.c.bf16 %v1474, %v1472
    %v1569 = vpack.c.bf16 %v1477, %v1475
    %v1570 = vpack.c.bf16 %v1478, %v1476
    %v1571 = vpack.c.bf16 %v1481, %v1479
    %v1572 = vpack.c.bf16 %v1482, %v1480
    %v1573 = vpack.c.bf16 %v1485, %v1483
    %v1574 = vpack.c.bf16 %v1486, %v1484
    %v1575 = vpack.c.bf16 %v1489, %v1487
    %v1576 = vpack.c.bf16 %v1490, %v1488
    %v1577 = vpack.c.bf16 %v1493, %v1491
    %v1578 = vpack.c.bf16 %v1494, %v1492
    %v1579 = vpack.c.bf16 %v1497, %v1495
    %v1580 = vpack.c.bf16 %v1498, %v1496
    %v1581 = vpack.c.bf16 %v1501, %v1499
    %v1582 = vpack.c.bf16 %v1502, %v1500
    %v1583 = vpack.c.bf16 %v1505, %v1503
    %v1584 = vpack.c.bf16 %v1506, %v1504
    %v1585 = vpack.c.bf16 %v1509, %v1507
    %v1586 = vpack.c.bf16 %v1510, %v1508
    %v1587 = vpack.c.bf16 %v1513, %v1511
    %v1588 = vpack.c.bf16 %v1514, %v1512
    %v1589 = vpack.c.bf16 %v1517, %v1515
    %v1590 = vpack.c.bf16 %v1518, %v1516
    %v1591 = vpack.c.bf16 %v1521, %v1519
    %v1592 = vpack.c.bf16 %v1522, %v1520
    %v1593 = vpack.c.bf16 %v1525, %v1523
    %v1594 = vpack.c.bf16 %v1526, %v1524
    %1595 = vmatprep.subr.bf16.mxu0 %v1532
    %1596 = vmatpush1.bf16.msra.mxu0 %v1531
    %1597 = vmatprep.subr.bf16.mxu0 %v1534
    %1598 = vmatpush1.bf16.msra.mxu0 %v1533
    %1599 = vmatprep.subr.bf16.mxu0 %v1536
    %1600 = vmatpush1.bf16.msra.mxu0 %v1535
    %1601 = vmatprep.subr.bf16.mxu0 %v1538
    %1602 = vmatpush1.bf16.msra.mxu0 %v1537
    %1603 = vmatprep.subr.bf16.mxu0 %v1540
    %1604 = vmatpush1.bf16.msra.mxu0 %v1539
    %1605 = vmatprep.subr.bf16.mxu0 %v1542
    %1606 = vmatpush1.bf16.msra.mxu0 %v1541
    %1607 = vmatprep.subr.bf16.mxu0 %v1544
    %1608 = vmatpush1.bf16.msra.mxu0 %v1543
    %1609 = vmatprep.subr.bf16.mxu0 %v1546
    %1610 = vmatpush1.bf16.msra.mxu0 %v1545
    %1611 = vmatprep.subr.bf16.mxu0 %v1548
    %1612 = vmatpush1.bf16.msra.mxu0 %v1547
    %1613 = vmatprep.subr.bf16.mxu0 %v1550
    %1614 = vmatpush1.bf16.msra.mxu0 %v1549
    %1615 = vmatprep.subr.bf16.mxu0 %v1552
    %1616 = vmatpush1.bf16.msra.mxu0 %v1551
    %1617 = vmatprep.subr.bf16.mxu0 %v1554
    %1618 = vmatpush1.bf16.msra.mxu0 %v1553
    %1619 = vmatprep.subr.bf16.mxu0 %v1556
    %1620 = vmatpush1.bf16.msra.mxu0 %v1555
    %1621 = vmatprep.subr.bf16.mxu0 %v1558
    %1622 = vmatpush1.bf16.msra.mxu0 %v1557
    %1623 = vmatprep.subr.bf16.mxu0 %v1560
    %1624 = vmatpush1.bf16.msra.mxu0 %v1559
    %1625 = vmatprep.subr.bf16.mxu0 %v1562
    %1626 = vmatpush1.bf16.msra.mxu0 %v1561
    %1627 = vmatprep.mubr.bf16.mxu0 %v1528
    %1628 = vmatmul.mubr.bf16.gmra.mrb[0].mxu0 %v1527
    %v1629 = vpop.f32.mrb[0].mxu0
    %v1630 = vadd.f32 0.0, %v1629
    %v1631 = vpop.f32.mrb[0].mxu0
    %v1632 = vadd.f32 0.0, %v1631
    %v1633 = vpop.f32.mrb[0].mxu0
    %v1634 = vpop.f32.mrb[0].mxu0
    %1635 = vdwg.mxu0
    %1636 = vmatprep.subr.bf16.mxu0 %v1564
    %1637 = vmatpush1.bf16.msra.mxu0 %v1563
    %1638 = vmatprep.subr.bf16.mxu0 %v1566
    %1639 = vmatpush1.bf16.msra.mxu0 %v1565
    %1640 = vmatprep.subr.bf16.mxu0 %v1568
    %1641 = vmatpush1.bf16.msra.mxu0 %v1567
    %1642 = vmatprep.subr.bf16.mxu0 %v1570
    %1643 = vmatpush1.bf16.msra.mxu0 %v1569
    %1644 = vmatprep.subr.bf16.mxu0 %v1572
    %1645 = vmatpush1.bf16.msra.mxu0 %v1571
    %1646 = vmatprep.subr.bf16.mxu0 %v1574
    %1647 = vmatpush1.bf16.msra.mxu0 %v1573
    %1648 = vmatprep.subr.bf16.mxu0 %v1576
    %1649 = vmatpush1.bf16.msra.mxu0 %v1575
    %1650 = vmatprep.subr.bf16.mxu0 %v1578
    %1651 = vmatpush1.bf16.msra.mxu0 %v1577
    %1652 = vmatprep.subr.bf16.mxu0 %v1580
    %1653 = vmatpush1.bf16.msra.mxu0 %v1579
    %1654 = vmatprep.subr.bf16.mxu0 %v1582
    %1655 = vmatpush1.bf16.msra.mxu0 %v1581
    %1656 = vmatprep.subr.bf16.mxu0 %v1584
    %1657 = vmatpush1.bf16.msra.mxu0 %v1583
    %1658 = vmatprep.subr.bf16.mxu0 %v1586
    %1659 = vmatpush1.bf16.msra.mxu0 %v1585
    %1660 = vmatprep.subr.bf16.mxu0 %v1588
    %1661 = vmatpush1.bf16.msra.mxu0 %v1587
    %1662 = vmatprep.subr.bf16.mxu0 %v1590
    %1663 = vmatpush1.bf16.msra.mxu0 %v1589
    %1664 = vmatprep.subr.bf16.mxu0 %v1592
    %1665 = vmatpush1.bf16.msra.mxu0 %v1591
    %1666 = vmatprep.subr.bf16.mxu0 %v1594
    %1667 = vmatpush1.bf16.msra.mxu0 %v1593
    %1668 = vmatprep.mubr.bf16.mxu0 %v1530
    %1669 = vmatmul.mubr.bf16.gmra.mrb[0].mxu0 %v1529
    %v1670 = vpop.f32.mrb[0].mxu0
    %v1671 = vadd.f32 %v1630, %v1670
    %v1672 = vpop.f32.mrb[0].mxu0
    %v1673 = vadd.f32 %v1632, %v1672
    %v1674 = vpop.f32.mrb[0].mxu0
    %v1675 = vpop.f32.mrb[0].mxu0
    %1676 = vdwg.mxu0
    %v1677 = vld [vmem:[#allocation9] sm:$0x3]
    %v1678 = vld [vmem:[#allocation10] sm:$0x3]
    %v1679 = vsel %vm1259, %v1671, 0.0
    %v1680 = vrot.slane %v1679, 4
    %v1681 = vadd.f32 %v1679, %v1680
    %v1682 = vrot.slane %v1681, 2
    %v1683 = vadd.f32 %v1681, %v1682
    %v1684 = vrot.slane %v1683, 1
    %v1685 = vadd.f32 %v1683, %v1684
    %v1686 = vsel %vm1259, %v1673, 0.0
    %v1687 = vrot.slane %v1686, 4
    %v1688 = vadd.f32 %v1686, %v1687
    %v1689 = vrot.slane %v1688, 2
    %v1690 = vadd.f32 %v1688, %v1689
    %v1691 = vrot.slane %v1690, 1
    %v1692 = vadd.f32 %v1690, %v1691
    %v1693 = vmul.f32 %v1685, %v1288
    %v1694 = vmul.f32 %v1692, %v1288
    %v1695 = vsub.f32 %v1671, %v1693
    %v1696 = vsub.f32 %v1673, %v1694
    %v1697 = vmul.f32 %v1695, %v1695
    %v1698 = vmul.f32 %v1696, %v1696
    %v1699 = vsel %vm1259, %v1697, 0.0
    %v1700 = vrot.slane %v1699, 4
    %v1701 = vadd.f32 %v1699, %v1700
    %v1702 = vrot.slane %v1701, 2
    %v1703 = vadd.f32 %v1701, %v1702
    %v1704 = vrot.slane %v1703, 1
    %v1705 = vadd.f32 %v1703, %v1704
    %v1706 = vsel %vm1259, %v1698, 0.0
    %v1707 = vrot.slane %v1706, 4
    %v1708 = vadd.f32 %v1706, %v1707
    %v1709 = vrot.slane %v1708, 2
    %v1710 = vadd.f32 %v1708, %v1709
    %v1711 = vrot.slane %v1710, 1
    %v1712 = vadd.f32 %v1710, %v1711
    %v1713 = vmul.f32 %v1705, %v1288
    %v1714 = vmul.f32 %v1712, %v1288
    %v1715 = vadd.f32 %v1713, 1e-05
    %v1716 = vadd.f32 %v1714, 1e-05
    %v1717 = vrsqrt.pop %v1715
    %v1718 = vrsqrt.pop %v1716
    %v1719 = vmul.f32 %v1695, %v1717
    %v1720 = vmul.f32 %v1696, %v1718
    %v1722 = vlaneseq
    %v1723 = vshrl.u32 %v1722, 7
    %v1724 = vsub.s32 0, %v1723
    %v1725 = vrot.slane %v1677, %v1724
    %v1726 = vlaneseq
    %v1727 = vshrl.u32 %v1726, 7
    %v1728 = vsub.s32 1, %v1727
    %v1729 = vrot.slane %v1677, %v1728
    %v1732 = vmul.f32 %v1719, %v1725
    %v1733 = vmul.f32 %v1720, %v1729
    %v1735 = vlaneseq
    %v1736 = vshrl.u32 %v1735, 7
    %v1737 = vsub.s32 0, %v1736
    %v1738 = vrot.slane %v1678, %v1737
    %v1739 = vlaneseq
    %v1740 = vshrl.u32 %v1739, 7
    %v1741 = vsub.s32 1, %v1740
    %v1742 = vrot.slane %v1678, %v1741
    %v1745 = vadd.f32 %v1732, %v1738
    %v1746 = vadd.f32 %v1733, %v1742
    %v1747 = vmax.f32 %v1745, 0.0
    %v1748 = vmax.f32 %v1746, 0.0
    %v1749 = vld [vmem:[%s7] sm:$0xff]
    %v1750 = vld [vmem:[%s7 + $0x8] sm:$0xff]
    %v1751 = vld [vmem:[%s7 + $0x10] sm:$0xff]
    %v1752 = vld [vmem:[%s7 + $0x18] sm:$0xff]
    %v1753 = vld [vmem:[%s7 + $0x20] sm:$0xff]
    %v1754 = vld [vmem:[%s7 + $0x28] sm:$0xff]
    %v1755 = vld [vmem:[%s7 + $0x30] sm:$0xff]
    %v1756 = vld [vmem:[%s7 + $0x38] sm:$0xff]
    %v1757 = vld [vmem:[%s7 + $0x40] sm:$0xff]
    %v1758 = vld [vmem:[%s7 + $0x48] sm:$0xff]
    %v1759 = vld [vmem:[%s7 + $0x50] sm:$0xff]
    %v1760 = vld [vmem:[%s7 + $0x58] sm:$0xff]
    %v1761 = vld [vmem:[%s7 + $0x60] sm:$0xff]
    %v1762 = vld [vmem:[%s7 + $0x68] sm:$0xff]
    %v1763 = vld [vmem:[%s7 + $0x70] sm:$0xff]
    %v1764 = vld [vmem:[%s7 + $0x78] sm:$0xff]
    %v1765 = vld [vmem:[%s7 + $0x80] sm:$0xff]
    %v1766 = vld [vmem:[%s7 + $0x88] sm:$0xff]
    %v1767 = vld [vmem:[%s7 + $0x90] sm:$0xff]
    %v1768 = vld [vmem:[%s7 + $0x98] sm:$0xff]
    %v1769 = vld [vmem:[%s7 + $0xa0] sm:$0xff]
    %v1770 = vld [vmem:[%s7 + $0xa8] sm:$0xff]
    %v1771 = vld [vmem:[%s7 + $0xb0] sm:$0xff]
    %v1772 = vld [vmem:[%s7 + $0xb8] sm:$0xff]
    %v1773 = vld [vmem:[%s7 + $0xc0] sm:$0xff]
    %v1774 = vld [vmem:[%s7 + $0xc8] sm:$0xff]
    %v1775 = vld [vmem:[%s7 + $0xd0] sm:$0xff]
    %v1776 = vld [vmem:[%s7 + $0xd8] sm:$0xff]
    %v1777 = vld [vmem:[%s7 + $0xe0] sm:$0xff]
    %v1778 = vld [vmem:[%s7 + $0xe8] sm:$0xff]
    %v1779 = vld [vmem:[%s7 + $0xf0] sm:$0xff]
    %v1780 = vld [vmem:[%s7 + $0xf8] sm:$0xff]
    %v1781 = vpack.c.bf16 %v1747, %v1747
    %v1782 = vpack.c.bf16 %v1748, %v1748
    %v1783 = vpack.c.bf16 %v1750, %v1749
    %v1784 = vpack.c.bf16 %v1752, %v1751
    %v1785 = vpack.c.bf16 %v1754, %v1753
    %v1786 = vpack.c.bf16 %v1756, %v1755
    %v1787 = vpack.c.bf16 %v1758, %v1757
    %v1788 = vpack.c.bf16 %v1760, %v1759
    %v1789 = vpack.c.bf16 %v1762, %v1761
    %v1790 = vpack.c.bf16 %v1764, %v1763
    %v1791 = vpack.c.bf16 %v1766, %v1765
    %v1792 = vpack.c.bf16 %v1768, %v1767
    %v1793 = vpack.c.bf16 %v1770, %v1769
    %v1794 = vpack.c.bf16 %v1772, %v1771
    %v1795 = vpack.c.bf16 %v1774, %v1773
    %v1796 = vpack.c.bf16 %v1776, %v1775
    %v1797 = vpack.c.bf16 %v1778, %v1777
    %v1798 = vpack.c.bf16 %v1780, %v1779
    %v1799 = vld [vmem:[%s8] sm:$0x1]
    %v1801 = vlaneseq
    %v1802 = vshrl.u32 %v1801, 7
    %v1803 = vsub.s32 0, %v1802
    %v1804 = vrot.slane %v1799, %v1803
    %1806 = vmatprep.subr.bf16.mxu0 0
    %1807 = vmatpush1.bf16.msra.mxu0 %v1783
    %1808 = vmatprep.subr.bf16.mxu0 0
    %1809 = vmatpush1.bf16.msra.mxu0 %v1784
    %1810 = vmatprep.subr.bf16.mxu0 0
    %1811 = vmatpush1.bf16.msra.mxu0 %v1785
    %1812 = vmatprep.subr.bf16.mxu0 0
    %1813 = vmatpush1.bf16.msra.mxu0 %v1786
    %1814 = vmatprep.subr.bf16.mxu0 0
    %1815 = vmatpush1.bf16.msra.mxu0 %v1787
    %1816 = vmatprep.subr.bf16.mxu0 0
    %1817 = vmatpush1.bf16.msra.mxu0 %v1788
    %1818 = vmatprep.subr.bf16.mxu0 0
    %1819 = vmatpush1.bf16.msra.mxu0 %v1789
    %1820 = vmatprep.subr.bf16.mxu0 0
    %1821 = vmatpush1.bf16.msra.mxu0 %v1790
    %1822 = vmatprep.subr.bf16.mxu0 0
    %1823 = vmatpush1.bf16.msra.mxu0 %v1791
    %1824 = vmatprep.subr.bf16.mxu0 0
    %1825 = vmatpush1.bf16.msra.mxu0 %v1792
    %1826 = vmatprep.subr.bf16.mxu0 0
    %1827 = vmatpush1.bf16.msra.mxu0 %v1793
    %1828 = vmatprep.subr.bf16.mxu0 0
    %1829 = vmatpush1.bf16.msra.mxu0 %v1794
    %1830 = vmatprep.subr.bf16.mxu0 0
    %1831 = vmatpush1.bf16.msra.mxu0 %v1795
    %1832 = vmatprep.subr.bf16.mxu0 0
    %1833 = vmatpush1.bf16.msra.mxu0 %v1796
    %1834 = vmatprep.subr.bf16.mxu0 0
    %1835 = vmatpush1.bf16.msra.mxu0 %v1797
    %1836 = vmatprep.subr.bf16.mxu0 0
    %1837 = vmatpush1.bf16.msra.mxu0 %v1798
    %1838 = vmatprep.mubr.bf16.mxu0 %v1782
    %1839 = vmatmul.mubr.bf16.gmra.mrb[0].mxu0 %v1781
    %v1840 = vpop.f32.mrb[0].mxu0
    %v1841 = vadd.f32 %v1804, %v1840
    %v1842 = vpop.f32.mrb[0].mxu0
    %v1843 = vpop.f32.mrb[0].mxu0
    %v1844 = vpop.f32.mrb[0].mxu0
    %1845 = vdwg.mxu0
    %vm1846 = vcmask 123904
    %1847 = vst.msk [vmem:[%s9] sm:$0x3] %vm1846, %v1841
    // Predicated region
    $region62: #{_lambda_.10} parent=1 // pred_check
      _
    $region63: #{_lambda_.10} parent=1 // pred_check_branch
      %1849 = sbr.rel (0) target = $region65
    $region64: #{_lambda_.10} parent=1 // pred_region
      _
    $region65: #{_lambda_.10} parent=1 // pred_fallthru
      _
    // Predicated region
    $region66: #{_lambda_.10} parent=1 // pred_check
      _
    $region67: #{_lambda_.10} parent=1 // pred_check_branch
      %1851 = sbr.rel (0) target = $region69
    $region68: #{_lambda_.10} parent=1 // pred_region
      _
    $region69: #{_lambda_.10} parent=1 // pred_fallthru
      _
    %1852 = vsyncpa [#allocation3], 1
    %1853 = vsyncpa [#allocation5], 1
    %1854 = vsyncpa [#allocation8], 1
    %1855 = vsyncpa [#allocation11], 1

// kernel: _lambda_.13
$region0: #{_lambda_.13}
  #allocation0 [shape = 'u32[]', space=smem, size = 0x4, offset = 0x4, fixed_abs, tag = 'smem constant byte address 0x4 - core index']
  #allocation1 [shape = 'u32[144,128]{1,0:T(1,128)}', space=vmem, size = 0x12000, scoped, tag = 'internal scratch']
  %s0 = inlined_call_operand.vmem [shape: f32[2,16,128], index: 0, kind: input, shape index: {}]
  %s1 = inlined_call_operand.vmem [shape: f32[128,1024], index: 1, kind: input, shape index: {}]
  %s2 = inlined_call_operand.vmem [shape: f32[1,128], index: 2, kind: input, shape index: {}]
  %s3 = inlined_call_operand.vmem [shape: f32[1,128], index: 3, kind: input, shape index: {}]
  %s4 = inlined_call_operand.vmem [shape: f32[2,1,1024], index: 4, kind: output, shape index: {0}]
  %s5 = inlined_call_operand.vmem [shape: f32[2,1,1024], index: 5, kind: output, shape index: {1}]
  %s6 = inlined_call_operand.vmem [shape: f32[2,1,1024], index: 6, kind: output, shape index: {2}]
  %s7 = inlined_call_operand.vmem [shape: f32[2,1,1024], index: 7, kind: output, shape index: {3}]
  %8 = xla_tuple %s4, %s5, %s6, %s7
  %s9 = sld [smem:[#allocation0]]
  $region77: #{_lambda_.13} parent=0
    _
  %s11 = ssub.s32 1, %s9
  %s12 = scalar_select 0, %s11, %s9
  loop: start=0, step=1, limit=4
  $region2: #{_lambda_.13} parent=0 // loop_pre_header
    _
  $region3: #{_lambda_.13} parent=0 // loop_header
    %s14 = sphi 0, %s18
    %p15 = scmp.ge.s32.totalorder %s14, 4
    %s21 = sphi 0, %s33
    %s22 = sphi 0, %s29
    %s23 = sphi 0, %s21
    %s24 = sphi 0, %s22
    %s25 = sphi 0, %s23
    %s26 = sphi 0, %s24
    %s38 = sphi 0, %s40
    %s41 = sphi 0, %s38
    %s42 = sphi 0, %s41
    %s58 = sphi 0, %s42
    %s62 = sphi 0, %s62
    %s64 = sphi 0, %s62
    %s65 = sphi 0, %s64
    %s79 = sphi 0, %s65
    %s83 = sphi 0, %s83
    %s85 = sphi 0, %s83
    %s86 = sphi 0, %s85
    %s100 = sphi 0, %s86
    %s104 = sphi 0, %s104
    %s106 = sphi 0, %s104
    %s107 = sphi 0, %s106
    %s121 = sphi 0, %s107
    %s127 = sphi 0, %s129
    %s130 = sphi 0, %s127
    %s131 = sphi 0, %s130
    %s147 = sphi 0, %s131
    %s153 = sphi 0, %s155
    %s156 = sphi 0, %s153
    %s157 = sphi 0, %s156
    %s173 = sphi 0, %s157
    %s179 = sphi 0, %s181
    %s182 = sphi 0, %s179
    %s183 = sphi 0, %s182
    %s199 = sphi 0, %s183
    %s205 = sphi 0, %s207
    %s208 = sphi 0, %s205
    %s209 = sphi 0, %s208
    %s225 = sphi 0, %s209
  $region4: #{_lambda_.13} parent=0 // loop_header_branch
    %17 = sbr.rel (%p15) target = $region8
  $region5: #{_lambda_.13} parent=0 // loop_body
    %s19 = ssub.s32 %s14, 1
    %s20 = ssub.s32 %s14, 2
    %s27 = sadd.s32 1, %s22
    %p28 = scmp.ge.s32.totalorder %s27, 1
    %s29 = scalar_select %p28, 0, %s27
    %s30 = sadd.s32 1, %s21
    %s31 = scalar_select %p28, %s30, %s21
    %p32 = scmp.ge.s32.totalorder %s31, 2
    %s33 = scalar_select %p32, 0, %s31
    %s34 = ssub.s32 %s21, %s33
    %s35 = ssub.s32 %s22, %s29
    %s36 = sor.u32 %s34, %s35
    %p37 = scmp.eq.s32.totalorder %s36, 0
    %s39 = sadd.s32 %s38, 1
    %s40 = scalar_select %p37, %s38, %s39
    %p43 = pneg %p37
    %p44 = scmp.eq.s32.totalorder %s14, 1
    %p45 = por %p43, %p44
    %p46 = scmp.ne.s32.totalorder %s38, %s41
    %p47 = scmp.eq.s32.totalorder %s14, 0
    %p48 = por %p46, %p47
    %p49 = scmp.ne.s32.totalorder %s38, %s41
    %p50 = scmp.eq.s32.totalorder %s19, 1
    %p51 = por %p49, %p50
    %p52 = scmp.ne.s32.totalorder %s41, %s42
    %p53 = scmp.eq.s32.totalorder %s19, 0
    %p54 = por %p52, %p53
    %p55 = scmp.ne.s32.totalorder %s41, %s42
    %p56 = scmp.eq.s32.totalorder %s20, 1
    %p57 = por %p55, %p56
    %p59 = scmp.ne.s32.totalorder %s42, %s58
    %p60 = scmp.eq.s32.totalorder %s20, 0
    %p61 = por %p59, %p60
    %s63 = sadd.s32 %s62, 1
    %p66 = scmp.eq.s32.totalorder %s14, 1
    %p67 = scmp.ne.s32.totalorder %s62, %s64
    %p68 = scmp.eq.s32.totalorder %s14, 0
    %p69 = por %p67, %p68
    %p70 = scmp.ne.s32.totalorder %s62, %s64
    %p71 = scmp.eq.s32.totalorder %s19, 1
    %p72 = por %p70, %p71
    %p73 = scmp.ne.s32.totalorder %s64, %s65
    %p74 = scmp.eq.s32.totalorder %s19, 0
    %p75 = por %p73, %p74
    %p76 = scmp.ne.s32.totalorder %s64, %s65
    %p77 = scmp.eq.s32.totalorder %s20, 1
    %p78 = por %p76, %p77
    %p80 = scmp.ne.s32.totalorder %s65, %s79
    %p81 = scmp.eq.s32.totalorder %s20, 0
    %p82 = por %p80, %p81
    %s84 = sadd.s32 %s83, 1
    %p87 = scmp.eq.s32.totalorder %s14, 1
    %p88 = scmp.ne.s32.totalorder %s83, %s85
    %p89 = scmp.eq.s32.totalorder %s14, 0
    %p90 = por %p88, %p89
    %p91 = scmp.ne.s32.totalorder %s83, %s85
    %p92 = scmp.eq.s32.totalorder %s19, 1
    %p93 = por %p91, %p92
    %p94 = scmp.ne.s32.totalorder %s85, %s86
    %p95 = scmp.eq.s32.totalorder %s19, 0
    %p96 = por %p94, %p95
    %p97 = scmp.ne.s32.totalorder %s85, %s86
    %p98 = scmp.eq.s32.totalorder %s20, 1
    %p99 = por %p97, %p98
    %p101 = scmp.ne.s32.totalorder %s86, %s100
    %p102 = scmp.eq.s32.totalorder %s20, 0
    %p103 = por %p101, %p102
    %s105 = sadd.s32 %s104, 1
    %p108 = scmp.eq.s32.totalorder %s14, 1
    %p109 = scmp.ne.s32.totalorder %s104, %s106
    %p110 = scmp.eq.s32.totalorder %s14, 0
    %p111 = por %p109, %p110
    %p112 = scmp.ne.s32.totalorder %s104, %s106
    %p113 = scmp.eq.s32.totalorder %s19, 1
    %p114 = por %p112, %p113
    %p115 = scmp.ne.s32.totalorder %s106, %s107
    %p116 = scmp.eq.s32.totalorder %s19, 0
    %p117 = por %p115, %p116
    %p118 = scmp.ne.s32.totalorder %s106, %s107
    %p119 = scmp.eq.s32.totalorder %s20, 1
    %p120 = por %p118, %p119
    %p122 = scmp.ne.s32.totalorder %s107, %s121
    %p123 = scmp.eq.s32.totalorder %s20, 0
    %p124 = por %p122, %p123
    %s125 = ssub.s32 %s21, %s33
    %p126 = scmp.eq.s32.totalorder %s125, 0
    %s128 = sadd.s32 %s127, 1
    %s129 = scalar_select %p126, %s127, %s128
    %p132 = pneg %p126
    %p133 = scmp.eq.s32.totalorder %s14, 1
    %p134 = por %p132, %p133
    %p135 = scmp.ne.s32.totalorder %s127, %s130
    %p136 = scmp.eq.s32.totalorder %s14, 0
    %p137 = por %p135, %p136
    %p138 = scmp.ne.s32.totalorder %s127, %s130
    %p139 = scmp.eq.s32.totalorder %s19, 1
    %p140 = por %p138, %p139
    %p141 = scmp.ne.s32.totalorder %s130, %s131
    %p142 = scmp.eq.s32.totalorder %s19, 0
    %p143 = por %p141, %p142
    %p144 = scmp.ne.s32.totalorder %s130, %s131
    %p145 = scmp.eq.s32.totalorder %s20, 1
    %p146 = por %p144, %p145
    %p148 = scmp.ne.s32.totalorder %s131, %s147
    %p149 = scmp.eq.s32.totalorder %s20, 0
    %p150 = por %p148, %p149
    %s151 = ssub.s32 %s21, %s33
    %p152 = scmp.eq.s32.totalorder %s151, 0
    %s154 = sadd.s32 %s153, 1
    %s155 = scalar_select %p152, %s153, %s154
    %p158 = pneg %p152
    %p159 = scmp.eq.s32.totalorder %s14, 1
    %p160 = por %p158, %p159
    %p161 = scmp.ne.s32.totalorder %s153, %s156
    %p162 = scmp.eq.s32.totalorder %s14, 0
    %p163 = por %p161, %p162
    %p164 = scmp.ne.s32.totalorder %s153, %s156
    %p165 = scmp.eq.s32.totalorder %s19, 1
    %p166 = por %p164, %p165
    %p167 = scmp.ne.s32.totalorder %s156, %s157
    %p168 = scmp.eq.s32.totalorder %s19, 0
    %p169 = por %p167, %p168
    %p170 = scmp.ne.s32.totalorder %s156, %s157
    %p171 = scmp.eq.s32.totalorder %s20, 1
    %p172 = por %p170, %p171
    %p174 = scmp.ne.s32.totalorder %s157, %s173
    %p175 = scmp.eq.s32.totalorder %s20, 0
    %p176 = por %p174, %p175
    %s177 = ssub.s32 %s21, %s33
    %p178 = scmp.eq.s32.totalorder %s177, 0
    %s180 = sadd.s32 %s179, 1
    %s181 = scalar_select %p178, %s179, %s180
    %p184 = pneg %p178
    %p185 = scmp.eq.s32.totalorder %s14, 1
    %p186 = por %p184, %p185
    %p187 = scmp.ne.s32.totalorder %s179, %s182
    %p188 = scmp.eq.s32.totalorder %s14, 0
    %p189 = por %p187, %p188
    %p190 = scmp.ne.s32.totalorder %s179, %s182
    %p191 = scmp.eq.s32.totalorder %s19, 1
    %p192 = por %p190, %p191
    %p193 = scmp.ne.s32.totalorder %s182, %s183
    %p194 = scmp.eq.s32.totalorder %s19, 0
    %p195 = por %p193, %p194
    %p196 = scmp.ne.s32.totalorder %s182, %s183
    %p197 = scmp.eq.s32.totalorder %s20, 1
    %p198 = por %p196, %p197
    %p200 = scmp.ne.s32.totalorder %s183, %s199
    %p201 = scmp.eq.s32.totalorder %s20, 0
    %p202 = por %p200, %p201
    %s203 = ssub.s32 %s21, %s33
    %p204 = scmp.eq.s32.totalorder %s203, 0
    %s206 = sadd.s32 %s205, 1
    %s207 = scalar_select %p204, %s205, %s206
    %p210 = pneg %p204
    %p211 = scmp.eq.s32.totalorder %s14, 1
    %p212 = por %p210, %p211
    %p213 = scmp.ne.s32.totalorder %s205, %s208
    %p214 = scmp.eq.s32.totalorder %s14, 0
    %p215 = por %p213, %p214
    %p216 = scmp.ne.s32.totalorder %s205, %s208
    %p217 = scmp.eq.s32.totalorder %s19, 1
    %p218 = por %p216, %p217
    %p219 = scmp.ne.s32.totalorder %s208, %s209
    %p220 = scmp.eq.s32.totalorder %s19, 0
    %p221 = por %p219, %p220
    %p222 = scmp.ne.s32.totalorder %s208, %s209
    %p223 = scmp.eq.s32.totalorder %s20, 1
    %p224 = por %p222, %p223
    %p226 = scmp.ne.s32.totalorder %s209, %s225
    %p227 = scmp.eq.s32.totalorder %s20, 0
    %p228 = por %p226, %p227
    %p229 = scmp.le.s32.totalorder 1, %s14
    %p230 = scmp.lt.s32.totalorder %s14, 3
    %p231 = pnand %p229, %p230
    %p232 = pneg %p231
    // Predicated region
    $region9: #{_lambda_.13} parent=5 // pred_check
      _
    $region10: #{_lambda_.13} parent=5 // pred_check_branch
      %234 = sbr.rel (%p231) target = $region12
    $region11: #{_lambda_.13} parent=5 // pred_region
      %s235 = ssub.s32 %s14, 1
      // Predicated region
      $region13: #{_lambda_.13} parent=11 // pred_check
        %p236 = pneg %p75
      $region14: #{_lambda_.13} parent=11 // pred_check_branch
        %238 = sbr.rel (%p236) target = $region16
      $region15: #{_lambda_.13} parent=11 // pred_region
        _
      $region16: #{_lambda_.13} parent=11 // pred_fallthru
        _
      // Predicated region
      $region17: #{_lambda_.13} parent=11 // pred_check
        %p239 = pneg %p96
      $region18: #{_lambda_.13} parent=11 // pred_check_branch
        %241 = sbr.rel (%p239) target = $region20
      $region19: #{_lambda_.13} parent=11 // pred_region
        _
      $region20: #{_lambda_.13} parent=11 // pred_fallthru
        _
      // Predicated region
      $region21: #{_lambda_.13} parent=11 // pred_check
        %p242 = pneg %p117
      $region22: #{_lambda_.13} parent=11 // pred_check_branch
        %244 = sbr.rel (%p242) target = $region24
      $region23: #{_lambda_.13} parent=11 // pred_region
        _
      $region24: #{_lambda_.13} parent=11 // pred_fallthru
        _
    $region12: #{_lambda_.13} parent=5 // pred_fallthru
      _
    %p245 = scmp.lt.s32.totalorder %s14, 2
    // Predicated region
    $region25: #{_lambda_.13} parent=5 // pred_check
      %p246 = pneg %p245
    $region26: #{_lambda_.13} parent=5 // pred_check_branch
      %248 = sbr.rel (%p246) target = $region28
    $region27: #{_lambda_.13} parent=5 // pred_region
      // Predicated region
      $region29: #{_lambda_.13} parent=27 // pred_check
        %p249 = pneg %p48
      $region30: #{_lambda_.13} parent=27 // pred_check_branch
        %251 = sbr.rel (%p249) target = $region32
      $region31: #{_lambda_.13} parent=27 // pred_region
        %s252 = smul.u32 2, %s22
        %p253 = scmp.lt.s32.totalorder %s21, 1
        %s254 = scalar_select %p253, %s21, 1
        %p255 = scmp.lt.s32.totalorder %s252, 1
        %s256 = scalar_select %p255, %s252, 1
        %s257 = smul.addr %s254, 2
        %s258 = sadd.s32 %s256, %s257
        %s259 = smul.addr %s258, 8
        %s260 = scalar_lea.vmem %s0, %s259
        %s261 = smul.u32 2, %s22
      $region32: #{_lambda_.13} parent=27 // pred_fallthru
        _
    $region28: #{_lambda_.13} parent=5 // pred_fallthru
      _
    %p262 = scmp.le.s32.totalorder 1, %s14
    %p263 = scmp.lt.s32.totalorder %s14, 3
    %p264 = pnand %p262, %p263
    %p265 = pneg %p264
    // Predicated region
    $region33: #{_lambda_.13} parent=5 // pred_check
      _
    $region34: #{_lambda_.13} parent=5 // pred_check_branch
      %267 = sbr.rel (%p264) target = $region36
    $region35: #{_lambda_.13} parent=5 // pred_region
      %s268 = ssub.s32 %s14, 1
      %s269 = smul.u32 2, %s24
      %p270 = scmp.lt.s32.totalorder %s23, 1
      %s271 = scalar_select %p270, %s23, 1
      %p272 = scmp.lt.s32.totalorder %s269, 1
      %s273 = scalar_select %p272, %s269, 1
      %s274 = smul.addr %s271, 2
      %s275 = sadd.s32 %s273, %s274
      %s276 = smul.addr %s275, 8
      %s277 = scalar_lea.vmem %s0, %s276
      %p278 = pneg %p54
      %p279 = pneg %p51
      %p280 = pneg %p75
      %p281 = pneg %p72
      %p282 = pneg %p96
      %p283 = pneg %p93
      %p284 = pneg %p117
      %p285 = pneg %p114
      %p286 = pneg %p143
      %p287 = pneg %p140
      %p288 = scmp.lt.s32.totalorder %s23, 1
      %s289 = scalar_select %p288, %s23, 1
      %s290 = smul.addr %s289, 8
      %s291 = scalar_lea.vmem %s4, %s290
      %p292 = pneg %p169
      %p293 = pneg %p166
      %p294 = scmp.lt.s32.totalorder %s23, 1
      %s295 = scalar_select %p294, %s23, 1
      %s296 = smul.addr %s295, 8
      %s297 = scalar_lea.vmem %s5, %s296
      %p298 = pneg %p195
      %p299 = pneg %p192
      %p300 = scmp.lt.s32.totalorder %s23, 1
      %s301 = scalar_select %p300, %s23, 1
      %s302 = smul.addr %s301, 8
      %s303 = scalar_lea.vmem %s6, %s302
      %p304 = pneg %p221
      %p305 = pneg %p218
      %p306 = scmp.lt.s32.totalorder %s23, 1
      %s307 = scalar_select %p306, %s23, 1
      %s308 = smul.addr %s307, 8
      %s309 = scalar_lea.vmem %s7, %s308
      %s310 = smul.u32 2, %s24
      %p311 = scmp.lt.s32.totalorder %s23, 1
      %s312 = scalar_select %p311, %s23, 1
      %p313 = scmp.lt.s32.totalorder %s310, 1
      %s314 = scalar_select %p313, %s310, 1
      %s315 = smul.addr %s312, 2
      %s316 = sadd.s32 %s314, %s315
      %s317 = smul.addr %s316, 8
      %s318 = scalar_lea.vmem %s0, %s317
      %s319 = smul.u32 2, %s24
      %p320 = scmp.lt.s32.totalorder %s23, 1
      %s321 = scalar_select %p320, %s23, 1
      %s322 = smul.addr %s321, 8
      %s323 = scalar_lea.vmem %s4, %s322
      %p324 = scmp.lt.s32.totalorder %s23, 1
      %s325 = scalar_select %p324, %s23, 1
      %s326 = smul.addr %s325, 8
      %s327 = scalar_lea.vmem %s5, %s326
      %p328 = scmp.lt.s32.totalorder %s23, 1
      %s329 = scalar_select %p328, %s23, 1
      %s330 = smul.addr %s329, 8
      %s331 = scalar_lea.vmem %s6, %s330
      %p332 = scmp.lt.s32.totalorder %s23, 1
      %s333 = scalar_select %p332, %s23, 1
      %s334 = smul.addr %s333, 8
      %s335 = scalar_lea.vmem %s7, %s334
      %v337 = vld [vmem:[%s318] sm:$0xff]
      %v338 = vld [vmem:[%s318 + $0x8] sm:$0xff]
      %v339 = vld [vmem:[%s2] sm:$0x1]
      %v341 = vlaneseq
      %v342 = vshrl.u32 %v341, 7
      %v343 = vsub.s32 0, %v342
      %v344 = vrot.slane %v339, %v343
      %v346 = vmul.f32 %v337, %v344
      %v347 = vmul.f32 %v338, %v344
      %v348 = vld [vmem:[%s3] sm:$0x1]
      %v350 = vlaneseq
      %v351 = vshrl.u32 %v350, 7
      %v352 = vsub.s32 0, %v351
      %v353 = vrot.slane %v348, %v352
      %v355 = vadd.f32 %v346, %v353
      %v356 = vadd.f32 %v347, %v353
      %v357 = vmax.f32 %v355, 0.0
      %v358 = vmax.f32 %v356, 0.0
      %v359 = vld [vmem:[%s1] sm:$0xff]
      %v360 = vld [vmem:[%s1 + $0x8] sm:$0xff]
      %v361 = vld [vmem:[%s1 + $0x10] sm:$0xff]
      %v362 = vld [vmem:[%s1 + $0x18] sm:$0xff]
      %v363 = vld [vmem:[%s1 + $0x20] sm:$0xff]
      %v364 = vld [vmem:[%s1 + $0x28] sm:$0xff]
      %v365 = vld [vmem:[%s1 + $0x30] sm:$0xff]
      %v366 = vld [vmem:[%s1 + $0x38] sm:$0xff]
      %v367 = vld [vmem:[%s1 + $0x40] sm:$0xff]
      %v368 = vld [vmem:[%s1 + $0x48] sm:$0xff]
      %v369 = vld [vmem:[%s1 + $0x50] sm:$0xff]
      %v370 = vld [vmem:[%s1 + $0x58] sm:$0xff]
      %v371 = vld [vmem:[%s1 + $0x60] sm:$0xff]
      %v372 = vld [vmem:[%s1 + $0x68] sm:$0xff]
      %v373 = vld [vmem:[%s1 + $0x70] sm:$0xff]
      %v374 = vld [vmem:[%s1 + $0x78] sm:$0xff]
      %v375 = vld [vmem:[%s1 + $0x80] sm:$0xff]
      %v376 = vld [vmem:[%s1 + $0x88] sm:$0xff]
      %v377 = vld [vmem:[%s1 + $0x90] sm:$0xff]
      %v378 = vld [vmem:[%s1 + $0x98] sm:$0xff]
      %v379 = vld [vmem:[%s1 + $0xa0] sm:$0xff]
      %v380 = vld [vmem:[%s1 + $0xa8] sm:$0xff]
      %v381 = vld [vmem:[%s1 + $0xb0] sm:$0xff]
      %v382 = vld [vmem:[%s1 + $0xb8] sm:$0xff]
      %v383 = vld [vmem:[%s1 + $0xc0] sm:$0xff]
      %v384 = vld [vmem:[%s1 + $0xc8] sm:$0xff]
      %v385 = vld [vmem:[%s1 + $0xd0] sm:$0xff]
      %v386 = vld [vmem:[%s1 + $0xd8] sm:$0xff]
      %v387 = vld [vmem:[%s1 + $0xe0] sm:$0xff]
      %v388 = vld [vmem:[%s1 + $0xe8] sm:$0xff]
      %v389 = vld [vmem:[%s1 + $0xf0] sm:$0xff]
      %v390 = vld [vmem:[%s1 + $0xf8] sm:$0xff]
      %v391 = vld [vmem:[%s1 + $0x100] sm:$0xff]
      %v392 = vld [vmem:[%s1 + $0x108] sm:$0xff]
      %v393 = vld [vmem:[%s1 + $0x110] sm:$0xff]
      %v394 = vld [vmem:[%s1 + $0x118] sm:$0xff]
      %v395 = vld [vmem:[%s1 + $0x120] sm:$0xff]
      %v396 = vld [vmem:[%s1 + $0x128] sm:$0xff]
      %v397 = vld [vmem:[%s1 + $0x130] sm:$0xff]
      %v398 = vld [vmem:[%s1 + $0x138] sm:$0xff]
      %v399 = vld [vmem:[%s1 + $0x140] sm:$0xff]
      %v400 = vld [vmem:[%s1 + $0x148] sm:$0xff]
      %v401 = vld [vmem:[%s1 + $0x150] sm:$0xff]
      %v402 = vld [vmem:[%s1 + $0x158] sm:$0xff]
      %v403 = vld [vmem:[%s1 + $0x160] sm:$0xff]
      %v404 = vld [vmem:[%s1 + $0x168] sm:$0xff]
      %v405 = vld [vmem:[%s1 + $0x170] sm:$0xff]
      %v406 = vld [vmem:[%s1 + $0x178] sm:$0xff]
      %v407 = vld [vmem:[%s1 + $0x180] sm:$0xff]
      %v408 = vld [vmem:[%s1 + $0x188] sm:$0xff]
      %v409 = vld [vmem:[%s1 + $0x190] sm:$0xff]
      %v410 = vld [vmem:[%s1 + $0x198] sm:$0xff]
      %v411 = vld [vmem:[%s1 + $0x1a0] sm:$0xff]
      %v412 = vld [vmem:[%s1 + $0x1a8] sm:$0xff]
      %v413 = vld [vmem:[%s1 + $0x1b0] sm:$0xff]
      %v414 = vld [vmem:[%s1 + $0x1b8] sm:$0xff]
      %v415 = vld [vmem:[%s1 + $0x1c0] sm:$0xff]
      %v416 = vld [vmem:[%s1 + $0x1c8] sm:$0xff]
      %v417 = vld [vmem:[%s1 + $0x1d0] sm:$0xff]
      %v418 = vld [vmem:[%s1 + $0x1d8] sm:$0xff]
      %v419 = vld [vmem:[%s1 + $0x1e0] sm:$0xff]
      %v420 = vld [vmem:[%s1 + $0x1e8] sm:$0xff]
      %v421 = vld [vmem:[%s1 + $0x1f0] sm:$0xff]
      %v422 = vld [vmem:[%s1 + $0x1f8] sm:$0xff]
      %v423 = vld [vmem:[%s1 + $0x200] sm:$0xff]
      %v424 = vld [vmem:[%s1 + $0x208] sm:$0xff]
      %v425 = vld [vmem:[%s1 + $0x210] sm:$0xff]
      %v426 = vld [vmem:[%s1 + $0x218] sm:$0xff]
      %v427 = vld [vmem:[%s1 + $0x220] sm:$0xff]
      %v428 = vld [vmem:[%s1 + $0x228] sm:$0xff]
      %v429 = vld [vmem:[%s1 + $0x230] sm:$0xff]
      %v430 = vld [vmem:[%s1 + $0x238] sm:$0xff]
      %v431 = vld [vmem:[%s1 + $0x240] sm:$0xff]
      %v432 = vld [vmem:[%s1 + $0x248] sm:$0xff]
      %v433 = vld [vmem:[%s1 + $0x250] sm:$0xff]
      %v434 = vld [vmem:[%s1 + $0x258] sm:$0xff]
      %v435 = vld [vmem:[%s1 + $0x260] sm:$0xff]
      %v436 = vld [vmem:[%s1 + $0x268] sm:$0xff]
      %v437 = vld [vmem:[%s1 + $0x270] sm:$0xff]
      %v438 = vld [vmem:[%s1 + $0x278] sm:$0xff]
      %v439 = vld [vmem:[%s1 + $0x280] sm:$0xff]
      %v440 = vld [vmem:[%s1 + $0x288] sm:$0xff]
      %v441 = vld [vmem:[%s1 + $0x290] sm:$0xff]
      %v442 = vld [vmem:[%s1 + $0x298] sm:$0xff]
      %v443 = vld [vmem:[%s1 + $0x2a0] sm:$0xff]
      %v444 = vld [vmem:[%s1 + $0x2a8] sm:$0xff]
      %v445 = vld [vmem:[%s1 + $0x2b0] sm:$0xff]
      %v446 = vld [vmem:[%s1 + $0x2b8] sm:$0xff]
      %v447 = vld [vmem:[%s1 + $0x2c0] sm:$0xff]
      %v448 = vld [vmem:[%s1 + $0x2c8] sm:$0xff]
      %v449 = vld [vmem:[%s1 + $0x2d0] sm:$0xff]
      %v450 = vld [vmem:[%s1 + $0x2d8] sm:$0xff]
      %v451 = vld [vmem:[%s1 + $0x2e0] sm:$0xff]
      %v452 = vld [vmem:[%s1 + $0x2e8] sm:$0xff]
      %v453 = vld [vmem:[%s1 + $0x2f0] sm:$0xff]
      %v454 = vld [vmem:[%s1 + $0x2f8] sm:$0xff]
      %v455 = vld [vmem:[%s1 + $0x300] sm:$0xff]
      %v456 = vld [vmem:[%s1 + $0x308] sm:$0xff]
      %v457 = vld [vmem:[%s1 + $0x310] sm:$0xff]
      %v458 = vld [vmem:[%s1 + $0x318] sm:$0xff]
      %v459 = vld [vmem:[%s1 + $0x320] sm:$0xff]
      %v460 = vld [vmem:[%s1 + $0x328] sm:$0xff]
      %v461 = vld [vmem:[%s1 + $0x330] sm:$0xff]
      %v462 = vld [vmem:[%s1 + $0x338] sm:$0xff]
      %v463 = vld [vmem:[%s1 + $0x340] sm:$0xff]
      %v464 = vld [vmem:[%s1 + $0x348] sm:$0xff]
      %v465 = vld [vmem:[%s1 + $0x350] sm:$0xff]
      %v466 = vld [vmem:[%s1 + $0x358] sm:$0xff]
      %v467 = vld [vmem:[%s1 + $0x360] sm:$0xff]
      %v468 = vld [vmem:[%s1 + $0x368] sm:$0xff]
      %v469 = vld [vmem:[%s1 + $0x370] sm:$0xff]
      %v470 = vld [vmem:[%s1 + $0x378] sm:$0xff]
      %v471 = vld [vmem:[%s1 + $0x380] sm:$0xff]
      %v472 = vld [vmem:[%s1 + $0x388] sm:$0xff]
      %v473 = vld [vmem:[%s1 + $0x390] sm:$0xff]
      %v474 = vld [vmem:[%s1 + $0x398] sm:$0xff]
      %v475 = vld [vmem:[%s1 + $0x3a0] sm:$0xff]
      %v476 = vld [vmem:[%s1 + $0x3a8] sm:$0xff]
      %v477 = vld [vmem:[%s1 + $0x3b0] sm:$0xff]
      %v478 = vld [vmem:[%s1 + $0x3b8] sm:$0xff]
      %v479 = vld [vmem:[%s1 + $0x3c0] sm:$0xff]
      %v480 = vld [vmem:[%s1 + $0x3c8] sm:$0xff]
      %v481 = vld [vmem:[%s1 + $0x3d0] sm:$0xff]
      %v482 = vld [vmem:[%s1 + $0x3d8] sm:$0xff]
      %v483 = vld [vmem:[%s1 + $0x3e0] sm:$0xff]
      %v484 = vld [vmem:[%s1 + $0x3e8] sm:$0xff]
      %v485 = vld [vmem:[%s1 + $0x3f0] sm:$0xff]
      %v486 = vld [vmem:[%s1 + $0x3f8] sm:$0xff]
      %v487 = vpack.c.bf16 %v358, %v357
      %v488 = vpack.c.bf16 %v367, %v359
      %v489 = vpack.c.bf16 %v368, %v360
      %v490 = vpack.c.bf16 %v369, %v361
      %v491 = vpack.c.bf16 %v370, %v362
      %v492 = vpack.c.bf16 %v371, %v363
      %v493 = vpack.c.bf16 %v372, %v364
      %v494 = vpack.c.bf16 %v373, %v365
      %v495 = vpack.c.bf16 %v374, %v366
      %v496 = vpack.c.bf16 %v383, %v375
      %v497 = vpack.c.bf16 %v384, %v376
      %v498 = vpack.c.bf16 %v385, %v377
      %v499 = vpack.c.bf16 %v386, %v378
      %v500 = vpack.c.bf16 %v387, %v379
      %v501 = vpack.c.bf16 %v388, %v380
      %v502 = vpack.c.bf16 %v389, %v381
      %v503 = vpack.c.bf16 %v390, %v382
      %v504 = vpack.c.bf16 %v399, %v391
      %v505 = vpack.c.bf16 %v400, %v392
      %v506 = vpack.c.bf16 %v401, %v393
      %v507 = vpack.c.bf16 %v402, %v394
      %v508 = vpack.c.bf16 %v403, %v395
      %v509 = vpack.c.bf16 %v404, %v396
      %v510 = vpack.c.bf16 %v405, %v397
      %v511 = vpack.c.bf16 %v406, %v398
      %v512 = vpack.c.bf16 %v415, %v407
      %v513 = vpack.c.bf16 %v416, %v408
      %v514 = vpack.c.bf16 %v417, %v409
      %v515 = vpack.c.bf16 %v418, %v410
      %v516 = vpack.c.bf16 %v419, %v411
      %v517 = vpack.c.bf16 %v420, %v412
      %v518 = vpack.c.bf16 %v421, %v413
      %v519 = vpack.c.bf16 %v422, %v414
      %v520 = vpack.c.bf16 %v431, %v423
      %v521 = vpack.c.bf16 %v432, %v424
      %v522 = vpack.c.bf16 %v433, %v425
      %v523 = vpack.c.bf16 %v434, %v426
      %v524 = vpack.c.bf16 %v435, %v427
      %v525 = vpack.c.bf16 %v436, %v428
      %v526 = vpack.c.bf16 %v437, %v429
      %v527 = vpack.c.bf16 %v438, %v430
      %v528 = vpack.c.bf16 %v447, %v439
      %v529 = vpack.c.bf16 %v448, %v440
      %v530 = vpack.c.bf16 %v449, %v441
      %v531 = vpack.c.bf16 %v450, %v442
      %v532 = vpack.c.bf16 %v451, %v443
      %v533 = vpack.c.bf16 %v452, %v444
      %v534 = vpack.c.bf16 %v453, %v445
      %v535 = vpack.c.bf16 %v454, %v446
      %v536 = vpack.c.bf16 %v463, %v455
      %v537 = vpack.c.bf16 %v464, %v456
      %v538 = vpack.c.bf16 %v465, %v457
      %v539 = vpack.c.bf16 %v466, %v458
      %v540 = vpack.c.bf16 %v467, %v459
      %v541 = vpack.c.bf16 %v468, %v460
      %v542 = vpack.c.bf16 %v469, %v461
      %v543 = vpack.c.bf16 %v470, %v462
      %v544 = vpack.c.bf16 %v479, %v471
      %v545 = vpack.c.bf16 %v480, %v472
      %v546 = vpack.c.bf16 %v481, %v473
      %v547 = vpack.c.bf16 %v482, %v474
      %v548 = vpack.c.bf16 %v483, %v475
      %v549 = vpack.c.bf16 %v484, %v476
      %v550 = vpack.c.bf16 %v485, %v477
      %v551 = vpack.c.bf16 %v486, %v478
      %552 = vmatprep.subr.bf16.mxu0 %v489
      %553 = vmatpush1.bf16.msra.mxu0 %v488
      %554 = vmatprep.subr.bf16.mxu0 %v497
      %555 = vmatpush1.bf16.msra.mxu0 %v496
      %556 = vmatprep.subr.bf16.mxu0 %v505
      %557 = vmatpush1.bf16.msra.mxu0 %v504
      %558 = vmatprep.subr.bf16.mxu0 %v513
      %559 = vmatpush1.bf16.msra.mxu0 %v512
      %560 = vmatprep.subr.bf16.mxu0 %v521
      %561 = vmatpush1.bf16.msra.mxu0 %v520
      %562 = vmatprep.subr.bf16.mxu0 %v529
      %563 = vmatpush1.bf16.msra.mxu0 %v528
      %564 = vmatprep.subr.bf16.mxu0 %v537
      %565 = vmatpush1.bf16.msra.mxu0 %v536
      %566 = vmatprep.subr.bf16.mxu0 %v545
      %567 = vmatpush1.bf16.msra.mxu0 %v544
      %568 = vmatprep.subr.bf16.mxu0 0
      %569 = vmatpush1.bf16.msra.mxu0 0
      %570 = vmatprep.subr.bf16.mxu0 0
      %571 = vmatpush1.bf16.msra.mxu0 0
      %572 = vmatprep.subr.bf16.mxu0 0
      %573 = vmatpush1.bf16.msra.mxu0 0
      %574 = vmatprep.subr.bf16.mxu0 0
      %575 = vmatpush1.bf16.msra.mxu0 0
      %576 = vmatprep.subr.bf16.mxu0 0
      %577 = vmatpush1.bf16.msra.mxu0 0
      %578 = vmatprep.subr.bf16.mxu0 0
      %579 = vmatpush1.bf16.msra.mxu0 0
      %580 = vmatprep.subr.bf16.mxu0 0
      %581 = vmatpush1.bf16.msra.mxu0 0
      %582 = vmatprep.subr.bf16.mxu0 0
      %583 = vmatpush1.bf16.msra.mxu0 0
      %584 = vmatprep.mubr.bf16.mxu0 0
      %585 = vmatmul.mubr.bf16.gmra.mrb[0].mxu0 %v487
      %v586 = vpop.f32.mrb[0].mxu0
      %v587 = vadd.f32 0.0, %v586
      %v588 = vpop.f32.mrb[0].mxu0
      %v589 = vadd.f32 0.0, %v588
      %v590 = vpop.f32.mrb[0].mxu0
      %v591 = vadd.f32 0.0, %v590
      %v592 = vpop.f32.mrb[0].mxu0
      %v593 = vadd.f32 0.0, %v592
      %594 = vdwg.mxu0
      %595 = vmatprep.subr.bf16.mxu0 %v491
      %596 = vmatpush1.bf16.msra.mxu0 %v490
      %597 = vmatprep.subr.bf16.mxu0 %v499
      %598 = vmatpush1.bf16.msra.mxu0 %v498
      %599 = vmatprep.subr.bf16.mxu0 %v507
      %600 = vmatpush1.bf16.msra.mxu0 %v506
      %601 = vmatprep.subr.bf16.mxu0 %v515
      %602 = vmatpush1.bf16.msra.mxu0 %v514
      %603 = vmatprep.subr.bf16.mxu0 %v523
      %604 = vmatpush1.bf16.msra.mxu0 %v522
      %605 = vmatprep.subr.bf16.mxu0 %v531
      %606 = vmatpush1.bf16.msra.mxu0 %v530
      %607 = vmatprep.subr.bf16.mxu0 %v539
      %608 = vmatpush1.bf16.msra.mxu0 %v538
      %609 = vmatprep.subr.bf16.mxu0 %v547
      %610 = vmatpush1.bf16.msra.mxu0 %v546
      %611 = vmatprep.subr.bf16.mxu0 0
      %612 = vmatpush1.bf16.msra.mxu0 0
      %613 = vmatprep.subr.bf16.mxu0 0
      %614 = vmatpush1.bf16.msra.mxu0 0
      %615 = vmatprep.subr.bf16.mxu0 0
      %616 = vmatpush1.bf16.msra.mxu0 0
      %617 = vmatprep.subr.bf16.mxu0 0
      %618 = vmatpush1.bf16.msra.mxu0 0
      %619 = vmatprep.subr.bf16.mxu0 0
      %620 = vmatpush1.bf16.msra.mxu0 0
      %621 = vmatprep.subr.bf16.mxu0 0
      %622 = vmatpush1.bf16.msra.mxu0 0
      %623 = vmatprep.subr.bf16.mxu0 0
      %624 = vmatpush1.bf16.msra.mxu0 0
      %625 = vmatprep.subr.bf16.mxu0 0
      %626 = vmatpush1.bf16.msra.mxu0 0
      %627 = vmatprep.mubr.bf16.mxu0 0
      %628 = vmatmul.mubr.bf16.gmra.mrb[0].mxu0 %v487
      %v629 = vpop.f32.mrb[0].mxu0
      %v630 = vadd.f32 0.0, %v629
      %v631 = vpop.f32.mrb[0].mxu0
      %v632 = vadd.f32 0.0, %v631
      %v633 = vpop.f32.mrb[0].mxu0
      %v634 = vadd.f32 0.0, %v633
      %v635 = vpop.f32.mrb[0].mxu0
      %v636 = vadd.f32 0.0, %v635
      %637 = vdwg.mxu0
      %638 = vmatprep.subr.bf16.mxu0 %v493
      %639 = vmatpush1.bf16.msra.mxu0 %v492
      %640 = vmatprep.subr.bf16.mxu0 %v501
      %641 = vmatpush1.bf16.msra.mxu0 %v500
      %642 = vmatprep.subr.bf16.mxu0 %v509
      %643 = vmatpush1.bf16.msra.mxu0 %v508
      %644 = vmatprep.subr.bf16.mxu0 %v517
      %645 = vmatpush1.bf16.msra.mxu0 %v516
      %646 = vmatprep.subr.bf16.mxu0 %v525
      %647 = vmatpush1.bf16.msra.mxu0 %v524
      %648 = vmatprep.subr.bf16.mxu0 %v533
      %649 = vmatpush1.bf16.msra.mxu0 %v532
      %650 = vmatprep.subr.bf16.mxu0 %v541
      %651 = vmatpush1.bf16.msra.mxu0 %v540
      %652 = vmatprep.subr.bf16.mxu0 %v549
      %653 = vmatpush1.bf16.msra.mxu0 %v548
      %654 = vmatprep.subr.bf16.mxu0 0
      %655 = vmatpush1.bf16.msra.mxu0 0
      %656 = vmatprep.subr.bf16.mxu0 0
      %657 = vmatpush1.bf16.msra.mxu0 0
      %658 = vmatprep.subr.bf16.mxu0 0
      %659 = vmatpush1.bf16.msra.mxu0 0
      %660 = vmatprep.subr.bf16.mxu0 0
      %661 = vmatpush1.bf16.msra.mxu0 0
      %662 = vmatprep.subr.bf16.mxu0 0
      %663 = vmatpush1.bf16.msra.mxu0 0
      %664 = vmatprep.subr.bf16.mxu0 0
      %665 = vmatpush1.bf16.msra.mxu0 0
      %666 = vmatprep.subr.bf16.mxu0 0
      %667 = vmatpush1.bf16.msra.mxu0 0
      %668 = vmatprep.subr.bf16.mxu0 0
      %669 = vmatpush1.bf16.msra.mxu0 0
      %670 = vmatprep.mubr.bf16.mxu0 0
      %671 = vmatmul.mubr.bf16.gmra.mrb[0].mxu0 %v487
      %v672 = vpop.f32.mrb[0].mxu0
      %v673 = vadd.f32 0.0, %v672
      %v674 = vpop.f32.mrb[0].mxu0
      %v675 = vadd.f32 0.0, %v674
      %v676 = vpop.f32.mrb[0].mxu0
      %v677 = vadd.f32 0.0, %v676
      %v678 = vpop.f32.mrb[0].mxu0
      %v679 = vadd.f32 0.0, %v678
      %680 = vdwg.mxu0
      %681 = vmatprep.subr.bf16.mxu0 %v495
      %682 = vmatpush1.bf16.msra.mxu0 %v494
      %683 = vmatprep.subr.bf16.mxu0 %v503
      %684 = vmatpush1.bf16.msra.mxu0 %v502
      %685 = vmatprep.subr.bf16.mxu0 %v511
      %686 = vmatpush1.bf16.msra.mxu0 %v510
      %687 = vmatprep.subr.bf16.mxu0 %v519
      %688 = vmatpush1.bf16.msra.mxu0 %v518
      %689 = vmatprep.subr.bf16.mxu0 %v527
      %690 = vmatpush1.bf16.msra.mxu0 %v526
      %691 = vmatprep.subr.bf16.mxu0 %v535
      %692 = vmatpush1.bf16.msra.mxu0 %v534
      %693 = vmatprep.subr.bf16.mxu0 %v543
      %694 = vmatpush1.bf16.msra.mxu0 %v542
      %695 = vmatprep.subr.bf16.mxu0 %v551
      %696 = vmatpush1.bf16.msra.mxu0 %v550
      %697 = vmatprep.subr.bf16.mxu0 0
      %698 = vmatpush1.bf16.msra.mxu0 0
      %699 = vmatprep.subr.bf16.mxu0 0
      %700 = vmatpush1.bf16.msra.mxu0 0
      %701 = vmatprep.subr.bf16.mxu0 0
      %702 = vmatpush1.bf16.msra.mxu0 0
      %703 = vmatprep.subr.bf16.mxu0 0
      %704 = vmatpush1.bf16.msra.mxu0 0
      %705 = vmatprep.subr.bf16.mxu0 0
      %706 = vmatpush1.bf16.msra.mxu0 0
      %707 = vmatprep.subr.bf16.mxu0 0
      %708 = vmatpush1.bf16.msra.mxu0 0
      %709 = vmatprep.subr.bf16.mxu0 0
      %710 = vmatpush1.bf16.msra.mxu0 0
      %711 = vmatprep.subr.bf16.mxu0 0
      %712 = vmatpush1.bf16.msra.mxu0 0
      %713 = vmatprep.mubr.bf16.mxu0 0
      %714 = vmatmul.mubr.bf16.gmra.mrb[0].mxu0 %v487
      %v715 = vpop.f32.mrb[0].mxu0
      %v716 = vadd.f32 0.0, %v715
      %v717 = vpop.f32.mrb[0].mxu0
      %v718 = vadd.f32 0.0, %v717
      %v719 = vpop.f32.mrb[0].mxu0
      %v720 = vadd.f32 0.0, %v719
      %v721 = vpop.f32.mrb[0].mxu0
      %v722 = vadd.f32 0.0, %v721
      %723 = vdwg.mxu0
      %p724 = scmp.eq.s32.totalorder %s24, 0
      // Predicated region
      $region37: #{_lambda_.13} parent=35 // pred_check
        %p725 = pneg %p724
      $region38: #{_lambda_.13} parent=35 // pred_check_branch
        %727 = sbr.rel (%p725) target = $region40
      $region39: #{_lambda_.13} parent=35 // pred_region
        %728 = vst [vmem:[%s323] sm:$0xff] 0.0
        %729 = vst [vmem:[%s327] sm:$0xff] 0.0
        %730 = vst [vmem:[%s331] sm:$0xff] -inf
        %731 = vst [vmem:[%s335] sm:$0xff] inf
      $region40: #{_lambda_.13} parent=35 // pred_fallthru
        _
      %v732 = vld [vmem:[%s323] sm:$0xff]
      %v733 = vadd.f32 %v587, %v591
      %v734 = vrot.slane %v733, 4
      %v735 = vadd.f32 %v733, %v734
      %v736 = vrot.slane %v735, 2
      %v737 = vadd.f32 %v735, %v736
      %v738 = vrot.slane %v737, 1
      %v739 = vadd.f32 %v737, %v738
      %v740 = vadd.f32 %v589, %v593
      %v741 = vrot.slane %v740, 4
      %v742 = vadd.f32 %v740, %v741
      %v743 = vrot.slane %v742, 2
      %v744 = vadd.f32 %v742, %v743
      %v745 = vrot.slane %v744, 1
      %v746 = vadd.f32 %v744, %v745
      %v747 = vadd.f32 %v630, %v634
      %v748 = vrot.slane %v747, 4
      %v749 = vadd.f32 %v747, %v748
      %v750 = vrot.slane %v749, 2
      %v751 = vadd.f32 %v749, %v750
      %v752 = vrot.slane %v751, 1
      %v753 = vadd.f32 %v751, %v752
      %v754 = vadd.f32 %v632, %v636
      %v755 = vrot.slane %v754, 4
      %v756 = vadd.f32 %v754, %v755
      %v757 = vrot.slane %v756, 2
      %v758 = vadd.f32 %v756, %v757
      %v759 = vrot.slane %v758, 1
      %v760 = vadd.f32 %v758, %v759
      %v761 = vadd.f32 %v673, %v677
      %v762 = vrot.slane %v761, 4
      %v763 = vadd.f32 %v761, %v762
      %v764 = vrot.slane %v763, 2
      %v765 = vadd.f32 %v763, %v764
      %v766 = vrot.slane %v765, 1
      %v767 = vadd.f32 %v765, %v766
      %v768 = vadd.f32 %v675, %v679
      %v769 = vrot.slane %v768, 4
      %v770 = vadd.f32 %v768, %v769
      %v771 = vrot.slane %v770, 2
      %v772 = vadd.f32 %v770, %v771
      %v773 = vrot.slane %v772, 1
      %v774 = vadd.f32 %v772, %v773
      %v775 = vadd.f32 %v716, %v720
      %v776 = vrot.slane %v775, 4
      %v777 = vadd.f32 %v775, %v776
      %v778 = vrot.slane %v777, 2
      %v779 = vadd.f32 %v777, %v778
      %v780 = vrot.slane %v779, 1
      %v781 = vadd.f32 %v779, %v780
      %v782 = vadd.f32 %v718, %v722
      %v783 = vrot.slane %v782, 4
      %v784 = vadd.f32 %v782, %v783
      %v785 = vrot.slane %v784, 2
      %v786 = vadd.f32 %v784, %v785
      %v787 = vrot.slane %v786, 1
      %v788 = vadd.f32 %v786, %v787
      %v797 = vcombine.low %v739, %v746
      %v798 = vcombine.low %v753, %v760
      %v799 = vcombine.low %v767, %v774
      %v800 = vcombine.low %v781, %v788
      %v802 = vunpack.c.l.s4 1966171168
      %v803 = vunpack.c.0.s8 %v802
      %v804 = vlaneseq
      %v805 = vshrl.u32 %v804, 7
      %v806 = vsub.s32 %v803, %v805
      %v807 = vrot.slane %v797, %v806
      %v809 = vunpack.c.l.s4 1966171168
      %v810 = vunpack.c.0.s8 %v809
      %v811 = vlaneseq
      %v812 = vshrl.u32 %v811, 7
      %v813 = vsub.s32 %v810, %v812
      %v814 = vrot.slane %v798, %v813
      %v816 = vunpack.c.l.s4 1966171168
      %v817 = vunpack.c.0.s8 %v816
      %v818 = vlaneseq
      %v819 = vshrl.u32 %v818, 7
      %v820 = vsub.s32 %v817, %v819
      %v821 = vrot.slane %v799, %v820
      %v823 = vunpack.c.l.s4 1966171168
      %v824 = vunpack.c.0.s8 %v823
      %v825 = vlaneseq
      %v826 = vshrl.u32 %v825, 7
      %v827 = vsub.s32 %v824, %v826
      %v828 = vrot.slane %v800, %v827
      %v829 = vcombine.low %v807, %v814
      %v830 = vcombine.low %v821, %v828
      %v832 = vunpack.c.l.s4 1966171168
      %v833 = vunpack.c.0.s8 %v832
      %v834 = vlaneseq
      %v835 = vshrl.u32 %v834, 7
      %v836 = vsub.s32 %v833, %v835
      %v837 = vrot.slane %v829, %v836
      %v839 = vunpack.c.l.s4 1966171168
      %v840 = vunpack.c.0.s8 %v839
      %v841 = vlaneseq
      %v842 = vshrl.u32 %v841, 7
      %v843 = vsub.s32 %v840, %v842
      %v844 = vrot.slane %v830, %v843
      %v845 = vcombine.low %v837, %v844
      %v847 = vadd.f32 %v732, %v845
      %848 = vst [vmem:[%s323] sm:$0xff] %v847
      %v849 = vld [vmem:[%s327] sm:$0xff]
      %v850 = vmul.f32 %v587, %v587
      %v851 = vmul.f32 %v589, %v589
      %v852 = vmul.f32 %v630, %v630
      %v853 = vmul.f32 %v632, %v632
      %v854 = vmul.f32 %v673, %v673
      %v855 = vmul.f32 %v675, %v675
      %v856 = vmul.f32 %v716, %v716
      %v857 = vmul.f32 %v718, %v718
      %v858 = vmul.f32 %v591, %v591
      %v859 = vmul.f32 %v593, %v593
      %v860 = vmul.f32 %v634, %v634
      %v861 = vmul.f32 %v636, %v636
      %v862 = vmul.f32 %v677, %v677
      %v863 = vmul.f32 %v679, %v679
      %v864 = vmul.f32 %v720, %v720
      %v865 = vmul.f32 %v722, %v722
      %v866 = vadd.f32 %v850, %v858
      %v867 = vrot.slane %v866, 4
      %v868 = vadd.f32 %v866, %v867
      %v869 = vrot.slane %v868, 2
      %v870 = vadd.f32 %v868, %v869
      %v871 = vrot.slane %v870, 1
      %v872 = vadd.f32 %v870, %v871
      %v873 = vadd.f32 %v851, %v859
      %v874 = vrot.slane %v873, 4
      %v875 = vadd.f32 %v873, %v874
      %v876 = vrot.slane %v875, 2
      %v877 = vadd.f32 %v875, %v876
      %v878 = vrot.slane %v877, 1
      %v879 = vadd.f32 %v877, %v878
      %v880 = vadd.f32 %v852, %v860
      %v881 = vrot.slane %v880, 4
      %v882 = vadd.f32 %v880, %v881
      %v883 = vrot.slane %v882, 2
      %v884 = vadd.f32 %v882, %v883
      %v885 = vrot.slane %v884, 1
      %v886 = vadd.f32 %v884, %v885
      %v887 = vadd.f32 %v853, %v861
      %v888 = vrot.slane %v887, 4
      %v889 = vadd.f32 %v887, %v888
      %v890 = vrot.slane %v889, 2
      %v891 = vadd.f32 %v889, %v890
      %v892 = vrot.slane %v891, 1
      %v893 = vadd.f32 %v891, %v892
      %v894 = vadd.f32 %v854, %v862
      %v895 = vrot.slane %v894, 4
      %v896 = vadd.f32 %v894, %v895
      %v897 = vrot.slane %v896, 2
      %v898 = vadd.f32 %v896, %v897
      %v899 = vrot.slane %v898, 1
      %v900 = vadd.f32 %v898, %v899
      %v901 = vadd.f32 %v855, %v863
      %v902 = vrot.slane %v901, 4
      %v903 = vadd.f32 %v901, %v902
      %v904 = vrot.slane %v903, 2
      %v905 = vadd.f32 %v903, %v904
      %v906 = vrot.slane %v905, 1
      %v907 = vadd.f32 %v905, %v906
      %v908 = vadd.f32 %v856, %v864
      %v909 = vrot.slane %v908, 4
      %v910 = vadd.f32 %v908, %v909
      %v911 = vrot.slane %v910, 2
      %v912 = vadd.f32 %v910, %v911
      %v913 = vrot.slane %v912, 1
      %v914 = vadd.f32 %v912, %v913
      %v915 = vadd.f32 %v857, %v865
      %v916 = vrot.slane %v915, 4
      %v917 = vadd.f32 %v915, %v916
      %v918 = vrot.slane %v917, 2
      %v919 = vadd.f32 %v917, %v918
      %v920 = vrot.slane %v919, 1
      %v921 = vadd.f32 %v919, %v920
      %v930 = vcombine.low %v872, %v879
      %v931 = vcombine.low %v886, %v893
      %v932 = vcombine.low %v900, %v907
      %v933 = vcombine.low %v914, %v921
      %v935 = vunpack.c.l.s4 1966171168
      %v936 = vunpack.c.0.s8 %v935
      %v937 = vlaneseq
      %v938 = vshrl.u32 %v937, 7
      %v939 = vsub.s32 %v936, %v938
      %v940 = vrot.slane %v930, %v939
      %v942 = vunpack.c.l.s4 1966171168
      %v943 = vunpack.c.0.s8 %v942
      %v944 = vlaneseq
      %v945 = vshrl.u32 %v944, 7
      %v946 = vsub.s32 %v943, %v945
      %v947 = vrot.slane %v931, %v946
      %v949 = vunpack.c.l.s4 1966171168
      %v950 = vunpack.c.0.s8 %v949
      %v951 = vlaneseq
      %v952 = vshrl.u32 %v951, 7
      %v953 = vsub.s32 %v950, %v952
      %v954 = vrot.slane %v932, %v953
      %v956 = vunpack.c.l.s4 1966171168
      %v957 = vunpack.c.0.s8 %v956
      %v958 = vlaneseq
      %v959 = vshrl.u32 %v958, 7
      %v960 = vsub.s32 %v957, %v959
      %v961 = vrot.slane %v933, %v960
      %v962 = vcombine.low %v940, %v947
      %v963 = vcombine.low %v954, %v961
      %v965 = vunpack.c.l.s4 1966171168
      %v966 = vunpack.c.0.s8 %v965
      %v967 = vlaneseq
      %v968 = vshrl.u32 %v967, 7
      %v969 = vsub.s32 %v966, %v968
      %v970 = vrot.slane %v962, %v969
      %v972 = vunpack.c.l.s4 1966171168
      %v973 = vunpack.c.0.s8 %v972
      %v974 = vlaneseq
      %v975 = vshrl.u32 %v974, 7
      %v976 = vsub.s32 %v973, %v975
      %v977 = vrot.slane %v963, %v976
      %v978 = vcombine.low %v970, %v977
      %v980 = vadd.f32 %v849, %v978
      %981 = vst [vmem:[%s327] sm:$0xff] %v980
      %v982 = vld [vmem:[%s331] sm:$0xff]
      %v983 = vmax.f32 %v587, %v591
      %v984 = vrot.slane %v983, 4
      %v985 = vmax.f32 %v983, %v984
      %v986 = vrot.slane %v985, 2
      %v987 = vmax.f32 %v985, %v986
      %v988 = vrot.slane %v987, 1
      %v989 = vmax.f32 %v987, %v988
      %v990 = vmax.f32 %v589, %v593
      %v991 = vrot.slane %v990, 4
      %v992 = vmax.f32 %v990, %v991
      %v993 = vrot.slane %v992, 2
      %v994 = vmax.f32 %v992, %v993
      %v995 = vrot.slane %v994, 1
      %v996 = vmax.f32 %v994, %v995
      %v997 = vmax.f32 %v630, %v634
      %v998 = vrot.slane %v997, 4
      %v999 = vmax.f32 %v997, %v998
      %v1000 = vrot.slane %v999, 2
      %v1001 = vmax.f32 %v999, %v1000
      %v1002 = vrot.slane %v1001, 1
      %v1003 = vmax.f32 %v1001, %v1002
      %v1004 = vmax.f32 %v632, %v636
      %v1005 = vrot.slane %v1004, 4
      %v1006 = vmax.f32 %v1004, %v1005
      %v1007 = vrot.slane %v1006, 2
      %v1008 = vmax.f32 %v1006, %v1007
      %v1009 = vrot.slane %v1008, 1
      %v1010 = vmax.f32 %v1008, %v1009
      %v1011 = vmax.f32 %v673, %v677
      %v1012 = vrot.slane %v1011, 4
      %v1013 = vmax.f32 %v1011, %v1012
      %v1014 = vrot.slane %v1013, 2
      %v1015 = vmax.f32 %v1013, %v1014
      %v1016 = vrot.slane %v1015, 1
      %v1017 = vmax.f32 %v1015, %v1016
      %v1018 = vmax.f32 %v675, %v679
      %v1019 = vrot.slane %v1018, 4
      %v1020 = vmax.f32 %v1018, %v1019
      %v1021 = vrot.slane %v1020, 2
      %v1022 = vmax.f32 %v1020, %v1021
      %v1023 = vrot.slane %v1022, 1
      %v1024 = vmax.f32 %v1022, %v1023
      %v1025 = vmax.f32 %v716, %v720
      %v1026 = vrot.slane %v1025, 4
      %v1027 = vmax.f32 %v1025, %v1026
      %v1028 = vrot.slane %v1027, 2
      %v1029 = vmax.f32 %v1027, %v1028
      %v1030 = vrot.slane %v1029, 1
      %v1031 = vmax.f32 %v1029, %v1030
      %v1032 = vmax.f32 %v718, %v722
      %v1033 = vrot.slane %v1032, 4
      %v1034 = vmax.f32 %v1032, %v1033
      %v1035 = vrot.slane %v1034, 2
      %v1036 = vmax.f32 %v1034, %v1035
      %v1037 = vrot.slane %v1036, 1
      %v1038 = vmax.f32 %v1036, %v1037
      %v1047 = vcombine.low %v989, %v996
      %v1048 = vcombine.low %v1003, %v1010
      %v1049 = vcombine.low %v1017, %v1024
      %v1050 = vcombine.low %v1031, %v1038
      %v1052 = vunpack.c.l.s4 1966171168
      %v1053 = vunpack.c.0.s8 %v1052
      %v1054 = vlaneseq
      %v1055 = vshrl.u32 %v1054, 7
      %v1056 = vsub.s32 %v1053, %v1055
      %v1057 = vrot.slane %v1047, %v1056
      %v1059 = vunpack.c.l.s4 1966171168
      %v1060 = vunpack.c.0.s8 %v1059
      %v1061 = vlaneseq
      %v1062 = vshrl.u32 %v1061, 7
      %v1063 = vsub.s32 %v1060, %v1062
      %v1064 = vrot.slane %v1048, %v1063
      %v1066 = vunpack.c.l.s4 1966171168
      %v1067 = vunpack.c.0.s8 %v1066
      %v1068 = vlaneseq
      %v1069 = vshrl.u32 %v1068, 7
      %v1070 = vsub.s32 %v1067, %v1069
      %v1071 = vrot.slane %v1049, %v1070
      %v1073 = vunpack.c.l.s4 1966171168
      %v1074 = vunpack.c.0.s8 %v1073
      %v1075 = vlaneseq
      %v1076 = vshrl.u32 %v1075, 7
      %v1077 = vsub.s32 %v1074, %v1076
      %v1078 = vrot.slane %v1050, %v1077
      %v1079 = vcombine.low %v1057, %v1064
      %v1080 = vcombine.low %v1071, %v1078
      %v1082 = vunpack.c.l.s4 1966171168
      %v1083 = vunpack.c.0.s8 %v1082
      %v1084 = vlaneseq
      %v1085 = vshrl.u32 %v1084, 7
      %v1086 = vsub.s32 %v1083, %v1085
      %v1087 = vrot.slane %v1079, %v1086
      %v1089 = vunpack.c.l.s4 1966171168
      %v1090 = vunpack.c.0.s8 %v1089
      %v1091 = vlaneseq
      %v1092 = vshrl.u32 %v1091, 7
      %v1093 = vsub.s32 %v1090, %v1092
      %v1094 = vrot.slane %v1080, %v1093
      %v1095 = vcombine.low %v1087, %v1094
      %v1097 = vmax.f32 %v982, %v1095
      %1098 = vst [vmem:[%s331] sm:$0xff] %v1097
      %v1099 = vld [vmem:[%s335] sm:$0xff]
      %v1100 = vmin.f32 %v587, %v591
      %v1101 = vrot.slane %v1100, 4
      %v1102 = vmin.f32 %v1100, %v1101
      %v1103 = vrot.slane %v1102, 2
      %v1104 = vmin.f32 %v1102, %v1103
      %v1105 = vrot.slane %v1104, 1
      %v1106 = vmin.f32 %v1104, %v1105
      %v1107 = vmin.f32 %v589, %v593
      %v1108 = vrot.slane %v1107, 4
      %v1109 = vmin.f32 %v1107, %v1108
      %v1110 = vrot.slane %v1109, 2
      %v1111 = vmin.f32 %v1109, %v1110
      %v1112 = vrot.slane %v1111, 1
      %v1113 = vmin.f32 %v1111, %v1112
      %v1114 = vmin.f32 %v630, %v634
      %v1115 = vrot.slane %v1114, 4
      %v1116 = vmin.f32 %v1114, %v1115
      %v1117 = vrot.slane %v1116, 2
      %v1118 = vmin.f32 %v1116, %v1117
      %v1119 = vrot.slane %v1118, 1
      %v1120 = vmin.f32 %v1118, %v1119
      %v1121 = vmin.f32 %v632, %v636
      %v1122 = vrot.slane %v1121, 4
      %v1123 = vmin.f32 %v1121, %v1122
      %v1124 = vrot.slane %v1123, 2
      %v1125 = vmin.f32 %v1123, %v1124
      %v1126 = vrot.slane %v1125, 1
      %v1127 = vmin.f32 %v1125, %v1126
      %v1128 = vmin.f32 %v673, %v677
      %v1129 = vrot.slane %v1128, 4
      %v1130 = vmin.f32 %v1128, %v1129
      %v1131 = vrot.slane %v1130, 2
      %v1132 = vmin.f32 %v1130, %v1131
      %v1133 = vrot.slane %v1132, 1
      %v1134 = vmin.f32 %v1132, %v1133
      %v1135 = vmin.f32 %v675, %v679
      %v1136 = vrot.slane %v1135, 4
      %v1137 = vmin.f32 %v1135, %v1136
      %v1138 = vrot.slane %v1137, 2
      %v1139 = vmin.f32 %v1137, %v1138
      %v1140 = vrot.slane %v1139, 1
      %v1141 = vmin.f32 %v1139, %v1140
      %v1142 = vmin.f32 %v716, %v720
      %v1143 = vrot.slane %v1142, 4
      %v1144 = vmin.f32 %v1142, %v1143
      %v1145 = vrot.slane %v1144, 2
      %v1146 = vmin.f32 %v1144, %v1145
      %v1147 = vrot.slane %v1146, 1
      %v1148 = vmin.f32 %v1146, %v1147
      %v1149 = vmin.f32 %v718, %v722
      %v1150 = vrot.slane %v1149, 4
      %v1151 = vmin.f32 %v1149, %v1150
      %v1152 = vrot.slane %v1151, 2
      %v1153 = vmin.f32 %v1151, %v1152
      %v1154 = vrot.slane %v1153, 1
      %v1155 = vmin.f32 %v1153, %v1154
      %v1164 = vcombine.low %v1106, %v1113
      %v1165 = vcombine.low %v1120, %v1127
      %v1166 = vcombine.low %v1134, %v1141
      %v1167 = vcombine.low %v1148, %v1155
      %v1169 = vunpack.c.l.s4 1966171168
      %v1170 = vunpack.c.0.s8 %v1169
      %v1171 = vlaneseq
      %v1172 = vshrl.u32 %v1171, 7
      %v1173 = vsub.s32 %v1170, %v1172
      %v1174 = vrot.slane %v1164, %v1173
      %v1176 = vunpack.c.l.s4 1966171168
      %v1177 = vunpack.c.0.s8 %v1176
      %v1178 = vlaneseq
      %v1179 = vshrl.u32 %v1178, 7
      %v1180 = vsub.s32 %v1177, %v1179
      %v1181 = vrot.slane %v1165, %v1180
      %v1183 = vunpack.c.l.s4 1966171168
      %v1184 = vunpack.c.0.s8 %v1183
      %v1185 = vlaneseq
      %v1186 = vshrl.u32 %v1185, 7
      %v1187 = vsub.s32 %v1184, %v1186
      %v1188 = vrot.slane %v1166, %v1187
      %v1190 = vunpack.c.l.s4 1966171168
      %v1191 = vunpack.c.0.s8 %v1190
      %v1192 = vlaneseq
      %v1193 = vshrl.u32 %v1192, 7
      %v1194 = vsub.s32 %v1191, %v1193
      %v1195 = vrot.slane %v1167, %v1194
      %v1196 = vcombine.low %v1174, %v1181
      %v1197 = vcombine.low %v1188, %v1195
      %v1199 = vunpack.c.l.s4 1966171168
      %v1200 = vunpack.c.0.s8 %v1199
      %v1201 = vlaneseq
      %v1202 = vshrl.u32 %v1201, 7
      %v1203 = vsub.s32 %v1200, %v1202
      %v1204 = vrot.slane %v1196, %v1203
      %v1206 = vunpack.c.l.s4 1966171168
      %v1207 = vunpack.c.0.s8 %v1206
      %v1208 = vlaneseq
      %v1209 = vshrl.u32 %v1208, 7
      %v1210 = vsub.s32 %v1207, %v1209
      %v1211 = vrot.slane %v1197, %v1210
      %v1212 = vcombine.low %v1204, %v1211
      %v1214 = vmin.f32 %v1099, %v1212
      %1215 = vst [vmem:[%s335] sm:$0xff] %v1214
      %p1216 = scmp.lt.s32.totalorder %s23, 1
      %s1217 = scalar_select %p1216, %s23, 1
      %s1218 = smul.addr %s1217, 8
      %s1219 = scalar_lea.vmem %s4, %s1218
      %p1220 = scmp.lt.s32.totalorder %s23, 1
      %s1221 = scalar_select %p1220, %s23, 1
      %s1222 = smul.addr %s1221, 8
      %s1223 = scalar_lea.vmem %s5, %s1222
      %p1224 = scmp.lt.s32.totalorder %s23, 1
      %s1225 = scalar_select %p1224, %s23, 1
      %s1226 = smul.addr %s1225, 8
      %s1227 = scalar_lea.vmem %s6, %s1226
      %p1228 = scmp.lt.s32.totalorder %s23, 1
      %s1229 = scalar_select %p1228, %s23, 1
      %s1230 = smul.addr %s1229, 8
      %s1231 = scalar_lea.vmem %s7, %s1230
      // Predicated region
      $region41: #{_lambda_.13} parent=35 // pred_check
        %p1232 = pneg %p140
      $region42: #{_lambda_.13} parent=35 // pred_check_branch
        %1234 = sbr.rel (%p1232) target = $region44
      $region43: #{_lambda_.13} parent=35 // pred_region
        _
      $region44: #{_lambda_.13} parent=35 // pred_fallthru
        _
      // Predicated region
      $region45: #{_lambda_.13} parent=35 // pred_check
        %p1235 = pneg %p166
      $region46: #{_lambda_.13} parent=35 // pred_check_branch
        %1237 = sbr.rel (%p1235) target = $region48
      $region47: #{_lambda_.13} parent=35 // pred_region
        _
      $region48: #{_lambda_.13} parent=35 // pred_fallthru
        _
      // Predicated region
      $region49: #{_lambda_.13} parent=35 // pred_check
        %p1238 = pneg %p192
      $region50: #{_lambda_.13} parent=35 // pred_check_branch
        %1240 = sbr.rel (%p1238) target = $region52
      $region51: #{_lambda_.13} parent=35 // pred_region
        _
      $region52: #{_lambda_.13} parent=35 // pred_fallthru
        _
      // Predicated region
      $region53: #{_lambda_.13} parent=35 // pred_check
        %p1241 = pneg %p218
      $region54: #{_lambda_.13} parent=35 // pred_check_branch
        %1243 = sbr.rel (%p1241) target = $region56
      $region55: #{_lambda_.13} parent=35 // pred_region
        _
      $region56: #{_lambda_.13} parent=35 // pred_fallthru
        _
    $region36: #{_lambda_.13} parent=5 // pred_fallthru
      _
    %p1244 = scmp.le.s32.totalorder 2, %s14
    // Predicated region
    $region57: #{_lambda_.13} parent=5 // pred_check
      %p1245 = pneg %p1244
    $region58: #{_lambda_.13} parent=5 // pred_check_branch
      %1247 = sbr.rel (%p1245) target = $region60
    $region59: #{_lambda_.13} parent=5 // pred_region
      %s1248 = ssub.s32 %s14, 2
      // Predicated region
      $region61: #{_lambda_.13} parent=59 // pred_check
        %p1249 = pneg %p146
      $region62: #{_lambda_.13} parent=59 // pred_check_branch
        %1251 = sbr.rel (%p1249) target = $region64
      $region63: #{_lambda_.13} parent=59 // pred_region
        %p1252 = scmp.lt.s32.totalorder %s25, 1
        %s1253 = scalar_select %p1252, %s25, 1
        %s1254 = smul.addr %s1253, 8
        %s1255 = scalar_lea.vmem %s4, %s1254
      $region64: #{_lambda_.13} parent=59 // pred_fallthru
        _
      // Predicated region
      $region65: #{_lambda_.13} parent=59 // pred_check
        %p1256 = pneg %p172
      $region66: #{_lambda_.13} parent=59 // pred_check_branch
        %1258 = sbr.rel (%p1256) target = $region68
      $region67: #{_lambda_.13} parent=59 // pred_region
        %p1259 = scmp.lt.s32.totalorder %s25, 1
        %s1260 = scalar_select %p1259, %s25, 1
        %s1261 = smul.addr %s1260, 8
        %s1262 = scalar_lea.vmem %s5, %s1261
      $region68: #{_lambda_.13} parent=59 // pred_fallthru
        _
      // Predicated region
      $region69: #{_lambda_.13} parent=59 // pred_check
        %p1263 = pneg %p198
      $region70: #{_lambda_.13} parent=59 // pred_check_branch
        %1265 = sbr.rel (%p1263) target = $region72
      $region71: #{_lambda_.13} parent=59 // pred_region
        %p1266 = scmp.lt.s32.totalorder %s25, 1
        %s1267 = scalar_select %p1266, %s25, 1
        %s1268 = smul.addr %s1267, 8
        %s1269 = scalar_lea.vmem %s6, %s1268
      $region72: #{_lambda_.13} parent=59 // pred_fallthru
        _
      // Predicated region
      $region73: #{_lambda_.13} parent=59 // pred_check
        %p1270 = pneg %p224
      $region74: #{_lambda_.13} parent=59 // pred_check_branch
        %1272 = sbr.rel (%p1270) target = $region76
      $region75: #{_lambda_.13} parent=59 // pred_region
        %p1273 = scmp.lt.s32.totalorder %s25, 1
        %s1274 = scalar_select %p1273, %s25, 1
        %s1275 = smul.addr %s1274, 8
        %s1276 = scalar_lea.vmem %s7, %s1275
      $region76: #{_lambda_.13} parent=59 // pred_fallthru
        _
    $region60: #{_lambda_.13} parent=5 // pred_fallthru
      _
  $region6: #{_lambda_.13} parent=0 // loop_footer
    %s18 = sadd.s32 1, %s14
  $region7: #{_lambda_.13} parent=0 // loop_footer_branch
    %13 = sbr.rel target = $region3
  $region8: #{_lambda_.13} parent=0 // loop_exit
    _

</llo_original>
